<compile_context>
chip_gen: v7x
topology: tpu7x:2x2x1
jax: 0.10.0
libtpu: 0.0.40
codegen_flags: <defaults>
</compile_context>

<pallas_src>
import jax
import jax.numpy as jnp
from jax.experimental import pallas as pl
from jax.experimental.pallas import tpu as pltpu

GROUPS = 32
EPS = 1e-6


# --------------------------------------------------------------------------
# Hardware introspection (VMEM budget / MXU depth) with safe fallbacks
# --------------------------------------------------------------------------
def _tpu_vmem_capacity_bytes():
    try:
        cap = getattr(pltpu.get_tpu_info(), "vmem_capacity_bytes", None)
        if cap:
            return int(cap)
    except Exception:
        pass
    return 64 * 1024 * 1024                     # conservative (v7x per-core VMEM)


def _mxu_is_shallow():
    # v2-v5 MXUs are 128-deep: a K=128 dot already fills the systolic array,
    # so the K=9*Cin im2col patch build is pure extra copy cost there.
    try:
        kind = jax.devices()[0].device_kind.lower()
        return any(t in kind for t in ("v2", "v3", "v4", "v5"))
    except Exception:
        return False


# --------------------------------------------------------------------------
# GroupNorm statistics -> per-(sample, channel) scale / shift  (tiny XLA ops)
# --------------------------------------------------------------------------
def _scale_shift_from_moments(mean, var, gamma, beta):
    N, G = mean.shape
    C = gamma.size
    cs = C // G
    inv = jax.lax.rsqrt(jnp.maximum(var, 0.0) + EPS)       # clamp one-pass variance
    mean_c = jnp.repeat(mean, cs, axis=1)                  # (N, C)
    inv_c = jnp.repeat(inv, cs, axis=1)                    # (N, C)
    g = gamma.reshape(1, C).astype(jnp.float32)
    b = beta.reshape(1, C).astype(jnp.float32)
    scale = g * inv_c
    shift = b - mean_c * scale
    return scale.reshape(N, 1, C), shift.reshape(N, 1, C)


def _gn_scale_shift_from_x(x, gamma, beta):
    # One cheap reduction over x (single HBM read) for the first GroupNorm.
    N, H, W, C = x.shape
    cs = C // GROUPS
    xg = x.reshape(N, H * W, GROUPS, cs).astype(jnp.float32)
    mean = jnp.mean(xg, axis=(1, 3))                       # (N, G)
    var = jnp.mean(jnp.square(xg), axis=(1, 3)) - jnp.square(mean)
    return _scale_shift_from_moments(mean, var, gamma, beta)


def _gn_scale_shift_from_sums(st, gamma, beta, hw):
    # st: (N, RT, 2, C) per-row-tile channel sums of h and h^2 (f32),
    # emitted by the stage-1 kernel -> no extra HBM read of h.
    N = st.shape[0]
    C = st.shape[-1]
    cs = C // GROUPS
    s = jnp.sum(st, axis=1)                                # (N, 2, C)
    s1 = jnp.sum(s[:, 0, :].reshape(N, GROUPS, cs), axis=-1)
    s2 = jnp.sum(s[:, 1, :].reshape(N, GROUPS, cs), axis=-1)
    cnt = float(hw * cs)
    mean = s1 / cnt
    var = s2 / cnt - jnp.square(mean)
    return _scale_shift_from_moments(mean, var, gamma, beta)


# --------------------------------------------------------------------------
# VMEM-aware row-tile selection
# --------------------------------------------------------------------------
def _auto_tile_rows(requested, N, H, W, cin, cout, cr, residual,
                    use_im2col, use_im2col_res,
                    x_itemsize, res_itemsize, out_itemsize, vmem_budget):
    if requested is not None:
        th = int(max(1, min(H, requested)))
    else:
        # fixed (non-tiled) VMEM: conv weights + 1-row halo blocks (double-buffered)
        fixed = 2 * (9 * cin * cout * 2)
        fixed += 2 * 2 * W * cin * x_itemsize
        if residual == "nin":
            fixed += 2 * (cr * cout * 2)
        elif residual == "conv":
            fixed += 2 * (9 * cr * cout * 2) + 2 * 2 * W * cr * res_itemsize
        per_row = 2 * W * cin * x_itemsize               # input block (dbl-buffered)
        per_row += (W + 2) * cin * 4                     # halo scratch (f32)
        per_row += W * cin * 4 + W * cout * 4            # tap temps + f32 accumulator
        if use_im2col:
            per_row += W * 9 * cin * 2                   # im2col patch (bf16)
        if residual is not None:
            per_row += 2 * W * cr * res_itemsize         # residual block (dbl-buffered)
        if residual == "conv":
            per_row += (W + 2) * cr * 4 + W * cr * 4
            if use_im2col_res:
                per_row += W * 9 * cr * 2
        per_row += 2 * W * cout * out_itemsize           # output block (dbl-buffered)
        th = int(max(1, min(H, (vmem_budget - fixed) // max(per_row, 1))))
        # keep >= 2 grid steps so both v7x TensorCores get work
        if N * (-(-H // th)) < 2 and th > 1 and H > 1:
            th = (H + 1) // 2
    while H % th:
        th -= 1
    return th


# --------------------------------------------------------------------------
# In-kernel helpers
# --------------------------------------------------------------------------
def _fill_halo_scratch(xp_ref, x_ref, top_ref, bot_ref, act,
                       r, last_r, th, w, c, has_halo):
    """Assemble the (SAME-padded) activated tile in the VMEM scratch.

    Only the 1-pixel border is zeroed: left/right columns every step (tiny),
    top/bottom rows only at the image edges; interior rows and interior
    halo rows are written with data (no full-scratch zeroing pass).
    """
    zcol = jnp.zeros((th + 2, 1, c), jnp.float32)
    xp_ref[:, 0:1, :] = zcol
    xp_ref[:, w + 1:w + 2, :] = zcol
    xp_ref[1:th + 1, 1:w + 1, :] = act(x_ref[0])
    zrow = jnp.zeros((w, c), jnp.float32)
    if has_halo:
        @pl.when(r == 0)
        def _():
            xp_ref[0, 1:w + 1, :] = zrow

        @pl.when(r > 0)
        def _():
            xp_ref[0, 1:w + 1, :] = act(top_ref[0, 0])

        @pl.when(r == last_r)
        def _():
            xp_ref[th + 1, 1:w + 1, :] = zrow

        @pl.when(r < last_r)
        def _():
            xp_ref[th + 1, 1:w + 1, :] = act(bot_ref[0, 0])
    else:
        xp_ref[0, 1:w + 1, :] = zrow
        xp_ref[th + 1, 1:w + 1, :] = zrow


def _conv3x3_from_scratch(xp_ref, w_ref, patch_ref, th, w, cin, cout, use_im2col):
    """3x3 SAME conv over the padded tile in `xp_ref` (f32 accumulation)."""
    if use_im2col:
        # Single K=9*Cin matmul.  Each activated tap is stored straight into a
        # lane-aligned column window of the bf16 patch scratch (no concat pass).
        for k in range(9):
            ky, kx = divmod(k, 3)
            patch_ref[:, k * cin:(k + 1) * cin] = (
                xp_ref[ky:ky + th, kx:kx + w, :]
                .reshape(th * w, cin).astype(jnp.bfloat16))
        return jnp.dot(patch_ref[...], w_ref[...],
                       preferred_element_type=jnp.float32)
    acc = jnp.zeros((th * w, cout), jnp.float32)
    for k in range(9):
        ky, kx = divmod(k, 3)
        tap = (xp_ref[ky:ky + th, kx:kx + w, :]
               .reshape(th * w, cin).astype(jnp.bfloat16))
        acc = acc + jnp.dot(tap, w_ref[k], preferred_element_type=jnp.float32)
    return acc


# --------------------------------------------------------------------------
# Fused stage:  [GN-apply + swish] -> 3x3 SAME conv + bias
#               -> [+ residual | + 1x1 nin | + 3x3 conv shortcut] -> store
#               (+ optional per-tile channel sums for the next GroupNorm)
# --------------------------------------------------------------------------
def _fused_gn_swish_conv(x, scale, shift, w_hwio, b, *,
                         residual=None, xres=None, res_w=None, res_b=None,
                         emit_stats=False, out_dtype=jnp.float32,
                         tile_rows=None):
    N, H, W, Cin = x.shape
    Cout = w_hwio.shape[-1]
    Cr = xres.shape[-1] if residual in ("nin", "conv") else Cout

    shallow_mxu = _mxu_is_shallow()
    use_im2col = (Cin % 128 == 0) and not shallow_mxu
    use_im2col_res = (residual == "conv") and (Cr % 128 == 0) and not shallow_mxu
    # TODO(synk): extend the im2col patch-build to Cin not a multiple of 128 by
    # padding each tap's column window to a lane-aligned 128 boundary (K-padded
    # weights) so small-Cin stages also get a deep-K matmul on v6e/v7x.

    cap = _tpu_vmem_capacity_bytes()
    vmem_budget = min(int(cap * 0.45), 64 * 1024 * 1024)
    vmem_limit = max(32 * 1024 * 1024, min(int(cap * 0.85), 112 * 1024 * 1024))

    x_itemsize = x.dtype.itemsize
    out_itemsize = jnp.dtype(out_dtype).itemsize
    res_itemsize = xres.dtype.itemsize if residual is not None else 4

    TH = _auto_tile_rows(tile_rows, N, H, W, Cin, Cout, Cr, residual,
                         use_im2col, use_im2col_res,
                         x_itemsize, res_itemsize, out_itemsize, vmem_budget)
    RT = H // TH
    has_halo = RT > 1          # drop the two thin halo-row DMAs when RT == 1

    # ---- kernel ----------------------------------------------------------
    def kernel(*refs):
        it = iter(refs)
        x_ref = next(it)
        top_ref = next(it) if has_halo else None
        bot_ref = next(it) if has_halo else None
        scale_ref, shift_ref = next(it), next(it)
        w_ref, b_ref = next(it), next(it)
        res_ref = next(it) if residual is not None else None
        rw_ref = rb_ref = rtop_ref = rbot_ref = None
        if residual == "nin":
            rw_ref, rb_ref = next(it), next(it)
        elif residual == "conv":
            rtop_ref = next(it) if has_halo else None
            rbot_ref = next(it) if has_halo else None
            rw_ref, rb_ref = next(it), next(it)
        o_ref = next(it)
        st_ref = next(it) if emit_stats else None
        xp_ref = next(it)
        patch_ref = next(it) if use_im2col else None
        xpr_ref = patchr_ref = None
        if residual == "conv":
            xpr_ref = next(it)
            if use_im2col_res:
                patchr_ref = next(it)

        r = pl.program_id(1)
        last_r = pl.num_programs(1) - 1

        sc = scale_ref[0]                                   # (1, Cin) f32
        sh = shift_ref[0]

        def act(v):                                         # GN-apply + swish
            y = v.astype(jnp.float32) * sc + sh
            return y * jax.nn.sigmoid(y)

        _fill_halo_scratch(xp_ref, x_ref, top_ref, bot_ref, act,
                           r, last_r, TH, W, Cin, has_halo)
        acc = _conv3x3_from_scratch(xp_ref, w_ref, patch_ref,
                                    TH, W, Cin, Cout, use_im2col)
        acc = acc + b_ref[...]

        if emit_stats:                                      # f32 sums for next GN
            st_ref[0, 0, 0:1, :] = jnp.sum(acc, axis=0, keepdims=True)
            st_ref[0, 0, 1:2, :] = jnp.sum(acc * acc, axis=0, keepdims=True)

        if residual == "add":                               # fused identity add
            acc = acc + res_ref[0].reshape(TH * W, Cout).astype(jnp.float32)
        elif residual == "nin":                             # fused 1x1 nin shortcut
            xr = res_ref[0].reshape(TH * W, Cr).astype(jnp.bfloat16)
            acc = acc + (jnp.dot(xr, rw_ref[...],
                                 preferred_element_type=jnp.float32) + rb_ref[...])
        elif residual == "conv":                            # fused 3x3 conv shortcut
            def ident(v):
                return v.astype(jnp.float32)
            _fill_halo_scratch(xpr_ref, res_ref, rtop_ref, rbot_ref, ident,
                               r, last_r, TH, W, Cr, has_halo)
            acc = acc + (_conv3x3_from_scratch(xpr_ref, rw_ref, patchr_ref,
                                               TH, W, Cr, Cout, use_im2col_res)
                         + rb_ref[...])

        o_ref[0] = acc.reshape(TH, W, Cout).astype(o_ref.dtype)

    # ---- pallas_call plumbing --------------------------------------------
    inputs = [x]
    in_specs = [pl.BlockSpec((1, TH, W, Cin), lambda n, r: (n, r, 0, 0))]
    if has_halo:
        inputs += [x, x]
        in_specs += [
            pl.BlockSpec((1, 1, W, Cin),
                         lambda n, r: (n, jnp.maximum(r * TH - 1, 0), 0, 0)),
            pl.BlockSpec((1, 1, W, Cin),
                         lambda n, r: (n, jnp.minimum(r * TH + TH, H - 1), 0, 0)),
        ]
    inputs += [scale, shift]
    in_specs += [pl.BlockSpec((1, 1, Cin), lambda n, r: (n, 0, 0)),
                 pl.BlockSpec((1, 1, Cin), lambda n, r: (n, 0, 0))]

    if use_im2col:
        w_in = w_hwio.reshape(9 * Cin, Cout).astype(jnp.bfloat16)
        w_spec = pl.BlockSpec((9 * Cin, Cout), lambda n, r: (0, 0))
    else:
        w_in = w_hwio.reshape(9, Cin, Cout).astype(jnp.bfloat16)
        w_spec = pl.BlockSpec((9, Cin, Cout), lambda n, r: (0, 0, 0))
    inputs += [w_in, jnp.asarray(b, jnp.float32).reshape(1, Cout)]
    in_specs += [w_spec, pl.BlockSpec((1, Cout), lambda n, r: (0, 0))]

    rw_in = None
    if residual == "add":
        inputs += [xres]
        in_specs += [pl.BlockSpec((1, TH, W, Cout), lambda n, r: (n, r, 0, 0))]
    elif residual == "nin":
        rw_in = res_w.astype(jnp.bfloat16)
        inputs += [xres, rw_in, jnp.asarray(res_b, jnp.float32).reshape(1, Cout)]
        in_specs += [pl.BlockSpec((1, TH, W, Cr), lambda n, r: (n, r, 0, 0)),
                     pl.BlockSpec((Cr, Cout), lambda n, r: (0, 0)),
                     pl.BlockSpec((1, Cout), lambda n, r: (0, 0))]
    elif residual == "conv":
        inputs += [xres]
        in_specs += [pl.BlockSpec((1, TH, W, Cr), lambda n, r: (n, r, 0, 0))]
        if has_halo:
            inputs += [xres, xres]
            in_specs += [
                pl.BlockSpec((1, 1, W, Cr),
                             lambda n, r: (n, jnp.maximum(r * TH - 1, 0), 0, 0)),
                pl.BlockSpec((1, 1, W, Cr),
                             lambda n, r: (n, jnp.minimum(r * TH + TH, H - 1), 0, 0)),
            ]
        if use_im2col_res:
            rw_in = res_w.reshape(9 * Cr, Cout).astype(jnp.bfloat16)
            rw_spec = pl.BlockSpec((9 * Cr, Cout), lambda n, r: (0, 0))
        else:
            rw_in = res_w.reshape(9, Cr, Cout).astype(jnp.bfloat16)
            rw_spec = pl.BlockSpec((9, Cr, Cout), lambda n, r: (0, 0, 0))
        inputs += [rw_in, jnp.asarray(res_b, jnp.float32).reshape(1, Cout)]
        in_specs += [rw_spec, pl.BlockSpec((1, Cout), lambda n, r: (0, 0))]

    out_spec_h = pl.BlockSpec((1, TH, W, Cout), lambda n, r: (n, r, 0, 0))
    if emit_stats:
        out_shape = (jax.ShapeDtypeStruct((N, H, W, Cout), out_dtype),
                     jax.ShapeDtypeStruct((N, RT, 2, Cout), jnp.float32))
        out_specs = (out_spec_h,
                     pl.BlockSpec((1, 1, 2, Cout), lambda n, r: (n, r, 0, 0)))
    else:
        out_shape = jax.ShapeDtypeStruct((N, H, W, Cout), out_dtype)
        out_specs = out_spec_h

    scratch = [pltpu.VMEM((TH + 2, W + 2, Cin), jnp.float32)]
    if use_im2col:
        scratch.append(pltpu.VMEM((TH * W, 9 * Cin), jnp.bfloat16))
    if residual == "conv":
        scratch.append(pltpu.VMEM((TH + 2, W + 2, Cr), jnp.float32))
        if use_im2col_res:
            scratch.append(pltpu.VMEM((TH * W, 9 * Cr), jnp.bfloat16))

    flops = 2 * N * H * W * 9 * Cin * Cout
    if residual == "nin":
        flops += 2 * N * H * W * Cr * Cout
    elif residual == "conv":
        flops += 2 * N * H * W * 9 * Cr * Cout
    bytes_accessed = (int(x.size) * x_itemsize
                      + N * H * W * Cout * out_itemsize
                      + int(w_in.size) * 2)
    if residual is not None:
        bytes_accessed += int(xres.size) * res_itemsize
    if rw_in is not None:
        bytes_accessed += int(rw_in.size) * 2
    if emit_stats:
        bytes_accessed += N * RT * 2 * Cout * 4
    cost = pl.CostEstimate(flops=int(flops),
                           transcendentals=int(N * H * W * Cin),
                           bytes_accessed=int(bytes_accessed))

    return pl.pallas_call(
        kernel,
        out_shape=out_shape,
        grid=(N, RT),
        in_specs=in_specs,
        out_specs=out_specs,
        scratch_shapes=scratch,
        compiler_params=pltpu.CompilerParams(
            dimension_semantics=("parallel", "parallel"),
            vmem_limit_bytes=int(vmem_limit)),
        cost_estimate=cost,
    )(*inputs)


# --------------------------------------------------------------------------
# ResnetBlock forward  (two fused pallas_calls, all shortcut flavors fused)
# --------------------------------------------------------------------------
def resnet_block_forward(params, x_nchw, *, conv_shortcut=False, tile_rows=None):
    x = jnp.transpose(x_nchw, (0, 2, 3, 1)).astype(jnp.float32)   # NCHW -> NHWC
    N, H, W, Cin = x.shape
    Cout = params["conv1_w"].shape[-1]

    # norm1 statistics -> per-sample, per-channel scale/shift
    scale1, shift1 = _gn_scale_shift_from_x(x, params["norm1_g"], params["norm1_b"])

    # stage 1: GN1 + swish + conv1  (bf16 inter-stage h1 + f32 sums for norm2)
    h1, st = _fused_gn_swish_conv(
        x, scale1, shift1, params["conv1_w"], params["conv1_b"],
        residual=None, emit_stats=True, out_dtype=jnp.bfloat16,
        tile_rows=tile_rows)

    scale2, shift2 = _gn_scale_shift_from_sums(
        st, params["norm2_g"], params["norm2_b"], H * W)

    # dropout(p=0.0) is the identity
    # stage 2: GN2 + swish + conv2 + fused shortcut/residual add
    if Cin == Cout:
        out = _fused_gn_swish_conv(
            h1, scale2, shift2, params["conv2_w"], params["conv2_b"],
            residual="add", xres=x, out_dtype=jnp.float32, tile_rows=tile_rows)
    elif conv_shortcut:
        out = _fused_gn_swish_conv(
            h1, scale2, shift2, params["conv2_w"], params["conv2_b"],
            residual="conv", xres=x,
            res_w=params["conv_shortcut_w"], res_b=params["conv_shortcut_b"],
            out_dtype=jnp.float32, tile_rows=tile_rows)
    else:
        out = _fused_gn_swish_conv(
            h1, scale2, shift2, params["conv2_w"], params["conv2_b"],
            residual="nin", xres=x,
            res_w=params["nin_w"], res_b=params["nin_b"],
            out_dtype=jnp.float32, tile_rows=tile_rows)

    return jnp.transpose(out, (0, 3, 1, 2))                       # NHWC -> NCHW


# --------------------------------------------------------------------------
# Deterministic parameter init (matches PyTorch module shapes/defaults)
# --------------------------------------------------------------------------
def init_params(key, in_channels, out_channels, conv_shortcut=False):
    ks = jax.random.split(key, 8)

    def conv_init(kw, kb, kh, kwid, cin, cout):
        fan_in = cin * kh * kwid
        bound = 1.0 / (fan_in ** 0.5)
        w = jax.random.uniform(kw, (kh, kwid, cin, cout), jnp.float32, -bound, bound)
        b = jax.random.uniform(kb, (1, cout), jnp.float32, -bound, bound)
        return w, b

    p = {
        "norm1_g": jnp.ones((1, in_channels), jnp.float32),
        "norm1_b": jnp.zeros((1, in_channels), jnp.float32),
        "norm2_g": jnp.ones((1, out_channels), jnp.float32),
        "norm2_b": jnp.zeros((1, out_channels), jnp.float32),
    }
    p["conv1_w"], p["conv1_b"] = conv_init(ks[0], ks[1], 3, 3, in_channels, out_channels)
    p["conv2_w"], p["conv2_b"] = conv_init(ks[2], ks[3], 3, 3, out_channels, out_channels)
    if in_channels != out_channels:
        if conv_shortcut:
            p["conv_shortcut_w"], p["conv_shortcut_b"] = conv_init(
                ks[4], ks[5], 3, 3, in_channels, out_channels)
        else:
            w, b = conv_init(ks[6], ks[7], 1, 1, in_channels, out_channels)
            p["nin_w"] = w[0, 0]                                  # (Cin, Cout)
            p["nin_b"] = b
    return p


# --------------------------------------------------------------------------
# Pure-JAX reference (f32) for a silent sanity check
# --------------------------------------------------------------------------
def _ref_forward(params, x_nchw, conv_shortcut=False):
    x = jnp.transpose(x_nchw, (0, 2, 3, 1)).astype(jnp.float32)

    def gn(v, g, b):
        N, H, W, C = v.shape
        vg = v.reshape(N, H, W, GROUPS, C // GROUPS)
        mean = jnp.mean(vg, axis=(1, 2, 4), keepdims=True)
        var = jnp.mean((vg - mean) ** 2, axis=(1, 2, 4), keepdims=True)
        y = ((vg - mean) / jnp.sqrt(var + EPS)).reshape(N, H, W, C)
        return y * g.reshape(1, 1, 1, C) + b.reshape(1, 1, 1, C)

    def swish(v):
        return v * jax.nn.sigmoid(v)

    def conv(v, w, b):
        y = jax.lax.conv_general_dilated(
            v, w, (1, 1), "SAME", dimension_numbers=("NHWC", "HWIO", "NHWC"))
        return y + b.reshape(1, 1, 1, -1)

    h = conv(swish(gn(x, params["norm1_g"], params["norm1_b"])),
             params["conv1_w"], params["conv1_b"])
    h = conv(swish(gn(h, params["norm2_g"], params["norm2_b"])),
             params["conv2_w"], params["conv2_b"])
    if x.shape[-1] != h.shape[-1]:
        if conv_shortcut:
            xs = conv(x, params["conv_shortcut_w"], params["conv_shortcut_b"])
        else:
            xs = jnp.einsum("nhwc,cd->nhwd", x, params["nin_w"]) \
                + params["nin_b"].reshape(1, 1, 1, -1)
    else:
        xs = x
    return jnp.transpose(xs + h, (0, 3, 1, 2))


if __name__ == "__main__":
    N, H, W = 2, 16, 16                     # channels must be divisible by 32 groups
    # (name, in_channels, out_channels, conv_shortcut, forced tile_rows)
    configs = [
        ("nin_shortcut", 32, 64, False, None),       # fused 1x1 nin shortcut
        ("identity", 64, 64, False, None),           # fused identity residual add
        ("conv_shortcut", 32, 64, True, None),       # fused 3x3 conv shortcut
        ("identity_c128_rt4", 128, 128, False, 4),   # im2col path + multi-tile halos
    ]
    fwd = jax.jit(resnet_block_forward,
                  static_argnames=("conv_shortcut", "tile_rows"))

    key = jax.random.PRNGKey(0)
    ks = jax.random.split(key, 2 * len(configs))
    for i, (name, c_in, c_out, use_cs, trows) in enumerate(configs):
        x = jax.random.normal(ks[2 * i], (N, c_in, H, W), jnp.float32)  # NCHW
        params = init_params(ks[2 * i + 1], c_in, c_out, conv_shortcut=use_cs)

        out = jax.block_until_ready(
            fwd(params, x, conv_shortcut=use_cs, tile_rows=trows))
        assert out.shape == (N, c_out, H, W), name
        assert bool(jnp.all(jnp.isfinite(out))), name

        ref = jax.block_until_ready(_ref_forward(params, x, conv_shortcut=use_cs))
        err = float(jnp.max(jnp.abs(out - ref)))
        assert jnp.allclose(out, ref, rtol=5e-2, atol=5e-2), (name, err)

    print("KERNEL_OK")
</pallas_src>

<mosaic_0001>
module attributes {stable_mosaic.version = 11 : i64} {
  func.func @kernel(%arg0: i32, %arg1: i32, %arg2: memref<1x16x16x32xf32, #tpu.memory_space<vmem>>, %arg3: memref<1x1x32xf32, #tpu.memory_space<vmem>>, %arg4: memref<1x1x32xf32, #tpu.memory_space<vmem>>, %arg5: memref<9x32x64xbf16, #tpu.memory_space<vmem>>, %arg6: memref<1x64xf32, #tpu.memory_space<vmem>>, %arg7: memref<1x16x16x64xbf16, #tpu.memory_space<vmem>>, %arg8: memref<1x1x2x64xf32, #tpu.memory_space<vmem>>, %arg9: memref<18x18x32xf32, #tpu.memory_space<vmem>>) attributes {dimension_semantics = [#tpu.dimension_semantics<parallel>, #tpu.dimension_semantics<parallel>], iteration_bounds = array<i64: 2, 1>, scalar_prefetch = 0 : i64, scratch_operands = 1 : i64, tpu.core_type = #tpu.core_type<tc>, window_params = [{transform_indices = @transform_0, window_bounds = array<i64: 1, 16, 16, 32>}, {transform_indices = @transform_1, window_bounds = array<i64: 1, 1, 32>}, {transform_indices = @transform_2, window_bounds = array<i64: 1, 1, 32>}, {pipeline_mode = #tpu.pipeline_mode<synchronous>, transform_indices = @transform_3, window_bounds = array<i64: 9, 32, 64>}, {pipeline_mode = #tpu.pipeline_mode<synchronous>, transform_indices = @transform_4, window_bounds = array<i64: 1, 64>}, {transform_indices = @transform_5, window_bounds = array<i64: 1, 16, 16, 64>}, {transform_indices = @transform_6, window_bounds = array<i64: 1, 1, 2, 64>}]} {
    %c0 = arith.constant 0 : index
    %c0_0 = arith.constant 0 : index
    %c0_1 = arith.constant 0 : index
    %0 = vector.load %arg3[%c0, %c0_0, %c0_1] : memref<1x1x32xf32, #tpu.memory_space<vmem>>, vector<1x1x32xf32>
    %1 = vector.shape_cast %0 : vector<1x1x32xf32> to vector<1x32xf32>
    %c0_2 = arith.constant 0 : index
    %c0_3 = arith.constant 0 : index
    %c0_4 = arith.constant 0 : index
    %2 = vector.load %arg4[%c0_2, %c0_3, %c0_4] : memref<1x1x32xf32, #tpu.memory_space<vmem>>, vector<1x1x32xf32>
    %3 = vector.shape_cast %2 : vector<1x1x32xf32> to vector<1x32xf32>
    %cst = arith.constant 0.000000e+00 : f32
    %4 = vector.broadcast %cst : f32 to vector<18x1x32xf32>
    %c0_5 = arith.constant 0 : index
    %c0_6 = arith.constant 0 : index
    %c0_7 = arith.constant 0 : index
    %5 = vector.load %arg9[%c0_5, %c0_6, %c0_7] : memref<18x18x32xf32, #tpu.memory_space<vmem>>, vector<18x1x32xf32>
    tpu.vector_store %arg9[%c0_5, %c0_6, %c0_7], %4 {strides = array<i32>} : memref<18x18x32xf32, #tpu.memory_space<vmem>>, vector<18x1x32xf32>,
    %c0_8 = arith.constant 0 : index
    %c17 = arith.constant 17 : index
    %c0_9 = arith.constant 0 : index
    %6 = vector.load %arg9[%c0_8, %c17, %c0_9] : memref<18x18x32xf32, #tpu.memory_space<vmem>>, vector<18x1x32xf32>
    tpu.vector_store %arg9[%c0_8, %c17, %c0_9], %4 {strides = array<i32>} : memref<18x18x32xf32, #tpu.memory_space<vmem>>, vector<18x1x32xf32>,
    %c0_10 = arith.constant 0 : index
    %c0_11 = arith.constant 0 : index
    %c0_12 = arith.constant 0 : index
    %c0_13 = arith.constant 0 : index
    %7 = vector.load %arg2[%c0_10, %c0_11, %c0_12, %c0_13] : memref<1x16x16x32xf32, #tpu.memory_space<vmem>>, vector<1x16x16x32xf32>
    %8 = vector.shape_cast %7 : vector<1x16x16x32xf32> to vector<16x16x32xf32>
    %9 = vector.shape_cast %1 : vector<1x32xf32> to vector<1x1x32xf32>
    %10 = vector.broadcast %9 : vector<1x1x32xf32> to vector<16x16x32xf32>
    %11 = arith.mulf %8, %10 : vector<16x16x32xf32>
    %12 = vector.shape_cast %3 : vector<1x32xf32> to vector<1x1x32xf32>
    %13 = vector.broadcast %12 : vector<1x1x32xf32> to vector<16x16x32xf32>
    %14 = arith.addf %11, %13 : vector<16x16x32xf32>
    %15 = arith.negf %14 : vector<16x16x32xf32>
    %16 = math.exp %15 : vector<16x16x32xf32>
    %cst_14 = arith.constant 1.000000e+00 : f32
    %17 = vector.broadcast %cst_14 : f32 to vector<16x16x32xf32>
    %18 = arith.addf %17, %16 : vector<16x16x32xf32>
    %19 = arith.divf %17, %18 : vector<16x16x32xf32>
    %20 = arith.mulf %14, %19 : vector<16x16x32xf32>
    %c1 = arith.constant 1 : index
    %c1_15 = arith.constant 1 : index
    %c0_16 = arith.constant 0 : index
    %21 = vector.load %arg9[%c1, %c1_15, %c0_16] : memref<18x18x32xf32, #tpu.memory_space<vmem>>, vector<16x16x32xf32>
    tpu.vector_store %arg9[%c1, %c1_15, %c0_16], %20 {strides = array<i32>} : memref<18x18x32xf32, #tpu.memory_space<vmem>>, vector<16x16x32xf32>,
    %cst_17 = arith.constant 0.000000e+00 : f32
    %22 = vector.broadcast %cst_17 : f32 to vector<16x32xf32>
    %c0_18 = arith.constant 0 : index
    %c1_19 = arith.constant 1 : index
    %c0_20 = arith.constant 0 : index
    %23 = vector.load %arg9[%c0_18, %c1_19, %c0_20] : memref<18x18x32xf32, #tpu.memory_space<vmem>>, vector<1x16x32xf32>
    %24 = vector.shape_cast %23 : vector<1x16x32xf32> to vector<16x32xf32>
    %25 = vector.shape_cast %22 : vector<16x32xf32> to vector<1x16x32xf32>
    tpu.vector_store %arg9[%c0_18, %c1_19, %c0_20], %25 {strides = array<i32>} : memref<18x18x32xf32, #tpu.memory_space<vmem>>, vector<1x16x32xf32>,
    %c17_21 = arith.constant 17 : index
    %c1_22 = arith.constant 1 : index
    %c0_23 = arith.constant 0 : index
    %26 = vector.load %arg9[%c17_21, %c1_22, %c0_23] : memref<18x18x32xf32, #tpu.memory_space<vmem>>, vector<1x16x32xf32>
    %27 = vector.shape_cast %26 : vector<1x16x32xf32> to vector<16x32xf32>
    %28 = vector.shape_cast %22 : vector<16x32xf32> to vector<1x16x32xf32>
    tpu.vector_store %arg9[%c17_21, %c1_22, %c0_23], %28 {strides = array<i32>} : memref<18x18x32xf32, #tpu.memory_space<vmem>>, vector<1x16x32xf32>,
    %cst_24 = arith.constant 0.000000e+00 : f32
    %29 = vector.broadcast %cst_24 : f32 to vector<256x64xf32>
    %c0_25 = arith.constant 0 : index
    %c0_26 = arith.constant 0 : index
    %c0_27 = arith.constant 0 : index
    %30 = vector.load %arg9[%c0_25, %c0_26, %c0_27] : memref<18x18x32xf32, #tpu.memory_space<vmem>>, vector<16x16x32xf32>
    %31 = vector.shape_cast %30 : vector<16x16x32xf32> to vector<256x32xf32>
    %32 = arith.truncf %31 : vector<256x32xf32> to vector<256x32xbf16>
    %c0_28 = arith.constant 0 : index
    %c0_29 = arith.constant 0 : index
    %c0_30 = arith.constant 0 : index
    %33 = vector.load %arg5[%c0_28, %c0_29, %c0_30] : memref<9x32x64xbf16, #tpu.memory_space<vmem>>, vector<1x32x64xbf16>
    %34 = vector.shape_cast %33 : vector<1x32x64xbf16> to vector<32x64xbf16>
    %cst_31 = arith.constant dense<0.000000e+00> : vector<256x64xf32>
    %35 = tpu.matmul %32, %34, %cst_31 {dimension_numbers = #tpu.dot_dimension_numbers<[1], [0], [0], [1], [0, 0, 1, 1], [], []>} : vector<256x32xbf16>, vector<32x64xbf16>, vector<256x64xf32> -> vector<256x64xf32>
    %36 = arith.addf %29, %35 : vector<256x64xf32>
    %c0_32 = arith.constant 0 : index
    %c1_33 = arith.constant 1 : index
    %c0_34 = arith.constant 0 : index
    %37 = vector.load %arg9[%c0_32, %c1_33, %c0_34] : memref<18x18x32xf32, #tpu.memory_space<vmem>>, vector<16x16x32xf32>
    %38 = vector.shape_cast %37 : vector<16x16x32xf32> to vector<256x32xf32>
    %39 = arith.truncf %38 : vector<256x32xf32> to vector<256x32xbf16>
    %c1_35 = arith.constant 1 : index
    %c0_36 = arith.constant 0 : index
    %c0_37 = arith.constant 0 : index
    %40 = vector.load %arg5[%c1_35, %c0_36, %c0_37] : memref<9x32x64xbf16, #tpu.memory_space<vmem>>, vector<1x32x64xbf16>
    %41 = vector.shape_cast %40 : vector<1x32x64xbf16> to vector<32x64xbf16>
    %cst_38 = arith.constant dense<0.000000e+00> : vector<256x64xf32>
    %42 = tpu.matmul %39, %41, %cst_38 {dimension_numbers = #tpu.dot_dimension_numbers<[1], [0], [0], [1], [0, 0, 1, 1], [], []>} : vector<256x32xbf16>, vector<32x64xbf16>, vector<256x64xf32> -> vector<256x64xf32>
    %43 = arith.addf %36, %42 : vector<256x64xf32>
    %c0_39 = arith.constant 0 : index
    %c2 = arith.constant 2 : index
    %c0_40 = arith.constant 0 : index
    %44 = vector.load %arg9[%c0_39, %c2, %c0_40] : memref<18x18x32xf32, #tpu.memory_space<vmem>>, vector<16x16x32xf32>
    %45 = vector.shape_cast %44 : vector<16x16x32xf32> to vector<256x32xf32>
    %46 = arith.truncf %45 : vector<256x32xf32> to vector<256x32xbf16>
    %c2_41 = arith.constant 2 : index
    %c0_42 = arith.constant 0 : index
    %c0_43 = arith.constant 0 : index
    %47 = vector.load %arg5[%c2_41, %c0_42, %c0_43] : memref<9x32x64xbf16, #tpu.memory_space<vmem>>, vector<1x32x64xbf16>
    %48 = vector.shape_cast %47 : vector<1x32x64xbf16> to vector<32x64xbf16>
    %cst_44 = arith.constant dense<0.000000e+00> : vector<256x64xf32>
    %49 = tpu.matmul %46, %48, %cst_44 {dimension_numbers = #tpu.dot_dimension_numbers<[1], [0], [0], [1], [0, 0, 1, 1], [], []>} : vector<256x32xbf16>, vector<32x64xbf16>, vector<256x64xf32> -> vector<256x64xf32>
    %50 = arith.addf %43, %49 : vector<256x64xf32>
    %c1_45 = arith.constant 1 : index
    %c0_46 = arith.constant 0 : index
    %c0_47 = arith.constant 0 : index
    %51 = vector.load %arg9[%c1_45, %c0_46, %c0_47] : memref<18x18x32xf32, #tpu.memory_space<vmem>>, vector<16x16x32xf32>
    %52 = vector.shape_cast %51 : vector<16x16x32xf32> to vector<256x32xf32>
    %53 = arith.truncf %52 : vector<256x32xf32> to vector<256x32xbf16>
    %c3 = arith.constant 3 : index
    %c0_48 = arith.constant 0 : index
    %c0_49 = arith.constant 0 : index
    %54 = vector.load %arg5[%c3, %c0_48, %c0_49] : memref<9x32x64xbf16, #tpu.memory_space<vmem>>, vector<1x32x64xbf16>
    %55 = vector.shape_cast %54 : vector<1x32x64xbf16> to vector<32x64xbf16>
    %cst_50 = arith.constant dense<0.000000e+00> : vector<256x64xf32>
    %56 = tpu.matmul %53, %55, %cst_50 {dimension_numbers = #tpu.dot_dimension_numbers<[1], [0], [0], [1], [0, 0, 1, 1], [], []>} : vector<256x32xbf16>, vector<32x64xbf16>, vector<256x64xf32> -> vector<256x64xf32>
    %57 = arith.addf %50, %56 : vector<256x64xf32>
    %c1_51 = arith.constant 1 : index
    %c1_52 = arith.constant 1 : index
    %c0_53 = arith.constant 0 : index
    %58 = vector.load %arg9[%c1_51, %c1_52, %c0_53] : memref<18x18x32xf32, #tpu.memory_space<vmem>>, vector<16x16x32xf32>
    %59 = vector.shape_cast %58 : vector<16x16x32xf32> to vector<256x32xf32>
    %60 = arith.truncf %59 : vector<256x32xf32> to vector<256x32xbf16>
    %c4 = arith.constant 4 : index
    %c0_54 = arith.constant 0 : index
    %c0_55 = arith.constant 0 : index
    %61 = vector.load %arg5[%c4, %c0_54, %c0_55] : memref<9x32x64xbf16, #tpu.memory_space<vmem>>, vector<1x32x64xbf16>
    %62 = vector.shape_cast %61 : vector<1x32x64xbf16> to vector<32x64xbf16>
    %cst_56 = arith.constant dense<0.000000e+00> : vector<256x64xf32>
    %63 = tpu.matmul %60, %62, %cst_56 {dimension_numbers = #tpu.dot_dimension_numbers<[1], [0], [0], [1], [0, 0, 1, 1], [], []>} : vector<256x32xbf16>, vector<32x64xbf16>, vector<256x64xf32> -> vector<256x64xf32>
    %64 = arith.addf %57, %63 : vector<256x64xf32>
    %c1_57 = arith.constant 1 : index
    %c2_58 = arith.constant 2 : index
    %c0_59 = arith.constant 0 : index
    %65 = vector.load %arg9[%c1_57, %c2_58, %c0_59] : memref<18x18x32xf32, #tpu.memory_space<vmem>>, vector<16x16x32xf32>
    %66 = vector.shape_cast %65 : vector<16x16x32xf32> to vector<256x32xf32>
    %67 = arith.truncf %66 : vector<256x32xf32> to vector<256x32xbf16>
    %c5 = arith.constant 5 : index
    %c0_60 = arith.constant 0 : index
    %c0_61 = arith.constant 0 : index
    %68 = vector.load %arg5[%c5, %c0_60, %c0_61] : memref<9x32x64xbf16, #tpu.memory_space<vmem>>, vector<1x32x64xbf16>
    %69 = vector.shape_cast %68 : vector<1x32x64xbf16> to vector<32x64xbf16>
    %cst_62 = arith.constant dense<0.000000e+00> : vector<256x64xf32>
    %70 = tpu.matmul %67, %69, %cst_62 {dimension_numbers = #tpu.dot_dimension_numbers<[1], [0], [0], [1], [0, 0, 1, 1], [], []>} : vector<256x32xbf16>, vector<32x64xbf16>, vector<256x64xf32> -> vector<256x64xf32>
    %71 = arith.addf %64, %70 : vector<256x64xf32>
    %c2_63 = arith.constant 2 : index
    %c0_64 = arith.constant 0 : index
    %c0_65 = arith.constant 0 : index
    %72 = vector.load %arg9[%c2_63, %c0_64, %c0_65] : memref<18x18x32xf32, #tpu.memory_space<vmem>>, vector<16x16x32xf32>
    %73 = vector.shape_cast %72 : vector<16x16x32xf32> to vector<256x32xf32>
    %74 = arith.truncf %73 : vector<256x32xf32> to vector<256x32xbf16>
    %c6 = arith.constant 6 : index
    %c0_66 = arith.constant 0 : index
    %c0_67 = arith.constant 0 : index
    %75 = vector.load %arg5[%c6, %c0_66, %c0_67] : memref<9x32x64xbf16, #tpu.memory_space<vmem>>, vector<1x32x64xbf16>
    %76 = vector.shape_cast %75 : vector<1x32x64xbf16> to vector<32x64xbf16>
    %cst_68 = arith.constant dense<0.000000e+00> : vector<256x64xf32>
    %77 = tpu.matmul %74, %76, %cst_68 {dimension_numbers = #tpu.dot_dimension_numbers<[1], [0], [0], [1], [0, 0, 1, 1], [], []>} : vector<256x32xbf16>, vector<32x64xbf16>, vector<256x64xf32> -> vector<256x64xf32>
    %78 = arith.addf %71, %77 : vector<256x64xf32>
    %c2_69 = arith.constant 2 : index
    %c1_70 = arith.constant 1 : index
    %c0_71 = arith.constant 0 : index
    %79 = vector.load %arg9[%c2_69, %c1_70, %c0_71] : memref<18x18x32xf32, #tpu.memory_space<vmem>>, vector<16x16x32xf32>
    %80 = vector.shape_cast %79 : vector<16x16x32xf32> to vector<256x32xf32>
    %81 = arith.truncf %80 : vector<256x32xf32> to vector<256x32xbf16>
    %c7 = arith.constant 7 : index
    %c0_72 = arith.constant 0 : index
    %c0_73 = arith.constant 0 : index
    %82 = vector.load %arg5[%c7, %c0_72, %c0_73] : memref<9x32x64xbf16, #tpu.memory_space<vmem>>, vector<1x32x64xbf16>
    %83 = vector.shape_cast %82 : vector<1x32x64xbf16> to vector<32x64xbf16>
    %cst_74 = arith.constant dense<0.000000e+00> : vector<256x64xf32>
    %84 = tpu.matmul %81, %83, %cst_74 {dimension_numbers = #tpu.dot_dimension_numbers<[1], [0], [0], [1], [0, 0, 1, 1], [], []>} : vector<256x32xbf16>, vector<32x64xbf16>, vector<256x64xf32> -> vector<256x64xf32>
    %85 = arith.addf %78, %84 : vector<256x64xf32>
    %c2_75 = arith.constant 2 : index
    %c2_76 = arith.constant 2 : index
    %c0_77 = arith.constant 0 : index
    %86 = vector.load %arg9[%c2_75, %c2_76, %c0_77] : memref<18x18x32xf32, #tpu.memory_space<vmem>>, vector<16x16x32xf32>
    %87 = vector.shape_cast %86 : vector<16x16x32xf32> to vector<256x32xf32>
    %88 = arith.truncf %87 : vector<256x32xf32> to vector<256x32xbf16>
    %c8 = arith.constant 8 : index
    %c0_78 = arith.constant 0 : index
    %c0_79 = arith.constant 0 : index
    %89 = vector.load %arg5[%c8, %c0_78, %c0_79] : memref<9x32x64xbf16, #tpu.memory_space<vmem>>, vector<1x32x64xbf16>
    %90 = vector.shape_cast %89 : vector<1x32x64xbf16> to vector<32x64xbf16>
    %cst_80 = arith.constant dense<0.000000e+00> : vector<256x64xf32>
    %91 = tpu.matmul %88, %90, %cst_80 {dimension_numbers = #tpu.dot_dimension_numbers<[1], [0], [0], [1], [0, 0, 1, 1], [], []>} : vector<256x32xbf16>, vector<32x64xbf16>, vector<256x64xf32> -> vector<256x64xf32>
    %92 = arith.addf %85, %91 : vector<256x64xf32>
    %c0_81 = arith.constant 0 : index
    %c0_82 = arith.constant 0 : index
    %93 = vector.load %arg6[%c0_81, %c0_82] : memref<1x64xf32, #tpu.memory_space<vmem>>, vector<1x64xf32>
    %94 = vector.broadcast %93 : vector<1x64xf32> to vector<256x64xf32>
    %95 = arith.addf %92, %94 : vector<256x64xf32>
    %cst_83 = arith.constant dense<0.000000e+00> : vector<64xf32>
    %96 = vector.multi_reduction <add>, %95, %cst_83 [0] : vector<256x64xf32> to vector<64xf32>
    %97 = vector.shape_cast %96 : vector<64xf32> to vector<1x64xf32>
    %c0_84 = arith.constant 0 : index
    %c0_85 = arith.constant 0 : index
    %c0_86 = arith.constant 0 : index
    %c0_87 = arith.constant 0 : index
    %98 = vector.load %arg8[%c0_84, %c0_85, %c0_86, %c0_87] : memref<1x1x2x64xf32, #tpu.memory_space<vmem>>, vector<1x1x1x64xf32>
    %99 = vector.shape_cast %98 : vector<1x1x1x64xf32> to vector<1x64xf32>
    %100 = vector.shape_cast %97 : vector<1x64xf32> to vector<1x1x1x64xf32>
    tpu.vector_store %arg8[%c0_84, %c0_85, %c0_86, %c0_87], %100 {strides = array<i32>} : memref<1x1x2x64xf32, #tpu.memory_space<vmem>>, vector<1x1x1x64xf32>,
    %101 = arith.mulf %95, %95 : vector<256x64xf32>
    %cst_88 = arith.constant dense<0.000000e+00> : vector<64xf32>
    %102 = vector.multi_reduction <add>, %101, %cst_88 [0] : vector<256x64xf32> to vector<64xf32>
    %103 = vector.shape_cast %102 : vector<64xf32> to vector<1x64xf32>
    %c0_89 = arith.constant 0 : index
    %c0_90 = arith.constant 0 : index
    %c1_91 = arith.constant 1 : index
    %c0_92 = arith.constant 0 : index
    %104 = vector.load %arg8[%c0_89, %c0_90, %c1_91, %c0_92] : memref<1x1x2x64xf32, #tpu.memory_space<vmem>>, vector<1x1x1x64xf32>
    %105 = vector.shape_cast %104 : vector<1x1x1x64xf32> to vector<1x64xf32>
    %106 = vector.shape_cast %103 : vector<1x64xf32> to vector<1x1x1x64xf32>
    tpu.vector_store %arg8[%c0_89, %c0_90, %c1_91, %c0_92], %106 {strides = array<i32>} : memref<1x1x2x64xf32, #tpu.memory_space<vmem>>, vector<1x1x1x64xf32>,
    %107 = vector.shape_cast %95 : vector<256x64xf32> to vector<16x16x64xf32>
    %108 = arith.truncf %107 : vector<16x16x64xf32> to vector<16x16x64xbf16>
    %c0_93 = arith.constant 0 : index
    %c0_94 = arith.constant 0 : index
    %c0_95 = arith.constant 0 : index
    %c0_96 = arith.constant 0 : index
    %109 = vector.load %arg7[%c0_93, %c0_94, %c0_95, %c0_96] : memref<1x16x16x64xbf16, #tpu.memory_space<vmem>>, vector<1x16x16x64xbf16>
    %110 = vector.shape_cast %109 : vector<1x16x16x64xbf16> to vector<16x16x64xbf16>
    %111 = vector.shape_cast %108 : vector<16x16x64xbf16> to vector<1x16x16x64xbf16>
    tpu.vector_store %arg7[%c0_93, %c0_94, %c0_95, %c0_96], %111 {strides = array<i32>} : memref<1x16x16x64xbf16, #tpu.memory_space<vmem>>, vector<1x16x16x64xbf16>,
    return
  }
  func.func @transform_0(%arg0: i32, %arg1: i32) -> (i32, i32, i32, i32) {
    %c0_i32 = arith.constant 0 : i32
    %c0_i32_0 = arith.constant 0 : i32
    %c0_i32_1 = arith.constant 0 : i32
    return %arg0, %arg1, %c0_i32, %c0_i32_0 : i32, i32, i32, i32
  }
  func.func @transform_1(%arg0: i32, %arg1: i32) -> (i32, i32, i32) {
    %c0_i32 = arith.constant 0 : i32
    %c0_i32_0 = arith.constant 0 : i32
    %c0_i32_1 = arith.constant 0 : i32
    return %arg0, %c0_i32, %c0_i32_0 : i32, i32, i32
  }
  func.func @transform_2(%arg0: i32, %arg1: i32) -> (i32, i32, i32) {
    %c0_i32 = arith.constant 0 : i32
    %c0_i32_0 = arith.constant 0 : i32
    %c0_i32_1 = arith.constant 0 : i32
    return %arg0, %c0_i32, %c0_i32_0 : i32, i32, i32
  }
  func.func @transform_3(%arg0: i32, %arg1: i32) -> (i32, i32, i32) {
    %c0_i32 = arith.constant 0 : i32
    %c0_i32_0 = arith.constant 0 : i32
    %c0_i32_1 = arith.constant 0 : i32
    %c0_i32_2 = arith.constant 0 : i32
    return %c0_i32, %c0_i32_0, %c0_i32_1 : i32, i32, i32
  }
  func.func @transform_4(%arg0: i32, %arg1: i32) -> (i32, i32) {
    %c0_i32 = arith.constant 0 : i32
    %c0_i32_0 = arith.constant 0 : i32
    %c0_i32_1 = arith.constant 0 : i32
    return %c0_i32, %c0_i32_0 : i32, i32
  }
  func.func @transform_5(%arg0: i32, %arg1: i32) -> (i32, i32, i32, i32) {
    %c0_i32 = arith.constant 0 : i32
    %c0_i32_0 = arith.constant 0 : i32
    %c0_i32_1 = arith.constant 0 : i32
    return %arg0, %arg1, %c0_i32, %c0_i32_0 : i32, i32, i32, i32
  }
  func.func @transform_6(%arg0: i32, %arg1: i32) -> (i32, i32, i32, i32) {
    %c0_i32 = arith.constant 0 : i32
    %c0_i32_0 = arith.constant 0 : i32
    %c0_i32_1 = arith.constant 0 : i32
    return %arg0, %arg1, %c0_i32, %c0_i32_0 : i32, i32, i32, i32
  }
}

module attributes {stable_mosaic.version = 11 : i64} {
  func.func @kernel(%arg0: i32, %arg1: i32, %arg2: memref<1x16x16x64xbf16, #tpu.memory_space<vmem>>, %arg3: memref<1x1x64xf32, #tpu.memory_space<vmem>>, %arg4: memref<1x1x64xf32, #tpu.memory_space<vmem>>, %arg5: memref<9x64x64xbf16, #tpu.memory_space<vmem>>, %arg6: memref<1x64xf32, #tpu.memory_space<vmem>>, %arg7: memref<1x16x16x32xf32, #tpu.memory_space<vmem>>, %arg8: memref<32x64xbf16, #tpu.memory_space<vmem>>, %arg9: memref<1x64xf32, #tpu.memory_space<vmem>>, %arg10: memref<1x16x16x64xf32, #tpu.memory_space<vmem>>, %arg11: memref<18x18x64xf32, #tpu.memory_space<vmem>>) attributes {dimension_semantics = [#tpu.dimension_semantics<parallel>, #tpu.dimension_semantics<parallel>], iteration_bounds = array<i64: 2, 1>, scalar_prefetch = 0 : i64, scratch_operands = 1 : i64, tpu.core_type = #tpu.core_type<tc>, window_params = [{transform_indices = @transform_0, window_bounds = array<i64: 1, 16, 16, 64>}, {transform_indices = @transform_1, window_bounds = array<i64: 1, 1, 64>}, {transform_indices = @transform_2, window_bounds = array<i64: 1, 1, 64>}, {pipeline_mode = #tpu.pipeline_mode<synchronous>, transform_indices = @transform_3, window_bounds = array<i64: 9, 64, 64>}, {pipeline_mode = #tpu.pipeline_mode<synchronous>, transform_indices = @transform_4, window_bounds = array<i64: 1, 64>}, {transform_indices = @transform_5, window_bounds = array<i64: 1, 16, 16, 32>}, {pipeline_mode = #tpu.pipeline_mode<synchronous>, transform_indices = @transform_6, window_bounds = array<i64: 32, 64>}, {pipeline_mode = #tpu.pipeline_mode<synchronous>, transform_indices = @transform_7, window_bounds = array<i64: 1, 64>}, {transform_indices = @transform_8, window_bounds = array<i64: 1, 16, 16, 64>}]} {
    %c0 = arith.constant 0 : index
    %c0_0 = arith.constant 0 : index
    %c0_1 = arith.constant 0 : index
    %0 = vector.load %arg3[%c0, %c0_0, %c0_1] : memref<1x1x64xf32, #tpu.memory_space<vmem>>, vector<1x1x64xf32>
    %1 = vector.shape_cast %0 : vector<1x1x64xf32> to vector<1x64xf32>
    %c0_2 = arith.constant 0 : index
    %c0_3 = arith.constant 0 : index
    %c0_4 = arith.constant 0 : index
    %2 = vector.load %arg4[%c0_2, %c0_3, %c0_4] : memref<1x1x64xf32, #tpu.memory_space<vmem>>, vector<1x1x64xf32>
    %3 = vector.shape_cast %2 : vector<1x1x64xf32> to vector<1x64xf32>
    %cst = arith.constant 0.000000e+00 : f32
    %4 = vector.broadcast %cst : f32 to vector<18x1x64xf32>
    %c0_5 = arith.constant 0 : index
    %c0_6 = arith.constant 0 : index
    %c0_7 = arith.constant 0 : index
    %5 = vector.load %arg11[%c0_5, %c0_6, %c0_7] : memref<18x18x64xf32, #tpu.memory_space<vmem>>, vector<18x1x64xf32>
    tpu.vector_store %arg11[%c0_5, %c0_6, %c0_7], %4 {strides = array<i32>} : memref<18x18x64xf32, #tpu.memory_space<vmem>>, vector<18x1x64xf32>,
    %c0_8 = arith.constant 0 : index
    %c17 = arith.constant 17 : index
    %c0_9 = arith.constant 0 : index
    %6 = vector.load %arg11[%c0_8, %c17, %c0_9] : memref<18x18x64xf32, #tpu.memory_space<vmem>>, vector<18x1x64xf32>
    tpu.vector_store %arg11[%c0_8, %c17, %c0_9], %4 {strides = array<i32>} : memref<18x18x64xf32, #tpu.memory_space<vmem>>, vector<18x1x64xf32>,
    %c0_10 = arith.constant 0 : index
    %c0_11 = arith.constant 0 : index
    %c0_12 = arith.constant 0 : index
    %c0_13 = arith.constant 0 : index
    %7 = vector.load %arg2[%c0_10, %c0_11, %c0_12, %c0_13] : memref<1x16x16x64xbf16, #tpu.memory_space<vmem>>, vector<1x16x16x64xbf16>
    %8 = vector.shape_cast %7 : vector<1x16x16x64xbf16> to vector<16x16x64xbf16>
    %9 = arith.extf %8 : vector<16x16x64xbf16> to vector<16x16x64xf32>
    %10 = vector.shape_cast %1 : vector<1x64xf32> to vector<1x1x64xf32>
    %11 = vector.broadcast %10 : vector<1x1x64xf32> to vector<16x16x64xf32>
    %12 = arith.mulf %9, %11 : vector<16x16x64xf32>
    %13 = vector.shape_cast %3 : vector<1x64xf32> to vector<1x1x64xf32>
    %14 = vector.broadcast %13 : vector<1x1x64xf32> to vector<16x16x64xf32>
    %15 = arith.addf %12, %14 : vector<16x16x64xf32>
    %16 = arith.negf %15 : vector<16x16x64xf32>
    %17 = math.exp %16 : vector<16x16x64xf32>
    %cst_14 = arith.constant 1.000000e+00 : f32
    %18 = vector.broadcast %cst_14 : f32 to vector<16x16x64xf32>
    %19 = arith.addf %18, %17 : vector<16x16x64xf32>
    %20 = arith.divf %18, %19 : vector<16x16x64xf32>
    %21 = arith.mulf %15, %20 : vector<16x16x64xf32>
    %c1 = arith.constant 1 : index
    %c1_15 = arith.constant 1 : index
    %c0_16 = arith.constant 0 : index
    %22 = vector.load %arg11[%c1, %c1_15, %c0_16] : memref<18x18x64xf32, #tpu.memory_space<vmem>>, vector<16x16x64xf32>
    tpu.vector_store %arg11[%c1, %c1_15, %c0_16], %21 {strides = array<i32>} : memref<18x18x64xf32, #tpu.memory_space<vmem>>, vector<16x16x64xf32>,
    %cst_17 = arith.constant 0.000000e+00 : f32
    %23 = vector.broadcast %cst_17 : f32 to vector<16x64xf32>
    %c0_18 = arith.constant 0 : index
    %c1_19 = arith.constant 1 : index
    %c0_20 = arith.constant 0 : index
    %24 = vector.load %arg11[%c0_18, %c1_19, %c0_20] : memref<18x18x64xf32, #tpu.memory_space<vmem>>, vector<1x16x64xf32>
    %25 = vector.shape_cast %24 : vector<1x16x64xf32> to vector<16x64xf32>
    %26 = vector.shape_cast %23 : vector<16x64xf32> to vector<1x16x64xf32>
    tpu.vector_store %arg11[%c0_18, %c1_19, %c0_20], %26 {strides = array<i32>} : memref<18x18x64xf32, #tpu.memory_space<vmem>>, vector<1x16x64xf32>,
    %c17_21 = arith.constant 17 : index
    %c1_22 = arith.constant 1 : index
    %c0_23 = arith.constant 0 : index
    %27 = vector.load %arg11[%c17_21, %c1_22, %c0_23] : memref<18x18x64xf32, #tpu.memory_space<vmem>>, vector<1x16x64xf32>
    %28 = vector.shape_cast %27 : vector<1x16x64xf32> to vector<16x64xf32>
    %29 = vector.shape_cast %23 : vector<16x64xf32> to vector<1x16x64xf32>
    tpu.vector_store %arg11[%c17_21, %c1_22, %c0_23], %29 {strides = array<i32>} : memref<18x18x64xf32, #tpu.memory_space<vmem>>, vector<1x16x64xf32>,
    %cst_24 = arith.constant 0.000000e+00 : f32
    %30 = vector.broadcast %cst_24 : f32 to vector<256x64xf32>
    %c0_25 = arith.constant 0 : index
    %c0_26 = arith.constant 0 : index
    %c0_27 = arith.constant 0 : index
    %31 = vector.load %arg11[%c0_25, %c0_26, %c0_27] : memref<18x18x64xf32, #tpu.memory_space<vmem>>, vector<16x16x64xf32>
    %32 = vector.shape_cast %31 : vector<16x16x64xf32> to vector<256x64xf32>
    %33 = arith.truncf %32 : vector<256x64xf32> to vector<256x64xbf16>
    %c0_28 = arith.constant 0 : index
    %c0_29 = arith.constant 0 : index
    %c0_30 = arith.constant 0 : index
    %34 = vector.load %arg5[%c0_28, %c0_29, %c0_30] : memref<9x64x64xbf16, #tpu.memory_space<vmem>>, vector<1x64x64xbf16>
    %35 = vector.shape_cast %34 : vector<1x64x64xbf16> to vector<64x64xbf16>
    %cst_31 = arith.constant dense<0.000000e+00> : vector<256x64xf32>
    %36 = tpu.matmul %33, %35, %cst_31 {dimension_numbers = #tpu.dot_dimension_numbers<[1], [0], [0], [1], [0, 0, 1, 1], [], []>} : vector<256x64xbf16>, vector<64x64xbf16>, vector<256x64xf32> -> vector<256x64xf32>
    %37 = arith.addf %30, %36 : vector<256x64xf32>
    %c0_32 = arith.constant 0 : index
    %c1_33 = arith.constant 1 : index
    %c0_34 = arith.constant 0 : index
    %38 = vector.load %arg11[%c0_32, %c1_33, %c0_34] : memref<18x18x64xf32, #tpu.memory_space<vmem>>, vector<16x16x64xf32>
    %39 = vector.shape_cast %38 : vector<16x16x64xf32> to vector<256x64xf32>
    %40 = arith.truncf %39 : vector<256x64xf32> to vector<256x64xbf16>
    %c1_35 = arith.constant 1 : index
    %c0_36 = arith.constant 0 : index
    %c0_37 = arith.constant 0 : index
    %41 = vector.load %arg5[%c1_35, %c0_36, %c0_37] : memref<9x64x64xbf16, #tpu.memory_space<vmem>>, vector<1x64x64xbf16>
    %42 = vector.shape_cast %41 : vector<1x64x64xbf16> to vector<64x64xbf16>
    %cst_38 = arith.constant dense<0.000000e+00> : vector<256x64xf32>
    %43 = tpu.matmul %40, %42, %cst_38 {dimension_numbers = #tpu.dot_dimension_numbers<[1], [0], [0], [1], [0, 0, 1, 1], [], []>} : vector<256x64xbf16>, vector<64x64xbf16>, vector<256x64xf32> -> vector<256x64xf32>
    %44 = arith.addf %37, %43 : vector<256x64xf32>
    %c0_39 = arith.constant 0 : index
    %c2 = arith.constant 2 : index
    %c0_40 = arith.constant 0 : index
    %45 = vector.load %arg11[%c0_39, %c2, %c0_40] : memref<18x18x64xf32, #tpu.memory_space<vmem>>, vector<16x16x64xf32>
    %46 = vector.shape_cast %45 : vector<16x16x64xf32> to vector<256x64xf32>
    %47 = arith.truncf %46 : vector<256x64xf32> to vector<256x64xbf16>
    %c2_41 = arith.constant 2 : index
    %c0_42 = arith.constant 0 : index
    %c0_43 = arith.constant 0 : index
    %48 = vector.load %arg5[%c2_41, %c0_42, %c0_43] : memref<9x64x64xbf16, #tpu.memory_space<vmem>>, vector<1x64x64xbf16>
    %49 = vector.shape_cast %48 : vector<1x64x64xbf16> to vector<64x64xbf16>
    %cst_44 = arith.constant dense<0.000000e+00> : vector<256x64xf32>
    %50 = tpu.matmul %47, %49, %cst_44 {dimension_numbers = #tpu.dot_dimension_numbers<[1], [0], [0], [1], [0, 0, 1, 1], [], []>} : vector<256x64xbf16>, vector<64x64xbf16>, vector<256x64xf32> -> vector<256x64xf32>
    %51 = arith.addf %44, %50 : vector<256x64xf32>
    %c1_45 = arith.constant 1 : index
    %c0_46 = arith.constant 0 : index
    %c0_47 = arith.constant 0 : index
    %52 = vector.load %arg11[%c1_45, %c0_46, %c0_47] : memref<18x18x64xf32, #tpu.memory_space<vmem>>, vector<16x16x64xf32>
    %53 = vector.shape_cast %52 : vector<16x16x64xf32> to vector<256x64xf32>
    %54 = arith.truncf %53 : vector<256x64xf32> to vector<256x64xbf16>
    %c3 = arith.constant 3 : index
    %c0_48 = arith.constant 0 : index
    %c0_49 = arith.constant 0 : index
    %55 = vector.load %arg5[%c3, %c0_48, %c0_49] : memref<9x64x64xbf16, #tpu.memory_space<vmem>>, vector<1x64x64xbf16>
    %56 = vector.shape_cast %55 : vector<1x64x64xbf16> to vector<64x64xbf16>
    %cst_50 = arith.constant dense<0.000000e+00> : vector<256x64xf32>
    %57 = tpu.matmul %54, %56, %cst_50 {dimension_numbers = #tpu.dot_dimension_numbers<[1], [0], [0], [1], [0, 0, 1, 1], [], []>} : vector<256x64xbf16>, vector<64x64xbf16>, vector<256x64xf32> -> vector<256x64xf32>
    %58 = arith.addf %51, %57 : vector<256x64xf32>
    %c1_51 = arith.constant 1 : index
    %c1_52 = arith.constant 1 : index
    %c0_53 = arith.constant 0 : index
    %59 = vector.load %arg11[%c1_51, %c1_52, %c0_53] : memref<18x18x64xf32, #tpu.memory_space<vmem>>, vector<16x16x64xf32>
    %60 = vector.shape_cast %59 : vector<16x16x64xf32> to vector<256x64xf32>
    %61 = arith.truncf %60 : vector<256x64xf32> to vector<256x64xbf16>
    %c4 = arith.constant 4 : index
    %c0_54 = arith.constant 0 : index
    %c0_55 = arith.constant 0 : index
    %62 = vector.load %arg5[%c4, %c0_54, %c0_55] : memref<9x64x64xbf16, #tpu.memory_space<vmem>>, vector<1x64x64xbf16>
    %63 = vector.shape_cast %62 : vector<1x64x64xbf16> to vector<64x64xbf16>
    %cst_56 = arith.constant dense<0.000000e+00> : vector<256x64xf32>
    %64 = tpu.matmul %61, %63, %cst_56 {dimension_numbers = #tpu.dot_dimension_numbers<[1], [0], [0], [1], [0, 0, 1, 1], [], []>} : vector<256x64xbf16>, vector<64x64xbf16>, vector<256x64xf32> -> vector<256x64xf32>
    %65 = arith.addf %58, %64 : vector<256x64xf32>
    %c1_57 = arith.constant 1 : index
    %c2_58 = arith.constant 2 : index
    %c0_59 = arith.constant 0 : index
    %66 = vector.load %arg11[%c1_57, %c2_58, %c0_59] : memref<18x18x64xf32, #tpu.memory_space<vmem>>, vector<16x16x64xf32>
    %67 = vector.shape_cast %66 : vector<16x16x64xf32> to vector<256x64xf32>
    %68 = arith.truncf %67 : vector<256x64xf32> to vector<256x64xbf16>
    %c5 = arith.constant 5 : index
    %c0_60 = arith.constant 0 : index
    %c0_61 = arith.constant 0 : index
    %69 = vector.load %arg5[%c5, %c0_60, %c0_61] : memref<9x64x64xbf16, #tpu.memory_space<vmem>>, vector<1x64x64xbf16>
    %70 = vector.shape_cast %69 : vector<1x64x64xbf16> to vector<64x64xbf16>
    %cst_62 = arith.constant dense<0.000000e+00> : vector<256x64xf32>
    %71 = tpu.matmul %68, %70, %cst_62 {dimension_numbers = #tpu.dot_dimension_numbers<[1], [0], [0], [1], [0, 0, 1, 1], [], []>} : vector<256x64xbf16>, vector<64x64xbf16>, vector<256x64xf32> -> vector<256x64xf32>
    %72 = arith.addf %65, %71 : vector<256x64xf32>
    %c2_63 = arith.constant 2 : index
    %c0_64 = arith.constant 0 : index
    %c0_65 = arith.constant 0 : index
    %73 = vector.load %arg11[%c2_63, %c0_64, %c0_65] : memref<18x18x64xf32, #tpu.memory_space<vmem>>, vector<16x16x64xf32>
    %74 = vector.shape_cast %73 : vector<16x16x64xf32> to vector<256x64xf32>
    %75 = arith.truncf %74 : vector<256x64xf32> to vector<256x64xbf16>
    %c6 = arith.constant 6 : index
    %c0_66 = arith.constant 0 : index
    %c0_67 = arith.constant 0 : index
    %76 = vector.load %arg5[%c6, %c0_66, %c0_67] : memref<9x64x64xbf16, #tpu.memory_space<vmem>>, vector<1x64x64xbf16>
    %77 = vector.shape_cast %76 : vector<1x64x64xbf16> to vector<64x64xbf16>
    %cst_68 = arith.constant dense<0.000000e+00> : vector<256x64xf32>
    %78 = tpu.matmul %75, %77, %cst_68 {dimension_numbers = #tpu.dot_dimension_numbers<[1], [0], [0], [1], [0, 0, 1, 1], [], []>} : vector<256x64xbf16>, vector<64x64xbf16>, vector<256x64xf32> -> vector<256x64xf32>
    %79 = arith.addf %72, %78 : vector<256x64xf32>
    %c2_69 = arith.constant 2 : index
    %c1_70 = arith.constant 1 : index
    %c0_71 = arith.constant 0 : index
    %80 = vector.load %arg11[%c2_69, %c1_70, %c0_71] : memref<18x18x64xf32, #tpu.memory_space<vmem>>, vector<16x16x64xf32>
    %81 = vector.shape_cast %80 : vector<16x16x64xf32> to vector<256x64xf32>
    %82 = arith.truncf %81 : vector<256x64xf32> to vector<256x64xbf16>
    %c7 = arith.constant 7 : index
    %c0_72 = arith.constant 0 : index
    %c0_73 = arith.constant 0 : index
    %83 = vector.load %arg5[%c7, %c0_72, %c0_73] : memref<9x64x64xbf16, #tpu.memory_space<vmem>>, vector<1x64x64xbf16>
    %84 = vector.shape_cast %83 : vector<1x64x64xbf16> to vector<64x64xbf16>
    %cst_74 = arith.constant dense<0.000000e+00> : vector<256x64xf32>
    %85 = tpu.matmul %82, %84, %cst_74 {dimension_numbers = #tpu.dot_dimension_numbers<[1], [0], [0], [1], [0, 0, 1, 1], [], []>} : vector<256x64xbf16>, vector<64x64xbf16>, vector<256x64xf32> -> vector<256x64xf32>
    %86 = arith.addf %79, %85 : vector<256x64xf32>
    %c2_75 = arith.constant 2 : index
    %c2_76 = arith.constant 2 : index
    %c0_77 = arith.constant 0 : index
    %87 = vector.load %arg11[%c2_75, %c2_76, %c0_77] : memref<18x18x64xf32, #tpu.memory_space<vmem>>, vector<16x16x64xf32>
    %88 = vector.shape_cast %87 : vector<16x16x64xf32> to vector<256x64xf32>
    %89 = arith.truncf %88 : vector<256x64xf32> to vector<256x64xbf16>
    %c8 = arith.constant 8 : index
    %c0_78 = arith.constant 0 : index
    %c0_79 = arith.constant 0 : index
    %90 = vector.load %arg5[%c8, %c0_78, %c0_79] : memref<9x64x64xbf16, #tpu.memory_space<vmem>>, vector<1x64x64xbf16>
    %91 = vector.shape_cast %90 : vector<1x64x64xbf16> to vector<64x64xbf16>
    %cst_80 = arith.constant dense<0.000000e+00> : vector<256x64xf32>
    %92 = tpu.matmul %89, %91, %cst_80 {dimension_numbers = #tpu.dot_dimension_numbers<[1], [0], [0], [1], [0, 0, 1, 1], [], []>} : vector<256x64xbf16>, vector<64x64xbf16>, vector<256x64xf32> -> vector<256x64xf32>
    %93 = arith.addf %86, %92 : vector<256x64xf32>
    %c0_81 = arith.constant 0 : index
    %c0_82 = arith.constant 0 : index
    %94 = vector.load %arg6[%c0_81, %c0_82] : memref<1x64xf32, #tpu.memory_space<vmem>>, vector<1x64xf32>
    %95 = vector.broadcast %94 : vector<1x64xf32> to vector<256x64xf32>
    %96 = arith.addf %93, %95 : vector<256x64xf32>
    %c0_83 = arith.constant 0 : index
    %c0_84 = arith.constant 0 : index
    %c0_85 = arith.constant 0 : index
    %c0_86 = arith.constant 0 : index
    %97 = vector.load %arg7[%c0_83, %c0_84, %c0_85, %c0_86] : memref<1x16x16x32xf32, #tpu.memory_space<vmem>>, vector<1x16x16x32xf32>
    %98 = vector.shape_cast %97 : vector<1x16x16x32xf32> to vector<16x16x32xf32>
    %99 = vector.shape_cast %98 : vector<16x16x32xf32> to vector<256x32xf32>
    %100 = arith.truncf %99 : vector<256x32xf32> to vector<256x32xbf16>
    %c0_87 = arith.constant 0 : index
    %c0_88 = arith.constant 0 : index
    %101 = vector.load %arg8[%c0_87, %c0_88] : memref<32x64xbf16, #tpu.memory_space<vmem>>, vector<32x64xbf16>
    %cst_89 = arith.constant dense<0.000000e+00> : vector<256x64xf32>
    %102 = tpu.matmul %100, %101, %cst_89 {dimension_numbers = #tpu.dot_dimension_numbers<[1], [0], [0], [1], [0, 0, 1, 1], [], []>} : vector<256x32xbf16>, vector<32x64xbf16>, vector<256x64xf32> -> vector<256x64xf32>
    %c0_90 = arith.constant 0 : index
    %c0_91 = arith.constant 0 : index
    %103 = vector.load %arg9[%c0_90, %c0_91] : memref<1x64xf32, #tpu.memory_space<vmem>>, vector<1x64xf32>
    %104 = vector.broadcast %103 : vector<1x64xf32> to vector<256x64xf32>
    %105 = arith.addf %102, %104 : vector<256x64xf32>
    %106 = arith.addf %96, %105 : vector<256x64xf32>
    %107 = vector.shape_cast %106 : vector<256x64xf32> to vector<16x16x64xf32>
    %c0_92 = arith.constant 0 : index
    %c0_93 = arith.constant 0 : index
    %c0_94 = arith.constant 0 : index
    %c0_95 = arith.constant 0 : index
    %108 = vector.load %arg10[%c0_92, %c0_93, %c0_94, %c0_95] : memref<1x16x16x64xf32, #tpu.memory_space<vmem>>, vector<1x16x16x64xf32>
    %109 = vector.shape_cast %108 : vector<1x16x16x64xf32> to vector<16x16x64xf32>
    %110 = vector.shape_cast %107 : vector<16x16x64xf32> to vector<1x16x16x64xf32>
    tpu.vector_store %arg10[%c0_92, %c0_93, %c0_94, %c0_95], %110 {strides = array<i32>} : memref<1x16x16x64xf32, #tpu.memory_space<vmem>>, vector<1x16x16x64xf32>,
    return
  }
  func.func @transform_0(%arg0: i32, %arg1: i32) -> (i32, i32, i32, i32) {
    %c0_i32 = arith.constant 0 : i32
    %c0_i32_0 = arith.constant 0 : i32
    %c0_i32_1 = arith.constant 0 : i32
    return %arg0, %arg1, %c0_i32, %c0_i32_0 : i32, i32, i32, i32
  }
  func.func @transform_1(%arg0: i32, %arg1: i32) -> (i32, i32, i32) {
    %c0_i32 = arith.constant 0 : i32
    %c0_i32_0 = arith.constant 0 : i32
    %c0_i32_1 = arith.constant 0 : i32
    return %arg0, %c0_i32, %c0_i32_0 : i32, i32, i32
  }
  func.func @transform_2(%arg0: i32, %arg1: i32) -> (i32, i32, i32) {
    %c0_i32 = arith.constant 0 : i32
    %c0_i32_0 = arith.constant 0 : i32
    %c0_i32_1 = arith.constant 0 : i32
    return %arg0, %c0_i32, %c0_i32_0 : i32, i32, i32
  }
  func.func @transform_3(%arg0: i32, %arg1: i32) -> (i32, i32, i32) {
    %c0_i32 = arith.constant 0 : i32
    %c0_i32_0 = arith.constant 0 : i32
    %c0_i32_1 = arith.constant 0 : i32
    %c0_i32_2 = arith.constant 0 : i32
    return %c0_i32, %c0_i32_0, %c0_i32_1 : i32, i32, i32
  }
  func.func @transform_4(%arg0: i32, %arg1: i32) -> (i32, i32) {
    %c0_i32 = arith.constant 0 : i32
    %c0_i32_0 = arith.constant 0 : i32
    %c0_i32_1 = arith.constant 0 : i32
    return %c0_i32, %c0_i32_0 : i32, i32
  }
  func.func @transform_5(%arg0: i32, %arg1: i32) -> (i32, i32, i32, i32) {
    %c0_i32 = arith.constant 0 : i32
    %c0_i32_0 = arith.constant 0 : i32
    %c0_i32_1 = arith.constant 0 : i32
    return %arg0, %arg1, %c0_i32, %c0_i32_0 : i32, i32, i32, i32
  }
  func.func @transform_6(%arg0: i32, %arg1: i32) -> (i32, i32) {
    %c0_i32 = arith.constant 0 : i32
    %c0_i32_0 = arith.constant 0 : i32
    %c0_i32_1 = arith.constant 0 : i32
    return %c0_i32, %c0_i32_0 : i32, i32
  }
  func.func @transform_7(%arg0: i32, %arg1: i32) -> (i32, i32) {
    %c0_i32 = arith.constant 0 : i32
    %c0_i32_0 = arith.constant 0 : i32
    %c0_i32_1 = arith.constant 0 : i32
    return %c0_i32, %c0_i32_0 : i32, i32
  }
  func.func @transform_8(%arg0: i32, %arg1: i32) -> (i32, i32, i32, i32) {
    %c0_i32 = arith.constant 0 : i32
    %c0_i32_0 = arith.constant 0 : i32
    %c0_i32_1 = arith.constant 0 : i32
    return %arg0, %arg1, %c0_i32, %c0_i32_0 : i32, i32, i32, i32
  }
}

</mosaic_0001>

<llo_original>
// kernel: squeeze.2
$region0: #{squeeze.2}
  %s0 = inlined_call_operand.vmem [shape: f32[2,64], index: 0, kind: input, shape index: {}]
  %s1 = inlined_call_operand.vmem [shape: f32[2,32,2], index: 1, kind: output, shape index: {}]
  $region1: #{squeeze.2} parent=0
    #allocation0 [shape = 'u8[4096]{0}', space=vmem, size = 0x1000, scoped, tag = 'scoped mem for input reshape']
    %s3 = sshllo.u32 0, 2
    %v4 = vld [vmem:[%s0] sm:%s3]
    %5 = vst [vmem:[#allocation0] sm:%s3] %v4
    %v6 = vld [vmem:[#allocation0] sm:$0x3]
    %vm7 = vcmask 15360
    %8 = vst.msk [vmem:[%s1] sm:$0x1] %vm7, %v6
    %s9 = scalar_lea.vmem %s1, 31
    %10 = vst.msk [vmem:[%s9] sm:$0x2] %vm7, %v6
    %v11 = vld [vmem:[#allocation0] sm:$0x3]
    %12 = vrot.lane.b32.xlu0 %v11, 126
    %v13 = vpop.permute.xlu0 %12
    %vm14 = vcmask 15360
    %s15 = scalar_lea.vmem %s1, 1
    %16 = vst.msk [vmem:[%s15] sm:$0x1] %vm14, %v13
    %s17 = scalar_lea.vmem %s1, 32
    %18 = vst.msk [vmem:[%s17] sm:$0x2] %vm14, %v13
    %v19 = vld [vmem:[#allocation0] sm:$0x3]
    %20 = vrot.lane.b32.xlu0 %v19, 124
    %v21 = vpop.permute.xlu0 %20
    %vm22 = vcmask 15360
    %s23 = scalar_lea.vmem %s1, 2
    %24 = vst.msk [vmem:[%s23] sm:$0x1] %vm22, %v21
    %s25 = scalar_lea.vmem %s1, 33
    %26 = vst.msk [vmem:[%s25] sm:$0x2] %vm22, %v21
    %v27 = vld [vmem:[#allocation0] sm:$0x3]
    %28 = vrot.lane.b32.xlu0 %v27, 122
    %v29 = vpop.permute.xlu0 %28
    %vm30 = vcmask 15360
    %s31 = scalar_lea.vmem %s1, 3
    %32 = vst.msk [vmem:[%s31] sm:$0x1] %vm30, %v29
    %s33 = scalar_lea.vmem %s1, 34
    %34 = vst.msk [vmem:[%s33] sm:$0x2] %vm30, %v29
    %v35 = vld [vmem:[#allocation0] sm:$0x3]
    %36 = vrot.lane.b32.xlu0 %v35, 120
    %v37 = vpop.permute.xlu0 %36
    %vm38 = vcmask 15360
    %s39 = scalar_lea.vmem %s1, 4
    %40 = vst.msk [vmem:[%s39] sm:$0x1] %vm38, %v37
    %s41 = scalar_lea.vmem %s1, 35
    %42 = vst.msk [vmem:[%s41] sm:$0x2] %vm38, %v37
    %v43 = vld [vmem:[#allocation0] sm:$0x3]
    %44 = vrot.lane.b32.xlu0 %v43, 118
    %v45 = vpop.permute.xlu0 %44
    %vm46 = vcmask 15360
    %s47 = scalar_lea.vmem %s1, 5
    %48 = vst.msk [vmem:[%s47] sm:$0x1] %vm46, %v45
    %s49 = scalar_lea.vmem %s1, 36
    %50 = vst.msk [vmem:[%s49] sm:$0x2] %vm46, %v45
    %v51 = vld [vmem:[#allocation0] sm:$0x3]
    %52 = vrot.lane.b32.xlu0 %v51, 116
    %v53 = vpop.permute.xlu0 %52
    %vm54 = vcmask 15360
    %s55 = scalar_lea.vmem %s1, 6
    %56 = vst.msk [vmem:[%s55] sm:$0x1] %vm54, %v53
    %s57 = scalar_lea.vmem %s1, 37
    %58 = vst.msk [vmem:[%s57] sm:$0x2] %vm54, %v53
    %v59 = vld [vmem:[#allocation0] sm:$0x3]
    %60 = vrot.lane.b32.xlu0 %v59, 114
    %v61 = vpop.permute.xlu0 %60
    %vm62 = vcmask 15360
    %s63 = scalar_lea.vmem %s1, 7
    %64 = vst.msk [vmem:[%s63] sm:$0x1] %vm62, %v61
    %s65 = scalar_lea.vmem %s1, 38
    %66 = vst.msk [vmem:[%s65] sm:$0x2] %vm62, %v61
    %v67 = vld [vmem:[#allocation0] sm:$0x3]
    %68 = vrot.lane.b32.xlu0 %v67, 112
    %v69 = vpop.permute.xlu0 %68
    %vm70 = vcmask 15360
    %s71 = scalar_lea.vmem %s1, 8
    %72 = vst.msk [vmem:[%s71] sm:$0x1] %vm70, %v69
    %s73 = scalar_lea.vmem %s1, 39
    %74 = vst.msk [vmem:[%s73] sm:$0x2] %vm70, %v69
    %v75 = vld [vmem:[#allocation0] sm:$0x3]
    %76 = vrot.lane.b32.xlu0 %v75, 110
    %v77 = vpop.permute.xlu0 %76
    %vm78 = vcmask 15360
    %s79 = scalar_lea.vmem %s1, 9
    %80 = vst.msk [vmem:[%s79] sm:$0x1] %vm78, %v77
    %s81 = scalar_lea.vmem %s1, 40
    %82 = vst.msk [vmem:[%s81] sm:$0x2] %vm78, %v77
    %v83 = vld [vmem:[#allocation0] sm:$0x3]
    %84 = vrot.lane.b32.xlu0 %v83, 108
    %v85 = vpop.permute.xlu0 %84
    %vm86 = vcmask 15360
    %s87 = scalar_lea.vmem %s1, 10
    %88 = vst.msk [vmem:[%s87] sm:$0x1] %vm86, %v85
    %s89 = scalar_lea.vmem %s1, 41
    %90 = vst.msk [vmem:[%s89] sm:$0x2] %vm86, %v85
    %v91 = vld [vmem:[#allocation0] sm:$0x3]
    %92 = vrot.lane.b32.xlu0 %v91, 106
    %v93 = vpop.permute.xlu0 %92
    %vm94 = vcmask 15360
    %s95 = scalar_lea.vmem %s1, 11
    %96 = vst.msk [vmem:[%s95] sm:$0x1] %vm94, %v93
    %s97 = scalar_lea.vmem %s1, 42
    %98 = vst.msk [vmem:[%s97] sm:$0x2] %vm94, %v93
    %v99 = vld [vmem:[#allocation0] sm:$0x3]
    %100 = vrot.lane.b32.xlu0 %v99, 104
    %v101 = vpop.permute.xlu0 %100
    %vm102 = vcmask 15360
    %s103 = scalar_lea.vmem %s1, 12
    %104 = vst.msk [vmem:[%s103] sm:$0x1] %vm102, %v101
    %s105 = scalar_lea.vmem %s1, 43
    %106 = vst.msk [vmem:[%s105] sm:$0x2] %vm102, %v101
    %v107 = vld [vmem:[#allocation0] sm:$0x3]
    %108 = vrot.lane.b32.xlu0 %v107, 102
    %v109 = vpop.permute.xlu0 %108
    %vm110 = vcmask 15360
    %s111 = scalar_lea.vmem %s1, 13
    %112 = vst.msk [vmem:[%s111] sm:$0x1] %vm110, %v109
    %s113 = scalar_lea.vmem %s1, 44
    %114 = vst.msk [vmem:[%s113] sm:$0x2] %vm110, %v109
    %v115 = vld [vmem:[#allocation0] sm:$0x3]
    %116 = vrot.lane.b32.xlu0 %v115, 100
    %v117 = vpop.permute.xlu0 %116
    %vm118 = vcmask 15360
    %s119 = scalar_lea.vmem %s1, 14
    %120 = vst.msk [vmem:[%s119] sm:$0x1] %vm118, %v117
    %s121 = scalar_lea.vmem %s1, 45
    %122 = vst.msk [vmem:[%s121] sm:$0x2] %vm118, %v117
    %v123 = vld [vmem:[#allocation0] sm:$0x3]
    %124 = vrot.lane.b32.xlu0 %v123, 98
    %v125 = vpop.permute.xlu0 %124
    %vm126 = vcmask 15360
    %s127 = scalar_lea.vmem %s1, 15
    %128 = vst.msk [vmem:[%s127] sm:$0x1] %vm126, %v125
    %s129 = scalar_lea.vmem %s1, 46
    %130 = vst.msk [vmem:[%s129] sm:$0x2] %vm126, %v125
    %v131 = vld [vmem:[#allocation0] sm:$0x3]
    %132 = vrot.lane.b32.xlu0 %v131, 96
    %v133 = vpop.permute.xlu0 %132
    %vm134 = vcmask 15360
    %s135 = scalar_lea.vmem %s1, 16
    %136 = vst.msk [vmem:[%s135] sm:$0x1] %vm134, %v133
    %s137 = scalar_lea.vmem %s1, 47
    %138 = vst.msk [vmem:[%s137] sm:$0x2] %vm134, %v133
    %v139 = vld [vmem:[#allocation0] sm:$0x3]
    %140 = vrot.lane.b32.xlu0 %v139, 94
    %v141 = vpop.permute.xlu0 %140
    %vm142 = vcmask 15360
    %s143 = scalar_lea.vmem %s1, 17
    %144 = vst.msk [vmem:[%s143] sm:$0x1] %vm142, %v141
    %s145 = scalar_lea.vmem %s1, 48
    %146 = vst.msk [vmem:[%s145] sm:$0x2] %vm142, %v141
    %v147 = vld [vmem:[#allocation0] sm:$0x3]
    %148 = vrot.lane.b32.xlu0 %v147, 92
    %v149 = vpop.permute.xlu0 %148
    %vm150 = vcmask 15360
    %s151 = scalar_lea.vmem %s1, 18
    %152 = vst.msk [vmem:[%s151] sm:$0x1] %vm150, %v149
    %s153 = scalar_lea.vmem %s1, 49
    %154 = vst.msk [vmem:[%s153] sm:$0x2] %vm150, %v149
    %v155 = vld [vmem:[#allocation0] sm:$0x3]
    %156 = vrot.lane.b32.xlu0 %v155, 90
    %v157 = vpop.permute.xlu0 %156
    %vm158 = vcmask 15360
    %s159 = scalar_lea.vmem %s1, 19
    %160 = vst.msk [vmem:[%s159] sm:$0x1] %vm158, %v157
    %s161 = scalar_lea.vmem %s1, 50
    %162 = vst.msk [vmem:[%s161] sm:$0x2] %vm158, %v157
    %v163 = vld [vmem:[#allocation0] sm:$0x3]
    %164 = vrot.lane.b32.xlu0 %v163, 88
    %v165 = vpop.permute.xlu0 %164
    %vm166 = vcmask 15360
    %s167 = scalar_lea.vmem %s1, 20
    %168 = vst.msk [vmem:[%s167] sm:$0x1] %vm166, %v165
    %s169 = scalar_lea.vmem %s1, 51
    %170 = vst.msk [vmem:[%s169] sm:$0x2] %vm166, %v165
    %v171 = vld [vmem:[#allocation0] sm:$0x3]
    %172 = vrot.lane.b32.xlu0 %v171, 86
    %v173 = vpop.permute.xlu0 %172
    %vm174 = vcmask 15360
    %s175 = scalar_lea.vmem %s1, 21
    %176 = vst.msk [vmem:[%s175] sm:$0x1] %vm174, %v173
    %s177 = scalar_lea.vmem %s1, 52
    %178 = vst.msk [vmem:[%s177] sm:$0x2] %vm174, %v173
    %v179 = vld [vmem:[#allocation0] sm:$0x3]
    %180 = vrot.lane.b32.xlu0 %v179, 84
    %v181 = vpop.permute.xlu0 %180
    %vm182 = vcmask 15360
    %s183 = scalar_lea.vmem %s1, 22
    %184 = vst.msk [vmem:[%s183] sm:$0x1] %vm182, %v181
    %s185 = scalar_lea.vmem %s1, 53
    %186 = vst.msk [vmem:[%s185] sm:$0x2] %vm182, %v181
    %v187 = vld [vmem:[#allocation0] sm:$0x3]
    %188 = vrot.lane.b32.xlu0 %v187, 82
    %v189 = vpop.permute.xlu0 %188
    %vm190 = vcmask 15360
    %s191 = scalar_lea.vmem %s1, 23
    %192 = vst.msk [vmem:[%s191] sm:$0x1] %vm190, %v189
    %s193 = scalar_lea.vmem %s1, 54
    %194 = vst.msk [vmem:[%s193] sm:$0x2] %vm190, %v189
    %v195 = vld [vmem:[#allocation0] sm:$0x3]
    %196 = vrot.lane.b32.xlu0 %v195, 80
    %v197 = vpop.permute.xlu0 %196
    %vm198 = vcmask 15360
    %s199 = scalar_lea.vmem %s1, 24
    %200 = vst.msk [vmem:[%s199] sm:$0x1] %vm198, %v197
    %s201 = scalar_lea.vmem %s1, 55
    %202 = vst.msk [vmem:[%s201] sm:$0x2] %vm198, %v197
    %v203 = vld [vmem:[#allocation0] sm:$0x3]
    %204 = vrot.lane.b32.xlu0 %v203, 78
    %v205 = vpop.permute.xlu0 %204
    %vm206 = vcmask 15360
    %s207 = scalar_lea.vmem %s1, 25
    %208 = vst.msk [vmem:[%s207] sm:$0x1] %vm206, %v205
    %s209 = scalar_lea.vmem %s1, 56
    %210 = vst.msk [vmem:[%s209] sm:$0x2] %vm206, %v205
    %v211 = vld [vmem:[#allocation0] sm:$0x3]
    %212 = vrot.lane.b32.xlu0 %v211, 76
    %v213 = vpop.permute.xlu0 %212
    %vm214 = vcmask 15360
    %s215 = scalar_lea.vmem %s1, 26
    %216 = vst.msk [vmem:[%s215] sm:$0x1] %vm214, %v213
    %s217 = scalar_lea.vmem %s1, 57
    %218 = vst.msk [vmem:[%s217] sm:$0x2] %vm214, %v213
    %v219 = vld [vmem:[#allocation0] sm:$0x3]
    %220 = vrot.lane.b32.xlu0 %v219, 74
    %v221 = vpop.permute.xlu0 %220
    %vm222 = vcmask 15360
    %s223 = scalar_lea.vmem %s1, 27
    %224 = vst.msk [vmem:[%s223] sm:$0x1] %vm222, %v221
    %s225 = scalar_lea.vmem %s1, 58
    %226 = vst.msk [vmem:[%s225] sm:$0x2] %vm222, %v221
    %v227 = vld [vmem:[#allocation0] sm:$0x3]
    %228 = vrot.lane.b32.xlu0 %v227, 72
    %v229 = vpop.permute.xlu0 %228
    %vm230 = vcmask 15360
    %s231 = scalar_lea.vmem %s1, 28
    %232 = vst.msk [vmem:[%s231] sm:$0x1] %vm230, %v229
    %s233 = scalar_lea.vmem %s1, 59
    %234 = vst.msk [vmem:[%s233] sm:$0x2] %vm230, %v229
    %v235 = vld [vmem:[#allocation0] sm:$0x3]
    %236 = vrot.lane.b32.xlu0 %v235, 70
    %v237 = vpop.permute.xlu0 %236
    %vm238 = vcmask 15360
    %s239 = scalar_lea.vmem %s1, 29
    %240 = vst.msk [vmem:[%s239] sm:$0x1] %vm238, %v237
    %s241 = scalar_lea.vmem %s1, 60
    %242 = vst.msk [vmem:[%s241] sm:$0x2] %vm238, %v237
    %v243 = vld [vmem:[#allocation0] sm:$0x3]
    %244 = vrot.lane.b32.xlu0 %v243, 68
    %v245 = vpop.permute.xlu0 %244
    %vm246 = vcmask 15360
    %s247 = scalar_lea.vmem %s1, 30
    %248 = vst.msk [vmem:[%s247] sm:$0x1] %vm246, %v245
    %s249 = scalar_lea.vmem %s1, 61
    %250 = vst.msk [vmem:[%s249] sm:$0x2] %vm246, %v245
    %v251 = vld [vmem:[#allocation0] sm:$0x3]
    %252 = vrot.lane.b32.xlu0 %v251, 66
    %v253 = vpop.permute.xlu0 %252
    %vm254 = vcmask 15360
    %s255 = scalar_lea.vmem %s1, 31
    %256 = vst.msk [vmem:[%s255] sm:$0x1] %vm254, %v253
    %s257 = scalar_lea.vmem %s1, 62
    %258 = vst.msk [vmem:[%s257] sm:$0x2] %vm254, %v253

// kernel: resnet_block_forward.2
$region0: #{resnet_block_forward.2}
  #allocation0 [shape = 'u32[]', space=smem, size = 0x4, offset = 0x4, fixed_abs, tag = 'smem constant byte address 0x4 - core index']
  #allocation1 [shape = 'u32[144,128]{1,0:T(1,128)}', space=vmem, size = 0x12000, scoped, tag = 'internal scratch']
  #allocation2 [shape = 'f32[18,18,32]{2,1,0:T(8,128)}', space=vmem, size = 0x36000, scoped, tag = 'scratch operand']
  %s0 = inlined_call_operand.vmem [shape: f32[2,16,16,32], index: 0, kind: input, shape index: {}]
  %s1 = inlined_call_operand.vmem [shape: f32[2,1,32], index: 1, kind: input, shape index: {}]
  %s2 = inlined_call_operand.vmem [shape: f32[2,1,32], index: 2, kind: input, shape index: {}]
  %s3 = inlined_call_operand.vmem [shape: bf16[9,32,64], index: 3, kind: input, shape index: {}]
  %s4 = inlined_call_operand.vmem [shape: f32[1,64], index: 4, kind: input, shape index: {}]
  %s5 = inlined_call_operand.vmem [shape: bf16[2,16,16,64], index: 5, kind: output, shape index: {0}]
  %s6 = inlined_call_operand.vmem [shape: f32[2,1,2,64], index: 6, kind: output, shape index: {1}]
  %7 = xla_tuple %s5, %s6
  %s8 = sld [smem:[#allocation0]]
  $region61: #{resnet_block_forward.2} parent=0
    _
  %s10 = ssub.s32 1, %s8
  %s11 = scalar_select 0, %s10, %s8
  loop: start=0, step=1, limit=4
  $region2: #{resnet_block_forward.2} parent=0 // loop_pre_header
    _
  $region3: #{resnet_block_forward.2} parent=0 // loop_header
    %s13 = sphi 0, %s17
    %p14 = scmp.ge.s32.totalorder %s13, 4
    %s20 = sphi 0, %s32
    %s21 = sphi 0, %s28
    %s22 = sphi 0, %s20
    %s23 = sphi 0, %s21
    %s24 = sphi 0, %s22
    %s25 = sphi 0, %s23
    %s37 = sphi 0, %s39
    %s40 = sphi 0, %s37
    %s41 = sphi 0, %s40
    %s57 = sphi 0, %s41
    %s63 = sphi 0, %s65
    %s66 = sphi 0, %s63
    %s67 = sphi 0, %s66
    %s83 = sphi 0, %s67
    %s89 = sphi 0, %s91
    %s92 = sphi 0, %s89
    %s93 = sphi 0, %s92
    %s109 = sphi 0, %s93
    %s113 = sphi 0, %s113
    %s115 = sphi 0, %s113
    %s116 = sphi 0, %s115
    %s130 = sphi 0, %s116
    %s134 = sphi 0, %s134
    %s136 = sphi 0, %s134
    %s137 = sphi 0, %s136
    %s151 = sphi 0, %s137
    %s159 = sphi 0, %s161
    %s162 = sphi 0, %s159
    %s163 = sphi 0, %s162
    %s179 = sphi 0, %s163
    %s187 = sphi 0, %s189
    %s190 = sphi 0, %s187
    %s191 = sphi 0, %s190
    %s207 = sphi 0, %s191
  $region4: #{resnet_block_forward.2} parent=0 // loop_header_branch
    %16 = sbr.rel (%p14) target = $region8
  $region5: #{resnet_block_forward.2} parent=0 // loop_body
    %s18 = ssub.s32 %s13, 1
    %s19 = ssub.s32 %s13, 2
    %s26 = sadd.s32 1, %s21
    %p27 = scmp.ge.s32.totalorder %s26, 1
    %s28 = scalar_select %p27, 0, %s26
    %s29 = sadd.s32 1, %s20
    %s30 = scalar_select %p27, %s29, %s20
    %p31 = scmp.ge.s32.totalorder %s30, 2
    %s32 = scalar_select %p31, 0, %s30
    %s33 = ssub.s32 %s20, %s32
    %s34 = ssub.s32 %s21, %s28
    %s35 = sor.u32 %s33, %s34
    %p36 = scmp.eq.s32.totalorder %s35, 0
    %s38 = sadd.s32 %s37, 1
    %s39 = scalar_select %p36, %s37, %s38
    %p42 = pneg %p36
    %p43 = scmp.eq.s32.totalorder %s13, 1
    %p44 = por %p42, %p43
    %p45 = scmp.ne.s32.totalorder %s37, %s40
    %p46 = scmp.eq.s32.totalorder %s13, 0
    %p47 = por %p45, %p46
    %p48 = scmp.ne.s32.totalorder %s37, %s40
    %p49 = scmp.eq.s32.totalorder %s18, 1
    %p50 = por %p48, %p49
    %p51 = scmp.ne.s32.totalorder %s40, %s41
    %p52 = scmp.eq.s32.totalorder %s18, 0
    %p53 = por %p51, %p52
    %p54 = scmp.ne.s32.totalorder %s40, %s41
    %p55 = scmp.eq.s32.totalorder %s19, 1
    %p56 = por %p54, %p55
    %p58 = scmp.ne.s32.totalorder %s41, %s57
    %p59 = scmp.eq.s32.totalorder %s19, 0
    %p60 = por %p58, %p59
    %s61 = ssub.s32 %s20, %s32
    %p62 = scmp.eq.s32.totalorder %s61, 0
    %s64 = sadd.s32 %s63, 1
    %s65 = scalar_select %p62, %s63, %s64
    %p68 = pneg %p62
    %p69 = scmp.eq.s32.totalorder %s13, 1
    %p70 = por %p68, %p69
    %p71 = scmp.ne.s32.totalorder %s63, %s66
    %p72 = scmp.eq.s32.totalorder %s13, 0
    %p73 = por %p71, %p72
    %p74 = scmp.ne.s32.totalorder %s63, %s66
    %p75 = scmp.eq.s32.totalorder %s18, 1
    %p76 = por %p74, %p75
    %p77 = scmp.ne.s32.totalorder %s66, %s67
    %p78 = scmp.eq.s32.totalorder %s18, 0
    %p79 = por %p77, %p78
    %p80 = scmp.ne.s32.totalorder %s66, %s67
    %p81 = scmp.eq.s32.totalorder %s19, 1
    %p82 = por %p80, %p81
    %p84 = scmp.ne.s32.totalorder %s67, %s83
    %p85 = scmp.eq.s32.totalorder %s19, 0
    %p86 = por %p84, %p85
    %s87 = ssub.s32 %s20, %s32
    %p88 = scmp.eq.s32.totalorder %s87, 0
    %s90 = sadd.s32 %s89, 1
    %s91 = scalar_select %p88, %s89, %s90
    %p94 = pneg %p88
    %p95 = scmp.eq.s32.totalorder %s13, 1
    %p96 = por %p94, %p95
    %p97 = scmp.ne.s32.totalorder %s89, %s92
    %p98 = scmp.eq.s32.totalorder %s13, 0
    %p99 = por %p97, %p98
    %p100 = scmp.ne.s32.totalorder %s89, %s92
    %p101 = scmp.eq.s32.totalorder %s18, 1
    %p102 = por %p100, %p101
    %p103 = scmp.ne.s32.totalorder %s92, %s93
    %p104 = scmp.eq.s32.totalorder %s18, 0
    %p105 = por %p103, %p104
    %p106 = scmp.ne.s32.totalorder %s92, %s93
    %p107 = scmp.eq.s32.totalorder %s19, 1
    %p108 = por %p106, %p107
    %p110 = scmp.ne.s32.totalorder %s93, %s109
    %p111 = scmp.eq.s32.totalorder %s19, 0
    %p112 = por %p110, %p111
    %s114 = sadd.s32 %s113, 1
    %p117 = scmp.eq.s32.totalorder %s13, 1
    %p118 = scmp.ne.s32.totalorder %s113, %s115
    %p119 = scmp.eq.s32.totalorder %s13, 0
    %p120 = por %p118, %p119
    %p121 = scmp.ne.s32.totalorder %s113, %s115
    %p122 = scmp.eq.s32.totalorder %s18, 1
    %p123 = por %p121, %p122
    %p124 = scmp.ne.s32.totalorder %s115, %s116
    %p125 = scmp.eq.s32.totalorder %s18, 0
    %p126 = por %p124, %p125
    %p127 = scmp.ne.s32.totalorder %s115, %s116
    %p128 = scmp.eq.s32.totalorder %s19, 1
    %p129 = por %p127, %p128
    %p131 = scmp.ne.s32.totalorder %s116, %s130
    %p132 = scmp.eq.s32.totalorder %s19, 0
    %p133 = por %p131, %p132
    %s135 = sadd.s32 %s134, 1
    %p138 = scmp.eq.s32.totalorder %s13, 1
    %p139 = scmp.ne.s32.totalorder %s134, %s136
    %p140 = scmp.eq.s32.totalorder %s13, 0
    %p141 = por %p139, %p140
    %p142 = scmp.ne.s32.totalorder %s134, %s136
    %p143 = scmp.eq.s32.totalorder %s18, 1
    %p144 = por %p142, %p143
    %p145 = scmp.ne.s32.totalorder %s136, %s137
    %p146 = scmp.eq.s32.totalorder %s18, 0
    %p147 = por %p145, %p146
    %p148 = scmp.ne.s32.totalorder %s136, %s137
    %p149 = scmp.eq.s32.totalorder %s19, 1
    %p150 = por %p148, %p149
    %p152 = scmp.ne.s32.totalorder %s137, %s151
    %p153 = scmp.eq.s32.totalorder %s19, 0
    %p154 = por %p152, %p153
    %s155 = ssub.s32 %s20, %s32
    %s156 = ssub.s32 %s21, %s28
    %s157 = sor.u32 %s155, %s156
    %p158 = scmp.eq.s32.totalorder %s157, 0
    %s160 = sadd.s32 %s159, 1
    %s161 = scalar_select %p158, %s159, %s160
    %p164 = pneg %p158
    %p165 = scmp.eq.s32.totalorder %s13, 1
    %p166 = por %p164, %p165
    %p167 = scmp.ne.s32.totalorder %s159, %s162
    %p168 = scmp.eq.s32.totalorder %s13, 0
    %p169 = por %p167, %p168
    %p170 = scmp.ne.s32.totalorder %s159, %s162
    %p171 = scmp.eq.s32.totalorder %s18, 1
    %p172 = por %p170, %p171
    %p173 = scmp.ne.s32.totalorder %s162, %s163
    %p174 = scmp.eq.s32.totalorder %s18, 0
    %p175 = por %p173, %p174
    %p176 = scmp.ne.s32.totalorder %s162, %s163
    %p177 = scmp.eq.s32.totalorder %s19, 1
    %p178 = por %p176, %p177
    %p180 = scmp.ne.s32.totalorder %s163, %s179
    %p181 = scmp.eq.s32.totalorder %s19, 0
    %p182 = por %p180, %p181
    %s183 = ssub.s32 %s20, %s32
    %s184 = ssub.s32 %s21, %s28
    %s185 = sor.u32 %s183, %s184
    %p186 = scmp.eq.s32.totalorder %s185, 0
    %s188 = sadd.s32 %s187, 1
    %s189 = scalar_select %p186, %s187, %s188
    %p192 = pneg %p186
    %p193 = scmp.eq.s32.totalorder %s13, 1
    %p194 = por %p192, %p193
    %p195 = scmp.ne.s32.totalorder %s187, %s190
    %p196 = scmp.eq.s32.totalorder %s13, 0
    %p197 = por %p195, %p196
    %p198 = scmp.ne.s32.totalorder %s187, %s190
    %p199 = scmp.eq.s32.totalorder %s18, 1
    %p200 = por %p198, %p199
    %p201 = scmp.ne.s32.totalorder %s190, %s191
    %p202 = scmp.eq.s32.totalorder %s18, 0
    %p203 = por %p201, %p202
    %p204 = scmp.ne.s32.totalorder %s190, %s191
    %p205 = scmp.eq.s32.totalorder %s19, 1
    %p206 = por %p204, %p205
    %p208 = scmp.ne.s32.totalorder %s191, %s207
    %p209 = scmp.eq.s32.totalorder %s19, 0
    %p210 = por %p208, %p209
    %p211 = scmp.le.s32.totalorder 1, %s13
    %p212 = scmp.lt.s32.totalorder %s13, 3
    %p213 = pnand %p211, %p212
    %p214 = pneg %p213
    // Predicated region
    $region9: #{resnet_block_forward.2} parent=5 // pred_check
      _
    $region10: #{resnet_block_forward.2} parent=5 // pred_check_branch
      %216 = sbr.rel (%p213) target = $region12
    $region11: #{resnet_block_forward.2} parent=5 // pred_region
      %s217 = ssub.s32 %s13, 1
      // Predicated region
      $region13: #{resnet_block_forward.2} parent=11 // pred_check
        %p218 = pneg %p126
      $region14: #{resnet_block_forward.2} parent=11 // pred_check_branch
        %220 = sbr.rel (%p218) target = $region16
      $region15: #{resnet_block_forward.2} parent=11 // pred_region
        _
      $region16: #{resnet_block_forward.2} parent=11 // pred_fallthru
        _
      // Predicated region
      $region17: #{resnet_block_forward.2} parent=11 // pred_check
        %p221 = pneg %p147
      $region18: #{resnet_block_forward.2} parent=11 // pred_check_branch
        %223 = sbr.rel (%p221) target = $region20
      $region19: #{resnet_block_forward.2} parent=11 // pred_region
        _
      $region20: #{resnet_block_forward.2} parent=11 // pred_fallthru
        _
    $region12: #{resnet_block_forward.2} parent=5 // pred_fallthru
      _
    %p224 = scmp.lt.s32.totalorder %s13, 2
    // Predicated region
    $region21: #{resnet_block_forward.2} parent=5 // pred_check
      %p225 = pneg %p224
    $region22: #{resnet_block_forward.2} parent=5 // pred_check_branch
      %227 = sbr.rel (%p225) target = $region24
    $region23: #{resnet_block_forward.2} parent=5 // pred_region
      // Predicated region
      $region25: #{resnet_block_forward.2} parent=23 // pred_check
        %p228 = pneg %p47
      $region26: #{resnet_block_forward.2} parent=23 // pred_check_branch
        %230 = sbr.rel (%p228) target = $region28
      $region27: #{resnet_block_forward.2} parent=23 // pred_region
        %s231 = smul.u32 16, %s21
        %p232 = scmp.lt.s32.totalorder %s20, 1
        %s233 = scalar_select %p232, %s20, 1
        %p234 = scmp.lt.s32.totalorder %s231, 15
        %s235 = scalar_select %p234, %s231, 15
        %s236 = smul.addr %s235, 2
        %s237 = smul.addr %s233, 32
        %s238 = sadd.s32 %s236, %s237
        %s239 = smul.addr %s238, 8
        %s240 = scalar_lea.vmem %s0, %s239
        %s241 = smul.u32 16, %s21
      $region28: #{resnet_block_forward.2} parent=23 // pred_fallthru
        _
      // Predicated region
      $region29: #{resnet_block_forward.2} parent=23 // pred_check
        %p242 = pneg %p73
      $region30: #{resnet_block_forward.2} parent=23 // pred_check_branch
        %244 = sbr.rel (%p242) target = $region32
      $region31: #{resnet_block_forward.2} parent=23 // pred_region
        %p245 = scmp.lt.s32.totalorder %s20, 1
        %s246 = scalar_select %p245, %s20, 1
        %s247 = scalar_lea.vmem %s1, %s246
      $region32: #{resnet_block_forward.2} parent=23 // pred_fallthru
        _
      // Predicated region
      $region33: #{resnet_block_forward.2} parent=23 // pred_check
        %p248 = pneg %p99
      $region34: #{resnet_block_forward.2} parent=23 // pred_check_branch
        %250 = sbr.rel (%p248) target = $region36
      $region35: #{resnet_block_forward.2} parent=23 // pred_region
        %p251 = scmp.lt.s32.totalorder %s20, 1
        %s252 = scalar_select %p251, %s20, 1
        %s253 = scalar_lea.vmem %s2, %s252
      $region36: #{resnet_block_forward.2} parent=23 // pred_fallthru
        _
    $region24: #{resnet_block_forward.2} parent=5 // pred_fallthru
      _
    %p254 = scmp.le.s32.totalorder 1, %s13
    %p255 = scmp.lt.s32.totalorder %s13, 3
    %p256 = pnand %p254, %p255
    %p257 = pneg %p256
    // Predicated region
    $region37: #{resnet_block_forward.2} parent=5 // pred_check
      _
    $region38: #{resnet_block_forward.2} parent=5 // pred_check_branch
      %259 = sbr.rel (%p256) target = $region40
    $region39: #{resnet_block_forward.2} parent=5 // pred_region
      %s260 = ssub.s32 %s13, 1
      %s261 = smul.u32 16, %s23
      %p262 = scmp.lt.s32.totalorder %s22, 1
      %s263 = scalar_select %p262, %s22, 1
      %p264 = scmp.lt.s32.totalorder %s261, 15
      %s265 = scalar_select %p264, %s261, 15
      %s266 = smul.addr %s265, 2
      %s267 = smul.addr %s263, 32
      %s268 = sadd.s32 %s266, %s267
      %s269 = smul.addr %s268, 8
      %s270 = scalar_lea.vmem %s0, %s269
      %p271 = pneg %p53
      %p272 = pneg %p50
      %p273 = scmp.lt.s32.totalorder %s22, 1
      %s274 = scalar_select %p273, %s22, 1
      %s275 = scalar_lea.vmem %s1, %s274
      %p276 = pneg %p79
      %p277 = pneg %p76
      %p278 = scmp.lt.s32.totalorder %s22, 1
      %s279 = scalar_select %p278, %s22, 1
      %s280 = scalar_lea.vmem %s2, %s279
      %p281 = pneg %p105
      %p282 = pneg %p102
      %p283 = pneg %p126
      %p284 = pneg %p123
      %p285 = pneg %p147
      %p286 = pneg %p144
      %p287 = pneg %p175
      %p288 = pneg %p172
      %s289 = smul.u32 16, %s23
      %p290 = scmp.lt.s32.totalorder %s22, 1
      %s291 = scalar_select %p290, %s22, 1
      %p292 = scmp.lt.s32.totalorder %s289, 15
      %s293 = scalar_select %p292, %s289, 15
      %s294 = smul.addr %s293, 2
      %s295 = smul.addr %s291, 32
      %s296 = sadd.s32 %s294, %s295
      %s297 = smul.addr %s296, 4
      %s298 = scalar_lea.vmem %s5, %s297
      %p299 = pneg %p203
      %p300 = pneg %p200
      %p301 = scmp.lt.s32.totalorder %s22, 1
      %s302 = scalar_select %p301, %s22, 1
      %p303 = scmp.lt.s32.totalorder %s23, 0
      %s304 = scalar_select %p303, %s23, 0
      %s305 = sadd.s32 %s304, %s302
      %s306 = smul.addr %s305, 2
      %s307 = scalar_lea.vmem %s6, %s306
      %s308 = smul.u32 16, %s23
      %p309 = scmp.lt.s32.totalorder %s22, 1
      %s310 = scalar_select %p309, %s22, 1
      %p311 = scmp.lt.s32.totalorder %s308, 15
      %s312 = scalar_select %p311, %s308, 15
      %s313 = smul.addr %s312, 2
      %s314 = smul.addr %s310, 32
      %s315 = sadd.s32 %s313, %s314
      %s316 = smul.addr %s315, 8
      %s317 = scalar_lea.vmem %s0, %s316
      %s318 = smul.u32 16, %s23
      %p319 = scmp.lt.s32.totalorder %s22, 1
      %s320 = scalar_select %p319, %s22, 1
      %s321 = scalar_lea.vmem %s1, %s320
      %p322 = scmp.lt.s32.totalorder %s22, 1
      %s323 = scalar_select %p322, %s22, 1
      %s324 = scalar_lea.vmem %s2, %s323
      %s325 = smul.u32 16, %s23
      %p326 = scmp.lt.s32.totalorder %s22, 1
      %s327 = scalar_select %p326, %s22, 1
      %p328 = scmp.lt.s32.totalorder %s325, 15
      %s329 = scalar_select %p328, %s325, 15
      %s330 = smul.addr %s329, 2
      %s331 = smul.addr %s327, 32
      %s332 = sadd.s32 %s330, %s331
      %s333 = smul.addr %s332, 4
      %s334 = scalar_lea.vmem %s5, %s333
      %s335 = smul.u32 16, %s23
      %p336 = scmp.lt.s32.totalorder %s22, 1
      %s337 = scalar_select %p336, %s22, 1
      %p338 = scmp.lt.s32.totalorder %s23, 0
      %s339 = scalar_select %p338, %s23, 0
      %s340 = sadd.s32 %s339, %s337
      %s341 = smul.addr %s340, 2
      %s342 = scalar_lea.vmem %s6, %s341
      %v344 = vld [vmem:[%s321] sm:$0x1]
      %v345 = vld [vmem:[%s324] sm:$0x1]
      %vm346 = vcmask 253952
      %347 = vst.msk [vmem:[#allocation2] sm:$0x1] %vm346, 0.0
      %348 = vst.msk [vmem:[#allocation2 + $0x18] sm:$0x1] %vm346, 0.0
      %349 = vst.msk [vmem:[#allocation2 + $0x30] sm:$0x1] %vm346, 0.0
      %350 = vst.msk [vmem:[#allocation2 + $0x48] sm:$0x1] %vm346, 0.0
      %351 = vst.msk [vmem:[#allocation2 + $0x60] sm:$0x1] %vm346, 0.0
      %352 = vst.msk [vmem:[#allocation2 + $0x78] sm:$0x1] %vm346, 0.0
      %353 = vst.msk [vmem:[#allocation2 + $0x90] sm:$0x1] %vm346, 0.0
      %354 = vst.msk [vmem:[#allocation2 + $0xa8] sm:$0x1] %vm346, 0.0
      %355 = vst.msk [vmem:[#allocation2 + $0xc0] sm:$0x1] %vm346, 0.0
      %356 = vst.msk [vmem:[#allocation2 + $0xd8] sm:$0x1] %vm346, 0.0
      %357 = vst.msk [vmem:[#allocation2 + $0xf0] sm:$0x1] %vm346, 0.0
      %358 = vst.msk [vmem:[#allocation2 + $0x108] sm:$0x1] %vm346, 0.0
      %359 = vst.msk [vmem:[#allocation2 + $0x120] sm:$0x1] %vm346, 0.0
      %360 = vst.msk [vmem:[#allocation2 + $0x138] sm:$0x1] %vm346, 0.0
      %361 = vst.msk [vmem:[#allocation2 + $0x150] sm:$0x1] %vm346, 0.0
      %362 = vst.msk [vmem:[#allocation2 + $0x168] sm:$0x1] %vm346, 0.0
      %363 = vst.msk [vmem:[#allocation2 + $0x180] sm:$0x1] %vm346, 0.0
      %364 = vst.msk [vmem:[#allocation2 + $0x198] sm:$0x1] %vm346, 0.0
      %365 = vst.msk [vmem:[#allocation2 + $0x11] sm:$0x1] %vm346, 0.0
      %366 = vst.msk [vmem:[#allocation2 + $0x29] sm:$0x1] %vm346, 0.0
      %367 = vst.msk [vmem:[#allocation2 + $0x41] sm:$0x1] %vm346, 0.0
      %368 = vst.msk [vmem:[#allocation2 + $0x59] sm:$0x1] %vm346, 0.0
      %369 = vst.msk [vmem:[#allocation2 + $0x71] sm:$0x1] %vm346, 0.0
      %370 = vst.msk [vmem:[#allocation2 + $0x89] sm:$0x1] %vm346, 0.0
      %371 = vst.msk [vmem:[#allocation2 + $0xa1] sm:$0x1] %vm346, 0.0
      %372 = vst.msk [vmem:[#allocation2 + $0xb9] sm:$0x1] %vm346, 0.0
      %373 = vst.msk [vmem:[#allocation2 + $0xd1] sm:$0x1] %vm346, 0.0
      %374 = vst.msk [vmem:[#allocation2 + $0xe9] sm:$0x1] %vm346, 0.0
      %375 = vst.msk [vmem:[#allocation2 + $0x101] sm:$0x1] %vm346, 0.0
      %376 = vst.msk [vmem:[#allocation2 + $0x119] sm:$0x1] %vm346, 0.0
      %377 = vst.msk [vmem:[#allocation2 + $0x131] sm:$0x1] %vm346, 0.0
      %378 = vst.msk [vmem:[#allocation2 + $0x149] sm:$0x1] %vm346, 0.0
      %379 = vst.msk [vmem:[#allocation2 + $0x161] sm:$0x1] %vm346, 0.0
      %380 = vst.msk [vmem:[#allocation2 + $0x179] sm:$0x1] %vm346, 0.0
      %381 = vst.msk [vmem:[#allocation2 + $0x191] sm:$0x1] %vm346, 0.0
      %382 = vst.msk [vmem:[#allocation2 + $0x1a9] sm:$0x1] %vm346, 0.0
      %v383 = vld [vmem:[%s317] sm:$0xff]
      %v384 = vld [vmem:[%s317 + $0x8] sm:$0xff]
      %v385 = vld [vmem:[%s317 + $0x10] sm:$0xff]
      %v386 = vld [vmem:[%s317 + $0x18] sm:$0xff]
      %v387 = vld [vmem:[%s317 + $0x20] sm:$0xff]
      %v388 = vld [vmem:[%s317 + $0x28] sm:$0xff]
      %v389 = vld [vmem:[%s317 + $0x30] sm:$0xff]
      %v390 = vld [vmem:[%s317 + $0x38] sm:$0xff]
      %v391 = vld [vmem:[%s317 + $0x40] sm:$0xff]
      %v392 = vld [vmem:[%s317 + $0x48] sm:$0xff]
      %v393 = vld [vmem:[%s317 + $0x50] sm:$0xff]
      %v394 = vld [vmem:[%s317 + $0x58] sm:$0xff]
      %v395 = vld [vmem:[%s317 + $0x60] sm:$0xff]
      %v396 = vld [vmem:[%s317 + $0x68] sm:$0xff]
      %v397 = vld [vmem:[%s317 + $0x70] sm:$0xff]
      %v398 = vld [vmem:[%s317 + $0x78] sm:$0xff]
      %v399 = vld [vmem:[%s317 + $0x80] sm:$0xff]
      %v400 = vld [vmem:[%s317 + $0x88] sm:$0xff]
      %v401 = vld [vmem:[%s317 + $0x90] sm:$0xff]
      %v402 = vld [vmem:[%s317 + $0x98] sm:$0xff]
      %v403 = vld [vmem:[%s317 + $0xa0] sm:$0xff]
      %v404 = vld [vmem:[%s317 + $0xa8] sm:$0xff]
      %v405 = vld [vmem:[%s317 + $0xb0] sm:$0xff]
      %v406 = vld [vmem:[%s317 + $0xb8] sm:$0xff]
      %v407 = vld [vmem:[%s317 + $0xc0] sm:$0xff]
      %v408 = vld [vmem:[%s317 + $0xc8] sm:$0xff]
      %v409 = vld [vmem:[%s317 + $0xd0] sm:$0xff]
      %v410 = vld [vmem:[%s317 + $0xd8] sm:$0xff]
      %v411 = vld [vmem:[%s317 + $0xe0] sm:$0xff]
      %v412 = vld [vmem:[%s317 + $0xe8] sm:$0xff]
      %v413 = vld [vmem:[%s317 + $0xf0] sm:$0xff]
      %v414 = vld [vmem:[%s317 + $0xf8] sm:$0xff]
      %v416 = vlaneseq
      %v417 = vshrl.u32 %v416, 7
      %v418 = vsub.s32 0, %v417
      %v419 = vrot.slane %v344, %v418
      %v421 = vmul.f32 %v383, %v419
      %v422 = vmul.f32 %v384, %v419
      %v423 = vmul.f32 %v385, %v419
      %v424 = vmul.f32 %v386, %v419
      %v425 = vmul.f32 %v387, %v419
      %v426 = vmul.f32 %v388, %v419
      %v427 = vmul.f32 %v389, %v419
      %v428 = vmul.f32 %v390, %v419
      %v429 = vmul.f32 %v391, %v419
      %v430 = vmul.f32 %v392, %v419
      %v431 = vmul.f32 %v393, %v419
      %v432 = vmul.f32 %v394, %v419
      %v433 = vmul.f32 %v395, %v419
      %v434 = vmul.f32 %v396, %v419
      %v435 = vmul.f32 %v397, %v419
      %v436 = vmul.f32 %v398, %v419
      %v437 = vmul.f32 %v399, %v419
      %v438 = vmul.f32 %v400, %v419
      %v439 = vmul.f32 %v401, %v419
      %v440 = vmul.f32 %v402, %v419
      %v441 = vmul.f32 %v403, %v419
      %v442 = vmul.f32 %v404, %v419
      %v443 = vmul.f32 %v405, %v419
      %v444 = vmul.f32 %v406, %v419
      %v445 = vmul.f32 %v407, %v419
      %v446 = vmul.f32 %v408, %v419
      %v447 = vmul.f32 %v409, %v419
      %v448 = vmul.f32 %v410, %v419
      %v449 = vmul.f32 %v411, %v419
      %v450 = vmul.f32 %v412, %v419
      %v451 = vmul.f32 %v413, %v419
      %v452 = vmul.f32 %v414, %v419
      %v454 = vlaneseq
      %v455 = vshrl.u32 %v454, 7
      %v456 = vsub.s32 0, %v455
      %v457 = vrot.slane %v345, %v456
      %v459 = vadd.f32 %v421, %v457
      %v460 = vadd.f32 %v422, %v457
      %v461 = vadd.f32 %v423, %v457
      %v462 = vadd.f32 %v424, %v457
      %v463 = vadd.f32 %v425, %v457
      %v464 = vadd.f32 %v426, %v457
      %v465 = vadd.f32 %v427, %v457
      %v466 = vadd.f32 %v428, %v457
      %v467 = vadd.f32 %v429, %v457
      %v468 = vadd.f32 %v430, %v457
      %v469 = vadd.f32 %v431, %v457
      %v470 = vadd.f32 %v432, %v457
      %v471 = vadd.f32 %v433, %v457
      %v472 = vadd.f32 %v434, %v457
      %v473 = vadd.f32 %v435, %v457
      %v474 = vadd.f32 %v436, %v457
      %v475 = vadd.f32 %v437, %v457
      %v476 = vadd.f32 %v438, %v457
      %v477 = vadd.f32 %v439, %v457
      %v478 = vadd.f32 %v440, %v457
      %v479 = vadd.f32 %v441, %v457
      %v480 = vadd.f32 %v442, %v457
      %v481 = vadd.f32 %v443, %v457
      %v482 = vadd.f32 %v444, %v457
      %v483 = vadd.f32 %v445, %v457
      %v484 = vadd.f32 %v446, %v457
      %v485 = vadd.f32 %v447, %v457
      %v486 = vadd.f32 %v448, %v457
      %v487 = vadd.f32 %v449, %v457
      %v488 = vadd.f32 %v450, %v457
      %v489 = vadd.f32 %v451, %v457
      %v490 = vadd.f32 %v452, %v457
      %v491 = vxor.u32 %v459, 2147483648
      %v492 = vxor.u32 %v460, 2147483648
      %v493 = vxor.u32 %v461, 2147483648
      %v494 = vxor.u32 %v462, 2147483648
      %v495 = vxor.u32 %v463, 2147483648
      %v496 = vxor.u32 %v464, 2147483648
      %v497 = vxor.u32 %v465, 2147483648
      %v498 = vxor.u32 %v466, 2147483648
      %v499 = vxor.u32 %v467, 2147483648
      %v500 = vxor.u32 %v468, 2147483648
      %v501 = vxor.u32 %v469, 2147483648
      %v502 = vxor.u32 %v470, 2147483648
      %v503 = vxor.u32 %v471, 2147483648
      %v504 = vxor.u32 %v472, 2147483648
      %v505 = vxor.u32 %v473, 2147483648
      %v506 = vxor.u32 %v474, 2147483648
      %v507 = vxor.u32 %v475, 2147483648
      %v508 = vxor.u32 %v476, 2147483648
      %v509 = vxor.u32 %v477, 2147483648
      %v510 = vxor.u32 %v478, 2147483648
      %v511 = vxor.u32 %v479, 2147483648
      %v512 = vxor.u32 %v480, 2147483648
      %v513 = vxor.u32 %v481, 2147483648
      %v514 = vxor.u32 %v482, 2147483648
      %v515 = vxor.u32 %v483, 2147483648
      %v516 = vxor.u32 %v484, 2147483648
      %v517 = vxor.u32 %v485, 2147483648
      %v518 = vxor.u32 %v486, 2147483648
      %v519 = vxor.u32 %v487, 2147483648
      %v520 = vxor.u32 %v488, 2147483648
      %v521 = vxor.u32 %v489, 2147483648
      %v522 = vxor.u32 %v490, 2147483648
      %v523 = vmul.f32 %v491, 1.442695
      %v524 = vpow.pop %v523
      %v525 = vmul.f32 %v492, 1.442695
      %v526 = vpow.pop %v525
      %v527 = vmul.f32 %v493, 1.442695
      %v528 = vpow.pop %v527
      %v529 = vmul.f32 %v494, 1.442695
      %v530 = vpow.pop %v529
      %v531 = vmul.f32 %v495, 1.442695
      %v532 = vpow.pop %v531
      %v533 = vmul.f32 %v496, 1.442695
      %v534 = vpow.pop %v533
      %v535 = vmul.f32 %v497, 1.442695
      %v536 = vpow.pop %v535
      %v537 = vmul.f32 %v498, 1.442695
      %v538 = vpow.pop %v537
      %v539 = vmul.f32 %v499, 1.442695
      %v540 = vpow.pop %v539
      %v541 = vmul.f32 %v500, 1.442695
      %v542 = vpow.pop %v541
      %v543 = vmul.f32 %v501, 1.442695
      %v544 = vpow.pop %v543
      %v545 = vmul.f32 %v502, 1.442695
      %v546 = vpow.pop %v545
      %v547 = vmul.f32 %v503, 1.442695
      %v548 = vpow.pop %v547
      %v549 = vmul.f32 %v504, 1.442695
      %v550 = vpow.pop %v549
      %v551 = vmul.f32 %v505, 1.442695
      %v552 = vpow.pop %v551
      %v553 = vmul.f32 %v506, 1.442695
      %v554 = vpow.pop %v553
      %v555 = vmul.f32 %v507, 1.442695
      %v556 = vpow.pop %v555
      %v557 = vmul.f32 %v508, 1.442695
      %v558 = vpow.pop %v557
      %v559 = vmul.f32 %v509, 1.442695
      %v560 = vpow.pop %v559
      %v561 = vmul.f32 %v510, 1.442695
      %v562 = vpow.pop %v561
      %v563 = vmul.f32 %v511, 1.442695
      %v564 = vpow.pop %v563
      %v565 = vmul.f32 %v512, 1.442695
      %v566 = vpow.pop %v565
      %v567 = vmul.f32 %v513, 1.442695
      %v568 = vpow.pop %v567
      %v569 = vmul.f32 %v514, 1.442695
      %v570 = vpow.pop %v569
      %v571 = vmul.f32 %v515, 1.442695
      %v572 = vpow.pop %v571
      %v573 = vmul.f32 %v516, 1.442695
      %v574 = vpow.pop %v573
      %v575 = vmul.f32 %v517, 1.442695
      %v576 = vpow.pop %v575
      %v577 = vmul.f32 %v518, 1.442695
      %v578 = vpow.pop %v577
      %v579 = vmul.f32 %v519, 1.442695
      %v580 = vpow.pop %v579
      %v581 = vmul.f32 %v520, 1.442695
      %v582 = vpow.pop %v581
      %v583 = vmul.f32 %v521, 1.442695
      %v584 = vpow.pop %v583
      %v585 = vmul.f32 %v522, 1.442695
      %v586 = vpow.pop %v585
      %v587 = vadd.f32 %v524, 1.0
      %v588 = vadd.f32 %v526, 1.0
      %v589 = vadd.f32 %v528, 1.0
      %v590 = vadd.f32 %v530, 1.0
      %v591 = vadd.f32 %v532, 1.0
      %v592 = vadd.f32 %v534, 1.0
      %v593 = vadd.f32 %v536, 1.0
      %v594 = vadd.f32 %v538, 1.0
      %v595 = vadd.f32 %v540, 1.0
      %v596 = vadd.f32 %v542, 1.0
      %v597 = vadd.f32 %v544, 1.0
      %v598 = vadd.f32 %v546, 1.0
      %v599 = vadd.f32 %v548, 1.0
      %v600 = vadd.f32 %v550, 1.0
      %v601 = vadd.f32 %v552, 1.0
      %v602 = vadd.f32 %v554, 1.0
      %v603 = vadd.f32 %v556, 1.0
      %v604 = vadd.f32 %v558, 1.0
      %v605 = vadd.f32 %v560, 1.0
      %v606 = vadd.f32 %v562, 1.0
      %v607 = vadd.f32 %v564, 1.0
      %v608 = vadd.f32 %v566, 1.0
      %v609 = vadd.f32 %v568, 1.0
      %v610 = vadd.f32 %v570, 1.0
      %v611 = vadd.f32 %v572, 1.0
      %v612 = vadd.f32 %v574, 1.0
      %v613 = vadd.f32 %v576, 1.0
      %v614 = vadd.f32 %v578, 1.0
      %v615 = vadd.f32 %v580, 1.0
      %v616 = vadd.f32 %v582, 1.0
      %v617 = vadd.f32 %v584, 1.0
      %v618 = vadd.f32 %v586, 1.0
      %v619 = vrcp.pop %v587
      %v620 = vmul.f32 1.0, %v619
      %v621 = vrcp.pop %v588
      %v622 = vmul.f32 1.0, %v621
      %v623 = vrcp.pop %v589
      %v624 = vmul.f32 1.0, %v623
      %v625 = vrcp.pop %v590
      %v626 = vmul.f32 1.0, %v625
      %v627 = vrcp.pop %v591
      %v628 = vmul.f32 1.0, %v627
      %v629 = vrcp.pop %v592
      %v630 = vmul.f32 1.0, %v629
      %v631 = vrcp.pop %v593
      %v632 = vmul.f32 1.0, %v631
      %v633 = vrcp.pop %v594
      %v634 = vmul.f32 1.0, %v633
      %v635 = vrcp.pop %v595
      %v636 = vmul.f32 1.0, %v635
      %v637 = vrcp.pop %v596
      %v638 = vmul.f32 1.0, %v637
      %v639 = vrcp.pop %v597
      %v640 = vmul.f32 1.0, %v639
      %v641 = vrcp.pop %v598
      %v642 = vmul.f32 1.0, %v641
      %v643 = vrcp.pop %v599
      %v644 = vmul.f32 1.0, %v643
      %v645 = vrcp.pop %v600
      %v646 = vmul.f32 1.0, %v645
      %v647 = vrcp.pop %v601
      %v648 = vmul.f32 1.0, %v647
      %v649 = vrcp.pop %v602
      %v650 = vmul.f32 1.0, %v649
      %v651 = vrcp.pop %v603
      %v652 = vmul.f32 1.0, %v651
      %v653 = vrcp.pop %v604
      %v654 = vmul.f32 1.0, %v653
      %v655 = vrcp.pop %v605
      %v656 = vmul.f32 1.0, %v655
      %v657 = vrcp.pop %v606
      %v658 = vmul.f32 1.0, %v657
      %v659 = vrcp.pop %v607
      %v660 = vmul.f32 1.0, %v659
      %v661 = vrcp.pop %v608
      %v662 = vmul.f32 1.0, %v661
      %v663 = vrcp.pop %v609
      %v664 = vmul.f32 1.0, %v663
      %v665 = vrcp.pop %v610
      %v666 = vmul.f32 1.0, %v665
      %v667 = vrcp.pop %v611
      %v668 = vmul.f32 1.0, %v667
      %v669 = vrcp.pop %v612
      %v670 = vmul.f32 1.0, %v669
      %v671 = vrcp.pop %v613
      %v672 = vmul.f32 1.0, %v671
      %v673 = vrcp.pop %v614
      %v674 = vmul.f32 1.0, %v673
      %v675 = vrcp.pop %v615
      %v676 = vmul.f32 1.0, %v675
      %v677 = vrcp.pop %v616
      %v678 = vmul.f32 1.0, %v677
      %v679 = vrcp.pop %v617
      %v680 = vmul.f32 1.0, %v679
      %v681 = vrcp.pop %v618
      %v682 = vmul.f32 1.0, %v681
      %v683 = vmul.f32 %v459, %v620
      %v684 = vmul.f32 %v460, %v622
      %v685 = vmul.f32 %v461, %v624
      %v686 = vmul.f32 %v462, %v626
      %v687 = vmul.f32 %v463, %v628
      %v688 = vmul.f32 %v464, %v630
      %v689 = vmul.f32 %v465, %v632
      %v690 = vmul.f32 %v466, %v634
      %v691 = vmul.f32 %v467, %v636
      %v692 = vmul.f32 %v468, %v638
      %v693 = vmul.f32 %v469, %v640
      %v694 = vmul.f32 %v470, %v642
      %v695 = vmul.f32 %v471, %v644
      %v696 = vmul.f32 %v472, %v646
      %v697 = vmul.f32 %v473, %v648
      %v698 = vmul.f32 %v474, %v650
      %v699 = vmul.f32 %v475, %v652
      %v700 = vmul.f32 %v476, %v654
      %v701 = vmul.f32 %v477, %v656
      %v702 = vmul.f32 %v478, %v658
      %v703 = vmul.f32 %v479, %v660
      %v704 = vmul.f32 %v480, %v662
      %v705 = vmul.f32 %v481, %v664
      %v706 = vmul.f32 %v482, %v666
      %v707 = vmul.f32 %v483, %v668
      %v708 = vmul.f32 %v484, %v670
      %v709 = vmul.f32 %v485, %v672
      %v710 = vmul.f32 %v486, %v674
      %v711 = vmul.f32 %v487, %v676
      %v712 = vmul.f32 %v488, %v678
      %v713 = vmul.f32 %v489, %v680
      %v714 = vmul.f32 %v490, %v682
      %s715 = scalar_lea.vmem [#allocation2], 24
      %vm716 = vcmask 261120
      %717 = vst.msk [vmem:[%s715 + $0x1] sm:$0xff] %vm716, %v683
      %718 = vst.msk [vmem:[%s715 + $0x9] sm:$0xff] %vm716, %v684
      %719 = vst.msk [vmem:[%s715 + $0x19] sm:$0xff] %vm716, %v685
      %720 = vst.msk [vmem:[%s715 + $0x21] sm:$0xff] %vm716, %v686
      %721 = vst.msk [vmem:[%s715 + $0x31] sm:$0xff] %vm716, %v687
      %722 = vst.msk [vmem:[%s715 + $0x39] sm:$0xff] %vm716, %v688
      %723 = vst.msk [vmem:[%s715 + $0x49] sm:$0xff] %vm716, %v689
      %724 = vst.msk [vmem:[%s715 + $0x51] sm:$0xff] %vm716, %v690
      %725 = vst.msk [vmem:[%s715 + $0x61] sm:$0xff] %vm716, %v691
      %726 = vst.msk [vmem:[%s715 + $0x69] sm:$0xff] %vm716, %v692
      %727 = vst.msk [vmem:[%s715 + $0x79] sm:$0xff] %vm716, %v693
      %728 = vst.msk [vmem:[%s715 + $0x81] sm:$0xff] %vm716, %v694
      %729 = vst.msk [vmem:[%s715 + $0x91] sm:$0xff] %vm716, %v695
      %730 = vst.msk [vmem:[%s715 + $0x99] sm:$0xff] %vm716, %v696
      %731 = vst.msk [vmem:[%s715 + $0xa9] sm:$0xff] %vm716, %v697
      %732 = vst.msk [vmem:[%s715 + $0xb1] sm:$0xff] %vm716, %v698
      %733 = vst.msk [vmem:[%s715 + $0xc1] sm:$0xff] %vm716, %v699
      %734 = vst.msk [vmem:[%s715 + $0xc9] sm:$0xff] %vm716, %v700
      %735 = vst.msk [vmem:[%s715 + $0xd9] sm:$0xff] %vm716, %v701
      %736 = vst.msk [vmem:[%s715 + $0xe1] sm:$0xff] %vm716, %v702
      %737 = vst.msk [vmem:[%s715 + $0xf1] sm:$0xff] %vm716, %v703
      %738 = vst.msk [vmem:[%s715 + $0xf9] sm:$0xff] %vm716, %v704
      %739 = vst.msk [vmem:[%s715 + $0x109] sm:$0xff] %vm716, %v705
      %740 = vst.msk [vmem:[%s715 + $0x111] sm:$0xff] %vm716, %v706
      %741 = vst.msk [vmem:[%s715 + $0x121] sm:$0xff] %vm716, %v707
      %742 = vst.msk [vmem:[%s715 + $0x129] sm:$0xff] %vm716, %v708
      %743 = vst.msk [vmem:[%s715 + $0x139] sm:$0xff] %vm716, %v709
      %744 = vst.msk [vmem:[%s715 + $0x141] sm:$0xff] %vm716, %v710
      %745 = vst.msk [vmem:[%s715 + $0x151] sm:$0xff] %vm716, %v711
      %746 = vst.msk [vmem:[%s715 + $0x159] sm:$0xff] %vm716, %v712
      %747 = vst.msk [vmem:[%s715 + $0x169] sm:$0xff] %vm716, %v713
      %748 = vst.msk [vmem:[%s715 + $0x171] sm:$0xff] %vm716, %v714
      %749 = vst.msk [vmem:[#allocation2 + $0x1] sm:$0xff] %vm716, 0.0
      %750 = vst.msk [vmem:[#allocation2 + $0x9] sm:$0xff] %vm716, 0.0
      %s751 = scalar_lea.vmem [#allocation2], 408
      %752 = vst.msk [vmem:[%s751 + $0x1] sm:$0xff] %vm716, 0.0
      %753 = vst.msk [vmem:[%s751 + $0x9] sm:$0xff] %vm716, 0.0
      %v754 = vld [vmem:[#allocation2] sm:$0xff]
      %v755 = vld [vmem:[#allocation2 + $0x8] sm:$0xff]
      %v756 = vld [vmem:[#allocation2 + $0x18] sm:$0xff]
      %v757 = vld [vmem:[#allocation2 + $0x20] sm:$0xff]
      %v758 = vld [vmem:[#allocation2 + $0x30] sm:$0xff]
      %v759 = vld [vmem:[#allocation2 + $0x38] sm:$0xff]
      %v760 = vld [vmem:[#allocation2 + $0x48] sm:$0xff]
      %v761 = vld [vmem:[#allocation2 + $0x50] sm:$0xff]
      %v762 = vld [vmem:[#allocation2 + $0x60] sm:$0xff]
      %v763 = vld [vmem:[#allocation2 + $0x68] sm:$0xff]
      %v764 = vld [vmem:[#allocation2 + $0x78] sm:$0xff]
      %v765 = vld [vmem:[#allocation2 + $0x80] sm:$0xff]
      %v766 = vld [vmem:[#allocation2 + $0x90] sm:$0xff]
      %v767 = vld [vmem:[#allocation2 + $0x98] sm:$0xff]
      %v768 = vld [vmem:[#allocation2 + $0xa8] sm:$0xff]
      %v769 = vld [vmem:[#allocation2 + $0xb0] sm:$0xff]
      %v770 = vld [vmem:[#allocation2 + $0xc0] sm:$0xff]
      %v771 = vld [vmem:[#allocation2 + $0xc8] sm:$0xff]
      %v772 = vld [vmem:[#allocation2 + $0xd8] sm:$0xff]
      %v773 = vld [vmem:[#allocation2 + $0xe0] sm:$0xff]
      %v774 = vld [vmem:[#allocation2 + $0xf0] sm:$0xff]
      %v775 = vld [vmem:[#allocation2 + $0xf8] sm:$0xff]
      %v776 = vld [vmem:[#allocation2 + $0x108] sm:$0xff]
      %v777 = vld [vmem:[#allocation2 + $0x110] sm:$0xff]
      %v778 = vld [vmem:[#allocation2 + $0x120] sm:$0xff]
      %v779 = vld [vmem:[#allocation2 + $0x128] sm:$0xff]
      %v780 = vld [vmem:[#allocation2 + $0x138] sm:$0xff]
      %v781 = vld [vmem:[#allocation2 + $0x140] sm:$0xff]
      %v782 = vld [vmem:[#allocation2 + $0x150] sm:$0xff]
      %v783 = vld [vmem:[#allocation2 + $0x158] sm:$0xff]
      %v784 = vld [vmem:[#allocation2 + $0x168] sm:$0xff]
      %v785 = vld [vmem:[#allocation2 + $0x170] sm:$0xff]
      %v786 = vpack.c.bf16 %v755, %v754
      %v787 = vpack.c.bf16 %v757, %v756
      %v788 = vpack.c.bf16 %v759, %v758
      %v789 = vpack.c.bf16 %v761, %v760
      %v790 = vpack.c.bf16 %v763, %v762
      %v791 = vpack.c.bf16 %v765, %v764
      %v792 = vpack.c.bf16 %v767, %v766
      %v793 = vpack.c.bf16 %v769, %v768
      %v794 = vpack.c.bf16 %v771, %v770
      %v795 = vpack.c.bf16 %v773, %v772
      %v796 = vpack.c.bf16 %v775, %v774
      %v797 = vpack.c.bf16 %v777, %v776
      %v798 = vpack.c.bf16 %v779, %v778
      %v799 = vpack.c.bf16 %v781, %v780
      %v800 = vpack.c.bf16 %v783, %v782
      %v801 = vpack.c.bf16 %v785, %v784
      %v802 = vld [vmem:[%s3] sm:$0xf]
      %v803 = vld [vmem:[%s3 + $0x4] sm:$0xf]
      %v804 = vld [vmem:[%s3 + $0x8] sm:$0xf]
      %v805 = vld [vmem:[%s3 + $0xc] sm:$0xf]
      %v806 = vld [vmem:[#allocation2 + $0x1] sm:$0xff]
      %v807 = vld [vmem:[#allocation2 + $0x9] sm:$0xff]
      %v808 = vld [vmem:[#allocation2 + $0x19] sm:$0xff]
      %v809 = vld [vmem:[#allocation2 + $0x21] sm:$0xff]
      %v810 = vld [vmem:[#allocation2 + $0x31] sm:$0xff]
      %v811 = vld [vmem:[#allocation2 + $0x39] sm:$0xff]
      %v812 = vld [vmem:[#allocation2 + $0x49] sm:$0xff]
      %v813 = vld [vmem:[#allocation2 + $0x51] sm:$0xff]
      %v814 = vld [vmem:[#allocation2 + $0x61] sm:$0xff]
      %v815 = vld [vmem:[#allocation2 + $0x69] sm:$0xff]
      %v816 = vld [vmem:[#allocation2 + $0x79] sm:$0xff]
      %v817 = vld [vmem:[#allocation2 + $0x81] sm:$0xff]
      %v818 = vld [vmem:[#allocation2 + $0x91] sm:$0xff]
      %v819 = vld [vmem:[#allocation2 + $0x99] sm:$0xff]
      %v820 = vld [vmem:[#allocation2 + $0xa9] sm:$0xff]
      %v821 = vld [vmem:[#allocation2 + $0xb1] sm:$0xff]
      %v822 = vld [vmem:[#allocation2 + $0xc1] sm:$0xff]
      %v823 = vld [vmem:[#allocation2 + $0xc9] sm:$0xff]
      %v824 = vld [vmem:[#allocation2 + $0xd9] sm:$0xff]
      %v825 = vld [vmem:[#allocation2 + $0xe1] sm:$0xff]
      %v826 = vld [vmem:[#allocation2 + $0xf1] sm:$0xff]
      %v827 = vld [vmem:[#allocation2 + $0xf9] sm:$0xff]
      %v828 = vld [vmem:[#allocation2 + $0x109] sm:$0xff]
      %v829 = vld [vmem:[#allocation2 + $0x111] sm:$0xff]
      %v830 = vld [vmem:[#allocation2 + $0x121] sm:$0xff]
      %v831 = vld [vmem:[#allocation2 + $0x129] sm:$0xff]
      %v832 = vld [vmem:[#allocation2 + $0x139] sm:$0xff]
      %v833 = vld [vmem:[#allocation2 + $0x141] sm:$0xff]
      %v834 = vld [vmem:[#allocation2 + $0x151] sm:$0xff]
      %v835 = vld [vmem:[#allocation2 + $0x159] sm:$0xff]
      %v836 = vld [vmem:[#allocation2 + $0x169] sm:$0xff]
      %v837 = vld [vmem:[#allocation2 + $0x171] sm:$0xff]
      %v838 = vpack.c.bf16 %v807, %v806
      %v839 = vpack.c.bf16 %v809, %v808
      %v840 = vpack.c.bf16 %v811, %v810
      %v841 = vpack.c.bf16 %v813, %v812
      %v842 = vpack.c.bf16 %v815, %v814
      %v843 = vpack.c.bf16 %v817, %v816
      %v844 = vpack.c.bf16 %v819, %v818
      %v845 = vpack.c.bf16 %v821, %v820
      %v846 = vpack.c.bf16 %v823, %v822
      %v847 = vpack.c.bf16 %v825, %v824
      %v848 = vpack.c.bf16 %v827, %v826
      %v849 = vpack.c.bf16 %v829, %v828
      %v850 = vpack.c.bf16 %v831, %v830
      %v851 = vpack.c.bf16 %v833, %v832
      %v852 = vpack.c.bf16 %v835, %v834
      %v853 = vpack.c.bf16 %v837, %v836
      %s854 = scalar_lea.vmem %s3, 16
      %v855 = vld [vmem:[%s854] sm:$0xf]
      %v856 = vld [vmem:[%s854 + $0x4] sm:$0xf]
      %v857 = vld [vmem:[%s854 + $0x8] sm:$0xf]
      %v858 = vld [vmem:[%s854 + $0xc] sm:$0xf]
      %v863 = vunpack.c.l.b16 %v855
      %v864 = vunpack.c.l.b16 %v856
      %v865 = vunpack.c.l.b16 %v857
      %v866 = vunpack.c.l.b16 %v858
      %v867 = vpack.c.b16 %v864, %v863
      %v868 = vpack.c.b16 %v866, %v865
      %v872 = vsel %vm716, %v838, 0
      %v875 = vsel %vm716, %v839, 0
      %v878 = vsel %vm716, %v840, 0
      %v881 = vsel %vm716, %v841, 0
      %v884 = vsel %vm716, %v842, 0
      %v887 = vsel %vm716, %v843, 0
      %v890 = vsel %vm716, %v844, 0
      %v893 = vsel %vm716, %v845, 0
      %v896 = vsel %vm716, %v846, 0
      %v899 = vsel %vm716, %v847, 0
      %v902 = vsel %vm716, %v848, 0
      %v905 = vsel %vm716, %v849, 0
      %v908 = vsel %vm716, %v850, 0
      %v911 = vsel %vm716, %v851, 0
      %v914 = vsel %vm716, %v852, 0
      %v917 = vsel %vm716, %v853, 0
      %919 = vmatprep.subr.bf16.mxu0 0
      %920 = vmatpush1.bf16.msra.mxu0 %v867
      %921 = vmatprep.subr.bf16.mxu0 0
      %922 = vmatpush1.bf16.msra.mxu0 %v868
      %923 = vmatprep.subr.bf16.mxu0 0
      %924 = vmatpush1.bf16.msra.mxu0 0
      %925 = vmatprep.subr.bf16.mxu0 0
      %926 = vmatpush1.bf16.msra.mxu0 0
      %927 = vmatprep.subr.bf16.mxu0 0
      %928 = vmatpush1.bf16.msra.mxu0 0
      %929 = vmatprep.subr.bf16.mxu0 0
      %930 = vmatpush1.bf16.msra.mxu0 0
      %931 = vmatprep.subr.bf16.mxu0 0
      %932 = vmatpush1.bf16.msra.mxu0 0
      %933 = vmatprep.subr.bf16.mxu0 0
      %934 = vmatpush1.bf16.msra.mxu0 0
      %935 = vmatprep.subr.bf16.mxu0 0
      %936 = vmatpush1.bf16.msra.mxu0 0
      %937 = vmatprep.subr.bf16.mxu0 0
      %938 = vmatpush1.bf16.msra.mxu0 0
      %939 = vmatprep.subr.bf16.mxu0 0
      %940 = vmatpush1.bf16.msra.mxu0 0
      %941 = vmatprep.subr.bf16.mxu0 0
      %942 = vmatpush1.bf16.msra.mxu0 0
      %943 = vmatprep.subr.bf16.mxu0 0
      %944 = vmatpush1.bf16.msra.mxu0 0
      %945 = vmatprep.subr.bf16.mxu0 0
      %946 = vmatpush1.bf16.msra.mxu0 0
      %947 = vmatprep.subr.bf16.mxu0 0
      %948 = vmatpush1.bf16.msra.mxu0 0
      %949 = vmatprep.subr.bf16.mxu0 0
      %950 = vmatpush1.bf16.msra.mxu0 0
      %951 = vmatprep.mubr.bf16.mxu0 0
      %952 = vmatmul.mubr.bf16.gmra.mrb[0].mxu0 %v872
      %v953 = vpop.f32.mrb[0].mxu0
      %v954 = vadd.f32 0.0, %v953
      %v955 = vpop.f32.mrb[0].mxu0
      %v956 = vpop.f32.mrb[0].mxu0
      %v957 = vadd.f32 0.0, %v956
      %v958 = vpop.f32.mrb[0].mxu0
      %959 = vmatprep.mubr.bf16.mxu0 0
      %960 = vmatmul.mubr.bf16.gmra.mrb[0].mxu0 %v875
      %v961 = vpop.f32.mrb[0].mxu0
      %v962 = vadd.f32 0.0, %v961
      %v963 = vpop.f32.mrb[0].mxu0
      %v964 = vpop.f32.mrb[0].mxu0
      %v965 = vadd.f32 0.0, %v964
      %v966 = vpop.f32.mrb[0].mxu0
      %967 = vmatprep.mubr.bf16.mxu0 0
      %968 = vmatmul.mubr.bf16.gmra.mrb[0].mxu0 %v878
      %v969 = vpop.f32.mrb[0].mxu0
      %v970 = vadd.f32 0.0, %v969
      %v971 = vpop.f32.mrb[0].mxu0
      %v972 = vpop.f32.mrb[0].mxu0
      %v973 = vadd.f32 0.0, %v972
      %v974 = vpop.f32.mrb[0].mxu0
      %975 = vmatprep.mubr.bf16.mxu0 0
      %976 = vmatmul.mubr.bf16.gmra.mrb[0].mxu0 %v881
      %v977 = vpop.f32.mrb[0].mxu0
      %v978 = vadd.f32 0.0, %v977
      %v979 = vpop.f32.mrb[0].mxu0
      %v980 = vpop.f32.mrb[0].mxu0
      %v981 = vadd.f32 0.0, %v980
      %v982 = vpop.f32.mrb[0].mxu0
      %983 = vmatprep.mubr.bf16.mxu0 0
      %984 = vmatmul.mubr.bf16.gmra.mrb[0].mxu0 %v884
      %v985 = vpop.f32.mrb[0].mxu0
      %v986 = vadd.f32 0.0, %v985
      %v987 = vpop.f32.mrb[0].mxu0
      %v988 = vpop.f32.mrb[0].mxu0
      %v989 = vadd.f32 0.0, %v988
      %v990 = vpop.f32.mrb[0].mxu0
      %991 = vmatprep.mubr.bf16.mxu0 0
      %992 = vmatmul.mubr.bf16.gmra.mrb[0].mxu0 %v887
      %v993 = vpop.f32.mrb[0].mxu0
      %v994 = vadd.f32 0.0, %v993
      %v995 = vpop.f32.mrb[0].mxu0
      %v996 = vpop.f32.mrb[0].mxu0
      %v997 = vadd.f32 0.0, %v996
      %v998 = vpop.f32.mrb[0].mxu0
      %999 = vmatprep.mubr.bf16.mxu0 0
      %1000 = vmatmul.mubr.bf16.gmra.mrb[0].mxu0 %v890
      %v1001 = vpop.f32.mrb[0].mxu0
      %v1002 = vadd.f32 0.0, %v1001
      %v1003 = vpop.f32.mrb[0].mxu0
      %v1004 = vpop.f32.mrb[0].mxu0
      %v1005 = vadd.f32 0.0, %v1004
      %v1006 = vpop.f32.mrb[0].mxu0
      %1007 = vmatprep.mubr.bf16.mxu0 0
      %1008 = vmatmul.mubr.bf16.gmra.mrb[0].mxu0 %v893
      %v1009 = vpop.f32.mrb[0].mxu0
      %v1010 = vadd.f32 0.0, %v1009
      %v1011 = vpop.f32.mrb[0].mxu0
      %v1012 = vpop.f32.mrb[0].mxu0
      %v1013 = vadd.f32 0.0, %v1012
      %v1014 = vpop.f32.mrb[0].mxu0
      %1015 = vmatprep.mubr.bf16.mxu0 0
      %1016 = vmatmul.mubr.bf16.gmra.mrb[0].mxu0 %v896
      %v1017 = vpop.f32.mrb[0].mxu0
      %v1018 = vadd.f32 0.0, %v1017
      %v1019 = vpop.f32.mrb[0].mxu0
      %v1020 = vpop.f32.mrb[0].mxu0
      %v1021 = vadd.f32 0.0, %v1020
      %v1022 = vpop.f32.mrb[0].mxu0
      %1023 = vmatprep.mubr.bf16.mxu0 0
      %1024 = vmatmul.mubr.bf16.gmra.mrb[0].mxu0 %v899
      %v1025 = vpop.f32.mrb[0].mxu0
      %v1026 = vadd.f32 0.0, %v1025
      %v1027 = vpop.f32.mrb[0].mxu0
      %v1028 = vpop.f32.mrb[0].mxu0
      %v1029 = vadd.f32 0.0, %v1028
      %v1030 = vpop.f32.mrb[0].mxu0
      %1031 = vmatprep.mubr.bf16.mxu0 0
      %1032 = vmatmul.mubr.bf16.gmra.mrb[0].mxu0 %v902
      %v1033 = vpop.f32.mrb[0].mxu0
      %v1034 = vadd.f32 0.0, %v1033
      %v1035 = vpop.f32.mrb[0].mxu0
      %v1036 = vpop.f32.mrb[0].mxu0
      %v1037 = vadd.f32 0.0, %v1036
      %v1038 = vpop.f32.mrb[0].mxu0
      %1039 = vmatprep.mubr.bf16.mxu0 0
      %1040 = vmatmul.mubr.bf16.gmra.mrb[0].mxu0 %v905
      %v1041 = vpop.f32.mrb[0].mxu0
      %v1042 = vadd.f32 0.0, %v1041
      %v1043 = vpop.f32.mrb[0].mxu0
      %v1044 = vpop.f32.mrb[0].mxu0
      %v1045 = vadd.f32 0.0, %v1044
      %v1046 = vpop.f32.mrb[0].mxu0
      %1047 = vmatprep.mubr.bf16.mxu0 0
      %1048 = vmatmul.mubr.bf16.gmra.mrb[0].mxu0 %v908
      %v1049 = vpop.f32.mrb[0].mxu0
      %v1050 = vadd.f32 0.0, %v1049
      %v1051 = vpop.f32.mrb[0].mxu0
      %v1052 = vpop.f32.mrb[0].mxu0
      %v1053 = vadd.f32 0.0, %v1052
      %v1054 = vpop.f32.mrb[0].mxu0
      %1055 = vmatprep.mubr.bf16.mxu0 0
      %1056 = vmatmul.mubr.bf16.gmra.mrb[0].mxu0 %v911
      %v1057 = vpop.f32.mrb[0].mxu0
      %v1058 = vadd.f32 0.0, %v1057
      %v1059 = vpop.f32.mrb[0].mxu0
      %v1060 = vpop.f32.mrb[0].mxu0
      %v1061 = vadd.f32 0.0, %v1060
      %v1062 = vpop.f32.mrb[0].mxu0
      %1063 = vmatprep.mubr.bf16.mxu0 0
      %1064 = vmatmul.mubr.bf16.gmra.mrb[0].mxu0 %v914
      %v1065 = vpop.f32.mrb[0].mxu0
      %v1066 = vadd.f32 0.0, %v1065
      %v1067 = vpop.f32.mrb[0].mxu0
      %v1068 = vpop.f32.mrb[0].mxu0
      %v1069 = vadd.f32 0.0, %v1068
      %v1070 = vpop.f32.mrb[0].mxu0
      %1071 = vmatprep.mubr.bf16.mxu0 0
      %1072 = vmatmul.mubr.bf16.gmra.mrb[0].mxu0 %v917
      %v1073 = vpop.f32.mrb[0].mxu0
      %v1074 = vadd.f32 0.0, %v1073
      %v1075 = vpop.f32.mrb[0].mxu0
      %v1076 = vpop.f32.mrb[0].mxu0
      %v1077 = vadd.f32 0.0, %v1076
      %v1078 = vpop.f32.mrb[0].mxu0
      %1079 = vdwg.mxu0
      %v1084 = vunpack.c.l.b16 %v802
      %v1085 = vunpack.c.l.b16 %v803
      %v1086 = vunpack.c.l.b16 %v804
      %v1087 = vunpack.c.l.b16 %v805
      %v1088 = vpack.c.b16 %v1085, %v1084
      %v1089 = vpack.c.b16 %v1087, %v1086
      %v1093 = vsel %vm716, %v786, 0
      %v1096 = vsel %vm716, %v787, 0
      %v1099 = vsel %vm716, %v788, 0
      %v1102 = vsel %vm716, %v789, 0
      %v1105 = vsel %vm716, %v790, 0
      %v1108 = vsel %vm716, %v791, 0
      %v1111 = vsel %vm716, %v792, 0
      %v1114 = vsel %vm716, %v793, 0
      %v1117 = vsel %vm716, %v794, 0
      %v1120 = vsel %vm716, %v795, 0
      %v1123 = vsel %vm716, %v796, 0
      %v1126 = vsel %vm716, %v797, 0
      %v1129 = vsel %vm716, %v798, 0
      %v1132 = vsel %vm716, %v799, 0
      %v1135 = vsel %vm716, %v800, 0
      %v1138 = vsel %vm716, %v801, 0
      %1140 = vmatprep.subr.bf16.mxu0 0
      %1141 = vmatpush1.bf16.msra.mxu0 %v1088
      %1142 = vmatprep.subr.bf16.mxu0 0
      %1143 = vmatpush1.bf16.msra.mxu0 %v1089
      %1144 = vmatprep.subr.bf16.mxu0 0
      %1145 = vmatpush1.bf16.msra.mxu0 0
      %1146 = vmatprep.subr.bf16.mxu0 0
      %1147 = vmatpush1.bf16.msra.mxu0 0
      %1148 = vmatprep.subr.bf16.mxu0 0
      %1149 = vmatpush1.bf16.msra.mxu0 0
      %1150 = vmatprep.subr.bf16.mxu0 0
      %1151 = vmatpush1.bf16.msra.mxu0 0
      %1152 = vmatprep.subr.bf16.mxu0 0
      %1153 = vmatpush1.bf16.msra.mxu0 0
      %1154 = vmatprep.subr.bf16.mxu0 0
      %1155 = vmatpush1.bf16.msra.mxu0 0
      %1156 = vmatprep.subr.bf16.mxu0 0
      %1157 = vmatpush1.bf16.msra.mxu0 0
      %1158 = vmatprep.subr.bf16.mxu0 0
      %1159 = vmatpush1.bf16.msra.mxu0 0
      %1160 = vmatprep.subr.bf16.mxu0 0
      %1161 = vmatpush1.bf16.msra.mxu0 0
      %1162 = vmatprep.subr.bf16.mxu0 0
      %1163 = vmatpush1.bf16.msra.mxu0 0
      %1164 = vmatprep.subr.bf16.mxu0 0
      %1165 = vmatpush1.bf16.msra.mxu0 0
      %1166 = vmatprep.subr.bf16.mxu0 0
      %1167 = vmatpush1.bf16.msra.mxu0 0
      %1168 = vmatprep.subr.bf16.mxu0 0
      %1169 = vmatpush1.bf16.msra.mxu0 0
      %1170 = vmatprep.subr.bf16.mxu0 0
      %1171 = vmatpush1.bf16.msra.mxu0 0
      %1172 = vmatprep.mubr.bf16.mxu0 0
      %1173 = vmatmul.mubr.bf16.gmra.mrb[0].mxu0 %v1093
      %v1174 = vpop.f32.mrb[0].mxu0
      %v1175 = vadd.f32 %v954, %v1174
      %v1176 = vpop.f32.mrb[0].mxu0
      %v1177 = vpop.f32.mrb[0].mxu0
      %v1178 = vadd.f32 %v957, %v1177
      %v1179 = vpop.f32.mrb[0].mxu0
      %1180 = vmatprep.mubr.bf16.mxu0 0
      %1181 = vmatmul.mubr.bf16.gmra.mrb[0].mxu0 %v1096
      %v1182 = vpop.f32.mrb[0].mxu0
      %v1183 = vadd.f32 %v962, %v1182
      %v1184 = vpop.f32.mrb[0].mxu0
      %v1185 = vpop.f32.mrb[0].mxu0
      %v1186 = vadd.f32 %v965, %v1185
      %v1187 = vpop.f32.mrb[0].mxu0
      %1188 = vmatprep.mubr.bf16.mxu0 0
      %1189 = vmatmul.mubr.bf16.gmra.mrb[0].mxu0 %v1099
      %v1190 = vpop.f32.mrb[0].mxu0
      %v1191 = vadd.f32 %v970, %v1190
      %v1192 = vpop.f32.mrb[0].mxu0
      %v1193 = vpop.f32.mrb[0].mxu0
      %v1194 = vadd.f32 %v973, %v1193
      %v1195 = vpop.f32.mrb[0].mxu0
      %1196 = vmatprep.mubr.bf16.mxu0 0
      %1197 = vmatmul.mubr.bf16.gmra.mrb[0].mxu0 %v1102
      %v1198 = vpop.f32.mrb[0].mxu0
      %v1199 = vadd.f32 %v978, %v1198
      %v1200 = vpop.f32.mrb[0].mxu0
      %v1201 = vpop.f32.mrb[0].mxu0
      %v1202 = vadd.f32 %v981, %v1201
      %v1203 = vpop.f32.mrb[0].mxu0
      %1204 = vmatprep.mubr.bf16.mxu0 0
      %1205 = vmatmul.mubr.bf16.gmra.mrb[0].mxu0 %v1105
      %v1206 = vpop.f32.mrb[0].mxu0
      %v1207 = vadd.f32 %v986, %v1206
      %v1208 = vpop.f32.mrb[0].mxu0
      %v1209 = vpop.f32.mrb[0].mxu0
      %v1210 = vadd.f32 %v989, %v1209
      %v1211 = vpop.f32.mrb[0].mxu0
      %1212 = vmatprep.mubr.bf16.mxu0 0
      %1213 = vmatmul.mubr.bf16.gmra.mrb[0].mxu0 %v1108
      %v1214 = vpop.f32.mrb[0].mxu0
      %v1215 = vadd.f32 %v994, %v1214
      %v1216 = vpop.f32.mrb[0].mxu0
      %v1217 = vpop.f32.mrb[0].mxu0
      %v1218 = vadd.f32 %v997, %v1217
      %v1219 = vpop.f32.mrb[0].mxu0
      %1220 = vmatprep.mubr.bf16.mxu0 0
      %1221 = vmatmul.mubr.bf16.gmra.mrb[0].mxu0 %v1111
      %v1222 = vpop.f32.mrb[0].mxu0
      %v1223 = vadd.f32 %v1002, %v1222
      %v1224 = vpop.f32.mrb[0].mxu0
      %v1225 = vpop.f32.mrb[0].mxu0
      %v1226 = vadd.f32 %v1005, %v1225
      %v1227 = vpop.f32.mrb[0].mxu0
      %1228 = vmatprep.mubr.bf16.mxu0 0
      %1229 = vmatmul.mubr.bf16.gmra.mrb[0].mxu0 %v1114
      %v1230 = vpop.f32.mrb[0].mxu0
      %v1231 = vadd.f32 %v1010, %v1230
      %v1232 = vpop.f32.mrb[0].mxu0
      %v1233 = vpop.f32.mrb[0].mxu0
      %v1234 = vadd.f32 %v1013, %v1233
      %v1235 = vpop.f32.mrb[0].mxu0
      %1236 = vmatprep.mubr.bf16.mxu0 0
      %1237 = vmatmul.mubr.bf16.gmra.mrb[0].mxu0 %v1117
      %v1238 = vpop.f32.mrb[0].mxu0
      %v1239 = vadd.f32 %v1018, %v1238
      %v1240 = vpop.f32.mrb[0].mxu0
      %v1241 = vpop.f32.mrb[0].mxu0
      %v1242 = vadd.f32 %v1021, %v1241
      %v1243 = vpop.f32.mrb[0].mxu0
      %1244 = vmatprep.mubr.bf16.mxu0 0
      %1245 = vmatmul.mubr.bf16.gmra.mrb[0].mxu0 %v1120
      %v1246 = vpop.f32.mrb[0].mxu0
      %v1247 = vadd.f32 %v1026, %v1246
      %v1248 = vpop.f32.mrb[0].mxu0
      %v1249 = vpop.f32.mrb[0].mxu0
      %v1250 = vadd.f32 %v1029, %v1249
      %v1251 = vpop.f32.mrb[0].mxu0
      %1252 = vmatprep.mubr.bf16.mxu0 0
      %1253 = vmatmul.mubr.bf16.gmra.mrb[0].mxu0 %v1123
      %v1254 = vpop.f32.mrb[0].mxu0
      %v1255 = vadd.f32 %v1034, %v1254
      %v1256 = vpop.f32.mrb[0].mxu0
      %v1257 = vpop.f32.mrb[0].mxu0
      %v1258 = vadd.f32 %v1037, %v1257
      %v1259 = vpop.f32.mrb[0].mxu0
      %1260 = vmatprep.mubr.bf16.mxu0 0
      %1261 = vmatmul.mubr.bf16.gmra.mrb[0].mxu0 %v1126
      %v1262 = vpop.f32.mrb[0].mxu0
      %v1263 = vadd.f32 %v1042, %v1262
      %v1264 = vpop.f32.mrb[0].mxu0
      %v1265 = vpop.f32.mrb[0].mxu0
      %v1266 = vadd.f32 %v1045, %v1265
      %v1267 = vpop.f32.mrb[0].mxu0
      %1268 = vmatprep.mubr.bf16.mxu0 0
      %1269 = vmatmul.mubr.bf16.gmra.mrb[0].mxu0 %v1129
      %v1270 = vpop.f32.mrb[0].mxu0
      %v1271 = vadd.f32 %v1050, %v1270
      %v1272 = vpop.f32.mrb[0].mxu0
      %v1273 = vpop.f32.mrb[0].mxu0
      %v1274 = vadd.f32 %v1053, %v1273
      %v1275 = vpop.f32.mrb[0].mxu0
      %1276 = vmatprep.mubr.bf16.mxu0 0
      %1277 = vmatmul.mubr.bf16.gmra.mrb[0].mxu0 %v1132
      %v1278 = vpop.f32.mrb[0].mxu0
      %v1279 = vadd.f32 %v1058, %v1278
      %v1280 = vpop.f32.mrb[0].mxu0
      %v1281 = vpop.f32.mrb[0].mxu0
      %v1282 = vadd.f32 %v1061, %v1281
      %v1283 = vpop.f32.mrb[0].mxu0
      %1284 = vmatprep.mubr.bf16.mxu0 0
      %1285 = vmatmul.mubr.bf16.gmra.mrb[0].mxu0 %v1135
      %v1286 = vpop.f32.mrb[0].mxu0
      %v1287 = vadd.f32 %v1066, %v1286
      %v1288 = vpop.f32.mrb[0].mxu0
      %v1289 = vpop.f32.mrb[0].mxu0
      %v1290 = vadd.f32 %v1069, %v1289
      %v1291 = vpop.f32.mrb[0].mxu0
      %1292 = vmatprep.mubr.bf16.mxu0 0
      %1293 = vmatmul.mubr.bf16.gmra.mrb[0].mxu0 %v1138
      %v1294 = vpop.f32.mrb[0].mxu0
      %v1295 = vadd.f32 %v1074, %v1294
      %v1296 = vpop.f32.mrb[0].mxu0
      %v1297 = vpop.f32.mrb[0].mxu0
      %v1298 = vadd.f32 %v1077, %v1297
      %v1299 = vpop.f32.mrb[0].mxu0
      %1300 = vdwg.mxu0
      %v1301 = vld [vmem:[#allocation2 + $0x2] sm:$0xff]
      %v1302 = vld [vmem:[#allocation2 + $0xa] sm:$0xff]
      %v1303 = vld [vmem:[#allocation2 + $0x1a] sm:$0xff]
      %v1304 = vld [vmem:[#allocation2 + $0x22] sm:$0xff]
      %v1305 = vld [vmem:[#allocation2 + $0x32] sm:$0xff]
      %v1306 = vld [vmem:[#allocation2 + $0x3a] sm:$0xff]
      %v1307 = vld [vmem:[#allocation2 + $0x4a] sm:$0xff]
      %v1308 = vld [vmem:[#allocation2 + $0x52] sm:$0xff]
      %v1309 = vld [vmem:[#allocation2 + $0x62] sm:$0xff]
      %v1310 = vld [vmem:[#allocation2 + $0x6a] sm:$0xff]
      %v1311 = vld [vmem:[#allocation2 + $0x7a] sm:$0xff]
      %v1312 = vld [vmem:[#allocation2 + $0x82] sm:$0xff]
      %v1313 = vld [vmem:[#allocation2 + $0x92] sm:$0xff]
      %v1314 = vld [vmem:[#allocation2 + $0x9a] sm:$0xff]
      %v1315 = vld [vmem:[#allocation2 + $0xaa] sm:$0xff]
      %v1316 = vld [vmem:[#allocation2 + $0xb2] sm:$0xff]
      %v1317 = vld [vmem:[#allocation2 + $0xc2] sm:$0xff]
      %v1318 = vld [vmem:[#allocation2 + $0xca] sm:$0xff]
      %v1319 = vld [vmem:[#allocation2 + $0xda] sm:$0xff]
      %v1320 = vld [vmem:[#allocation2 + $0xe2] sm:$0xff]
      %v1321 = vld [vmem:[#allocation2 + $0xf2] sm:$0xff]
      %v1322 = vld [vmem:[#allocation2 + $0xfa] sm:$0xff]
      %v1323 = vld [vmem:[#allocation2 + $0x10a] sm:$0xff]
      %v1324 = vld [vmem:[#allocation2 + $0x112] sm:$0xff]
      %v1325 = vld [vmem:[#allocation2 + $0x122] sm:$0xff]
      %v1326 = vld [vmem:[#allocation2 + $0x12a] sm:$0xff]
      %v1327 = vld [vmem:[#allocation2 + $0x13a] sm:$0xff]
      %v1328 = vld [vmem:[#allocation2 + $0x142] sm:$0xff]
      %v1329 = vld [vmem:[#allocation2 + $0x152] sm:$0xff]
      %v1330 = vld [vmem:[#allocation2 + $0x15a] sm:$0xff]
      %v1331 = vld [vmem:[#allocation2 + $0x16a] sm:$0xff]
      %v1332 = vld [vmem:[#allocation2 + $0x172] sm:$0xff]
      %v1333 = vpack.c.bf16 %v1302, %v1301
      %v1334 = vpack.c.bf16 %v1304, %v1303
      %v1335 = vpack.c.bf16 %v1306, %v1305
      %v1336 = vpack.c.bf16 %v1308, %v1307
      %v1337 = vpack.c.bf16 %v1310, %v1309
      %v1338 = vpack.c.bf16 %v1312, %v1311
      %v1339 = vpack.c.bf16 %v1314, %v1313
      %v1340 = vpack.c.bf16 %v1316, %v1315
      %v1341 = vpack.c.bf16 %v1318, %v1317
      %v1342 = vpack.c.bf16 %v1320, %v1319
      %v1343 = vpack.c.bf16 %v1322, %v1321
      %v1344 = vpack.c.bf16 %v1324, %v1323
      %v1345 = vpack.c.bf16 %v1326, %v1325
      %v1346 = vpack.c.bf16 %v1328, %v1327
      %v1347 = vpack.c.bf16 %v1330, %v1329
      %v1348 = vpack.c.bf16 %v1332, %v1331
      %s1349 = scalar_lea.vmem %s3, 32
      %v1350 = vld [vmem:[%s1349] sm:$0xf]
      %v1351 = vld [vmem:[%s1349 + $0x4] sm:$0xf]
      %v1352 = vld [vmem:[%s1349 + $0x8] sm:$0xf]
      %v1353 = vld [vmem:[%s1349 + $0xc] sm:$0xf]
      %v1358 = vunpack.c.l.b16 %v1350
      %v1359 = vunpack.c.l.b16 %v1351
      %v1360 = vunpack.c.l.b16 %v1352
      %v1361 = vunpack.c.l.b16 %v1353
      %v1362 = vpack.c.b16 %v1359, %v1358
      %v1363 = vpack.c.b16 %v1361, %v1360
      %v1367 = vsel %vm716, %v1333, 0
      %v1370 = vsel %vm716, %v1334, 0
      %v1373 = vsel %vm716, %v1335, 0
      %v1376 = vsel %vm716, %v1336, 0
      %v1379 = vsel %vm716, %v1337, 0
      %v1382 = vsel %vm716, %v1338, 0
      %v1385 = vsel %vm716, %v1339, 0
      %v1388 = vsel %vm716, %v1340, 0
      %v1391 = vsel %vm716, %v1341, 0
      %v1394 = vsel %vm716, %v1342, 0
      %v1397 = vsel %vm716, %v1343, 0
      %v1400 = vsel %vm716, %v1344, 0
      %v1403 = vsel %vm716, %v1345, 0
      %v1406 = vsel %vm716, %v1346, 0
      %v1409 = vsel %vm716, %v1347, 0
      %v1412 = vsel %vm716, %v1348, 0
      %1414 = vmatprep.subr.bf16.mxu0 0
      %1415 = vmatpush1.bf16.msra.mxu0 %v1362
      %1416 = vmatprep.subr.bf16.mxu0 0
      %1417 = vmatpush1.bf16.msra.mxu0 %v1363
      %1418 = vmatprep.subr.bf16.mxu0 0
      %1419 = vmatpush1.bf16.msra.mxu0 0
      %1420 = vmatprep.subr.bf16.mxu0 0
      %1421 = vmatpush1.bf16.msra.mxu0 0
      %1422 = vmatprep.subr.bf16.mxu0 0
      %1423 = vmatpush1.bf16.msra.mxu0 0
      %1424 = vmatprep.subr.bf16.mxu0 0
      %1425 = vmatpush1.bf16.msra.mxu0 0
      %1426 = vmatprep.subr.bf16.mxu0 0
      %1427 = vmatpush1.bf16.msra.mxu0 0
      %1428 = vmatprep.subr.bf16.mxu0 0
      %1429 = vmatpush1.bf16.msra.mxu0 0
      %1430 = vmatprep.subr.bf16.mxu0 0
      %1431 = vmatpush1.bf16.msra.mxu0 0
      %1432 = vmatprep.subr.bf16.mxu0 0
      %1433 = vmatpush1.bf16.msra.mxu0 0
      %1434 = vmatprep.subr.bf16.mxu0 0
      %1435 = vmatpush1.bf16.msra.mxu0 0
      %1436 = vmatprep.subr.bf16.mxu0 0
      %1437 = vmatpush1.bf16.msra.mxu0 0
      %1438 = vmatprep.subr.bf16.mxu0 0
      %1439 = vmatpush1.bf16.msra.mxu0 0
      %1440 = vmatprep.subr.bf16.mxu0 0
      %1441 = vmatpush1.bf16.msra.mxu0 0
      %1442 = vmatprep.subr.bf16.mxu0 0
      %1443 = vmatpush1.bf16.msra.mxu0 0
      %1444 = vmatprep.subr.bf16.mxu0 0
      %1445 = vmatpush1.bf16.msra.mxu0 0
      %1446 = vmatprep.mubr.bf16.mxu0 0
      %1447 = vmatmul.mubr.bf16.gmra.mrb[0].mxu0 %v1367
      %v1448 = vpop.f32.mrb[0].mxu0
      %v1449 = vadd.f32 0.0, %v1448
      %v1450 = vpop.f32.mrb[0].mxu0
      %v1451 = vpop.f32.mrb[0].mxu0
      %v1452 = vadd.f32 0.0, %v1451
      %v1453 = vpop.f32.mrb[0].mxu0
      %1454 = vmatprep.mubr.bf16.mxu0 0
      %1455 = vmatmul.mubr.bf16.gmra.mrb[0].mxu0 %v1370
      %v1456 = vpop.f32.mrb[0].mxu0
      %v1457 = vadd.f32 0.0, %v1456
      %v1458 = vpop.f32.mrb[0].mxu0
      %v1459 = vpop.f32.mrb[0].mxu0
      %v1460 = vadd.f32 0.0, %v1459
      %v1461 = vpop.f32.mrb[0].mxu0
      %1462 = vmatprep.mubr.bf16.mxu0 0
      %1463 = vmatmul.mubr.bf16.gmra.mrb[0].mxu0 %v1373
      %v1464 = vpop.f32.mrb[0].mxu0
      %v1465 = vadd.f32 0.0, %v1464
      %v1466 = vpop.f32.mrb[0].mxu0
      %v1467 = vpop.f32.mrb[0].mxu0
      %v1468 = vadd.f32 0.0, %v1467
      %v1469 = vpop.f32.mrb[0].mxu0
      %1470 = vmatprep.mubr.bf16.mxu0 0
      %1471 = vmatmul.mubr.bf16.gmra.mrb[0].mxu0 %v1376
      %v1472 = vpop.f32.mrb[0].mxu0
      %v1473 = vadd.f32 0.0, %v1472
      %v1474 = vpop.f32.mrb[0].mxu0
      %v1475 = vpop.f32.mrb[0].mxu0
      %v1476 = vadd.f32 0.0, %v1475
      %v1477 = vpop.f32.mrb[0].mxu0
      %1478 = vmatprep.mubr.bf16.mxu0 0
      %1479 = vmatmul.mubr.bf16.gmra.mrb[0].mxu0 %v1379
      %v1480 = vpop.f32.mrb[0].mxu0
      %v1481 = vadd.f32 0.0, %v1480
      %v1482 = vpop.f32.mrb[0].mxu0
      %v1483 = vpop.f32.mrb[0].mxu0
      %v1484 = vadd.f32 0.0, %v1483
      %v1485 = vpop.f32.mrb[0].mxu0
      %1486 = vmatprep.mubr.bf16.mxu0 0
      %1487 = vmatmul.mubr.bf16.gmra.mrb[0].mxu0 %v1382
      %v1488 = vpop.f32.mrb[0].mxu0
      %v1489 = vadd.f32 0.0, %v1488
      %v1490 = vpop.f32.mrb[0].mxu0
      %v1491 = vpop.f32.mrb[0].mxu0
      %v1492 = vadd.f32 0.0, %v1491
      %v1493 = vpop.f32.mrb[0].mxu0
      %1494 = vmatprep.mubr.bf16.mxu0 0
      %1495 = vmatmul.mubr.bf16.gmra.mrb[0].mxu0 %v1385
      %v1496 = vpop.f32.mrb[0].mxu0
      %v1497 = vadd.f32 0.0, %v1496
      %v1498 = vpop.f32.mrb[0].mxu0
      %v1499 = vpop.f32.mrb[0].mxu0
      %v1500 = vadd.f32 0.0, %v1499
      %v1501 = vpop.f32.mrb[0].mxu0
      %1502 = vmatprep.mubr.bf16.mxu0 0
      %1503 = vmatmul.mubr.bf16.gmra.mrb[0].mxu0 %v1388
      %v1504 = vpop.f32.mrb[0].mxu0
      %v1505 = vadd.f32 0.0, %v1504
      %v1506 = vpop.f32.mrb[0].mxu0
      %v1507 = vpop.f32.mrb[0].mxu0
      %v1508 = vadd.f32 0.0, %v1507
      %v1509 = vpop.f32.mrb[0].mxu0
      %1510 = vmatprep.mubr.bf16.mxu0 0
      %1511 = vmatmul.mubr.bf16.gmra.mrb[0].mxu0 %v1391
      %v1512 = vpop.f32.mrb[0].mxu0
      %v1513 = vadd.f32 0.0, %v1512
      %v1514 = vpop.f32.mrb[0].mxu0
      %v1515 = vpop.f32.mrb[0].mxu0
      %v1516 = vadd.f32 0.0, %v1515
      %v1517 = vpop.f32.mrb[0].mxu0
      %1518 = vmatprep.mubr.bf16.mxu0 0
      %1519 = vmatmul.mubr.bf16.gmra.mrb[0].mxu0 %v1394
      %v1520 = vpop.f32.mrb[0].mxu0
      %v1521 = vadd.f32 0.0, %v1520
      %v1522 = vpop.f32.mrb[0].mxu0
      %v1523 = vpop.f32.mrb[0].mxu0
      %v1524 = vadd.f32 0.0, %v1523
      %v1525 = vpop.f32.mrb[0].mxu0
      %1526 = vmatprep.mubr.bf16.mxu0 0
      %1527 = vmatmul.mubr.bf16.gmra.mrb[0].mxu0 %v1397
      %v1528 = vpop.f32.mrb[0].mxu0
      %v1529 = vadd.f32 0.0, %v1528
      %v1530 = vpop.f32.mrb[0].mxu0
      %v1531 = vpop.f32.mrb[0].mxu0
      %v1532 = vadd.f32 0.0, %v1531
      %v1533 = vpop.f32.mrb[0].mxu0
      %1534 = vmatprep.mubr.bf16.mxu0 0
      %1535 = vmatmul.mubr.bf16.gmra.mrb[0].mxu0 %v1400
      %v1536 = vpop.f32.mrb[0].mxu0
      %v1537 = vadd.f32 0.0, %v1536
      %v1538 = vpop.f32.mrb[0].mxu0
      %v1539 = vpop.f32.mrb[0].mxu0
      %v1540 = vadd.f32 0.0, %v1539
      %v1541 = vpop.f32.mrb[0].mxu0
      %1542 = vmatprep.mubr.bf16.mxu0 0
      %1543 = vmatmul.mubr.bf16.gmra.mrb[0].mxu0 %v1403
      %v1544 = vpop.f32.mrb[0].mxu0
      %v1545 = vadd.f32 0.0, %v1544
      %v1546 = vpop.f32.mrb[0].mxu0
      %v1547 = vpop.f32.mrb[0].mxu0
      %v1548 = vadd.f32 0.0, %v1547
      %v1549 = vpop.f32.mrb[0].mxu0
      %1550 = vmatprep.mubr.bf16.mxu0 0
      %1551 = vmatmul.mubr.bf16.gmra.mrb[0].mxu0 %v1406
      %v1552 = vpop.f32.mrb[0].mxu0
      %v1553 = vadd.f32 0.0, %v1552
      %v1554 = vpop.f32.mrb[0].mxu0
      %v1555 = vpop.f32.mrb[0].mxu0
      %v1556 = vadd.f32 0.0, %v1555
      %v1557 = vpop.f32.mrb[0].mxu0
      %1558 = vmatprep.mubr.bf16.mxu0 0
      %1559 = vmatmul.mubr.bf16.gmra.mrb[0].mxu0 %v1409
      %v1560 = vpop.f32.mrb[0].mxu0
      %v1561 = vadd.f32 0.0, %v1560
      %v1562 = vpop.f32.mrb[0].mxu0
      %v1563 = vpop.f32.mrb[0].mxu0
      %v1564 = vadd.f32 0.0, %v1563
      %v1565 = vpop.f32.mrb[0].mxu0
      %1566 = vmatprep.mubr.bf16.mxu0 0
      %1567 = vmatmul.mubr.bf16.gmra.mrb[0].mxu0 %v1412
      %v1568 = vpop.f32.mrb[0].mxu0
      %v1569 = vadd.f32 0.0, %v1568
      %v1570 = vpop.f32.mrb[0].mxu0
      %v1571 = vpop.f32.mrb[0].mxu0
      %v1572 = vadd.f32 0.0, %v1571
      %v1573 = vpop.f32.mrb[0].mxu0
      %1574 = vdwg.mxu0
      %v1575 = vadd.f32 %v1175, %v1449
      %v1576 = vadd.f32 %v1178, %v1452
      %v1577 = vadd.f32 %v1183, %v1457
      %v1578 = vadd.f32 %v1186, %v1460
      %v1579 = vadd.f32 %v1191, %v1465
      %v1580 = vadd.f32 %v1194, %v1468
      %v1581 = vadd.f32 %v1199, %v1473
      %v1582 = vadd.f32 %v1202, %v1476
      %v1583 = vadd.f32 %v1207, %v1481
      %v1584 = vadd.f32 %v1210, %v1484
      %v1585 = vadd.f32 %v1215, %v1489
      %v1586 = vadd.f32 %v1218, %v1492
      %v1587 = vadd.f32 %v1223, %v1497
      %v1588 = vadd.f32 %v1226, %v1500
      %v1589 = vadd.f32 %v1231, %v1505
      %v1590 = vadd.f32 %v1234, %v1508
      %v1591 = vadd.f32 %v1239, %v1513
      %v1592 = vadd.f32 %v1242, %v1516
      %v1593 = vadd.f32 %v1247, %v1521
      %v1594 = vadd.f32 %v1250, %v1524
      %v1595 = vadd.f32 %v1255, %v1529
      %v1596 = vadd.f32 %v1258, %v1532
      %v1597 = vadd.f32 %v1263, %v1537
      %v1598 = vadd.f32 %v1266, %v1540
      %v1599 = vadd.f32 %v1271, %v1545
      %v1600 = vadd.f32 %v1274, %v1548
      %v1601 = vadd.f32 %v1279, %v1553
      %v1602 = vadd.f32 %v1282, %v1556
      %v1603 = vadd.f32 %v1287, %v1561
      %v1604 = vadd.f32 %v1290, %v1564
      %v1605 = vadd.f32 %v1295, %v1569
      %v1606 = vadd.f32 %v1298, %v1572
      %v1607 = vld [vmem:[%s715] sm:$0xff]
      %v1608 = vld [vmem:[%s715 + $0x8] sm:$0xff]
      %v1609 = vld [vmem:[%s715 + $0x18] sm:$0xff]
      %v1610 = vld [vmem:[%s715 + $0x20] sm:$0xff]
      %v1611 = vld [vmem:[%s715 + $0x30] sm:$0xff]
      %v1612 = vld [vmem:[%s715 + $0x38] sm:$0xff]
      %v1613 = vld [vmem:[%s715 + $0x48] sm:$0xff]
      %v1614 = vld [vmem:[%s715 + $0x50] sm:$0xff]
      %v1615 = vld [vmem:[%s715 + $0x60] sm:$0xff]
      %v1616 = vld [vmem:[%s715 + $0x68] sm:$0xff]
      %v1617 = vld [vmem:[%s715 + $0x78] sm:$0xff]
      %v1618 = vld [vmem:[%s715 + $0x80] sm:$0xff]
      %v1619 = vld [vmem:[%s715 + $0x90] sm:$0xff]
      %v1620 = vld [vmem:[%s715 + $0x98] sm:$0xff]
      %v1621 = vld [vmem:[%s715 + $0xa8] sm:$0xff]
      %v1622 = vld [vmem:[%s715 + $0xb0] sm:$0xff]
      %v1623 = vld [vmem:[%s715 + $0xc0] sm:$0xff]
      %v1624 = vld [vmem:[%s715 + $0xc8] sm:$0xff]
      %v1625 = vld [vmem:[%s715 + $0xd8] sm:$0xff]
      %v1626 = vld [vmem:[%s715 + $0xe0] sm:$0xff]
      %v1627 = vld [vmem:[%s715 + $0xf0] sm:$0xff]
      %v1628 = vld [vmem:[%s715 + $0xf8] sm:$0xff]
      %v1629 = vld [vmem:[%s715 + $0x108] sm:$0xff]
      %v1630 = vld [vmem:[%s715 + $0x110] sm:$0xff]
      %v1631 = vld [vmem:[%s715 + $0x120] sm:$0xff]
      %v1632 = vld [vmem:[%s715 + $0x128] sm:$0xff]
      %v1633 = vld [vmem:[%s715 + $0x138] sm:$0xff]
      %v1634 = vld [vmem:[%s715 + $0x140] sm:$0xff]
      %v1635 = vld [vmem:[%s715 + $0x150] sm:$0xff]
      %v1636 = vld [vmem:[%s715 + $0x158] sm:$0xff]
      %v1637 = vld [vmem:[%s715 + $0x168] sm:$0xff]
      %v1638 = vld [vmem:[%s715 + $0x170] sm:$0xff]
      %v1639 = vpack.c.bf16 %v1608, %v1607
      %v1640 = vpack.c.bf16 %v1610, %v1609
      %v1641 = vpack.c.bf16 %v1612, %v1611
      %v1642 = vpack.c.bf16 %v1614, %v1613
      %v1643 = vpack.c.bf16 %v1616, %v1615
      %v1644 = vpack.c.bf16 %v1618, %v1617
      %v1645 = vpack.c.bf16 %v1620, %v1619
      %v1646 = vpack.c.bf16 %v1622, %v1621
      %v1647 = vpack.c.bf16 %v1624, %v1623
      %v1648 = vpack.c.bf16 %v1626, %v1625
      %v1649 = vpack.c.bf16 %v1628, %v1627
      %v1650 = vpack.c.bf16 %v1630, %v1629
      %v1651 = vpack.c.bf16 %v1632, %v1631
      %v1652 = vpack.c.bf16 %v1634, %v1633
      %v1653 = vpack.c.bf16 %v1636, %v1635
      %v1654 = vpack.c.bf16 %v1638, %v1637
      %s1655 = scalar_lea.vmem %s3, 48
      %v1656 = vld [vmem:[%s1655] sm:$0xf]
      %v1657 = vld [vmem:[%s1655 + $0x4] sm:$0xf]
      %v1658 = vld [vmem:[%s1655 + $0x8] sm:$0xf]
      %v1659 = vld [vmem:[%s1655 + $0xc] sm:$0xf]
      %v1664 = vunpack.c.l.b16 %v1656
      %v1665 = vunpack.c.l.b16 %v1657
      %v1666 = vunpack.c.l.b16 %v1658
      %v1667 = vunpack.c.l.b16 %v1659
      %v1668 = vpack.c.b16 %v1665, %v1664
      %v1669 = vpack.c.b16 %v1667, %v1666
      %v1673 = vsel %vm716, %v1639, 0
      %v1676 = vsel %vm716, %v1640, 0
      %v1679 = vsel %vm716, %v1641, 0
      %v1682 = vsel %vm716, %v1642, 0
      %v1685 = vsel %vm716, %v1643, 0
      %v1688 = vsel %vm716, %v1644, 0
      %v1691 = vsel %vm716, %v1645, 0
      %v1694 = vsel %vm716, %v1646, 0
      %v1697 = vsel %vm716, %v1647, 0
      %v1700 = vsel %vm716, %v1648, 0
      %v1703 = vsel %vm716, %v1649, 0
      %v1706 = vsel %vm716, %v1650, 0
      %v1709 = vsel %vm716, %v1651, 0
      %v1712 = vsel %vm716, %v1652, 0
      %v1715 = vsel %vm716, %v1653, 0
      %v1718 = vsel %vm716, %v1654, 0
      %1720 = vmatprep.subr.bf16.mxu0 0
      %1721 = vmatpush1.bf16.msra.mxu0 %v1668
      %1722 = vmatprep.subr.bf16.mxu0 0
      %1723 = vmatpush1.bf16.msra.mxu0 %v1669
      %1724 = vmatprep.subr.bf16.mxu0 0
      %1725 = vmatpush1.bf16.msra.mxu0 0
      %1726 = vmatprep.subr.bf16.mxu0 0
      %1727 = vmatpush1.bf16.msra.mxu0 0
      %1728 = vmatprep.subr.bf16.mxu0 0
      %1729 = vmatpush1.bf16.msra.mxu0 0
      %1730 = vmatprep.subr.bf16.mxu0 0
      %1731 = vmatpush1.bf16.msra.mxu0 0
      %1732 = vmatprep.subr.bf16.mxu0 0
      %1733 = vmatpush1.bf16.msra.mxu0 0
      %1734 = vmatprep.subr.bf16.mxu0 0
      %1735 = vmatpush1.bf16.msra.mxu0 0
      %1736 = vmatprep.subr.bf16.mxu0 0
      %1737 = vmatpush1.bf16.msra.mxu0 0
      %1738 = vmatprep.subr.bf16.mxu0 0
      %1739 = vmatpush1.bf16.msra.mxu0 0
      %1740 = vmatprep.subr.bf16.mxu0 0
      %1741 = vmatpush1.bf16.msra.mxu0 0
      %1742 = vmatprep.subr.bf16.mxu0 0
      %1743 = vmatpush1.bf16.msra.mxu0 0
      %1744 = vmatprep.subr.bf16.mxu0 0
      %1745 = vmatpush1.bf16.msra.mxu0 0
      %1746 = vmatprep.subr.bf16.mxu0 0
      %1747 = vmatpush1.bf16.msra.mxu0 0
      %1748 = vmatprep.subr.bf16.mxu0 0
      %1749 = vmatpush1.bf16.msra.mxu0 0
      %1750 = vmatprep.subr.bf16.mxu0 0
      %1751 = vmatpush1.bf16.msra.mxu0 0
      %1752 = vmatprep.mubr.bf16.mxu0 0
      %1753 = vmatmul.mubr.bf16.gmra.mrb[0].mxu0 %v1673
      %v1754 = vpop.f32.mrb[0].mxu0
      %v1755 = vadd.f32 0.0, %v1754
      %v1756 = vpop.f32.mrb[0].mxu0
      %v1757 = vpop.f32.mrb[0].mxu0
      %v1758 = vadd.f32 0.0, %v1757
      %v1759 = vpop.f32.mrb[0].mxu0
      %1760 = vmatprep.mubr.bf16.mxu0 0
      %1761 = vmatmul.mubr.bf16.gmra.mrb[0].mxu0 %v1676
      %v1762 = vpop.f32.mrb[0].mxu0
      %v1763 = vadd.f32 0.0, %v1762
      %v1764 = vpop.f32.mrb[0].mxu0
      %v1765 = vpop.f32.mrb[0].mxu0
      %v1766 = vadd.f32 0.0, %v1765
      %v1767 = vpop.f32.mrb[0].mxu0
      %1768 = vmatprep.mubr.bf16.mxu0 0
      %1769 = vmatmul.mubr.bf16.gmra.mrb[0].mxu0 %v1679
      %v1770 = vpop.f32.mrb[0].mxu0
      %v1771 = vadd.f32 0.0, %v1770
      %v1772 = vpop.f32.mrb[0].mxu0
      %v1773 = vpop.f32.mrb[0].mxu0
      %v1774 = vadd.f32 0.0, %v1773
      %v1775 = vpop.f32.mrb[0].mxu0
      %1776 = vmatprep.mubr.bf16.mxu0 0
      %1777 = vmatmul.mubr.bf16.gmra.mrb[0].mxu0 %v1682
      %v1778 = vpop.f32.mrb[0].mxu0
      %v1779 = vadd.f32 0.0, %v1778
      %v1780 = vpop.f32.mrb[0].mxu0
      %v1781 = vpop.f32.mrb[0].mxu0
      %v1782 = vadd.f32 0.0, %v1781
      %v1783 = vpop.f32.mrb[0].mxu0
      %1784 = vmatprep.mubr.bf16.mxu0 0
      %1785 = vmatmul.mubr.bf16.gmra.mrb[0].mxu0 %v1685
      %v1786 = vpop.f32.mrb[0].mxu0
      %v1787 = vadd.f32 0.0, %v1786
      %v1788 = vpop.f32.mrb[0].mxu0
      %v1789 = vpop.f32.mrb[0].mxu0
      %v1790 = vadd.f32 0.0, %v1789
      %v1791 = vpop.f32.mrb[0].mxu0
      %1792 = vmatprep.mubr.bf16.mxu0 0
      %1793 = vmatmul.mubr.bf16.gmra.mrb[0].mxu0 %v1688
      %v1794 = vpop.f32.mrb[0].mxu0
      %v1795 = vadd.f32 0.0, %v1794
      %v1796 = vpop.f32.mrb[0].mxu0
      %v1797 = vpop.f32.mrb[0].mxu0
      %v1798 = vadd.f32 0.0, %v1797
      %v1799 = vpop.f32.mrb[0].mxu0
      %1800 = vmatprep.mubr.bf16.mxu0 0
      %1801 = vmatmul.mubr.bf16.gmra.mrb[0].mxu0 %v1691
      %v1802 = vpop.f32.mrb[0].mxu0
      %v1803 = vadd.f32 0.0, %v1802
      %v1804 = vpop.f32.mrb[0].mxu0
      %v1805 = vpop.f32.mrb[0].mxu0
      %v1806 = vadd.f32 0.0, %v1805
      %v1807 = vpop.f32.mrb[0].mxu0
      %1808 = vmatprep.mubr.bf16.mxu0 0
      %1809 = vmatmul.mubr.bf16.gmra.mrb[0].mxu0 %v1694
      %v1810 = vpop.f32.mrb[0].mxu0
      %v1811 = vadd.f32 0.0, %v1810
      %v1812 = vpop.f32.mrb[0].mxu0
      %v1813 = vpop.f32.mrb[0].mxu0
      %v1814 = vadd.f32 0.0, %v1813
      %v1815 = vpop.f32.mrb[0].mxu0
      %1816 = vmatprep.mubr.bf16.mxu0 0
      %1817 = vmatmul.mubr.bf16.gmra.mrb[0].mxu0 %v1697
      %v1818 = vpop.f32.mrb[0].mxu0
      %v1819 = vadd.f32 0.0, %v1818
      %v1820 = vpop.f32.mrb[0].mxu0
      %v1821 = vpop.f32.mrb[0].mxu0
      %v1822 = vadd.f32 0.0, %v1821
      %v1823 = vpop.f32.mrb[0].mxu0
      %1824 = vmatprep.mubr.bf16.mxu0 0
      %1825 = vmatmul.mubr.bf16.gmra.mrb[0].mxu0 %v1700
      %v1826 = vpop.f32.mrb[0].mxu0
      %v1827 = vadd.f32 0.0, %v1826
      %v1828 = vpop.f32.mrb[0].mxu0
      %v1829 = vpop.f32.mrb[0].mxu0
      %v1830 = vadd.f32 0.0, %v1829
      %v1831 = vpop.f32.mrb[0].mxu0
      %1832 = vmatprep.mubr.bf16.mxu0 0
      %1833 = vmatmul.mubr.bf16.gmra.mrb[0].mxu0 %v1703
      %v1834 = vpop.f32.mrb[0].mxu0
      %v1835 = vadd.f32 0.0, %v1834
      %v1836 = vpop.f32.mrb[0].mxu0
      %v1837 = vpop.f32.mrb[0].mxu0
      %v1838 = vadd.f32 0.0, %v1837
      %v1839 = vpop.f32.mrb[0].mxu0
      %1840 = vmatprep.mubr.bf16.mxu0 0
      %1841 = vmatmul.mubr.bf16.gmra.mrb[0].mxu0 %v1706
      %v1842 = vpop.f32.mrb[0].mxu0
      %v1843 = vadd.f32 0.0, %v1842
      %v1844 = vpop.f32.mrb[0].mxu0
      %v1845 = vpop.f32.mrb[0].mxu0
      %v1846 = vadd.f32 0.0, %v1845
      %v1847 = vpop.f32.mrb[0].mxu0
      %1848 = vmatprep.mubr.bf16.mxu0 0
      %1849 = vmatmul.mubr.bf16.gmra.mrb[0].mxu0 %v1709
      %v1850 = vpop.f32.mrb[0].mxu0
      %v1851 = vadd.f32 0.0, %v1850
      %v1852 = vpop.f32.mrb[0].mxu0
      %v1853 = vpop.f32.mrb[0].mxu0
      %v1854 = vadd.f32 0.0, %v1853
      %v1855 = vpop.f32.mrb[0].mxu0
      %1856 = vmatprep.mubr.bf16.mxu0 0
      %1857 = vmatmul.mubr.bf16.gmra.mrb[0].mxu0 %v1712
      %v1858 = vpop.f32.mrb[0].mxu0
      %v1859 = vadd.f32 0.0, %v1858
      %v1860 = vpop.f32.mrb[0].mxu0
      %v1861 = vpop.f32.mrb[0].mxu0
      %v1862 = vadd.f32 0.0, %v1861
      %v1863 = vpop.f32.mrb[0].mxu0
      %1864 = vmatprep.mubr.bf16.mxu0 0
      %1865 = vmatmul.mubr.bf16.gmra.mrb[0].mxu0 %v1715
      %v1866 = vpop.f32.mrb[0].mxu0
      %v1867 = vadd.f32 0.0, %v1866
      %v1868 = vpop.f32.mrb[0].mxu0
      %v1869 = vpop.f32.mrb[0].mxu0
      %v1870 = vadd.f32 0.0, %v1869
      %v1871 = vpop.f32.mrb[0].mxu0
      %1872 = vmatprep.mubr.bf16.mxu0 0
      %1873 = vmatmul.mubr.bf16.gmra.mrb[0].mxu0 %v1718
      %v1874 = vpop.f32.mrb[0].mxu0
      %v1875 = vadd.f32 0.0, %v1874
      %v1876 = vpop.f32.mrb[0].mxu0
      %v1877 = vpop.f32.mrb[0].mxu0
      %v1878 = vadd.f32 0.0, %v1877
      %v1879 = vpop.f32.mrb[0].mxu0
      %1880 = vdwg.mxu0
      %v1881 = vadd.f32 %v1575, %v1755
      %v1882 = vadd.f32 %v1576, %v1758
      %v1883 = vadd.f32 %v1577, %v1763
      %v1884 = vadd.f32 %v1578, %v1766
      %v1885 = vadd.f32 %v1579, %v1771
      %v1886 = vadd.f32 %v1580, %v1774
      %v1887 = vadd.f32 %v1581, %v1779
      %v1888 = vadd.f32 %v1582, %v1782
      %v1889 = vadd.f32 %v1583, %v1787
      %v1890 = vadd.f32 %v1584, %v1790
      %v1891 = vadd.f32 %v1585, %v1795
      %v1892 = vadd.f32 %v1586, %v1798
      %v1893 = vadd.f32 %v1587, %v1803
      %v1894 = vadd.f32 %v1588, %v1806
      %v1895 = vadd.f32 %v1589, %v1811
      %v1896 = vadd.f32 %v1590, %v1814
      %v1897 = vadd.f32 %v1591, %v1819
      %v1898 = vadd.f32 %v1592, %v1822
      %v1899 = vadd.f32 %v1593, %v1827
      %v1900 = vadd.f32 %v1594, %v1830
      %v1901 = vadd.f32 %v1595, %v1835
      %v1902 = vadd.f32 %v1596, %v1838
      %v1903 = vadd.f32 %v1597, %v1843
      %v1904 = vadd.f32 %v1598, %v1846
      %v1905 = vadd.f32 %v1599, %v1851
      %v1906 = vadd.f32 %v1600, %v1854
      %v1907 = vadd.f32 %v1601, %v1859
      %v1908 = vadd.f32 %v1602, %v1862
      %v1909 = vadd.f32 %v1603, %v1867
      %v1910 = vadd.f32 %v1604, %v1870
      %v1911 = vadd.f32 %v1605, %v1875
      %v1912 = vadd.f32 %v1606, %v1878
      %v1913 = vld [vmem:[%s715 + $0x1] sm:$0xff]
      %v1914 = vld [vmem:[%s715 + $0x9] sm:$0xff]
      %v1915 = vld [vmem:[%s715 + $0x19] sm:$0xff]
      %v1916 = vld [vmem:[%s715 + $0x21] sm:$0xff]
      %v1917 = vld [vmem:[%s715 + $0x31] sm:$0xff]
      %v1918 = vld [vmem:[%s715 + $0x39] sm:$0xff]
      %v1919 = vld [vmem:[%s715 + $0x49] sm:$0xff]
      %v1920 = vld [vmem:[%s715 + $0x51] sm:$0xff]
      %v1921 = vld [vmem:[%s715 + $0x61] sm:$0xff]
      %v1922 = vld [vmem:[%s715 + $0x69] sm:$0xff]
      %v1923 = vld [vmem:[%s715 + $0x79] sm:$0xff]
      %v1924 = vld [vmem:[%s715 + $0x81] sm:$0xff]
      %v1925 = vld [vmem:[%s715 + $0x91] sm:$0xff]
      %v1926 = vld [vmem:[%s715 + $0x99] sm:$0xff]
      %v1927 = vld [vmem:[%s715 + $0xa9] sm:$0xff]
      %v1928 = vld [vmem:[%s715 + $0xb1] sm:$0xff]
      %v1929 = vld [vmem:[%s715 + $0xc1] sm:$0xff]
      %v1930 = vld [vmem:[%s715 + $0xc9] sm:$0xff]
      %v1931 = vld [vmem:[%s715 + $0xd9] sm:$0xff]
      %v1932 = vld [vmem:[%s715 + $0xe1] sm:$0xff]
      %v1933 = vld [vmem:[%s715 + $0xf1] sm:$0xff]
      %v1934 = vld [vmem:[%s715 + $0xf9] sm:$0xff]
      %v1935 = vld [vmem:[%s715 + $0x109] sm:$0xff]
      %v1936 = vld [vmem:[%s715 + $0x111] sm:$0xff]
      %v1937 = vld [vmem:[%s715 + $0x121] sm:$0xff]
      %v1938 = vld [vmem:[%s715 + $0x129] sm:$0xff]
      %v1939 = vld [vmem:[%s715 + $0x139] sm:$0xff]
      %v1940 = vld [vmem:[%s715 + $0x141] sm:$0xff]
      %v1941 = vld [vmem:[%s715 + $0x151] sm:$0xff]
      %v1942 = vld [vmem:[%s715 + $0x159] sm:$0xff]
      %v1943 = vld [vmem:[%s715 + $0x169] sm:$0xff]
      %v1944 = vld [vmem:[%s715 + $0x171] sm:$0xff]
      %v1945 = vpack.c.bf16 %v1914, %v1913
      %v1946 = vpack.c.bf16 %v1916, %v1915
      %v1947 = vpack.c.bf16 %v1918, %v1917
      %v1948 = vpack.c.bf16 %v1920, %v1919
      %v1949 = vpack.c.bf16 %v1922, %v1921
      %v1950 = vpack.c.bf16 %v1924, %v1923
      %v1951 = vpack.c.bf16 %v1926, %v1925
      %v1952 = vpack.c.bf16 %v1928, %v1927
      %v1953 = vpack.c.bf16 %v1930, %v1929
      %v1954 = vpack.c.bf16 %v1932, %v1931
      %v1955 = vpack.c.bf16 %v1934, %v1933
      %v1956 = vpack.c.bf16 %v1936, %v1935
      %v1957 = vpack.c.bf16 %v1938, %v1937
      %v1958 = vpack.c.bf16 %v1940, %v1939
      %v1959 = vpack.c.bf16 %v1942, %v1941
      %v1960 = vpack.c.bf16 %v1944, %v1943
      %s1961 = scalar_lea.vmem %s3, 64
      %v1962 = vld [vmem:[%s1961] sm:$0xf]
      %v1963 = vld [vmem:[%s1961 + $0x4] sm:$0xf]
      %v1964 = vld [vmem:[%s1961 + $0x8] sm:$0xf]
      %v1965 = vld [vmem:[%s1961 + $0xc] sm:$0xf]
      %v1970 = vunpack.c.l.b16 %v1962
      %v1971 = vunpack.c.l.b16 %v1963
      %v1972 = vunpack.c.l.b16 %v1964
      %v1973 = vunpack.c.l.b16 %v1965
      %v1974 = vpack.c.b16 %v1971, %v1970
      %v1975 = vpack.c.b16 %v1973, %v1972
      %v1979 = vsel %vm716, %v1945, 0
      %v1982 = vsel %vm716, %v1946, 0
      %v1985 = vsel %vm716, %v1947, 0
      %v1988 = vsel %vm716, %v1948, 0
      %v1991 = vsel %vm716, %v1949, 0
      %v1994 = vsel %vm716, %v1950, 0
      %v1997 = vsel %vm716, %v1951, 0
      %v2000 = vsel %vm716, %v1952, 0
      %v2003 = vsel %vm716, %v1953, 0
      %v2006 = vsel %vm716, %v1954, 0
      %v2009 = vsel %vm716, %v1955, 0
      %v2012 = vsel %vm716, %v1956, 0
      %v2015 = vsel %vm716, %v1957, 0
      %v2018 = vsel %vm716, %v1958, 0
      %v2021 = vsel %vm716, %v1959, 0
      %v2024 = vsel %vm716, %v1960, 0
      %2026 = vmatprep.subr.bf16.mxu0 0
      %2027 = vmatpush1.bf16.msra.mxu0 %v1974
      %2028 = vmatprep.subr.bf16.mxu0 0
      %2029 = vmatpush1.bf16.msra.mxu0 %v1975
      %2030 = vmatprep.subr.bf16.mxu0 0
      %2031 = vmatpush1.bf16.msra.mxu0 0
      %2032 = vmatprep.subr.bf16.mxu0 0
      %2033 = vmatpush1.bf16.msra.mxu0 0
      %2034 = vmatprep.subr.bf16.mxu0 0
      %2035 = vmatpush1.bf16.msra.mxu0 0
      %2036 = vmatprep.subr.bf16.mxu0 0
      %2037 = vmatpush1.bf16.msra.mxu0 0
      %2038 = vmatprep.subr.bf16.mxu0 0
      %2039 = vmatpush1.bf16.msra.mxu0 0
      %2040 = vmatprep.subr.bf16.mxu0 0
      %2041 = vmatpush1.bf16.msra.mxu0 0
      %2042 = vmatprep.subr.bf16.mxu0 0
      %2043 = vmatpush1.bf16.msra.mxu0 0
      %2044 = vmatprep.subr.bf16.mxu0 0
      %2045 = vmatpush1.bf16.msra.mxu0 0
      %2046 = vmatprep.subr.bf16.mxu0 0
      %2047 = vmatpush1.bf16.msra.mxu0 0
      %2048 = vmatprep.subr.bf16.mxu0 0
      %2049 = vmatpush1.bf16.msra.mxu0 0
      %2050 = vmatprep.subr.bf16.mxu0 0
      %2051 = vmatpush1.bf16.msra.mxu0 0
      %2052 = vmatprep.subr.bf16.mxu0 0
      %2053 = vmatpush1.bf16.msra.mxu0 0
      %2054 = vmatprep.subr.bf16.mxu0 0
      %2055 = vmatpush1.bf16.msra.mxu0 0
      %2056 = vmatprep.subr.bf16.mxu0 0
      %2057 = vmatpush1.bf16.msra.mxu0 0
      %2058 = vmatprep.mubr.bf16.mxu0 0
      %2059 = vmatmul.mubr.bf16.gmra.mrb[0].mxu0 %v1979
      %v2060 = vpop.f32.mrb[0].mxu0
      %v2061 = vadd.f32 0.0, %v2060
      %v2062 = vpop.f32.mrb[0].mxu0
      %v2063 = vpop.f32.mrb[0].mxu0
      %v2064 = vadd.f32 0.0, %v2063
      %v2065 = vpop.f32.mrb[0].mxu0
      %2066 = vmatprep.mubr.bf16.mxu0 0
      %2067 = vmatmul.mubr.bf16.gmra.mrb[0].mxu0 %v1982
      %v2068 = vpop.f32.mrb[0].mxu0
      %v2069 = vadd.f32 0.0, %v2068
      %v2070 = vpop.f32.mrb[0].mxu0
      %v2071 = vpop.f32.mrb[0].mxu0
      %v2072 = vadd.f32 0.0, %v2071
      %v2073 = vpop.f32.mrb[0].mxu0
      %2074 = vmatprep.mubr.bf16.mxu0 0
      %2075 = vmatmul.mubr.bf16.gmra.mrb[0].mxu0 %v1985
      %v2076 = vpop.f32.mrb[0].mxu0
      %v2077 = vadd.f32 0.0, %v2076
      %v2078 = vpop.f32.mrb[0].mxu0
      %v2079 = vpop.f32.mrb[0].mxu0
      %v2080 = vadd.f32 0.0, %v2079
      %v2081 = vpop.f32.mrb[0].mxu0
      %2082 = vmatprep.mubr.bf16.mxu0 0
      %2083 = vmatmul.mubr.bf16.gmra.mrb[0].mxu0 %v1988
      %v2084 = vpop.f32.mrb[0].mxu0
      %v2085 = vadd.f32 0.0, %v2084
      %v2086 = vpop.f32.mrb[0].mxu0
      %v2087 = vpop.f32.mrb[0].mxu0
      %v2088 = vadd.f32 0.0, %v2087
      %v2089 = vpop.f32.mrb[0].mxu0
      %2090 = vmatprep.mubr.bf16.mxu0 0
      %2091 = vmatmul.mubr.bf16.gmra.mrb[0].mxu0 %v1991
      %v2092 = vpop.f32.mrb[0].mxu0
      %v2093 = vadd.f32 0.0, %v2092
      %v2094 = vpop.f32.mrb[0].mxu0
      %v2095 = vpop.f32.mrb[0].mxu0
      %v2096 = vadd.f32 0.0, %v2095
      %v2097 = vpop.f32.mrb[0].mxu0
      %2098 = vmatprep.mubr.bf16.mxu0 0
      %2099 = vmatmul.mubr.bf16.gmra.mrb[0].mxu0 %v1994
      %v2100 = vpop.f32.mrb[0].mxu0
      %v2101 = vadd.f32 0.0, %v2100
      %v2102 = vpop.f32.mrb[0].mxu0
      %v2103 = vpop.f32.mrb[0].mxu0
      %v2104 = vadd.f32 0.0, %v2103
      %v2105 = vpop.f32.mrb[0].mxu0
      %2106 = vmatprep.mubr.bf16.mxu0 0
      %2107 = vmatmul.mubr.bf16.gmra.mrb[0].mxu0 %v1997
      %v2108 = vpop.f32.mrb[0].mxu0
      %v2109 = vadd.f32 0.0, %v2108
      %v2110 = vpop.f32.mrb[0].mxu0
      %v2111 = vpop.f32.mrb[0].mxu0
      %v2112 = vadd.f32 0.0, %v2111
      %v2113 = vpop.f32.mrb[0].mxu0
      %2114 = vmatprep.mubr.bf16.mxu0 0
      %2115 = vmatmul.mubr.bf16.gmra.mrb[0].mxu0 %v2000
      %v2116 = vpop.f32.mrb[0].mxu0
      %v2117 = vadd.f32 0.0, %v2116
      %v2118 = vpop.f32.mrb[0].mxu0
      %v2119 = vpop.f32.mrb[0].mxu0
      %v2120 = vadd.f32 0.0, %v2119
      %v2121 = vpop.f32.mrb[0].mxu0
      %2122 = vmatprep.mubr.bf16.mxu0 0
      %2123 = vmatmul.mubr.bf16.gmra.mrb[0].mxu0 %v2003
      %v2124 = vpop.f32.mrb[0].mxu0
      %v2125 = vadd.f32 0.0, %v2124
      %v2126 = vpop.f32.mrb[0].mxu0
      %v2127 = vpop.f32.mrb[0].mxu0
      %v2128 = vadd.f32 0.0, %v2127
      %v2129 = vpop.f32.mrb[0].mxu0
      %2130 = vmatprep.mubr.bf16.mxu0 0
      %2131 = vmatmul.mubr.bf16.gmra.mrb[0].mxu0 %v2006
      %v2132 = vpop.f32.mrb[0].mxu0
      %v2133 = vadd.f32 0.0, %v2132
      %v2134 = vpop.f32.mrb[0].mxu0
      %v2135 = vpop.f32.mrb[0].mxu0
      %v2136 = vadd.f32 0.0, %v2135
      %v2137 = vpop.f32.mrb[0].mxu0
      %2138 = vmatprep.mubr.bf16.mxu0 0
      %2139 = vmatmul.mubr.bf16.gmra.mrb[0].mxu0 %v2009
      %v2140 = vpop.f32.mrb[0].mxu0
      %v2141 = vadd.f32 0.0, %v2140
      %v2142 = vpop.f32.mrb[0].mxu0
      %v2143 = vpop.f32.mrb[0].mxu0
      %v2144 = vadd.f32 0.0, %v2143
      %v2145 = vpop.f32.mrb[0].mxu0
      %2146 = vmatprep.mubr.bf16.mxu0 0
      %2147 = vmatmul.mubr.bf16.gmra.mrb[0].mxu0 %v2012
      %v2148 = vpop.f32.mrb[0].mxu0
      %v2149 = vadd.f32 0.0, %v2148
      %v2150 = vpop.f32.mrb[0].mxu0
      %v2151 = vpop.f32.mrb[0].mxu0
      %v2152 = vadd.f32 0.0, %v2151
      %v2153 = vpop.f32.mrb[0].mxu0
      %2154 = vmatprep.mubr.bf16.mxu0 0
      %2155 = vmatmul.mubr.bf16.gmra.mrb[0].mxu0 %v2015
      %v2156 = vpop.f32.mrb[0].mxu0
      %v2157 = vadd.f32 0.0, %v2156
      %v2158 = vpop.f32.mrb[0].mxu0
      %v2159 = vpop.f32.mrb[0].mxu0
      %v2160 = vadd.f32 0.0, %v2159
      %v2161 = vpop.f32.mrb[0].mxu0
      %2162 = vmatprep.mubr.bf16.mxu0 0
      %2163 = vmatmul.mubr.bf16.gmra.mrb[0].mxu0 %v2018
      %v2164 = vpop.f32.mrb[0].mxu0
      %v2165 = vadd.f32 0.0, %v2164
      %v2166 = vpop.f32.mrb[0].mxu0
      %v2167 = vpop.f32.mrb[0].mxu0
      %v2168 = vadd.f32 0.0, %v2167
      %v2169 = vpop.f32.mrb[0].mxu0
      %2170 = vmatprep.mubr.bf16.mxu0 0
      %2171 = vmatmul.mubr.bf16.gmra.mrb[0].mxu0 %v2021
      %v2172 = vpop.f32.mrb[0].mxu0
      %v2173 = vadd.f32 0.0, %v2172
      %v2174 = vpop.f32.mrb[0].mxu0
      %v2175 = vpop.f32.mrb[0].mxu0
      %v2176 = vadd.f32 0.0, %v2175
      %v2177 = vpop.f32.mrb[0].mxu0
      %2178 = vmatprep.mubr.bf16.mxu0 0
      %2179 = vmatmul.mubr.bf16.gmra.mrb[0].mxu0 %v2024
      %v2180 = vpop.f32.mrb[0].mxu0
      %v2181 = vadd.f32 0.0, %v2180
      %v2182 = vpop.f32.mrb[0].mxu0
      %v2183 = vpop.f32.mrb[0].mxu0
      %v2184 = vadd.f32 0.0, %v2183
      %v2185 = vpop.f32.mrb[0].mxu0
      %2186 = vdwg.mxu0
      %v2187 = vadd.f32 %v1881, %v2061
      %v2188 = vadd.f32 %v1882, %v2064
      %v2189 = vadd.f32 %v1883, %v2069
      %v2190 = vadd.f32 %v1884, %v2072
      %v2191 = vadd.f32 %v1885, %v2077
      %v2192 = vadd.f32 %v1886, %v2080
      %v2193 = vadd.f32 %v1887, %v2085
      %v2194 = vadd.f32 %v1888, %v2088
      %v2195 = vadd.f32 %v1889, %v2093
      %v2196 = vadd.f32 %v1890, %v2096
      %v2197 = vadd.f32 %v1891, %v2101
      %v2198 = vadd.f32 %v1892, %v2104
      %v2199 = vadd.f32 %v1893, %v2109
      %v2200 = vadd.f32 %v1894, %v2112
      %v2201 = vadd.f32 %v1895, %v2117
      %v2202 = vadd.f32 %v1896, %v2120
      %v2203 = vadd.f32 %v1897, %v2125
      %v2204 = vadd.f32 %v1898, %v2128
      %v2205 = vadd.f32 %v1899, %v2133
      %v2206 = vadd.f32 %v1900, %v2136
      %v2207 = vadd.f32 %v1901, %v2141
      %v2208 = vadd.f32 %v1902, %v2144
      %v2209 = vadd.f32 %v1903, %v2149
      %v2210 = vadd.f32 %v1904, %v2152
      %v2211 = vadd.f32 %v1905, %v2157
      %v2212 = vadd.f32 %v1906, %v2160
      %v2213 = vadd.f32 %v1907, %v2165
      %v2214 = vadd.f32 %v1908, %v2168
      %v2215 = vadd.f32 %v1909, %v2173
      %v2216 = vadd.f32 %v1910, %v2176
      %v2217 = vadd.f32 %v1911, %v2181
      %v2218 = vadd.f32 %v1912, %v2184
      %v2219 = vld [vmem:[%s715 + $0x2] sm:$0xff]
      %v2220 = vld [vmem:[%s715 + $0xa] sm:$0xff]
      %v2221 = vld [vmem:[%s715 + $0x1a] sm:$0xff]
      %v2222 = vld [vmem:[%s715 + $0x22] sm:$0xff]
      %v2223 = vld [vmem:[%s715 + $0x32] sm:$0xff]
      %v2224 = vld [vmem:[%s715 + $0x3a] sm:$0xff]
      %v2225 = vld [vmem:[%s715 + $0x4a] sm:$0xff]
      %v2226 = vld [vmem:[%s715 + $0x52] sm:$0xff]
      %v2227 = vld [vmem:[%s715 + $0x62] sm:$0xff]
      %v2228 = vld [vmem:[%s715 + $0x6a] sm:$0xff]
      %v2229 = vld [vmem:[%s715 + $0x7a] sm:$0xff]
      %v2230 = vld [vmem:[%s715 + $0x82] sm:$0xff]
      %v2231 = vld [vmem:[%s715 + $0x92] sm:$0xff]
      %v2232 = vld [vmem:[%s715 + $0x9a] sm:$0xff]
      %v2233 = vld [vmem:[%s715 + $0xaa] sm:$0xff]
      %v2234 = vld [vmem:[%s715 + $0xb2] sm:$0xff]
      %v2235 = vld [vmem:[%s715 + $0xc2] sm:$0xff]
      %v2236 = vld [vmem:[%s715 + $0xca] sm:$0xff]
      %v2237 = vld [vmem:[%s715 + $0xda] sm:$0xff]
      %v2238 = vld [vmem:[%s715 + $0xe2] sm:$0xff]
      %v2239 = vld [vmem:[%s715 + $0xf2] sm:$0xff]
      %v2240 = vld [vmem:[%s715 + $0xfa] sm:$0xff]
      %v2241 = vld [vmem:[%s715 + $0x10a] sm:$0xff]
      %v2242 = vld [vmem:[%s715 + $0x112] sm:$0xff]
      %v2243 = vld [vmem:[%s715 + $0x122] sm:$0xff]
      %v2244 = vld [vmem:[%s715 + $0x12a] sm:$0xff]
      %v2245 = vld [vmem:[%s715 + $0x13a] sm:$0xff]
      %v2246 = vld [vmem:[%s715 + $0x142] sm:$0xff]
      %v2247 = vld [vmem:[%s715 + $0x152] sm:$0xff]
      %v2248 = vld [vmem:[%s715 + $0x15a] sm:$0xff]
      %v2249 = vld [vmem:[%s715 + $0x16a] sm:$0xff]
      %v2250 = vld [vmem:[%s715 + $0x172] sm:$0xff]
      %v2251 = vpack.c.bf16 %v2220, %v2219
      %v2252 = vpack.c.bf16 %v2222, %v2221
      %v2253 = vpack.c.bf16 %v2224, %v2223
      %v2254 = vpack.c.bf16 %v2226, %v2225
      %v2255 = vpack.c.bf16 %v2228, %v2227
      %v2256 = vpack.c.bf16 %v2230, %v2229
      %v2257 = vpack.c.bf16 %v2232, %v2231
      %v2258 = vpack.c.bf16 %v2234, %v2233
      %v2259 = vpack.c.bf16 %v2236, %v2235
      %v2260 = vpack.c.bf16 %v2238, %v2237
      %v2261 = vpack.c.bf16 %v2240, %v2239
      %v2262 = vpack.c.bf16 %v2242, %v2241
      %v2263 = vpack.c.bf16 %v2244, %v2243
      %v2264 = vpack.c.bf16 %v2246, %v2245
      %v2265 = vpack.c.bf16 %v2248, %v2247
      %v2266 = vpack.c.bf16 %v2250, %v2249
      %s2267 = scalar_lea.vmem %s3, 80
      %v2268 = vld [vmem:[%s2267] sm:$0xf]
      %v2269 = vld [vmem:[%s2267 + $0x4] sm:$0xf]
      %v2270 = vld [vmem:[%s2267 + $0x8] sm:$0xf]
      %v2271 = vld [vmem:[%s2267 + $0xc] sm:$0xf]
      %v2276 = vunpack.c.l.b16 %v2268
      %v2277 = vunpack.c.l.b16 %v2269
      %v2278 = vunpack.c.l.b16 %v2270
      %v2279 = vunpack.c.l.b16 %v2271
      %v2280 = vpack.c.b16 %v2277, %v2276
      %v2281 = vpack.c.b16 %v2279, %v2278
      %v2285 = vsel %vm716, %v2251, 0
      %v2288 = vsel %vm716, %v2252, 0
      %v2291 = vsel %vm716, %v2253, 0
      %v2294 = vsel %vm716, %v2254, 0
      %v2297 = vsel %vm716, %v2255, 0
      %v2300 = vsel %vm716, %v2256, 0
      %v2303 = vsel %vm716, %v2257, 0
      %v2306 = vsel %vm716, %v2258, 0
      %v2309 = vsel %vm716, %v2259, 0
      %v2312 = vsel %vm716, %v2260, 0
      %v2315 = vsel %vm716, %v2261, 0
      %v2318 = vsel %vm716, %v2262, 0
      %v2321 = vsel %vm716, %v2263, 0
      %v2324 = vsel %vm716, %v2264, 0
      %v2327 = vsel %vm716, %v2265, 0
      %v2330 = vsel %vm716, %v2266, 0
      %2332 = vmatprep.subr.bf16.mxu0 0
      %2333 = vmatpush1.bf16.msra.mxu0 %v2280
      %2334 = vmatprep.subr.bf16.mxu0 0
      %2335 = vmatpush1.bf16.msra.mxu0 %v2281
      %2336 = vmatprep.subr.bf16.mxu0 0
      %2337 = vmatpush1.bf16.msra.mxu0 0
      %2338 = vmatprep.subr.bf16.mxu0 0
      %2339 = vmatpush1.bf16.msra.mxu0 0
      %2340 = vmatprep.subr.bf16.mxu0 0
      %2341 = vmatpush1.bf16.msra.mxu0 0
      %2342 = vmatprep.subr.bf16.mxu0 0
      %2343 = vmatpush1.bf16.msra.mxu0 0
      %2344 = vmatprep.subr.bf16.mxu0 0
      %2345 = vmatpush1.bf16.msra.mxu0 0
      %2346 = vmatprep.subr.bf16.mxu0 0
      %2347 = vmatpush1.bf16.msra.mxu0 0
      %2348 = vmatprep.subr.bf16.mxu0 0
      %2349 = vmatpush1.bf16.msra.mxu0 0
      %2350 = vmatprep.subr.bf16.mxu0 0
      %2351 = vmatpush1.bf16.msra.mxu0 0
      %2352 = vmatprep.subr.bf16.mxu0 0
      %2353 = vmatpush1.bf16.msra.mxu0 0
      %2354 = vmatprep.subr.bf16.mxu0 0
      %2355 = vmatpush1.bf16.msra.mxu0 0
      %2356 = vmatprep.subr.bf16.mxu0 0
      %2357 = vmatpush1.bf16.msra.mxu0 0
      %2358 = vmatprep.subr.bf16.mxu0 0
      %2359 = vmatpush1.bf16.msra.mxu0 0
      %2360 = vmatprep.subr.bf16.mxu0 0
      %2361 = vmatpush1.bf16.msra.mxu0 0
      %2362 = vmatprep.subr.bf16.mxu0 0
      %2363 = vmatpush1.bf16.msra.mxu0 0
      %2364 = vmatprep.mubr.bf16.mxu0 0
      %2365 = vmatmul.mubr.bf16.gmra.mrb[0].mxu0 %v2285
      %v2366 = vpop.f32.mrb[0].mxu0
      %v2367 = vadd.f32 0.0, %v2366
      %v2368 = vpop.f32.mrb[0].mxu0
      %v2369 = vpop.f32.mrb[0].mxu0
      %v2370 = vadd.f32 0.0, %v2369
      %v2371 = vpop.f32.mrb[0].mxu0
      %2372 = vmatprep.mubr.bf16.mxu0 0
      %2373 = vmatmul.mubr.bf16.gmra.mrb[0].mxu0 %v2288
      %v2374 = vpop.f32.mrb[0].mxu0
      %v2375 = vadd.f32 0.0, %v2374
      %v2376 = vpop.f32.mrb[0].mxu0
      %v2377 = vpop.f32.mrb[0].mxu0
      %v2378 = vadd.f32 0.0, %v2377
      %v2379 = vpop.f32.mrb[0].mxu0
      %2380 = vmatprep.mubr.bf16.mxu0 0
      %2381 = vmatmul.mubr.bf16.gmra.mrb[0].mxu0 %v2291
      %v2382 = vpop.f32.mrb[0].mxu0
      %v2383 = vadd.f32 0.0, %v2382
      %v2384 = vpop.f32.mrb[0].mxu0
      %v2385 = vpop.f32.mrb[0].mxu0
      %v2386 = vadd.f32 0.0, %v2385
      %v2387 = vpop.f32.mrb[0].mxu0
      %2388 = vmatprep.mubr.bf16.mxu0 0
      %2389 = vmatmul.mubr.bf16.gmra.mrb[0].mxu0 %v2294
      %v2390 = vpop.f32.mrb[0].mxu0
      %v2391 = vadd.f32 0.0, %v2390
      %v2392 = vpop.f32.mrb[0].mxu0
      %v2393 = vpop.f32.mrb[0].mxu0
      %v2394 = vadd.f32 0.0, %v2393
      %v2395 = vpop.f32.mrb[0].mxu0
      %2396 = vmatprep.mubr.bf16.mxu0 0
      %2397 = vmatmul.mubr.bf16.gmra.mrb[0].mxu0 %v2297
      %v2398 = vpop.f32.mrb[0].mxu0
      %v2399 = vadd.f32 0.0, %v2398
      %v2400 = vpop.f32.mrb[0].mxu0
      %v2401 = vpop.f32.mrb[0].mxu0
      %v2402 = vadd.f32 0.0, %v2401
      %v2403 = vpop.f32.mrb[0].mxu0
      %2404 = vmatprep.mubr.bf16.mxu0 0
      %2405 = vmatmul.mubr.bf16.gmra.mrb[0].mxu0 %v2300
      %v2406 = vpop.f32.mrb[0].mxu0
      %v2407 = vadd.f32 0.0, %v2406
      %v2408 = vpop.f32.mrb[0].mxu0
      %v2409 = vpop.f32.mrb[0].mxu0
      %v2410 = vadd.f32 0.0, %v2409
      %v2411 = vpop.f32.mrb[0].mxu0
      %2412 = vmatprep.mubr.bf16.mxu0 0
      %2413 = vmatmul.mubr.bf16.gmra.mrb[0].mxu0 %v2303
      %v2414 = vpop.f32.mrb[0].mxu0
      %v2415 = vadd.f32 0.0, %v2414
      %v2416 = vpop.f32.mrb[0].mxu0
      %v2417 = vpop.f32.mrb[0].mxu0
      %v2418 = vadd.f32 0.0, %v2417
      %v2419 = vpop.f32.mrb[0].mxu0
      %2420 = vmatprep.mubr.bf16.mxu0 0
      %2421 = vmatmul.mubr.bf16.gmra.mrb[0].mxu0 %v2306
      %v2422 = vpop.f32.mrb[0].mxu0
      %v2423 = vadd.f32 0.0, %v2422
      %v2424 = vpop.f32.mrb[0].mxu0
      %v2425 = vpop.f32.mrb[0].mxu0
      %v2426 = vadd.f32 0.0, %v2425
      %v2427 = vpop.f32.mrb[0].mxu0
      %2428 = vmatprep.mubr.bf16.mxu0 0
      %2429 = vmatmul.mubr.bf16.gmra.mrb[0].mxu0 %v2309
      %v2430 = vpop.f32.mrb[0].mxu0
      %v2431 = vadd.f32 0.0, %v2430
      %v2432 = vpop.f32.mrb[0].mxu0
      %v2433 = vpop.f32.mrb[0].mxu0
      %v2434 = vadd.f32 0.0, %v2433
      %v2435 = vpop.f32.mrb[0].mxu0
      %2436 = vmatprep.mubr.bf16.mxu0 0
      %2437 = vmatmul.mubr.bf16.gmra.mrb[0].mxu0 %v2312
      %v2438 = vpop.f32.mrb[0].mxu0
      %v2439 = vadd.f32 0.0, %v2438
      %v2440 = vpop.f32.mrb[0].mxu0
      %v2441 = vpop.f32.mrb[0].mxu0
      %v2442 = vadd.f32 0.0, %v2441
      %v2443 = vpop.f32.mrb[0].mxu0
      %2444 = vmatprep.mubr.bf16.mxu0 0
      %2445 = vmatmul.mubr.bf16.gmra.mrb[0].mxu0 %v2315
      %v2446 = vpop.f32.mrb[0].mxu0
      %v2447 = vadd.f32 0.0, %v2446
      %v2448 = vpop.f32.mrb[0].mxu0
      %v2449 = vpop.f32.mrb[0].mxu0
      %v2450 = vadd.f32 0.0, %v2449
      %v2451 = vpop.f32.mrb[0].mxu0
      %2452 = vmatprep.mubr.bf16.mxu0 0
      %2453 = vmatmul.mubr.bf16.gmra.mrb[0].mxu0 %v2318
      %v2454 = vpop.f32.mrb[0].mxu0
      %v2455 = vadd.f32 0.0, %v2454
      %v2456 = vpop.f32.mrb[0].mxu0
      %v2457 = vpop.f32.mrb[0].mxu0
      %v2458 = vadd.f32 0.0, %v2457
      %v2459 = vpop.f32.mrb[0].mxu0
      %2460 = vmatprep.mubr.bf16.mxu0 0
      %2461 = vmatmul.mubr.bf16.gmra.mrb[0].mxu0 %v2321
      %v2462 = vpop.f32.mrb[0].mxu0
      %v2463 = vadd.f32 0.0, %v2462
      %v2464 = vpop.f32.mrb[0].mxu0
      %v2465 = vpop.f32.mrb[0].mxu0
      %v2466 = vadd.f32 0.0, %v2465
      %v2467 = vpop.f32.mrb[0].mxu0
      %2468 = vmatprep.mubr.bf16.mxu0 0
      %2469 = vmatmul.mubr.bf16.gmra.mrb[0].mxu0 %v2324
      %v2470 = vpop.f32.mrb[0].mxu0
      %v2471 = vadd.f32 0.0, %v2470
      %v2472 = vpop.f32.mrb[0].mxu0
      %v2473 = vpop.f32.mrb[0].mxu0
      %v2474 = vadd.f32 0.0, %v2473
      %v2475 = vpop.f32.mrb[0].mxu0
      %2476 = vmatprep.mubr.bf16.mxu0 0
      %2477 = vmatmul.mubr.bf16.gmra.mrb[0].mxu0 %v2327
      %v2478 = vpop.f32.mrb[0].mxu0
      %v2479 = vadd.f32 0.0, %v2478
      %v2480 = vpop.f32.mrb[0].mxu0
      %v2481 = vpop.f32.mrb[0].mxu0
      %v2482 = vadd.f32 0.0, %v2481
      %v2483 = vpop.f32.mrb[0].mxu0
      %2484 = vmatprep.mubr.bf16.mxu0 0
      %2485 = vmatmul.mubr.bf16.gmra.mrb[0].mxu0 %v2330
      %v2486 = vpop.f32.mrb[0].mxu0
      %v2487 = vadd.f32 0.0, %v2486
      %v2488 = vpop.f32.mrb[0].mxu0
      %v2489 = vpop.f32.mrb[0].mxu0
      %v2490 = vadd.f32 0.0, %v2489
      %v2491 = vpop.f32.mrb[0].mxu0
      %2492 = vdwg.mxu0
      %v2493 = vadd.f32 %v2187, %v2367
      %v2494 = vadd.f32 %v2188, %v2370
      %v2495 = vadd.f32 %v2189, %v2375
      %v2496 = vadd.f32 %v2190, %v2378
      %v2497 = vadd.f32 %v2191, %v2383
      %v2498 = vadd.f32 %v2192, %v2386
      %v2499 = vadd.f32 %v2193, %v2391
      %v2500 = vadd.f32 %v2194, %v2394
      %v2501 = vadd.f32 %v2195, %v2399
      %v2502 = vadd.f32 %v2196, %v2402
      %v2503 = vadd.f32 %v2197, %v2407
      %v2504 = vadd.f32 %v2198, %v2410
      %v2505 = vadd.f32 %v2199, %v2415
      %v2506 = vadd.f32 %v2200, %v2418
      %v2507 = vadd.f32 %v2201, %v2423
      %v2508 = vadd.f32 %v2202, %v2426
      %v2509 = vadd.f32 %v2203, %v2431
      %v2510 = vadd.f32 %v2204, %v2434
      %v2511 = vadd.f32 %v2205, %v2439
      %v2512 = vadd.f32 %v2206, %v2442
      %v2513 = vadd.f32 %v2207, %v2447
      %v2514 = vadd.f32 %v2208, %v2450
      %v2515 = vadd.f32 %v2209, %v2455
      %v2516 = vadd.f32 %v2210, %v2458
      %v2517 = vadd.f32 %v2211, %v2463
      %v2518 = vadd.f32 %v2212, %v2466
      %v2519 = vadd.f32 %v2213, %v2471
      %v2520 = vadd.f32 %v2214, %v2474
      %v2521 = vadd.f32 %v2215, %v2479
      %v2522 = vadd.f32 %v2216, %v2482
      %v2523 = vadd.f32 %v2217, %v2487
      %v2524 = vadd.f32 %v2218, %v2490
      %s2525 = scalar_lea.vmem [#allocation2], 48
      %v2526 = vld [vmem:[%s2525] sm:$0xff]
      %v2527 = vld [vmem:[%s2525 + $0x8] sm:$0xff]
      %v2528 = vld [vmem:[%s2525 + $0x18] sm:$0xff]
      %v2529 = vld [vmem:[%s2525 + $0x20] sm:$0xff]
      %v2530 = vld [vmem:[%s2525 + $0x30] sm:$0xff]
      %v2531 = vld [vmem:[%s2525 + $0x38] sm:$0xff]
      %v2532 = vld [vmem:[%s2525 + $0x48] sm:$0xff]
      %v2533 = vld [vmem:[%s2525 + $0x50] sm:$0xff]
      %v2534 = vld [vmem:[%s2525 + $0x60] sm:$0xff]
      %v2535 = vld [vmem:[%s2525 + $0x68] sm:$0xff]
      %v2536 = vld [vmem:[%s2525 + $0x78] sm:$0xff]
      %v2537 = vld [vmem:[%s2525 + $0x80] sm:$0xff]
      %v2538 = vld [vmem:[%s2525 + $0x90] sm:$0xff]
      %v2539 = vld [vmem:[%s2525 + $0x98] sm:$0xff]
      %v2540 = vld [vmem:[%s2525 + $0xa8] sm:$0xff]
      %v2541 = vld [vmem:[%s2525 + $0xb0] sm:$0xff]
      %v2542 = vld [vmem:[%s2525 + $0xc0] sm:$0xff]
      %v2543 = vld [vmem:[%s2525 + $0xc8] sm:$0xff]
      %v2544 = vld [vmem:[%s2525 + $0xd8] sm:$0xff]
      %v2545 = vld [vmem:[%s2525 + $0xe0] sm:$0xff]
      %v2546 = vld [vmem:[%s2525 + $0xf0] sm:$0xff]
      %v2547 = vld [vmem:[%s2525 + $0xf8] sm:$0xff]
      %v2548 = vld [vmem:[%s2525 + $0x108] sm:$0xff]
      %v2549 = vld [vmem:[%s2525 + $0x110] sm:$0xff]
      %v2550 = vld [vmem:[%s2525 + $0x120] sm:$0xff]
      %v2551 = vld [vmem:[%s2525 + $0x128] sm:$0xff]
      %v2552 = vld [vmem:[%s2525 + $0x138] sm:$0xff]
      %v2553 = vld [vmem:[%s2525 + $0x140] sm:$0xff]
      %v2554 = vld [vmem:[%s2525 + $0x150] sm:$0xff]
      %v2555 = vld [vmem:[%s2525 + $0x158] sm:$0xff]
      %v2556 = vld [vmem:[%s2525 + $0x168] sm:$0xff]
      %v2557 = vld [vmem:[%s2525 + $0x170] sm:$0xff]
      %v2558 = vpack.c.bf16 %v2527, %v2526
      %v2559 = vpack.c.bf16 %v2529, %v2528
      %v2560 = vpack.c.bf16 %v2531, %v2530
      %v2561 = vpack.c.bf16 %v2533, %v2532
      %v2562 = vpack.c.bf16 %v2535, %v2534
      %v2563 = vpack.c.bf16 %v2537, %v2536
      %v2564 = vpack.c.bf16 %v2539, %v2538
      %v2565 = vpack.c.bf16 %v2541, %v2540
      %v2566 = vpack.c.bf16 %v2543, %v2542
      %v2567 = vpack.c.bf16 %v2545, %v2544
      %v2568 = vpack.c.bf16 %v2547, %v2546
      %v2569 = vpack.c.bf16 %v2549, %v2548
      %v2570 = vpack.c.bf16 %v2551, %v2550
      %v2571 = vpack.c.bf16 %v2553, %v2552
      %v2572 = vpack.c.bf16 %v2555, %v2554
      %v2573 = vpack.c.bf16 %v2557, %v2556
      %s2574 = scalar_lea.vmem %s3, 96
      %v2575 = vld [vmem:[%s2574] sm:$0xf]
      %v2576 = vld [vmem:[%s2574 + $0x4] sm:$0xf]
      %v2577 = vld [vmem:[%s2574 + $0x8] sm:$0xf]
      %v2578 = vld [vmem:[%s2574 + $0xc] sm:$0xf]
      %v2583 = vunpack.c.l.b16 %v2575
      %v2584 = vunpack.c.l.b16 %v2576
      %v2585 = vunpack.c.l.b16 %v2577
      %v2586 = vunpack.c.l.b16 %v2578
      %v2587 = vpack.c.b16 %v2584, %v2583
      %v2588 = vpack.c.b16 %v2586, %v2585
      %v2592 = vsel %vm716, %v2558, 0
      %v2595 = vsel %vm716, %v2559, 0
      %v2598 = vsel %vm716, %v2560, 0
      %v2601 = vsel %vm716, %v2561, 0
      %v2604 = vsel %vm716, %v2562, 0
      %v2607 = vsel %vm716, %v2563, 0
      %v2610 = vsel %vm716, %v2564, 0
      %v2613 = vsel %vm716, %v2565, 0
      %v2616 = vsel %vm716, %v2566, 0
      %v2619 = vsel %vm716, %v2567, 0
      %v2622 = vsel %vm716, %v2568, 0
      %v2625 = vsel %vm716, %v2569, 0
      %v2628 = vsel %vm716, %v2570, 0
      %v2631 = vsel %vm716, %v2571, 0
      %v2634 = vsel %vm716, %v2572, 0
      %v2637 = vsel %vm716, %v2573, 0
      %2639 = vmatprep.subr.bf16.mxu0 0
      %2640 = vmatpush1.bf16.msra.mxu0 %v2587
      %2641 = vmatprep.subr.bf16.mxu0 0
      %2642 = vmatpush1.bf16.msra.mxu0 %v2588
      %2643 = vmatprep.subr.bf16.mxu0 0
      %2644 = vmatpush1.bf16.msra.mxu0 0
      %2645 = vmatprep.subr.bf16.mxu0 0
      %2646 = vmatpush1.bf16.msra.mxu0 0
      %2647 = vmatprep.subr.bf16.mxu0 0
      %2648 = vmatpush1.bf16.msra.mxu0 0
      %2649 = vmatprep.subr.bf16.mxu0 0
      %2650 = vmatpush1.bf16.msra.mxu0 0
      %2651 = vmatprep.subr.bf16.mxu0 0
      %2652 = vmatpush1.bf16.msra.mxu0 0
      %2653 = vmatprep.subr.bf16.mxu0 0
      %2654 = vmatpush1.bf16.msra.mxu0 0
      %2655 = vmatprep.subr.bf16.mxu0 0
      %2656 = vmatpush1.bf16.msra.mxu0 0
      %2657 = vmatprep.subr.bf16.mxu0 0
      %2658 = vmatpush1.bf16.msra.mxu0 0
      %2659 = vmatprep.subr.bf16.mxu0 0
      %2660 = vmatpush1.bf16.msra.mxu0 0
      %2661 = vmatprep.subr.bf16.mxu0 0
      %2662 = vmatpush1.bf16.msra.mxu0 0
      %2663 = vmatprep.subr.bf16.mxu0 0
      %2664 = vmatpush1.bf16.msra.mxu0 0
      %2665 = vmatprep.subr.bf16.mxu0 0
      %2666 = vmatpush1.bf16.msra.mxu0 0
      %2667 = vmatprep.subr.bf16.mxu0 0
      %2668 = vmatpush1.bf16.msra.mxu0 0
      %2669 = vmatprep.subr.bf16.mxu0 0
      %2670 = vmatpush1.bf16.msra.mxu0 0
      %2671 = vmatprep.mubr.bf16.mxu0 0
      %2672 = vmatmul.mubr.bf16.gmra.mrb[0].mxu0 %v2592
      %v2673 = vpop.f32.mrb[0].mxu0
      %v2674 = vadd.f32 0.0, %v2673
      %v2675 = vpop.f32.mrb[0].mxu0
      %v2676 = vpop.f32.mrb[0].mxu0
      %v2677 = vadd.f32 0.0, %v2676
      %v2678 = vpop.f32.mrb[0].mxu0
      %2679 = vmatprep.mubr.bf16.mxu0 0
      %2680 = vmatmul.mubr.bf16.gmra.mrb[0].mxu0 %v2595
      %v2681 = vpop.f32.mrb[0].mxu0
      %v2682 = vadd.f32 0.0, %v2681
      %v2683 = vpop.f32.mrb[0].mxu0
      %v2684 = vpop.f32.mrb[0].mxu0
      %v2685 = vadd.f32 0.0, %v2684
      %v2686 = vpop.f32.mrb[0].mxu0
      %2687 = vmatprep.mubr.bf16.mxu0 0
      %2688 = vmatmul.mubr.bf16.gmra.mrb[0].mxu0 %v2598
      %v2689 = vpop.f32.mrb[0].mxu0
      %v2690 = vadd.f32 0.0, %v2689
      %v2691 = vpop.f32.mrb[0].mxu0
      %v2692 = vpop.f32.mrb[0].mxu0
      %v2693 = vadd.f32 0.0, %v2692
      %v2694 = vpop.f32.mrb[0].mxu0
      %2695 = vmatprep.mubr.bf16.mxu0 0
      %2696 = vmatmul.mubr.bf16.gmra.mrb[0].mxu0 %v2601
      %v2697 = vpop.f32.mrb[0].mxu0
      %v2698 = vadd.f32 0.0, %v2697
      %v2699 = vpop.f32.mrb[0].mxu0
      %v2700 = vpop.f32.mrb[0].mxu0
      %v2701 = vadd.f32 0.0, %v2700
      %v2702 = vpop.f32.mrb[0].mxu0
      %2703 = vmatprep.mubr.bf16.mxu0 0
      %2704 = vmatmul.mubr.bf16.gmra.mrb[0].mxu0 %v2604
      %v2705 = vpop.f32.mrb[0].mxu0
      %v2706 = vadd.f32 0.0, %v2705
      %v2707 = vpop.f32.mrb[0].mxu0
      %v2708 = vpop.f32.mrb[0].mxu0
      %v2709 = vadd.f32 0.0, %v2708
      %v2710 = vpop.f32.mrb[0].mxu0
      %2711 = vmatprep.mubr.bf16.mxu0 0
      %2712 = vmatmul.mubr.bf16.gmra.mrb[0].mxu0 %v2607
      %v2713 = vpop.f32.mrb[0].mxu0
      %v2714 = vadd.f32 0.0, %v2713
      %v2715 = vpop.f32.mrb[0].mxu0
      %v2716 = vpop.f32.mrb[0].mxu0
      %v2717 = vadd.f32 0.0, %v2716
      %v2718 = vpop.f32.mrb[0].mxu0
      %2719 = vmatprep.mubr.bf16.mxu0 0
      %2720 = vmatmul.mubr.bf16.gmra.mrb[0].mxu0 %v2610
      %v2721 = vpop.f32.mrb[0].mxu0
      %v2722 = vadd.f32 0.0, %v2721
      %v2723 = vpop.f32.mrb[0].mxu0
      %v2724 = vpop.f32.mrb[0].mxu0
      %v2725 = vadd.f32 0.0, %v2724
      %v2726 = vpop.f32.mrb[0].mxu0
      %2727 = vmatprep.mubr.bf16.mxu0 0
      %2728 = vmatmul.mubr.bf16.gmra.mrb[0].mxu0 %v2613
      %v2729 = vpop.f32.mrb[0].mxu0
      %v2730 = vadd.f32 0.0, %v2729
      %v2731 = vpop.f32.mrb[0].mxu0
      %v2732 = vpop.f32.mrb[0].mxu0
      %v2733 = vadd.f32 0.0, %v2732
      %v2734 = vpop.f32.mrb[0].mxu0
      %2735 = vmatprep.mubr.bf16.mxu0 0
      %2736 = vmatmul.mubr.bf16.gmra.mrb[0].mxu0 %v2616
      %v2737 = vpop.f32.mrb[0].mxu0
      %v2738 = vadd.f32 0.0, %v2737
      %v2739 = vpop.f32.mrb[0].mxu0
      %v2740 = vpop.f32.mrb[0].mxu0
      %v2741 = vadd.f32 0.0, %v2740
      %v2742 = vpop.f32.mrb[0].mxu0
      %2743 = vmatprep.mubr.bf16.mxu0 0
      %2744 = vmatmul.mubr.bf16.gmra.mrb[0].mxu0 %v2619
      %v2745 = vpop.f32.mrb[0].mxu0
      %v2746 = vadd.f32 0.0, %v2745
      %v2747 = vpop.f32.mrb[0].mxu0
      %v2748 = vpop.f32.mrb[0].mxu0
      %v2749 = vadd.f32 0.0, %v2748
      %v2750 = vpop.f32.mrb[0].mxu0
      %2751 = vmatprep.mubr.bf16.mxu0 0
      %2752 = vmatmul.mubr.bf16.gmra.mrb[0].mxu0 %v2622
      %v2753 = vpop.f32.mrb[0].mxu0
      %v2754 = vadd.f32 0.0, %v2753
      %v2755 = vpop.f32.mrb[0].mxu0
      %v2756 = vpop.f32.mrb[0].mxu0
      %v2757 = vadd.f32 0.0, %v2756
      %v2758 = vpop.f32.mrb[0].mxu0
      %2759 = vmatprep.mubr.bf16.mxu0 0
      %2760 = vmatmul.mubr.bf16.gmra.mrb[0].mxu0 %v2625
      %v2761 = vpop.f32.mrb[0].mxu0
      %v2762 = vadd.f32 0.0, %v2761
      %v2763 = vpop.f32.mrb[0].mxu0
      %v2764 = vpop.f32.mrb[0].mxu0
      %v2765 = vadd.f32 0.0, %v2764
      %v2766 = vpop.f32.mrb[0].mxu0
      %2767 = vmatprep.mubr.bf16.mxu0 0
      %2768 = vmatmul.mubr.bf16.gmra.mrb[0].mxu0 %v2628
      %v2769 = vpop.f32.mrb[0].mxu0
      %v2770 = vadd.f32 0.0, %v2769
      %v2771 = vpop.f32.mrb[0].mxu0
      %v2772 = vpop.f32.mrb[0].mxu0
      %v2773 = vadd.f32 0.0, %v2772
      %v2774 = vpop.f32.mrb[0].mxu0
      %2775 = vmatprep.mubr.bf16.mxu0 0
      %2776 = vmatmul.mubr.bf16.gmra.mrb[0].mxu0 %v2631
      %v2777 = vpop.f32.mrb[0].mxu0
      %v2778 = vadd.f32 0.0, %v2777
      %v2779 = vpop.f32.mrb[0].mxu0
      %v2780 = vpop.f32.mrb[0].mxu0
      %v2781 = vadd.f32 0.0, %v2780
      %v2782 = vpop.f32.mrb[0].mxu0
      %2783 = vmatprep.mubr.bf16.mxu0 0
      %2784 = vmatmul.mubr.bf16.gmra.mrb[0].mxu0 %v2634
      %v2785 = vpop.f32.mrb[0].mxu0
      %v2786 = vadd.f32 0.0, %v2785
      %v2787 = vpop.f32.mrb[0].mxu0
      %v2788 = vpop.f32.mrb[0].mxu0
      %v2789 = vadd.f32 0.0, %v2788
      %v2790 = vpop.f32.mrb[0].mxu0
      %2791 = vmatprep.mubr.bf16.mxu0 0
      %2792 = vmatmul.mubr.bf16.gmra.mrb[0].mxu0 %v2637
      %v2793 = vpop.f32.mrb[0].mxu0
      %v2794 = vadd.f32 0.0, %v2793
      %v2795 = vpop.f32.mrb[0].mxu0
      %v2796 = vpop.f32.mrb[0].mxu0
      %v2797 = vadd.f32 0.0, %v2796
      %v2798 = vpop.f32.mrb[0].mxu0
      %2799 = vdwg.mxu0
      %v2800 = vadd.f32 %v2493, %v2674
      %v2801 = vadd.f32 %v2494, %v2677
      %v2802 = vadd.f32 %v2495, %v2682
      %v2803 = vadd.f32 %v2496, %v2685
      %v2804 = vadd.f32 %v2497, %v2690
      %v2805 = vadd.f32 %v2498, %v2693
      %v2806 = vadd.f32 %v2499, %v2698
      %v2807 = vadd.f32 %v2500, %v2701
      %v2808 = vadd.f32 %v2501, %v2706
      %v2809 = vadd.f32 %v2502, %v2709
      %v2810 = vadd.f32 %v2503, %v2714
      %v2811 = vadd.f32 %v2504, %v2717
      %v2812 = vadd.f32 %v2505, %v2722
      %v2813 = vadd.f32 %v2506, %v2725
      %v2814 = vadd.f32 %v2507, %v2730
      %v2815 = vadd.f32 %v2508, %v2733
      %v2816 = vadd.f32 %v2509, %v2738
      %v2817 = vadd.f32 %v2510, %v2741
      %v2818 = vadd.f32 %v2511, %v2746
      %v2819 = vadd.f32 %v2512, %v2749
      %v2820 = vadd.f32 %v2513, %v2754
      %v2821 = vadd.f32 %v2514, %v2757
      %v2822 = vadd.f32 %v2515, %v2762
      %v2823 = vadd.f32 %v2516, %v2765
      %v2824 = vadd.f32 %v2517, %v2770
      %v2825 = vadd.f32 %v2518, %v2773
      %v2826 = vadd.f32 %v2519, %v2778
      %v2827 = vadd.f32 %v2520, %v2781
      %v2828 = vadd.f32 %v2521, %v2786
      %v2829 = vadd.f32 %v2522, %v2789
      %v2830 = vadd.f32 %v2523, %v2794
      %v2831 = vadd.f32 %v2524, %v2797
      %v2832 = vld [vmem:[%s2525 + $0x1] sm:$0xff]
      %v2833 = vld [vmem:[%s2525 + $0x9] sm:$0xff]
      %v2834 = vld [vmem:[%s2525 + $0x19] sm:$0xff]
      %v2835 = vld [vmem:[%s2525 + $0x21] sm:$0xff]
      %v2836 = vld [vmem:[%s2525 + $0x31] sm:$0xff]
      %v2837 = vld [vmem:[%s2525 + $0x39] sm:$0xff]
      %v2838 = vld [vmem:[%s2525 + $0x49] sm:$0xff]
      %v2839 = vld [vmem:[%s2525 + $0x51] sm:$0xff]
      %v2840 = vld [vmem:[%s2525 + $0x61] sm:$0xff]
      %v2841 = vld [vmem:[%s2525 + $0x69] sm:$0xff]
      %v2842 = vld [vmem:[%s2525 + $0x79] sm:$0xff]
      %v2843 = vld [vmem:[%s2525 + $0x81] sm:$0xff]
      %v2844 = vld [vmem:[%s2525 + $0x91] sm:$0xff]
      %v2845 = vld [vmem:[%s2525 + $0x99] sm:$0xff]
      %v2846 = vld [vmem:[%s2525 + $0xa9] sm:$0xff]
      %v2847 = vld [vmem:[%s2525 + $0xb1] sm:$0xff]
      %v2848 = vld [vmem:[%s2525 + $0xc1] sm:$0xff]
      %v2849 = vld [vmem:[%s2525 + $0xc9] sm:$0xff]
      %v2850 = vld [vmem:[%s2525 + $0xd9] sm:$0xff]
      %v2851 = vld [vmem:[%s2525 + $0xe1] sm:$0xff]
      %v2852 = vld [vmem:[%s2525 + $0xf1] sm:$0xff]
      %v2853 = vld [vmem:[%s2525 + $0xf9] sm:$0xff]
      %v2854 = vld [vmem:[%s2525 + $0x109] sm:$0xff]
      %v2855 = vld [vmem:[%s2525 + $0x111] sm:$0xff]
      %v2856 = vld [vmem:[%s2525 + $0x121] sm:$0xff]
      %v2857 = vld [vmem:[%s2525 + $0x129] sm:$0xff]
      %v2858 = vld [vmem:[%s2525 + $0x139] sm:$0xff]
      %v2859 = vld [vmem:[%s2525 + $0x141] sm:$0xff]
      %v2860 = vld [vmem:[%s2525 + $0x151] sm:$0xff]
      %v2861 = vld [vmem:[%s2525 + $0x159] sm:$0xff]
      %v2862 = vld [vmem:[%s2525 + $0x169] sm:$0xff]
      %v2863 = vld [vmem:[%s2525 + $0x171] sm:$0xff]
      %v2864 = vpack.c.bf16 %v2833, %v2832
      %v2865 = vpack.c.bf16 %v2835, %v2834
      %v2866 = vpack.c.bf16 %v2837, %v2836
      %v2867 = vpack.c.bf16 %v2839, %v2838
      %v2868 = vpack.c.bf16 %v2841, %v2840
      %v2869 = vpack.c.bf16 %v2843, %v2842
      %v2870 = vpack.c.bf16 %v2845, %v2844
      %v2871 = vpack.c.bf16 %v2847, %v2846
      %v2872 = vpack.c.bf16 %v2849, %v2848
      %v2873 = vpack.c.bf16 %v2851, %v2850
      %v2874 = vpack.c.bf16 %v2853, %v2852
      %v2875 = vpack.c.bf16 %v2855, %v2854
      %v2876 = vpack.c.bf16 %v2857, %v2856
      %v2877 = vpack.c.bf16 %v2859, %v2858
      %v2878 = vpack.c.bf16 %v2861, %v2860
      %v2879 = vpack.c.bf16 %v2863, %v2862
      %s2880 = scalar_lea.vmem %s3, 112
      %v2881 = vld [vmem:[%s2880] sm:$0xf]
      %v2882 = vld [vmem:[%s2880 + $0x4] sm:$0xf]
      %v2883 = vld [vmem:[%s2880 + $0x8] sm:$0xf]
      %v2884 = vld [vmem:[%s2880 + $0xc] sm:$0xf]
      %v2889 = vunpack.c.l.b16 %v2881
      %v2890 = vunpack.c.l.b16 %v2882
      %v2891 = vunpack.c.l.b16 %v2883
      %v2892 = vunpack.c.l.b16 %v2884
      %v2893 = vpack.c.b16 %v2890, %v2889
      %v2894 = vpack.c.b16 %v2892, %v2891
      %v2898 = vsel %vm716, %v2864, 0
      %v2901 = vsel %vm716, %v2865, 0
      %v2904 = vsel %vm716, %v2866, 0
      %v2907 = vsel %vm716, %v2867, 0
      %v2910 = vsel %vm716, %v2868, 0
      %v2913 = vsel %vm716, %v2869, 0
      %v2916 = vsel %vm716, %v2870, 0
      %v2919 = vsel %vm716, %v2871, 0
      %v2922 = vsel %vm716, %v2872, 0
      %v2925 = vsel %vm716, %v2873, 0
      %v2928 = vsel %vm716, %v2874, 0
      %v2931 = vsel %vm716, %v2875, 0
      %v2934 = vsel %vm716, %v2876, 0
      %v2937 = vsel %vm716, %v2877, 0
      %v2940 = vsel %vm716, %v2878, 0
      %v2943 = vsel %vm716, %v2879, 0
      %2945 = vmatprep.subr.bf16.mxu0 0
      %2946 = vmatpush1.bf16.msra.mxu0 %v2893
      %2947 = vmatprep.subr.bf16.mxu0 0
      %2948 = vmatpush1.bf16.msra.mxu0 %v2894
      %2949 = vmatprep.subr.bf16.mxu0 0
      %2950 = vmatpush1.bf16.msra.mxu0 0
      %2951 = vmatprep.subr.bf16.mxu0 0
      %2952 = vmatpush1.bf16.msra.mxu0 0
      %2953 = vmatprep.subr.bf16.mxu0 0
      %2954 = vmatpush1.bf16.msra.mxu0 0
      %2955 = vmatprep.subr.bf16.mxu0 0
      %2956 = vmatpush1.bf16.msra.mxu0 0
      %2957 = vmatprep.subr.bf16.mxu0 0
      %2958 = vmatpush1.bf16.msra.mxu0 0
      %2959 = vmatprep.subr.bf16.mxu0 0
      %2960 = vmatpush1.bf16.msra.mxu0 0
      %2961 = vmatprep.subr.bf16.mxu0 0
      %2962 = vmatpush1.bf16.msra.mxu0 0
      %2963 = vmatprep.subr.bf16.mxu0 0
      %2964 = vmatpush1.bf16.msra.mxu0 0
      %2965 = vmatprep.subr.bf16.mxu0 0
      %2966 = vmatpush1.bf16.msra.mxu0 0
      %2967 = vmatprep.subr.bf16.mxu0 0
      %2968 = vmatpush1.bf16.msra.mxu0 0
      %2969 = vmatprep.subr.bf16.mxu0 0
      %2970 = vmatpush1.bf16.msra.mxu0 0
      %2971 = vmatprep.subr.bf16.mxu0 0
      %2972 = vmatpush1.bf16.msra.mxu0 0
      %2973 = vmatprep.subr.bf16.mxu0 0
      %2974 = vmatpush1.bf16.msra.mxu0 0
      %2975 = vmatprep.subr.bf16.mxu0 0
      %2976 = vmatpush1.bf16.msra.mxu0 0
      %2977 = vmatprep.mubr.bf16.mxu0 0
      %2978 = vmatmul.mubr.bf16.gmra.mrb[0].mxu0 %v2898
      %v2979 = vpop.f32.mrb[0].mxu0
      %v2980 = vadd.f32 0.0, %v2979
      %v2981 = vpop.f32.mrb[0].mxu0
      %v2982 = vpop.f32.mrb[0].mxu0
      %v2983 = vadd.f32 0.0, %v2982
      %v2984 = vpop.f32.mrb[0].mxu0
      %2985 = vmatprep.mubr.bf16.mxu0 0
      %2986 = vmatmul.mubr.bf16.gmra.mrb[0].mxu0 %v2901
      %v2987 = vpop.f32.mrb[0].mxu0
      %v2988 = vadd.f32 0.0, %v2987
      %v2989 = vpop.f32.mrb[0].mxu0
      %v2990 = vpop.f32.mrb[0].mxu0
      %v2991 = vadd.f32 0.0, %v2990
      %v2992 = vpop.f32.mrb[0].mxu0
      %2993 = vmatprep.mubr.bf16.mxu0 0
      %2994 = vmatmul.mubr.bf16.gmra.mrb[0].mxu0 %v2904
      %v2995 = vpop.f32.mrb[0].mxu0
      %v2996 = vadd.f32 0.0, %v2995
      %v2997 = vpop.f32.mrb[0].mxu0
      %v2998 = vpop.f32.mrb[0].mxu0
      %v2999 = vadd.f32 0.0, %v2998
      %v3000 = vpop.f32.mrb[0].mxu0
      %3001 = vmatprep.mubr.bf16.mxu0 0
      %3002 = vmatmul.mubr.bf16.gmra.mrb[0].mxu0 %v2907
      %v3003 = vpop.f32.mrb[0].mxu0
      %v3004 = vadd.f32 0.0, %v3003
      %v3005 = vpop.f32.mrb[0].mxu0
      %v3006 = vpop.f32.mrb[0].mxu0
      %v3007 = vadd.f32 0.0, %v3006
      %v3008 = vpop.f32.mrb[0].mxu0
      %3009 = vmatprep.mubr.bf16.mxu0 0
      %3010 = vmatmul.mubr.bf16.gmra.mrb[0].mxu0 %v2910
      %v3011 = vpop.f32.mrb[0].mxu0
      %v3012 = vadd.f32 0.0, %v3011
      %v3013 = vpop.f32.mrb[0].mxu0
      %v3014 = vpop.f32.mrb[0].mxu0
      %v3015 = vadd.f32 0.0, %v3014
      %v3016 = vpop.f32.mrb[0].mxu0
      %3017 = vmatprep.mubr.bf16.mxu0 0
      %3018 = vmatmul.mubr.bf16.gmra.mrb[0].mxu0 %v2913
      %v3019 = vpop.f32.mrb[0].mxu0
      %v3020 = vadd.f32 0.0, %v3019
      %v3021 = vpop.f32.mrb[0].mxu0
      %v3022 = vpop.f32.mrb[0].mxu0
      %v3023 = vadd.f32 0.0, %v3022
      %v3024 = vpop.f32.mrb[0].mxu0
      %3025 = vmatprep.mubr.bf16.mxu0 0
      %3026 = vmatmul.mubr.bf16.gmra.mrb[0].mxu0 %v2916
      %v3027 = vpop.f32.mrb[0].mxu0
      %v3028 = vadd.f32 0.0, %v3027
      %v3029 = vpop.f32.mrb[0].mxu0
      %v3030 = vpop.f32.mrb[0].mxu0
      %v3031 = vadd.f32 0.0, %v3030
      %v3032 = vpop.f32.mrb[0].mxu0
      %3033 = vmatprep.mubr.bf16.mxu0 0
      %3034 = vmatmul.mubr.bf16.gmra.mrb[0].mxu0 %v2919
      %v3035 = vpop.f32.mrb[0].mxu0
      %v3036 = vadd.f32 0.0, %v3035
      %v3037 = vpop.f32.mrb[0].mxu0
      %v3038 = vpop.f32.mrb[0].mxu0
      %v3039 = vadd.f32 0.0, %v3038
      %v3040 = vpop.f32.mrb[0].mxu0
      %3041 = vmatprep.mubr.bf16.mxu0 0
      %3042 = vmatmul.mubr.bf16.gmra.mrb[0].mxu0 %v2922
      %v3043 = vpop.f32.mrb[0].mxu0
      %v3044 = vadd.f32 0.0, %v3043
      %v3045 = vpop.f32.mrb[0].mxu0
      %v3046 = vpop.f32.mrb[0].mxu0
      %v3047 = vadd.f32 0.0, %v3046
      %v3048 = vpop.f32.mrb[0].mxu0
      %3049 = vmatprep.mubr.bf16.mxu0 0
      %3050 = vmatmul.mubr.bf16.gmra.mrb[0].mxu0 %v2925
      %v3051 = vpop.f32.mrb[0].mxu0
      %v3052 = vadd.f32 0.0, %v3051
      %v3053 = vpop.f32.mrb[0].mxu0
      %v3054 = vpop.f32.mrb[0].mxu0
      %v3055 = vadd.f32 0.0, %v3054
      %v3056 = vpop.f32.mrb[0].mxu0
      %3057 = vmatprep.mubr.bf16.mxu0 0
      %3058 = vmatmul.mubr.bf16.gmra.mrb[0].mxu0 %v2928
      %v3059 = vpop.f32.mrb[0].mxu0
      %v3060 = vadd.f32 0.0, %v3059
      %v3061 = vpop.f32.mrb[0].mxu0
      %v3062 = vpop.f32.mrb[0].mxu0
      %v3063 = vadd.f32 0.0, %v3062
      %v3064 = vpop.f32.mrb[0].mxu0
      %3065 = vmatprep.mubr.bf16.mxu0 0
      %3066 = vmatmul.mubr.bf16.gmra.mrb[0].mxu0 %v2931
      %v3067 = vpop.f32.mrb[0].mxu0
      %v3068 = vadd.f32 0.0, %v3067
      %v3069 = vpop.f32.mrb[0].mxu0
      %v3070 = vpop.f32.mrb[0].mxu0
      %v3071 = vadd.f32 0.0, %v3070
      %v3072 = vpop.f32.mrb[0].mxu0
      %3073 = vmatprep.mubr.bf16.mxu0 0
      %3074 = vmatmul.mubr.bf16.gmra.mrb[0].mxu0 %v2934
      %v3075 = vpop.f32.mrb[0].mxu0
      %v3076 = vadd.f32 0.0, %v3075
      %v3077 = vpop.f32.mrb[0].mxu0
      %v3078 = vpop.f32.mrb[0].mxu0
      %v3079 = vadd.f32 0.0, %v3078
      %v3080 = vpop.f32.mrb[0].mxu0
      %3081 = vmatprep.mubr.bf16.mxu0 0
      %3082 = vmatmul.mubr.bf16.gmra.mrb[0].mxu0 %v2937
      %v3083 = vpop.f32.mrb[0].mxu0
      %v3084 = vadd.f32 0.0, %v3083
      %v3085 = vpop.f32.mrb[0].mxu0
      %v3086 = vpop.f32.mrb[0].mxu0
      %v3087 = vadd.f32 0.0, %v3086
      %v3088 = vpop.f32.mrb[0].mxu0
      %3089 = vmatprep.mubr.bf16.mxu0 0
      %3090 = vmatmul.mubr.bf16.gmra.mrb[0].mxu0 %v2940
      %v3091 = vpop.f32.mrb[0].mxu0
      %v3092 = vadd.f32 0.0, %v3091
      %v3093 = vpop.f32.mrb[0].mxu0
      %v3094 = vpop.f32.mrb[0].mxu0
      %v3095 = vadd.f32 0.0, %v3094
      %v3096 = vpop.f32.mrb[0].mxu0
      %3097 = vmatprep.mubr.bf16.mxu0 0
      %3098 = vmatmul.mubr.bf16.gmra.mrb[0].mxu0 %v2943
      %v3099 = vpop.f32.mrb[0].mxu0
      %v3100 = vadd.f32 0.0, %v3099
      %v3101 = vpop.f32.mrb[0].mxu0
      %v3102 = vpop.f32.mrb[0].mxu0
      %v3103 = vadd.f32 0.0, %v3102
      %v3104 = vpop.f32.mrb[0].mxu0
      %3105 = vdwg.mxu0
      %v3106 = vadd.f32 %v2800, %v2980
      %v3107 = vadd.f32 %v2801, %v2983
      %v3108 = vadd.f32 %v2802, %v2988
      %v3109 = vadd.f32 %v2803, %v2991
      %v3110 = vadd.f32 %v2804, %v2996
      %v3111 = vadd.f32 %v2805, %v2999
      %v3112 = vadd.f32 %v2806, %v3004
      %v3113 = vadd.f32 %v2807, %v3007
      %v3114 = vadd.f32 %v2808, %v3012
      %v3115 = vadd.f32 %v2809, %v3015
      %v3116 = vadd.f32 %v2810, %v3020
      %v3117 = vadd.f32 %v2811, %v3023
      %v3118 = vadd.f32 %v2812, %v3028
      %v3119 = vadd.f32 %v2813, %v3031
      %v3120 = vadd.f32 %v2814, %v3036
      %v3121 = vadd.f32 %v2815, %v3039
      %v3122 = vadd.f32 %v2816, %v3044
      %v3123 = vadd.f32 %v2817, %v3047
      %v3124 = vadd.f32 %v2818, %v3052
      %v3125 = vadd.f32 %v2819, %v3055
      %v3126 = vadd.f32 %v2820, %v3060
      %v3127 = vadd.f32 %v2821, %v3063
      %v3128 = vadd.f32 %v2822, %v3068
      %v3129 = vadd.f32 %v2823, %v3071
      %v3130 = vadd.f32 %v2824, %v3076
      %v3131 = vadd.f32 %v2825, %v3079
      %v3132 = vadd.f32 %v2826, %v3084
      %v3133 = vadd.f32 %v2827, %v3087
      %v3134 = vadd.f32 %v2828, %v3092
      %v3135 = vadd.f32 %v2829, %v3095
      %v3136 = vadd.f32 %v2830, %v3100
      %v3137 = vadd.f32 %v2831, %v3103
      %v3138 = vld [vmem:[%s2525 + $0x2] sm:$0xff]
      %v3139 = vld [vmem:[%s2525 + $0xa] sm:$0xff]
      %v3140 = vld [vmem:[%s2525 + $0x1a] sm:$0xff]
      %v3141 = vld [vmem:[%s2525 + $0x22] sm:$0xff]
      %v3142 = vld [vmem:[%s2525 + $0x32] sm:$0xff]
      %v3143 = vld [vmem:[%s2525 + $0x3a] sm:$0xff]
      %v3144 = vld [vmem:[%s2525 + $0x4a] sm:$0xff]
      %v3145 = vld [vmem:[%s2525 + $0x52] sm:$0xff]
      %v3146 = vld [vmem:[%s2525 + $0x62] sm:$0xff]
      %v3147 = vld [vmem:[%s2525 + $0x6a] sm:$0xff]
      %v3148 = vld [vmem:[%s2525 + $0x7a] sm:$0xff]
      %v3149 = vld [vmem:[%s2525 + $0x82] sm:$0xff]
      %v3150 = vld [vmem:[%s2525 + $0x92] sm:$0xff]
      %v3151 = vld [vmem:[%s2525 + $0x9a] sm:$0xff]
      %v3152 = vld [vmem:[%s2525 + $0xaa] sm:$0xff]
      %v3153 = vld [vmem:[%s2525 + $0xb2] sm:$0xff]
      %v3154 = vld [vmem:[%s2525 + $0xc2] sm:$0xff]
      %v3155 = vld [vmem:[%s2525 + $0xca] sm:$0xff]
      %v3156 = vld [vmem:[%s2525 + $0xda] sm:$0xff]
      %v3157 = vld [vmem:[%s2525 + $0xe2] sm:$0xff]
      %v3158 = vld [vmem:[%s2525 + $0xf2] sm:$0xff]
      %v3159 = vld [vmem:[%s2525 + $0xfa] sm:$0xff]
      %v3160 = vld [vmem:[%s2525 + $0x10a] sm:$0xff]
      %v3161 = vld [vmem:[%s2525 + $0x112] sm:$0xff]
      %v3162 = vld [vmem:[%s2525 + $0x122] sm:$0xff]
      %v3163 = vld [vmem:[%s2525 + $0x12a] sm:$0xff]
      %v3164 = vld [vmem:[%s2525 + $0x13a] sm:$0xff]
      %v3165 = vld [vmem:[%s2525 + $0x142] sm:$0xff]
      %v3166 = vld [vmem:[%s2525 + $0x152] sm:$0xff]
      %v3167 = vld [vmem:[%s2525 + $0x15a] sm:$0xff]
      %v3168 = vld [vmem:[%s2525 + $0x16a] sm:$0xff]
      %v3169 = vld [vmem:[%s2525 + $0x172] sm:$0xff]
      %v3170 = vpack.c.bf16 %v3139, %v3138
      %v3171 = vpack.c.bf16 %v3141, %v3140
      %v3172 = vpack.c.bf16 %v3143, %v3142
      %v3173 = vpack.c.bf16 %v3145, %v3144
      %v3174 = vpack.c.bf16 %v3147, %v3146
      %v3175 = vpack.c.bf16 %v3149, %v3148
      %v3176 = vpack.c.bf16 %v3151, %v3150
      %v3177 = vpack.c.bf16 %v3153, %v3152
      %v3178 = vpack.c.bf16 %v3155, %v3154
      %v3179 = vpack.c.bf16 %v3157, %v3156
      %v3180 = vpack.c.bf16 %v3159, %v3158
      %v3181 = vpack.c.bf16 %v3161, %v3160
      %v3182 = vpack.c.bf16 %v3163, %v3162
      %v3183 = vpack.c.bf16 %v3165, %v3164
      %v3184 = vpack.c.bf16 %v3167, %v3166
      %v3185 = vpack.c.bf16 %v3169, %v3168
      %s3186 = scalar_lea.vmem %s3, 128
      %v3187 = vld [vmem:[%s3186] sm:$0xf]
      %v3188 = vld [vmem:[%s3186 + $0x4] sm:$0xf]
      %v3189 = vld [vmem:[%s3186 + $0x8] sm:$0xf]
      %v3190 = vld [vmem:[%s3186 + $0xc] sm:$0xf]
      %v3195 = vunpack.c.l.b16 %v3187
      %v3196 = vunpack.c.l.b16 %v3188
      %v3197 = vunpack.c.l.b16 %v3189
      %v3198 = vunpack.c.l.b16 %v3190
      %v3199 = vpack.c.b16 %v3196, %v3195
      %v3200 = vpack.c.b16 %v3198, %v3197
      %v3204 = vsel %vm716, %v3170, 0
      %v3207 = vsel %vm716, %v3171, 0
      %v3210 = vsel %vm716, %v3172, 0
      %v3213 = vsel %vm716, %v3173, 0
      %v3216 = vsel %vm716, %v3174, 0
      %v3219 = vsel %vm716, %v3175, 0
      %v3222 = vsel %vm716, %v3176, 0
      %v3225 = vsel %vm716, %v3177, 0
      %v3228 = vsel %vm716, %v3178, 0
      %v3231 = vsel %vm716, %v3179, 0
      %v3234 = vsel %vm716, %v3180, 0
      %v3237 = vsel %vm716, %v3181, 0
      %v3240 = vsel %vm716, %v3182, 0
      %v3243 = vsel %vm716, %v3183, 0
      %v3246 = vsel %vm716, %v3184, 0
      %v3249 = vsel %vm716, %v3185, 0
      %3251 = vmatprep.subr.bf16.mxu0 0
      %3252 = vmatpush1.bf16.msra.mxu0 %v3199
      %3253 = vmatprep.subr.bf16.mxu0 0
      %3254 = vmatpush1.bf16.msra.mxu0 %v3200
      %3255 = vmatprep.subr.bf16.mxu0 0
      %3256 = vmatpush1.bf16.msra.mxu0 0
      %3257 = vmatprep.subr.bf16.mxu0 0
      %3258 = vmatpush1.bf16.msra.mxu0 0
      %3259 = vmatprep.subr.bf16.mxu0 0
      %3260 = vmatpush1.bf16.msra.mxu0 0
      %3261 = vmatprep.subr.bf16.mxu0 0
      %3262 = vmatpush1.bf16.msra.mxu0 0
      %3263 = vmatprep.subr.bf16.mxu0 0
      %3264 = vmatpush1.bf16.msra.mxu0 0
      %3265 = vmatprep.subr.bf16.mxu0 0
      %3266 = vmatpush1.bf16.msra.mxu0 0
      %3267 = vmatprep.subr.bf16.mxu0 0
      %3268 = vmatpush1.bf16.msra.mxu0 0
      %3269 = vmatprep.subr.bf16.mxu0 0
      %3270 = vmatpush1.bf16.msra.mxu0 0
      %3271 = vmatprep.subr.bf16.mxu0 0
      %3272 = vmatpush1.bf16.msra.mxu0 0
      %3273 = vmatprep.subr.bf16.mxu0 0
      %3274 = vmatpush1.bf16.msra.mxu0 0
      %3275 = vmatprep.subr.bf16.mxu0 0
      %3276 = vmatpush1.bf16.msra.mxu0 0
      %3277 = vmatprep.subr.bf16.mxu0 0
      %3278 = vmatpush1.bf16.msra.mxu0 0
      %3279 = vmatprep.subr.bf16.mxu0 0
      %3280 = vmatpush1.bf16.msra.mxu0 0
      %3281 = vmatprep.subr.bf16.mxu0 0
      %3282 = vmatpush1.bf16.msra.mxu0 0
      %3283 = vmatprep.mubr.bf16.mxu0 0
      %3284 = vmatmul.mubr.bf16.gmra.mrb[0].mxu0 %v3204
      %v3285 = vpop.f32.mrb[0].mxu0
      %v3286 = vadd.f32 0.0, %v3285
      %v3287 = vpop.f32.mrb[0].mxu0
      %v3288 = vpop.f32.mrb[0].mxu0
      %v3289 = vadd.f32 0.0, %v3288
      %v3290 = vpop.f32.mrb[0].mxu0
      %3291 = vmatprep.mubr.bf16.mxu0 0
      %3292 = vmatmul.mubr.bf16.gmra.mrb[0].mxu0 %v3207
      %v3293 = vpop.f32.mrb[0].mxu0
      %v3294 = vadd.f32 0.0, %v3293
      %v3295 = vpop.f32.mrb[0].mxu0
      %v3296 = vpop.f32.mrb[0].mxu0
      %v3297 = vadd.f32 0.0, %v3296
      %v3298 = vpop.f32.mrb[0].mxu0
      %3299 = vmatprep.mubr.bf16.mxu0 0
      %3300 = vmatmul.mubr.bf16.gmra.mrb[0].mxu0 %v3210
      %v3301 = vpop.f32.mrb[0].mxu0
      %v3302 = vadd.f32 0.0, %v3301
      %v3303 = vpop.f32.mrb[0].mxu0
      %v3304 = vpop.f32.mrb[0].mxu0
      %v3305 = vadd.f32 0.0, %v3304
      %v3306 = vpop.f32.mrb[0].mxu0
      %3307 = vmatprep.mubr.bf16.mxu0 0
      %3308 = vmatmul.mubr.bf16.gmra.mrb[0].mxu0 %v3213
      %v3309 = vpop.f32.mrb[0].mxu0
      %v3310 = vadd.f32 0.0, %v3309
      %v3311 = vpop.f32.mrb[0].mxu0
      %v3312 = vpop.f32.mrb[0].mxu0
      %v3313 = vadd.f32 0.0, %v3312
      %v3314 = vpop.f32.mrb[0].mxu0
      %3315 = vmatprep.mubr.bf16.mxu0 0
      %3316 = vmatmul.mubr.bf16.gmra.mrb[0].mxu0 %v3216
      %v3317 = vpop.f32.mrb[0].mxu0
      %v3318 = vadd.f32 0.0, %v3317
      %v3319 = vpop.f32.mrb[0].mxu0
      %v3320 = vpop.f32.mrb[0].mxu0
      %v3321 = vadd.f32 0.0, %v3320
      %v3322 = vpop.f32.mrb[0].mxu0
      %3323 = vmatprep.mubr.bf16.mxu0 0
      %3324 = vmatmul.mubr.bf16.gmra.mrb[0].mxu0 %v3219
      %v3325 = vpop.f32.mrb[0].mxu0
      %v3326 = vadd.f32 0.0, %v3325
      %v3327 = vpop.f32.mrb[0].mxu0
      %v3328 = vpop.f32.mrb[0].mxu0
      %v3329 = vadd.f32 0.0, %v3328
      %v3330 = vpop.f32.mrb[0].mxu0
      %3331 = vmatprep.mubr.bf16.mxu0 0
      %3332 = vmatmul.mubr.bf16.gmra.mrb[0].mxu0 %v3222
      %v3333 = vpop.f32.mrb[0].mxu0
      %v3334 = vadd.f32 0.0, %v3333
      %v3335 = vpop.f32.mrb[0].mxu0
      %v3336 = vpop.f32.mrb[0].mxu0
      %v3337 = vadd.f32 0.0, %v3336
      %v3338 = vpop.f32.mrb[0].mxu0
      %3339 = vmatprep.mubr.bf16.mxu0 0
      %3340 = vmatmul.mubr.bf16.gmra.mrb[0].mxu0 %v3225
      %v3341 = vpop.f32.mrb[0].mxu0
      %v3342 = vadd.f32 0.0, %v3341
      %v3343 = vpop.f32.mrb[0].mxu0
      %v3344 = vpop.f32.mrb[0].mxu0
      %v3345 = vadd.f32 0.0, %v3344
      %v3346 = vpop.f32.mrb[0].mxu0
      %3347 = vmatprep.mubr.bf16.mxu0 0
      %3348 = vmatmul.mubr.bf16.gmra.mrb[0].mxu0 %v3228
      %v3349 = vpop.f32.mrb[0].mxu0
      %v3350 = vadd.f32 0.0, %v3349
      %v3351 = vpop.f32.mrb[0].mxu0
      %v3352 = vpop.f32.mrb[0].mxu0
      %v3353 = vadd.f32 0.0, %v3352
      %v3354 = vpop.f32.mrb[0].mxu0
      %3355 = vmatprep.mubr.bf16.mxu0 0
      %3356 = vmatmul.mubr.bf16.gmra.mrb[0].mxu0 %v3231
      %v3357 = vpop.f32.mrb[0].mxu0
      %v3358 = vadd.f32 0.0, %v3357
      %v3359 = vpop.f32.mrb[0].mxu0
      %v3360 = vpop.f32.mrb[0].mxu0
      %v3361 = vadd.f32 0.0, %v3360
      %v3362 = vpop.f32.mrb[0].mxu0
      %3363 = vmatprep.mubr.bf16.mxu0 0
      %3364 = vmatmul.mubr.bf16.gmra.mrb[0].mxu0 %v3234
      %v3365 = vpop.f32.mrb[0].mxu0
      %v3366 = vadd.f32 0.0, %v3365
      %v3367 = vpop.f32.mrb[0].mxu0
      %v3368 = vpop.f32.mrb[0].mxu0
      %v3369 = vadd.f32 0.0, %v3368
      %v3370 = vpop.f32.mrb[0].mxu0
      %3371 = vmatprep.mubr.bf16.mxu0 0
      %3372 = vmatmul.mubr.bf16.gmra.mrb[0].mxu0 %v3237
      %v3373 = vpop.f32.mrb[0].mxu0
      %v3374 = vadd.f32 0.0, %v3373
      %v3375 = vpop.f32.mrb[0].mxu0
      %v3376 = vpop.f32.mrb[0].mxu0
      %v3377 = vadd.f32 0.0, %v3376
      %v3378 = vpop.f32.mrb[0].mxu0
      %3379 = vmatprep.mubr.bf16.mxu0 0
      %3380 = vmatmul.mubr.bf16.gmra.mrb[0].mxu0 %v3240
      %v3381 = vpop.f32.mrb[0].mxu0
      %v3382 = vadd.f32 0.0, %v3381
      %v3383 = vpop.f32.mrb[0].mxu0
      %v3384 = vpop.f32.mrb[0].mxu0
      %v3385 = vadd.f32 0.0, %v3384
      %v3386 = vpop.f32.mrb[0].mxu0
      %3387 = vmatprep.mubr.bf16.mxu0 0
      %3388 = vmatmul.mubr.bf16.gmra.mrb[0].mxu0 %v3243
      %v3389 = vpop.f32.mrb[0].mxu0
      %v3390 = vadd.f32 0.0, %v3389
      %v3391 = vpop.f32.mrb[0].mxu0
      %v3392 = vpop.f32.mrb[0].mxu0
      %v3393 = vadd.f32 0.0, %v3392
      %v3394 = vpop.f32.mrb[0].mxu0
      %3395 = vmatprep.mubr.bf16.mxu0 0
      %3396 = vmatmul.mubr.bf16.gmra.mrb[0].mxu0 %v3246
      %v3397 = vpop.f32.mrb[0].mxu0
      %v3398 = vadd.f32 0.0, %v3397
      %v3399 = vpop.f32.mrb[0].mxu0
      %v3400 = vpop.f32.mrb[0].mxu0
      %v3401 = vadd.f32 0.0, %v3400
      %v3402 = vpop.f32.mrb[0].mxu0
      %3403 = vmatprep.mubr.bf16.mxu0 0
      %3404 = vmatmul.mubr.bf16.gmra.mrb[0].mxu0 %v3249
      %v3405 = vpop.f32.mrb[0].mxu0
      %v3406 = vadd.f32 0.0, %v3405
      %v3407 = vpop.f32.mrb[0].mxu0
      %v3408 = vpop.f32.mrb[0].mxu0
      %v3409 = vadd.f32 0.0, %v3408
      %v3410 = vpop.f32.mrb[0].mxu0
      %3411 = vdwg.mxu0
      %v3412 = vadd.f32 %v3106, %v3286
      %v3413 = vadd.f32 %v3107, %v3289
      %v3414 = vadd.f32 %v3108, %v3294
      %v3415 = vadd.f32 %v3109, %v3297
      %v3416 = vadd.f32 %v3110, %v3302
      %v3417 = vadd.f32 %v3111, %v3305
      %v3418 = vadd.f32 %v3112, %v3310
      %v3419 = vadd.f32 %v3113, %v3313
      %v3420 = vadd.f32 %v3114, %v3318
      %v3421 = vadd.f32 %v3115, %v3321
      %v3422 = vadd.f32 %v3116, %v3326
      %v3423 = vadd.f32 %v3117, %v3329
      %v3424 = vadd.f32 %v3118, %v3334
      %v3425 = vadd.f32 %v3119, %v3337
      %v3426 = vadd.f32 %v3120, %v3342
      %v3427 = vadd.f32 %v3121, %v3345
      %v3428 = vadd.f32 %v3122, %v3350
      %v3429 = vadd.f32 %v3123, %v3353
      %v3430 = vadd.f32 %v3124, %v3358
      %v3431 = vadd.f32 %v3125, %v3361
      %v3432 = vadd.f32 %v3126, %v3366
      %v3433 = vadd.f32 %v3127, %v3369
      %v3434 = vadd.f32 %v3128, %v3374
      %v3435 = vadd.f32 %v3129, %v3377
      %v3436 = vadd.f32 %v3130, %v3382
      %v3437 = vadd.f32 %v3131, %v3385
      %v3438 = vadd.f32 %v3132, %v3390
      %v3439 = vadd.f32 %v3133, %v3393
      %v3440 = vadd.f32 %v3134, %v3398
      %v3441 = vadd.f32 %v3135, %v3401
      %v3442 = vadd.f32 %v3136, %v3406
      %v3443 = vadd.f32 %v3137, %v3409
      %v3444 = vld [vmem:[%s4] sm:$0x1]
      %v3446 = vlaneseq
      %v3447 = vshrl.u32 %v3446, 7
      %v3448 = vsub.s32 0, %v3447
      %v3449 = vrot.slane %v3444, %v3448
      %v3451 = vadd.f32 %v3412, %v3449
      %v3452 = vadd.f32 %v3413, %v3449
      %v3453 = vadd.f32 %v3414, %v3449
      %v3454 = vadd.f32 %v3415, %v3449
      %v3455 = vadd.f32 %v3416, %v3449
      %v3456 = vadd.f32 %v3417, %v3449
      %v3457 = vadd.f32 %v3418, %v3449
      %v3458 = vadd.f32 %v3419, %v3449
      %v3459 = vadd.f32 %v3420, %v3449
      %v3460 = vadd.f32 %v3421, %v3449
      %v3461 = vadd.f32 %v3422, %v3449
      %v3462 = vadd.f32 %v3423, %v3449
      %v3463 = vadd.f32 %v3424, %v3449
      %v3464 = vadd.f32 %v3425, %v3449
      %v3465 = vadd.f32 %v3426, %v3449
      %v3466 = vadd.f32 %v3427, %v3449
      %v3467 = vadd.f32 %v3428, %v3449
      %v3468 = vadd.f32 %v3429, %v3449
      %v3469 = vadd.f32 %v3430, %v3449
      %v3470 = vadd.f32 %v3431, %v3449
      %v3471 = vadd.f32 %v3432, %v3449
      %v3472 = vadd.f32 %v3433, %v3449
      %v3473 = vadd.f32 %v3434, %v3449
      %v3474 = vadd.f32 %v3435, %v3449
      %v3475 = vadd.f32 %v3436, %v3449
      %v3476 = vadd.f32 %v3437, %v3449
      %v3477 = vadd.f32 %v3438, %v3449
      %v3478 = vadd.f32 %v3439, %v3449
      %v3479 = vadd.f32 %v3440, %v3449
      %v3480 = vadd.f32 %v3441, %v3449
      %v3481 = vadd.f32 %v3442, %v3449
      %v3482 = vadd.f32 %v3443, %v3449
      %vm3483 = vcmask 523264
      %v3484 = vsel %vm3483, %v3451, 0.0
      %v3485 = vsel %vm3483, %v3452, 0.0
      %v3486 = vadd.f32 %v3484, %v3485
      %v3487 = vsel %vm3483, %v3453, 0.0
      %v3488 = vadd.f32 %v3486, %v3487
      %v3489 = vsel %vm3483, %v3454, 0.0
      %v3490 = vadd.f32 %v3488, %v3489
      %v3491 = vsel %vm3483, %v3455, 0.0
      %v3492 = vadd.f32 %v3490, %v3491
      %v3493 = vsel %vm3483, %v3456, 0.0
      %v3494 = vadd.f32 %v3492, %v3493
      %v3495 = vsel %vm3483, %v3457, 0.0
      %v3496 = vadd.f32 %v3494, %v3495
      %v3497 = vsel %vm3483, %v3458, 0.0
      %v3498 = vadd.f32 %v3496, %v3497
      %v3499 = vsel %vm3483, %v3459, 0.0
      %v3500 = vadd.f32 %v3498, %v3499
      %v3501 = vsel %vm3483, %v3460, 0.0
      %v3502 = vadd.f32 %v3500, %v3501
      %v3503 = vsel %vm3483, %v3461, 0.0
      %v3504 = vadd.f32 %v3502, %v3503
      %v3505 = vsel %vm3483, %v3462, 0.0
      %v3506 = vadd.f32 %v3504, %v3505
      %v3507 = vsel %vm3483, %v3463, 0.0
      %v3508 = vadd.f32 %v3506, %v3507
      %v3509 = vsel %vm3483, %v3464, 0.0
      %v3510 = vadd.f32 %v3508, %v3509
      %v3511 = vsel %vm3483, %v3465, 0.0
      %v3512 = vadd.f32 %v3510, %v3511
      %v3513 = vsel %vm3483, %v3466, 0.0
      %v3514 = vadd.f32 %v3512, %v3513
      %v3515 = vsel %vm3483, %v3467, 0.0
      %v3516 = vadd.f32 %v3514, %v3515
      %v3517 = vsel %vm3483, %v3468, 0.0
      %v3518 = vadd.f32 %v3516, %v3517
      %v3519 = vsel %vm3483, %v3469, 0.0
      %v3520 = vadd.f32 %v3518, %v3519
      %v3521 = vsel %vm3483, %v3470, 0.0
      %v3522 = vadd.f32 %v3520, %v3521
      %v3523 = vsel %vm3483, %v3471, 0.0
      %v3524 = vadd.f32 %v3522, %v3523
      %v3525 = vsel %vm3483, %v3472, 0.0
      %v3526 = vadd.f32 %v3524, %v3525
      %v3527 = vsel %vm3483, %v3473, 0.0
      %v3528 = vadd.f32 %v3526, %v3527
      %v3529 = vsel %vm3483, %v3474, 0.0
      %v3530 = vadd.f32 %v3528, %v3529
      %v3531 = vsel %vm3483, %v3475, 0.0
      %v3532 = vadd.f32 %v3530, %v3531
      %v3533 = vsel %vm3483, %v3476, 0.0
      %v3534 = vadd.f32 %v3532, %v3533
      %v3535 = vsel %vm3483, %v3477, 0.0
      %v3536 = vadd.f32 %v3534, %v3535
      %v3537 = vsel %vm3483, %v3478, 0.0
      %v3538 = vadd.f32 %v3536, %v3537
      %v3539 = vsel %vm3483, %v3479, 0.0
      %v3540 = vadd.f32 %v3538, %v3539
      %v3541 = vsel %vm3483, %v3480, 0.0
      %v3542 = vadd.f32 %v3540, %v3541
      %v3543 = vsel %vm3483, %v3481, 0.0
      %v3544 = vadd.f32 %v3542, %v3543
      %v3545 = vsel %vm3483, %v3482, 0.0
      %v3546 = vadd.f32 %v3544, %v3545
      %v3547 = vrot.slane %v3546, 4
      %v3548 = vadd.f32 %v3546, %v3547
      %v3549 = vrot.slane %v3548, 2
      %v3550 = vadd.f32 %v3548, %v3549
      %v3551 = vrot.slane %v3550, 1
      %v3552 = vadd.f32 %v3550, %v3551
      %vm3553 = vcmask 516096
      %3554 = vst.msk [vmem:[%s342] sm:$0x1] %vm3553, %v3552
      %v3555 = vmul.f32 %v3451, %v3451
      %v3556 = vmul.f32 %v3452, %v3452
      %v3557 = vmul.f32 %v3453, %v3453
      %v3558 = vmul.f32 %v3454, %v3454
      %v3559 = vmul.f32 %v3455, %v3455
      %v3560 = vmul.f32 %v3456, %v3456
      %v3561 = vmul.f32 %v3457, %v3457
      %v3562 = vmul.f32 %v3458, %v3458
      %v3563 = vmul.f32 %v3459, %v3459
      %v3564 = vmul.f32 %v3460, %v3460
      %v3565 = vmul.f32 %v3461, %v3461
      %v3566 = vmul.f32 %v3462, %v3462
      %v3567 = vmul.f32 %v3463, %v3463
      %v3568 = vmul.f32 %v3464, %v3464
      %v3569 = vmul.f32 %v3465, %v3465
      %v3570 = vmul.f32 %v3466, %v3466
      %v3571 = vmul.f32 %v3467, %v3467
      %v3572 = vmul.f32 %v3468, %v3468
      %v3573 = vmul.f32 %v3469, %v3469
      %v3574 = vmul.f32 %v3470, %v3470
      %v3575 = vmul.f32 %v3471, %v3471
      %v3576 = vmul.f32 %v3472, %v3472
      %v3577 = vmul.f32 %v3473, %v3473
      %v3578 = vmul.f32 %v3474, %v3474
      %v3579 = vmul.f32 %v3475, %v3475
      %v3580 = vmul.f32 %v3476, %v3476
      %v3581 = vmul.f32 %v3477, %v3477
      %v3582 = vmul.f32 %v3478, %v3478
      %v3583 = vmul.f32 %v3479, %v3479
      %v3584 = vmul.f32 %v3480, %v3480
      %v3585 = vmul.f32 %v3481, %v3481
      %v3586 = vmul.f32 %v3482, %v3482
      %v3587 = vsel %vm3483, %v3555, 0.0
      %v3588 = vsel %vm3483, %v3556, 0.0
      %v3589 = vadd.f32 %v3587, %v3588
      %v3590 = vsel %vm3483, %v3557, 0.0
      %v3591 = vadd.f32 %v3589, %v3590
      %v3592 = vsel %vm3483, %v3558, 0.0
      %v3593 = vadd.f32 %v3591, %v3592
      %v3594 = vsel %vm3483, %v3559, 0.0
      %v3595 = vadd.f32 %v3593, %v3594
      %v3596 = vsel %vm3483, %v3560, 0.0
      %v3597 = vadd.f32 %v3595, %v3596
      %v3598 = vsel %vm3483, %v3561, 0.0
      %v3599 = vadd.f32 %v3597, %v3598
      %v3600 = vsel %vm3483, %v3562, 0.0
      %v3601 = vadd.f32 %v3599, %v3600
      %v3602 = vsel %vm3483, %v3563, 0.0
      %v3603 = vadd.f32 %v3601, %v3602
      %v3604 = vsel %vm3483, %v3564, 0.0
      %v3605 = vadd.f32 %v3603, %v3604
      %v3606 = vsel %vm3483, %v3565, 0.0
      %v3607 = vadd.f32 %v3605, %v3606
      %v3608 = vsel %vm3483, %v3566, 0.0
      %v3609 = vadd.f32 %v3607, %v3608
      %v3610 = vsel %vm3483, %v3567, 0.0
      %v3611 = vadd.f32 %v3609, %v3610
      %v3612 = vsel %vm3483, %v3568, 0.0
      %v3613 = vadd.f32 %v3611, %v3612
      %v3614 = vsel %vm3483, %v3569, 0.0
      %v3615 = vadd.f32 %v3613, %v3614
      %v3616 = vsel %vm3483, %v3570, 0.0
      %v3617 = vadd.f32 %v3615, %v3616
      %v3618 = vsel %vm3483, %v3571, 0.0
      %v3619 = vadd.f32 %v3617, %v3618
      %v3620 = vsel %vm3483, %v3572, 0.0
      %v3621 = vadd.f32 %v3619, %v3620
      %v3622 = vsel %vm3483, %v3573, 0.0
      %v3623 = vadd.f32 %v3621, %v3622
      %v3624 = vsel %vm3483, %v3574, 0.0
      %v3625 = vadd.f32 %v3623, %v3624
      %v3626 = vsel %vm3483, %v3575, 0.0
      %v3627 = vadd.f32 %v3625, %v3626
      %v3628 = vsel %vm3483, %v3576, 0.0
      %v3629 = vadd.f32 %v3627, %v3628
      %v3630 = vsel %vm3483, %v3577, 0.0
      %v3631 = vadd.f32 %v3629, %v3630
      %v3632 = vsel %vm3483, %v3578, 0.0
      %v3633 = vadd.f32 %v3631, %v3632
      %v3634 = vsel %vm3483, %v3579, 0.0
      %v3635 = vadd.f32 %v3633, %v3634
      %v3636 = vsel %vm3483, %v3580, 0.0
      %v3637 = vadd.f32 %v3635, %v3636
      %v3638 = vsel %vm3483, %v3581, 0.0
      %v3639 = vadd.f32 %v3637, %v3638
      %v3640 = vsel %vm3483, %v3582, 0.0
      %v3641 = vadd.f32 %v3639, %v3640
      %v3642 = vsel %vm3483, %v3583, 0.0
      %v3643 = vadd.f32 %v3641, %v3642
      %v3644 = vsel %vm3483, %v3584, 0.0
      %v3645 = vadd.f32 %v3643, %v3644
      %v3646 = vsel %vm3483, %v3585, 0.0
      %v3647 = vadd.f32 %v3645, %v3646
      %v3648 = vsel %vm3483, %v3586, 0.0
      %v3649 = vadd.f32 %v3647, %v3648
      %v3650 = vrot.slane %v3649, 4
      %v3651 = vadd.f32 %v3649, %v3650
      %v3652 = vrot.slane %v3651, 2
      %v3653 = vadd.f32 %v3651, %v3652
      %v3654 = vrot.slane %v3653, 1
      %v3655 = vadd.f32 %v3653, %v3654
      %3656 = vst.msk [vmem:[%s342 + $0x1] sm:$0x1] %vm3553, %v3655
      %v3657 = vpack.c.bf16 %v3452, %v3451
      %v3658 = vpack.c.bf16 %v3454, %v3453
      %v3659 = vpack.c.bf16 %v3456, %v3455
      %v3660 = vpack.c.bf16 %v3458, %v3457
      %v3661 = vpack.c.bf16 %v3460, %v3459
      %v3662 = vpack.c.bf16 %v3462, %v3461
      %v3663 = vpack.c.bf16 %v3464, %v3463
      %v3664 = vpack.c.bf16 %v3466, %v3465
      %v3665 = vpack.c.bf16 %v3468, %v3467
      %v3666 = vpack.c.bf16 %v3470, %v3469
      %v3667 = vpack.c.bf16 %v3472, %v3471
      %v3668 = vpack.c.bf16 %v3474, %v3473
      %v3669 = vpack.c.bf16 %v3476, %v3475
      %v3670 = vpack.c.bf16 %v3478, %v3477
      %v3671 = vpack.c.bf16 %v3480, %v3479
      %v3672 = vpack.c.bf16 %v3482, %v3481
      %v3689 = vunpack.c.l.b16 %v3657
      %v3690 = vunpack.c.h.b16 %v3657
      %v3691 = vunpack.c.l.b16 %v3658
      %v3692 = vunpack.c.h.b16 %v3658
      %v3693 = vunpack.c.l.b16 %v3659
      %v3694 = vunpack.c.h.b16 %v3659
      %v3695 = vunpack.c.l.b16 %v3660
      %v3696 = vunpack.c.h.b16 %v3660
      %v3697 = vunpack.c.l.b16 %v3661
      %v3698 = vunpack.c.h.b16 %v3661
      %v3699 = vunpack.c.l.b16 %v3662
      %v3700 = vunpack.c.h.b16 %v3662
      %v3701 = vunpack.c.l.b16 %v3663
      %v3702 = vunpack.c.h.b16 %v3663
      %v3703 = vunpack.c.l.b16 %v3664
      %v3704 = vunpack.c.h.b16 %v3664
      %v3705 = vunpack.c.l.b16 %v3665
      %v3706 = vunpack.c.h.b16 %v3665
      %v3707 = vunpack.c.l.b16 %v3666
      %v3708 = vunpack.c.h.b16 %v3666
      %v3709 = vunpack.c.l.b16 %v3667
      %v3710 = vunpack.c.h.b16 %v3667
      %v3711 = vunpack.c.l.b16 %v3668
      %v3712 = vunpack.c.h.b16 %v3668
      %v3713 = vunpack.c.l.b16 %v3669
      %v3714 = vunpack.c.h.b16 %v3669
      %v3715 = vunpack.c.l.b16 %v3670
      %v3716 = vunpack.c.h.b16 %v3670
      %v3717 = vunpack.c.l.b16 %v3671
      %v3718 = vunpack.c.h.b16 %v3671
      %v3719 = vunpack.c.l.b16 %v3672
      %v3720 = vunpack.c.h.b16 %v3672
      %v3721 = vpack.c.b16 %v3689, %v3689
      %v3722 = vpack.c.b16 %v3690, %v3690
      %v3723 = vpack.c.b16 %v3691, %v3691
      %v3724 = vpack.c.b16 %v3692, %v3692
      %v3725 = vpack.c.b16 %v3693, %v3693
      %v3726 = vpack.c.b16 %v3694, %v3694
      %v3727 = vpack.c.b16 %v3695, %v3695
      %v3728 = vpack.c.b16 %v3696, %v3696
      %v3729 = vpack.c.b16 %v3697, %v3697
      %v3730 = vpack.c.b16 %v3698, %v3698
      %v3731 = vpack.c.b16 %v3699, %v3699
      %v3732 = vpack.c.b16 %v3700, %v3700
      %v3733 = vpack.c.b16 %v3701, %v3701
      %v3734 = vpack.c.b16 %v3702, %v3702
      %v3735 = vpack.c.b16 %v3703, %v3703
      %v3736 = vpack.c.b16 %v3704, %v3704
      %v3737 = vpack.c.b16 %v3705, %v3705
      %v3738 = vpack.c.b16 %v3706, %v3706
      %v3739 = vpack.c.b16 %v3707, %v3707
      %v3740 = vpack.c.b16 %v3708, %v3708
      %v3741 = vpack.c.b16 %v3709, %v3709
      %v3742 = vpack.c.b16 %v3710, %v3710
      %v3743 = vpack.c.b16 %v3711, %v3711
      %v3744 = vpack.c.b16 %v3712, %v3712
      %v3745 = vpack.c.b16 %v3713, %v3713
      %v3746 = vpack.c.b16 %v3714, %v3714
      %v3747 = vpack.c.b16 %v3715, %v3715
      %v3748 = vpack.c.b16 %v3716, %v3716
      %v3749 = vpack.c.b16 %v3717, %v3717
      %v3750 = vpack.c.b16 %v3718, %v3718
      %v3751 = vpack.c.b16 %v3719, %v3719
      %v3752 = vpack.c.b16 %v3720, %v3720
      %vm3785 = vcmask 519168
      %3786 = vst.msk [vmem:[%s334] sm:$0xf] %vm3785, %v3721
      %3787 = vst.msk [vmem:[%s334 + $0x4] sm:$0xf] %vm3785, %v3722
      %3788 = vst.msk [vmem:[%s334 + $0x8] sm:$0xf] %vm3785, %v3723
      %3789 = vst.msk [vmem:[%s334 + $0xc] sm:$0xf] %vm3785, %v3724
      %3790 = vst.msk [vmem:[%s334 + $0x10] sm:$0xf] %vm3785, %v3725
      %3791 = vst.msk [vmem:[%s334 + $0x14] sm:$0xf] %vm3785, %v3726
      %3792 = vst.msk [vmem:[%s334 + $0x18] sm:$0xf] %vm3785, %v3727
      %3793 = vst.msk [vmem:[%s334 + $0x1c] sm:$0xf] %vm3785, %v3728
      %3794 = vst.msk [vmem:[%s334 + $0x20] sm:$0xf] %vm3785, %v3729
      %3795 = vst.msk [vmem:[%s334 + $0x24] sm:$0xf] %vm3785, %v3730
      %3796 = vst.msk [vmem:[%s334 + $0x28] sm:$0xf] %vm3785, %v3731
      %3797 = vst.msk [vmem:[%s334 + $0x2c] sm:$0xf] %vm3785, %v3732
      %3798 = vst.msk [vmem:[%s334 + $0x30] sm:$0xf] %vm3785, %v3733
      %3799 = vst.msk [vmem:[%s334 + $0x34] sm:$0xf] %vm3785, %v3734
      %3800 = vst.msk [vmem:[%s334 + $0x38] sm:$0xf] %vm3785, %v3735
      %3801 = vst.msk [vmem:[%s334 + $0x3c] sm:$0xf] %vm3785, %v3736
      %3802 = vst.msk [vmem:[%s334 + $0x40] sm:$0xf] %vm3785, %v3737
      %3803 = vst.msk [vmem:[%s334 + $0x44] sm:$0xf] %vm3785, %v3738
      %3804 = vst.msk [vmem:[%s334 + $0x48] sm:$0xf] %vm3785, %v3739
      %3805 = vst.msk [vmem:[%s334 + $0x4c] sm:$0xf] %vm3785, %v3740
      %3806 = vst.msk [vmem:[%s334 + $0x50] sm:$0xf] %vm3785, %v3741
      %3807 = vst.msk [vmem:[%s334 + $0x54] sm:$0xf] %vm3785, %v3742
      %3808 = vst.msk [vmem:[%s334 + $0x58] sm:$0xf] %vm3785, %v3743
      %3809 = vst.msk [vmem:[%s334 + $0x5c] sm:$0xf] %vm3785, %v3744
      %3810 = vst.msk [vmem:[%s334 + $0x60] sm:$0xf] %vm3785, %v3745
      %3811 = vst.msk [vmem:[%s334 + $0x64] sm:$0xf] %vm3785, %v3746
      %3812 = vst.msk [vmem:[%s334 + $0x68] sm:$0xf] %vm3785, %v3747
      %3813 = vst.msk [vmem:[%s334 + $0x6c] sm:$0xf] %vm3785, %v3748
      %3814 = vst.msk [vmem:[%s334 + $0x70] sm:$0xf] %vm3785, %v3749
      %3815 = vst.msk [vmem:[%s334 + $0x74] sm:$0xf] %vm3785, %v3750
      %3816 = vst.msk [vmem:[%s334 + $0x78] sm:$0xf] %vm3785, %v3751
      %3817 = vst.msk [vmem:[%s334 + $0x7c] sm:$0xf] %vm3785, %v3752
      %s3818 = smul.u32 16, %s23
      %p3819 = scmp.lt.s32.totalorder %s22, 1
      %s3820 = scalar_select %p3819, %s22, 1
      %p3821 = scmp.lt.s32.totalorder %s3818, 15
      %s3822 = scalar_select %p3821, %s3818, 15
      %s3823 = smul.addr %s3822, 2
      %s3824 = smul.addr %s3820, 32
      %s3825 = sadd.s32 %s3823, %s3824
      %s3826 = smul.addr %s3825, 4
      %s3827 = scalar_lea.vmem %s5, %s3826
      %p3828 = scmp.lt.s32.totalorder %s22, 1
      %s3829 = scalar_select %p3828, %s22, 1
      %p3830 = scmp.lt.s32.totalorder %s23, 0
      %s3831 = scalar_select %p3830, %s23, 0
      %s3832 = sadd.s32 %s3831, %s3829
      %s3833 = smul.addr %s3832, 2
      %s3834 = scalar_lea.vmem %s6, %s3833
      // Predicated region
      $region41: #{resnet_block_forward.2} parent=39 // pred_check
        %p3835 = pneg %p172
      $region42: #{resnet_block_forward.2} parent=39 // pred_check_branch
        %3837 = sbr.rel (%p3835) target = $region44
      $region43: #{resnet_block_forward.2} parent=39 // pred_region
        %s3838 = smul.u32 16, %s23
      $region44: #{resnet_block_forward.2} parent=39 // pred_fallthru
        _
      // Predicated region
      $region45: #{resnet_block_forward.2} parent=39 // pred_check
        %p3839 = pneg %p200
      $region46: #{resnet_block_forward.2} parent=39 // pred_check_branch
        %3841 = sbr.rel (%p3839) target = $region48
      $region47: #{resnet_block_forward.2} parent=39 // pred_region
        _
      $region48: #{resnet_block_forward.2} parent=39 // pred_fallthru
        _
    $region40: #{resnet_block_forward.2} parent=5 // pred_fallthru
      _
    %p3842 = scmp.le.s32.totalorder 2, %s13
    // Predicated region
    $region49: #{resnet_block_forward.2} parent=5 // pred_check
      %p3843 = pneg %p3842
    $region50: #{resnet_block_forward.2} parent=5 // pred_check_branch
      %3845 = sbr.rel (%p3843) target = $region52
    $region51: #{resnet_block_forward.2} parent=5 // pred_region
      %s3846 = ssub.s32 %s13, 2
      // Predicated region
      $region53: #{resnet_block_forward.2} parent=51 // pred_check
        %p3847 = pneg %p178
      $region54: #{resnet_block_forward.2} parent=51 // pred_check_branch
        %3849 = sbr.rel (%p3847) target = $region56
      $region55: #{resnet_block_forward.2} parent=51 // pred_region
        %s3850 = smul.u32 16, %s25
        %p3851 = scmp.lt.s32.totalorder %s24, 1
        %s3852 = scalar_select %p3851, %s24, 1
        %p3853 = scmp.lt.s32.totalorder %s3850, 15
        %s3854 = scalar_select %p3853, %s3850, 15
        %s3855 = smul.addr %s3854, 2
        %s3856 = smul.addr %s3852, 32
        %s3857 = sadd.s32 %s3855, %s3856
        %s3858 = smul.addr %s3857, 4
        %s3859 = scalar_lea.vmem %s5, %s3858
      $region56: #{resnet_block_forward.2} parent=51 // pred_fallthru
        _
      // Predicated region
      $region57: #{resnet_block_forward.2} parent=51 // pred_check
        %p3860 = pneg %p206
      $region58: #{resnet_block_forward.2} parent=51 // pred_check_branch
        %3862 = sbr.rel (%p3860) target = $region60
      $region59: #{resnet_block_forward.2} parent=51 // pred_region
        %p3863 = scmp.lt.s32.totalorder %s24, 1
        %s3864 = scalar_select %p3863, %s24, 1
        %p3865 = scmp.lt.s32.totalorder %s25, 0
        %s3866 = scalar_select %p3865, %s25, 0
        %s3867 = sadd.s32 %s3866, %s3864
        %s3868 = smul.addr %s3867, 2
        %s3869 = scalar_lea.vmem %s6, %s3868
      $region60: #{resnet_block_forward.2} parent=51 // pred_fallthru
        _
    $region52: #{resnet_block_forward.2} parent=5 // pred_fallthru
      _
  $region6: #{resnet_block_forward.2} parent=0 // loop_footer
    %s17 = sadd.s32 1, %s13
  $region7: #{resnet_block_forward.2} parent=0 // loop_footer_branch
    %12 = sbr.rel target = $region3
  $region8: #{resnet_block_forward.2} parent=0 // loop_exit
    _

// kernel: resnet_block_forward.3
$region0: #{resnet_block_forward.3}
  #allocation0 [shape = 'u32[]', space=smem, size = 0x4, offset = 0x4, fixed_abs, tag = 'smem constant byte address 0x4 - core index']
  #allocation1 [shape = 'u32[144,128]{1,0:T(1,128)}', space=vmem, size = 0x12000, scoped, tag = 'internal scratch']
  #allocation2 [shape = 'f32[18,18,64]{2,1,0:T(8,128)}', space=vmem, size = 0x36000, scoped, tag = 'scratch operand']
  %s0 = inlined_call_operand.vmem [shape: bf16[2,16,16,64], index: 0, kind: input, shape index: {}]
  %s1 = inlined_call_operand.vmem [shape: f32[2,1,64], index: 1, kind: input, shape index: {}]
  %s2 = inlined_call_operand.vmem [shape: f32[2,1,64], index: 2, kind: input, shape index: {}]
  %s3 = inlined_call_operand.vmem [shape: bf16[9,64,64], index: 3, kind: input, shape index: {}]
  %s4 = inlined_call_operand.vmem [shape: f32[1,64], index: 4, kind: input, shape index: {}]
  %s5 = inlined_call_operand.vmem [shape: f32[2,16,16,32], index: 5, kind: input, shape index: {}]
  %s6 = inlined_call_operand.vmem [shape: bf16[32,64], index: 6, kind: input, shape index: {}]
  %s7 = inlined_call_operand.vmem [shape: f32[1,64], index: 7, kind: input, shape index: {}]
  %s8 = inlined_call_operand.hbm [shape: f32[2,16,16,64], index: 8, kind: output, shape index: {}]
  %s9 = sld [smem:[#allocation0]]
  $region65: #{resnet_block_forward.3} parent=0
    _
  %s11 = ssub.s32 1, %s9
  %s12 = scalar_select 0, %s11, %s9
  $region1: #{resnet_block_forward.3} parent=0
    #allocation3 [shape = 'u8[262144]{0}', space=vmem, size = 0x40000, scoped, tag = 'output window, operand 0']
    #allocation4 [shape = 's32[2]{0}', space=sflag, size = 0x8, scoped, tag = 'scoped memory for resnet_block_forward.3']
    %13 = vsyncpa [#allocation4], 0
    %s14 = scalar_lea.sflag [#allocation4], 1
    %15 = vsyncpa %s14, 0
    loop: start=0, step=1, limit=4
    $region2: #{resnet_block_forward.3} parent=1 // loop_pre_header
      _
    $region3: #{resnet_block_forward.3} parent=1 // loop_header
      %s17 = sphi 0, %s21
      %p18 = scmp.ge.s32.totalorder %s17, 4
      %s24 = sphi 0, %s36
      %s25 = sphi 0, %s32
      %s26 = sphi 0, %s24
      %s27 = sphi 0, %s25
      %s28 = sphi 0, %s26
      %s29 = sphi 0, %s27
      %s41 = sphi 0, %s43
      %s44 = sphi 0, %s41
      %s45 = sphi 0, %s44
      %s61 = sphi 0, %s45
      %s67 = sphi 0, %s69
      %s70 = sphi 0, %s67
      %s71 = sphi 0, %s70
      %s87 = sphi 0, %s71
      %s93 = sphi 0, %s95
      %s96 = sphi 0, %s93
      %s97 = sphi 0, %s96
      %s113 = sphi 0, %s97
      %s117 = sphi 0, %s117
      %s119 = sphi 0, %s117
      %s120 = sphi 0, %s119
      %s134 = sphi 0, %s120
      %s138 = sphi 0, %s138
      %s140 = sphi 0, %s138
      %s141 = sphi 0, %s140
      %s155 = sphi 0, %s141
      %s163 = sphi 0, %s165
      %s166 = sphi 0, %s163
      %s167 = sphi 0, %s166
      %s183 = sphi 0, %s167
      %s187 = sphi 0, %s187
      %s189 = sphi 0, %s187
      %s190 = sphi 0, %s189
      %s204 = sphi 0, %s190
      %s208 = sphi 0, %s208
      %s210 = sphi 0, %s208
      %s211 = sphi 0, %s210
      %s225 = sphi 0, %s211
      %s233 = sphi 0, %s235
      %s236 = sphi 0, %s233
      %s237 = sphi 0, %s236
      %s253 = sphi 0, %s237
    $region4: #{resnet_block_forward.3} parent=1 // loop_header_branch
      %20 = sbr.rel (%p18) target = $region8
    $region5: #{resnet_block_forward.3} parent=1 // loop_body
      %s22 = ssub.s32 %s17, 1
      %s23 = ssub.s32 %s17, 2
      %s30 = sadd.s32 1, %s25
      %p31 = scmp.ge.s32.totalorder %s30, 1
      %s32 = scalar_select %p31, 0, %s30
      %s33 = sadd.s32 1, %s24
      %s34 = scalar_select %p31, %s33, %s24
      %p35 = scmp.ge.s32.totalorder %s34, 2
      %s36 = scalar_select %p35, 0, %s34
      %s37 = ssub.s32 %s24, %s36
      %s38 = ssub.s32 %s25, %s32
      %s39 = sor.u32 %s37, %s38
      %p40 = scmp.eq.s32.totalorder %s39, 0
      %s42 = sadd.s32 %s41, 1
      %s43 = scalar_select %p40, %s41, %s42
      %p46 = pneg %p40
      %p47 = scmp.eq.s32.totalorder %s17, 1
      %p48 = por %p46, %p47
      %p49 = scmp.ne.s32.totalorder %s41, %s44
      %p50 = scmp.eq.s32.totalorder %s17, 0
      %p51 = por %p49, %p50
      %p52 = scmp.ne.s32.totalorder %s41, %s44
      %p53 = scmp.eq.s32.totalorder %s22, 1
      %p54 = por %p52, %p53
      %p55 = scmp.ne.s32.totalorder %s44, %s45
      %p56 = scmp.eq.s32.totalorder %s22, 0
      %p57 = por %p55, %p56
      %p58 = scmp.ne.s32.totalorder %s44, %s45
      %p59 = scmp.eq.s32.totalorder %s23, 1
      %p60 = por %p58, %p59
      %p62 = scmp.ne.s32.totalorder %s45, %s61
      %p63 = scmp.eq.s32.totalorder %s23, 0
      %p64 = por %p62, %p63
      %s65 = ssub.s32 %s24, %s36
      %p66 = scmp.eq.s32.totalorder %s65, 0
      %s68 = sadd.s32 %s67, 1
      %s69 = scalar_select %p66, %s67, %s68
      %p72 = pneg %p66
      %p73 = scmp.eq.s32.totalorder %s17, 1
      %p74 = por %p72, %p73
      %p75 = scmp.ne.s32.totalorder %s67, %s70
      %p76 = scmp.eq.s32.totalorder %s17, 0
      %p77 = por %p75, %p76
      %p78 = scmp.ne.s32.totalorder %s67, %s70
      %p79 = scmp.eq.s32.totalorder %s22, 1
      %p80 = por %p78, %p79
      %p81 = scmp.ne.s32.totalorder %s70, %s71
      %p82 = scmp.eq.s32.totalorder %s22, 0
      %p83 = por %p81, %p82
      %p84 = scmp.ne.s32.totalorder %s70, %s71
      %p85 = scmp.eq.s32.totalorder %s23, 1
      %p86 = por %p84, %p85
      %p88 = scmp.ne.s32.totalorder %s71, %s87
      %p89 = scmp.eq.s32.totalorder %s23, 0
      %p90 = por %p88, %p89
      %s91 = ssub.s32 %s24, %s36
      %p92 = scmp.eq.s32.totalorder %s91, 0
      %s94 = sadd.s32 %s93, 1
      %s95 = scalar_select %p92, %s93, %s94
      %p98 = pneg %p92
      %p99 = scmp.eq.s32.totalorder %s17, 1
      %p100 = por %p98, %p99
      %p101 = scmp.ne.s32.totalorder %s93, %s96
      %p102 = scmp.eq.s32.totalorder %s17, 0
      %p103 = por %p101, %p102
      %p104 = scmp.ne.s32.totalorder %s93, %s96
      %p105 = scmp.eq.s32.totalorder %s22, 1
      %p106 = por %p104, %p105
      %p107 = scmp.ne.s32.totalorder %s96, %s97
      %p108 = scmp.eq.s32.totalorder %s22, 0
      %p109 = por %p107, %p108
      %p110 = scmp.ne.s32.totalorder %s96, %s97
      %p111 = scmp.eq.s32.totalorder %s23, 1
      %p112 = por %p110, %p111
      %p114 = scmp.ne.s32.totalorder %s97, %s113
      %p115 = scmp.eq.s32.totalorder %s23, 0
      %p116 = por %p114, %p115
      %s118 = sadd.s32 %s117, 1
      %p121 = scmp.eq.s32.totalorder %s17, 1
      %p122 = scmp.ne.s32.totalorder %s117, %s119
      %p123 = scmp.eq.s32.totalorder %s17, 0
      %p124 = por %p122, %p123
      %p125 = scmp.ne.s32.totalorder %s117, %s119
      %p126 = scmp.eq.s32.totalorder %s22, 1
      %p127 = por %p125, %p126
      %p128 = scmp.ne.s32.totalorder %s119, %s120
      %p129 = scmp.eq.s32.totalorder %s22, 0
      %p130 = por %p128, %p129
      %p131 = scmp.ne.s32.totalorder %s119, %s120
      %p132 = scmp.eq.s32.totalorder %s23, 1
      %p133 = por %p131, %p132
      %p135 = scmp.ne.s32.totalorder %s120, %s134
      %p136 = scmp.eq.s32.totalorder %s23, 0
      %p137 = por %p135, %p136
      %s139 = sadd.s32 %s138, 1
      %p142 = scmp.eq.s32.totalorder %s17, 1
      %p143 = scmp.ne.s32.totalorder %s138, %s140
      %p144 = scmp.eq.s32.totalorder %s17, 0
      %p145 = por %p143, %p144
      %p146 = scmp.ne.s32.totalorder %s138, %s140
      %p147 = scmp.eq.s32.totalorder %s22, 1
      %p148 = por %p146, %p147
      %p149 = scmp.ne.s32.totalorder %s140, %s141
      %p150 = scmp.eq.s32.totalorder %s22, 0
      %p151 = por %p149, %p150
      %p152 = scmp.ne.s32.totalorder %s140, %s141
      %p153 = scmp.eq.s32.totalorder %s23, 1
      %p154 = por %p152, %p153
      %p156 = scmp.ne.s32.totalorder %s141, %s155
      %p157 = scmp.eq.s32.totalorder %s23, 0
      %p158 = por %p156, %p157
      %s159 = ssub.s32 %s24, %s36
      %s160 = ssub.s32 %s25, %s32
      %s161 = sor.u32 %s159, %s160
      %p162 = scmp.eq.s32.totalorder %s161, 0
      %s164 = sadd.s32 %s163, 1
      %s165 = scalar_select %p162, %s163, %s164
      %p168 = pneg %p162
      %p169 = scmp.eq.s32.totalorder %s17, 1
      %p170 = por %p168, %p169
      %p171 = scmp.ne.s32.totalorder %s163, %s166
      %p172 = scmp.eq.s32.totalorder %s17, 0
      %p173 = por %p171, %p172
      %p174 = scmp.ne.s32.totalorder %s163, %s166
      %p175 = scmp.eq.s32.totalorder %s22, 1
      %p176 = por %p174, %p175
      %p177 = scmp.ne.s32.totalorder %s166, %s167
      %p178 = scmp.eq.s32.totalorder %s22, 0
      %p179 = por %p177, %p178
      %p180 = scmp.ne.s32.totalorder %s166, %s167
      %p181 = scmp.eq.s32.totalorder %s23, 1
      %p182 = por %p180, %p181
      %p184 = scmp.ne.s32.totalorder %s167, %s183
      %p185 = scmp.eq.s32.totalorder %s23, 0
      %p186 = por %p184, %p185
      %s188 = sadd.s32 %s187, 1
      %p191 = scmp.eq.s32.totalorder %s17, 1
      %p192 = scmp.ne.s32.totalorder %s187, %s189
      %p193 = scmp.eq.s32.totalorder %s17, 0
      %p194 = por %p192, %p193
      %p195 = scmp.ne.s32.totalorder %s187, %s189
      %p196 = scmp.eq.s32.totalorder %s22, 1
      %p197 = por %p195, %p196
      %p198 = scmp.ne.s32.totalorder %s189, %s190
      %p199 = scmp.eq.s32.totalorder %s22, 0
      %p200 = por %p198, %p199
      %p201 = scmp.ne.s32.totalorder %s189, %s190
      %p202 = scmp.eq.s32.totalorder %s23, 1
      %p203 = por %p201, %p202
      %p205 = scmp.ne.s32.totalorder %s190, %s204
      %p206 = scmp.eq.s32.totalorder %s23, 0
      %p207 = por %p205, %p206
      %s209 = sadd.s32 %s208, 1
      %p212 = scmp.eq.s32.totalorder %s17, 1
      %p213 = scmp.ne.s32.totalorder %s208, %s210
      %p214 = scmp.eq.s32.totalorder %s17, 0
      %p215 = por %p213, %p214
      %p216 = scmp.ne.s32.totalorder %s208, %s210
      %p217 = scmp.eq.s32.totalorder %s22, 1
      %p218 = por %p216, %p217
      %p219 = scmp.ne.s32.totalorder %s210, %s211
      %p220 = scmp.eq.s32.totalorder %s22, 0
      %p221 = por %p219, %p220
      %p222 = scmp.ne.s32.totalorder %s210, %s211
      %p223 = scmp.eq.s32.totalorder %s23, 1
      %p224 = por %p222, %p223
      %p226 = scmp.ne.s32.totalorder %s211, %s225
      %p227 = scmp.eq.s32.totalorder %s23, 0
      %p228 = por %p226, %p227
      %s229 = ssub.s32 %s24, %s36
      %s230 = ssub.s32 %s25, %s32
      %s231 = sor.u32 %s229, %s230
      %p232 = scmp.eq.s32.totalorder %s231, 0
      %s234 = sadd.s32 %s233, 1
      %s235 = scalar_select %p232, %s233, %s234
      %p238 = pneg %p232
      %p239 = scmp.eq.s32.totalorder %s17, 1
      %p240 = por %p238, %p239
      %p241 = scmp.ne.s32.totalorder %s233, %s236
      %p242 = scmp.eq.s32.totalorder %s17, 0
      %p243 = por %p241, %p242
      %p244 = scmp.ne.s32.totalorder %s233, %s236
      %p245 = scmp.eq.s32.totalorder %s22, 1
      %p246 = por %p244, %p245
      %p247 = scmp.ne.s32.totalorder %s236, %s237
      %p248 = scmp.eq.s32.totalorder %s22, 0
      %p249 = por %p247, %p248
      %p250 = scmp.ne.s32.totalorder %s236, %s237
      %p251 = scmp.eq.s32.totalorder %s23, 1
      %p252 = por %p250, %p251
      %p254 = scmp.ne.s32.totalorder %s237, %s253
      %p255 = scmp.eq.s32.totalorder %s23, 0
      %p256 = por %p254, %p255
      %p257 = scmp.le.s32.totalorder 1, %s17
      %p258 = scmp.lt.s32.totalorder %s17, 3
      %p259 = pnand %p257, %p258
      %p260 = pneg %p259
      // Predicated region
      $region9: #{resnet_block_forward.3} parent=5 // pred_check
        _
      $region10: #{resnet_block_forward.3} parent=5 // pred_check_branch
        %262 = sbr.rel (%p259) target = $region12
      $region11: #{resnet_block_forward.3} parent=5 // pred_region
        %s263 = ssub.s32 %s17, 1
        // Predicated region
        $region13: #{resnet_block_forward.3} parent=11 // pred_check
          %p264 = pneg %p130
        $region14: #{resnet_block_forward.3} parent=11 // pred_check_branch
          %266 = sbr.rel (%p264) target = $region16
        $region15: #{resnet_block_forward.3} parent=11 // pred_region
          _
        $region16: #{resnet_block_forward.3} parent=11 // pred_fallthru
          _
        // Predicated region
        $region17: #{resnet_block_forward.3} parent=11 // pred_check
          %p267 = pneg %p151
        $region18: #{resnet_block_forward.3} parent=11 // pred_check_branch
          %269 = sbr.rel (%p267) target = $region20
        $region19: #{resnet_block_forward.3} parent=11 // pred_region
          _
        $region20: #{resnet_block_forward.3} parent=11 // pred_fallthru
          _
        // Predicated region
        $region21: #{resnet_block_forward.3} parent=11 // pred_check
          %p270 = pneg %p200
        $region22: #{resnet_block_forward.3} parent=11 // pred_check_branch
          %272 = sbr.rel (%p270) target = $region24
        $region23: #{resnet_block_forward.3} parent=11 // pred_region
          _
        $region24: #{resnet_block_forward.3} parent=11 // pred_fallthru
          _
        // Predicated region
        $region25: #{resnet_block_forward.3} parent=11 // pred_check
          %p273 = pneg %p221
        $region26: #{resnet_block_forward.3} parent=11 // pred_check_branch
          %275 = sbr.rel (%p273) target = $region28
        $region27: #{resnet_block_forward.3} parent=11 // pred_region
          _
        $region28: #{resnet_block_forward.3} parent=11 // pred_fallthru
          _
      $region12: #{resnet_block_forward.3} parent=5 // pred_fallthru
        _
      %p276 = scmp.lt.s32.totalorder %s17, 2
      // Predicated region
      $region29: #{resnet_block_forward.3} parent=5 // pred_check
        %p277 = pneg %p276
      $region30: #{resnet_block_forward.3} parent=5 // pred_check_branch
        %279 = sbr.rel (%p277) target = $region32
      $region31: #{resnet_block_forward.3} parent=5 // pred_region
        // Predicated region
        $region33: #{resnet_block_forward.3} parent=31 // pred_check
          %p280 = pneg %p51
        $region34: #{resnet_block_forward.3} parent=31 // pred_check_branch
          %282 = sbr.rel (%p280) target = $region36
        $region35: #{resnet_block_forward.3} parent=31 // pred_region
          %s283 = smul.u32 16, %s25
          %p284 = scmp.lt.s32.totalorder %s24, 1
          %s285 = scalar_select %p284, %s24, 1
          %p286 = scmp.lt.s32.totalorder %s283, 15
          %s287 = scalar_select %p286, %s283, 15
          %s288 = smul.addr %s287, 2
          %s289 = smul.addr %s285, 32
          %s290 = sadd.s32 %s288, %s289
          %s291 = smul.addr %s290, 4
          %s292 = scalar_lea.vmem %s0, %s291
          %s293 = smul.u32 16, %s25
        $region36: #{resnet_block_forward.3} parent=31 // pred_fallthru
          _
        // Predicated region
        $region37: #{resnet_block_forward.3} parent=31 // pred_check
          %p294 = pneg %p77
        $region38: #{resnet_block_forward.3} parent=31 // pred_check_branch
          %296 = sbr.rel (%p294) target = $region40
        $region39: #{resnet_block_forward.3} parent=31 // pred_region
          %p297 = scmp.lt.s32.totalorder %s24, 1
          %s298 = scalar_select %p297, %s24, 1
          %s299 = scalar_lea.vmem %s1, %s298
        $region40: #{resnet_block_forward.3} parent=31 // pred_fallthru
          _
        // Predicated region
        $region41: #{resnet_block_forward.3} parent=31 // pred_check
          %p300 = pneg %p103
        $region42: #{resnet_block_forward.3} parent=31 // pred_check_branch
          %302 = sbr.rel (%p300) target = $region44
        $region43: #{resnet_block_forward.3} parent=31 // pred_region
          %p303 = scmp.lt.s32.totalorder %s24, 1
          %s304 = scalar_select %p303, %s24, 1
          %s305 = scalar_lea.vmem %s2, %s304
        $region44: #{resnet_block_forward.3} parent=31 // pred_fallthru
          _
        // Predicated region
        $region45: #{resnet_block_forward.3} parent=31 // pred_check
          %p306 = pneg %p173
        $region46: #{resnet_block_forward.3} parent=31 // pred_check_branch
          %308 = sbr.rel (%p306) target = $region48
        $region47: #{resnet_block_forward.3} parent=31 // pred_region
          %s309 = smul.u32 16, %s25
          %p310 = scmp.lt.s32.totalorder %s24, 1
          %s311 = scalar_select %p310, %s24, 1
          %p312 = scmp.lt.s32.totalorder %s309, 15
          %s313 = scalar_select %p312, %s309, 15
          %s314 = smul.addr %s313, 2
          %s315 = smul.addr %s311, 32
          %s316 = sadd.s32 %s314, %s315
          %s317 = smul.addr %s316, 8
          %s318 = scalar_lea.vmem %s5, %s317
          %s319 = smul.u32 16, %s25
        $region48: #{resnet_block_forward.3} parent=31 // pred_fallthru
          _
      $region32: #{resnet_block_forward.3} parent=5 // pred_fallthru
        _
      %p320 = scmp.le.s32.totalorder 1, %s17
      %p321 = scmp.lt.s32.totalorder %s17, 3
      %p322 = pnand %p320, %p321
      %p323 = pneg %p322
      // Predicated region
      $region49: #{resnet_block_forward.3} parent=5 // pred_check
        _
      $region50: #{resnet_block_forward.3} parent=5 // pred_check_branch
        %325 = sbr.rel (%p322) target = $region52
      $region51: #{resnet_block_forward.3} parent=5 // pred_region
        %s326 = ssub.s32 %s17, 1
        %s327 = smul.u32 16, %s27
        %p328 = scmp.lt.s32.totalorder %s26, 1
        %s329 = scalar_select %p328, %s26, 1
        %p330 = scmp.lt.s32.totalorder %s327, 15
        %s331 = scalar_select %p330, %s327, 15
        %s332 = smul.addr %s331, 2
        %s333 = smul.addr %s329, 32
        %s334 = sadd.s32 %s332, %s333
        %s335 = smul.addr %s334, 4
        %s336 = scalar_lea.vmem %s0, %s335
        %p337 = pneg %p57
        %p338 = pneg %p54
        %p339 = scmp.lt.s32.totalorder %s26, 1
        %s340 = scalar_select %p339, %s26, 1
        %s341 = scalar_lea.vmem %s1, %s340
        %p342 = pneg %p83
        %p343 = pneg %p80
        %p344 = scmp.lt.s32.totalorder %s26, 1
        %s345 = scalar_select %p344, %s26, 1
        %s346 = scalar_lea.vmem %s2, %s345
        %p347 = pneg %p109
        %p348 = pneg %p106
        %p349 = pneg %p130
        %p350 = pneg %p127
        %p351 = pneg %p151
        %p352 = pneg %p148
        %s353 = smul.u32 16, %s27
        %p354 = scmp.lt.s32.totalorder %s26, 1
        %s355 = scalar_select %p354, %s26, 1
        %p356 = scmp.lt.s32.totalorder %s353, 15
        %s357 = scalar_select %p356, %s353, 15
        %s358 = smul.addr %s357, 2
        %s359 = smul.addr %s355, 32
        %s360 = sadd.s32 %s358, %s359
        %s361 = smul.addr %s360, 8
        %s362 = scalar_lea.vmem %s5, %s361
        %p363 = pneg %p179
        %p364 = pneg %p176
        %p365 = pneg %p200
        %p366 = pneg %p197
        %p367 = pneg %p221
        %p368 = pneg %p218
        %p369 = pneg %p249
        %p370 = pneg %p246
        %s371 = sand.u32 %s236, 1
        %s372 = scalar_lea.sflag [#allocation4], %s371
        %s373 = sand.u32 %s236, 1
        %s374 = smul.addr %s373, 256
        %s375 = scalar_lea.vmem [#allocation3], %s374
        %s376 = smul.u32 16, %s27
        %p377 = scmp.lt.s32.totalorder %s26, 1
        %s378 = scalar_select %p377, %s26, 1
        %p379 = scmp.lt.s32.totalorder %s376, 15
        %s380 = scalar_select %p379, %s376, 15
        %s381 = smul.addr %s380, 2
        %s382 = smul.addr %s378, 32
        %s383 = sadd.s32 %s381, %s382
        %s384 = smul.addr %s383, 4
        %s385 = scalar_lea.vmem %s0, %s384
        %s386 = smul.u32 16, %s27
        %p387 = scmp.lt.s32.totalorder %s26, 1
        %s388 = scalar_select %p387, %s26, 1
        %s389 = scalar_lea.vmem %s1, %s388
        %p390 = scmp.lt.s32.totalorder %s26, 1
        %s391 = scalar_select %p390, %s26, 1
        %s392 = scalar_lea.vmem %s2, %s391
        %s393 = smul.u32 16, %s27
        %p394 = scmp.lt.s32.totalorder %s26, 1
        %s395 = scalar_select %p394, %s26, 1
        %p396 = scmp.lt.s32.totalorder %s393, 15
        %s397 = scalar_select %p396, %s393, 15
        %s398 = smul.addr %s397, 2
        %s399 = smul.addr %s395, 32
        %s400 = sadd.s32 %s398, %s399
        %s401 = smul.addr %s400, 8
        %s402 = scalar_lea.vmem %s5, %s401
        %s403 = smul.u32 16, %s27
        %s404 = smul.u32 16, %s27
        %v406 = vld [vmem:[%s389] sm:$0x1]
        %v407 = vld [vmem:[%s392] sm:$0x1]
        %vm408 = vcmask 516096
        %409 = vst.msk [vmem:[#allocation2] sm:$0x1] %vm408, 0.0
        %410 = vst.msk [vmem:[#allocation2 + $0x18] sm:$0x1] %vm408, 0.0
        %411 = vst.msk [vmem:[#allocation2 + $0x30] sm:$0x1] %vm408, 0.0
        %412 = vst.msk [vmem:[#allocation2 + $0x48] sm:$0x1] %vm408, 0.0
        %413 = vst.msk [vmem:[#allocation2 + $0x60] sm:$0x1] %vm408, 0.0
        %414 = vst.msk [vmem:[#allocation2 + $0x78] sm:$0x1] %vm408, 0.0
        %415 = vst.msk [vmem:[#allocation2 + $0x90] sm:$0x1] %vm408, 0.0
        %416 = vst.msk [vmem:[#allocation2 + $0xa8] sm:$0x1] %vm408, 0.0
        %417 = vst.msk [vmem:[#allocation2 + $0xc0] sm:$0x1] %vm408, 0.0
        %418 = vst.msk [vmem:[#allocation2 + $0xd8] sm:$0x1] %vm408, 0.0
        %419 = vst.msk [vmem:[#allocation2 + $0xf0] sm:$0x1] %vm408, 0.0
        %420 = vst.msk [vmem:[#allocation2 + $0x108] sm:$0x1] %vm408, 0.0
        %421 = vst.msk [vmem:[#allocation2 + $0x120] sm:$0x1] %vm408, 0.0
        %422 = vst.msk [vmem:[#allocation2 + $0x138] sm:$0x1] %vm408, 0.0
        %423 = vst.msk [vmem:[#allocation2 + $0x150] sm:$0x1] %vm408, 0.0
        %424 = vst.msk [vmem:[#allocation2 + $0x168] sm:$0x1] %vm408, 0.0
        %425 = vst.msk [vmem:[#allocation2 + $0x180] sm:$0x1] %vm408, 0.0
        %426 = vst.msk [vmem:[#allocation2 + $0x198] sm:$0x1] %vm408, 0.0
        %427 = vst.msk [vmem:[#allocation2 + $0x11] sm:$0x1] %vm408, 0.0
        %428 = vst.msk [vmem:[#allocation2 + $0x29] sm:$0x1] %vm408, 0.0
        %429 = vst.msk [vmem:[#allocation2 + $0x41] sm:$0x1] %vm408, 0.0
        %430 = vst.msk [vmem:[#allocation2 + $0x59] sm:$0x1] %vm408, 0.0
        %431 = vst.msk [vmem:[#allocation2 + $0x71] sm:$0x1] %vm408, 0.0
        %432 = vst.msk [vmem:[#allocation2 + $0x89] sm:$0x1] %vm408, 0.0
        %433 = vst.msk [vmem:[#allocation2 + $0xa1] sm:$0x1] %vm408, 0.0
        %434 = vst.msk [vmem:[#allocation2 + $0xb9] sm:$0x1] %vm408, 0.0
        %435 = vst.msk [vmem:[#allocation2 + $0xd1] sm:$0x1] %vm408, 0.0
        %436 = vst.msk [vmem:[#allocation2 + $0xe9] sm:$0x1] %vm408, 0.0
        %437 = vst.msk [vmem:[#allocation2 + $0x101] sm:$0x1] %vm408, 0.0
        %438 = vst.msk [vmem:[#allocation2 + $0x119] sm:$0x1] %vm408, 0.0
        %439 = vst.msk [vmem:[#allocation2 + $0x131] sm:$0x1] %vm408, 0.0
        %440 = vst.msk [vmem:[#allocation2 + $0x149] sm:$0x1] %vm408, 0.0
        %441 = vst.msk [vmem:[#allocation2 + $0x161] sm:$0x1] %vm408, 0.0
        %442 = vst.msk [vmem:[#allocation2 + $0x179] sm:$0x1] %vm408, 0.0
        %443 = vst.msk [vmem:[#allocation2 + $0x191] sm:$0x1] %vm408, 0.0
        %444 = vst.msk [vmem:[#allocation2 + $0x1a9] sm:$0x1] %vm408, 0.0
        %v445 = vld [vmem:[%s385] sm:$0xf]
        %v446 = vld [vmem:[%s385 + $0x4] sm:$0xf]
        %v447 = vld [vmem:[%s385 + $0x8] sm:$0xf]
        %v448 = vld [vmem:[%s385 + $0xc] sm:$0xf]
        %v449 = vld [vmem:[%s385 + $0x10] sm:$0xf]
        %v450 = vld [vmem:[%s385 + $0x14] sm:$0xf]
        %v451 = vld [vmem:[%s385 + $0x18] sm:$0xf]
        %v452 = vld [vmem:[%s385 + $0x1c] sm:$0xf]
        %v453 = vld [vmem:[%s385 + $0x20] sm:$0xf]
        %v454 = vld [vmem:[%s385 + $0x24] sm:$0xf]
        %v455 = vld [vmem:[%s385 + $0x28] sm:$0xf]
        %v456 = vld [vmem:[%s385 + $0x2c] sm:$0xf]
        %v457 = vld [vmem:[%s385 + $0x30] sm:$0xf]
        %v458 = vld [vmem:[%s385 + $0x34] sm:$0xf]
        %v459 = vld [vmem:[%s385 + $0x38] sm:$0xf]
        %v460 = vld [vmem:[%s385 + $0x3c] sm:$0xf]
        %v461 = vld [vmem:[%s385 + $0x40] sm:$0xf]
        %v462 = vld [vmem:[%s385 + $0x44] sm:$0xf]
        %v463 = vld [vmem:[%s385 + $0x48] sm:$0xf]
        %v464 = vld [vmem:[%s385 + $0x4c] sm:$0xf]
        %v465 = vld [vmem:[%s385 + $0x50] sm:$0xf]
        %v466 = vld [vmem:[%s385 + $0x54] sm:$0xf]
        %v467 = vld [vmem:[%s385 + $0x58] sm:$0xf]
        %v468 = vld [vmem:[%s385 + $0x5c] sm:$0xf]
        %v469 = vld [vmem:[%s385 + $0x60] sm:$0xf]
        %v470 = vld [vmem:[%s385 + $0x64] sm:$0xf]
        %v471 = vld [vmem:[%s385 + $0x68] sm:$0xf]
        %v472 = vld [vmem:[%s385 + $0x6c] sm:$0xf]
        %v473 = vld [vmem:[%s385 + $0x70] sm:$0xf]
        %v474 = vld [vmem:[%s385 + $0x74] sm:$0xf]
        %v475 = vld [vmem:[%s385 + $0x78] sm:$0xf]
        %v476 = vld [vmem:[%s385 + $0x7c] sm:$0xf]
        %v477 = vunpack.c.l.bf16 %v445
        %v478 = vunpack.c.l.bf16 %v446
        %v479 = vunpack.c.l.bf16 %v447
        %v480 = vunpack.c.l.bf16 %v448
        %v481 = vunpack.c.l.bf16 %v449
        %v482 = vunpack.c.l.bf16 %v450
        %v483 = vunpack.c.l.bf16 %v451
        %v484 = vunpack.c.l.bf16 %v452
        %v485 = vunpack.c.l.bf16 %v453
        %v486 = vunpack.c.l.bf16 %v454
        %v487 = vunpack.c.l.bf16 %v455
        %v488 = vunpack.c.l.bf16 %v456
        %v489 = vunpack.c.l.bf16 %v457
        %v490 = vunpack.c.l.bf16 %v458
        %v491 = vunpack.c.l.bf16 %v459
        %v492 = vunpack.c.l.bf16 %v460
        %v493 = vunpack.c.l.bf16 %v461
        %v494 = vunpack.c.l.bf16 %v462
        %v495 = vunpack.c.l.bf16 %v463
        %v496 = vunpack.c.l.bf16 %v464
        %v497 = vunpack.c.l.bf16 %v465
        %v498 = vunpack.c.l.bf16 %v466
        %v499 = vunpack.c.l.bf16 %v467
        %v500 = vunpack.c.l.bf16 %v468
        %v501 = vunpack.c.l.bf16 %v469
        %v502 = vunpack.c.l.bf16 %v470
        %v503 = vunpack.c.l.bf16 %v471
        %v504 = vunpack.c.l.bf16 %v472
        %v505 = vunpack.c.l.bf16 %v473
        %v506 = vunpack.c.l.bf16 %v474
        %v507 = vunpack.c.l.bf16 %v475
        %v508 = vunpack.c.l.bf16 %v476
        %v510 = vlaneseq
        %v511 = vshrl.u32 %v510, 7
        %v512 = vsub.s32 0, %v511
        %v513 = vrot.slane %v406, %v512
        %v515 = vmul.f32 %v477, %v513
        %v516 = vmul.f32 %v478, %v513
        %v517 = vmul.f32 %v479, %v513
        %v518 = vmul.f32 %v480, %v513
        %v519 = vmul.f32 %v481, %v513
        %v520 = vmul.f32 %v482, %v513
        %v521 = vmul.f32 %v483, %v513
        %v522 = vmul.f32 %v484, %v513
        %v523 = vmul.f32 %v485, %v513
        %v524 = vmul.f32 %v486, %v513
        %v525 = vmul.f32 %v487, %v513
        %v526 = vmul.f32 %v488, %v513
        %v527 = vmul.f32 %v489, %v513
        %v528 = vmul.f32 %v490, %v513
        %v529 = vmul.f32 %v491, %v513
        %v530 = vmul.f32 %v492, %v513
        %v531 = vmul.f32 %v493, %v513
        %v532 = vmul.f32 %v494, %v513
        %v533 = vmul.f32 %v495, %v513
        %v534 = vmul.f32 %v496, %v513
        %v535 = vmul.f32 %v497, %v513
        %v536 = vmul.f32 %v498, %v513
        %v537 = vmul.f32 %v499, %v513
        %v538 = vmul.f32 %v500, %v513
        %v539 = vmul.f32 %v501, %v513
        %v540 = vmul.f32 %v502, %v513
        %v541 = vmul.f32 %v503, %v513
        %v542 = vmul.f32 %v504, %v513
        %v543 = vmul.f32 %v505, %v513
        %v544 = vmul.f32 %v506, %v513
        %v545 = vmul.f32 %v507, %v513
        %v546 = vmul.f32 %v508, %v513
        %v548 = vlaneseq
        %v549 = vshrl.u32 %v548, 7
        %v550 = vsub.s32 0, %v549
        %v551 = vrot.slane %v407, %v550
        %v553 = vadd.f32 %v515, %v551
        %v554 = vadd.f32 %v516, %v551
        %v555 = vadd.f32 %v517, %v551
        %v556 = vadd.f32 %v518, %v551
        %v557 = vadd.f32 %v519, %v551
        %v558 = vadd.f32 %v520, %v551
        %v559 = vadd.f32 %v521, %v551
        %v560 = vadd.f32 %v522, %v551
        %v561 = vadd.f32 %v523, %v551
        %v562 = vadd.f32 %v524, %v551
        %v563 = vadd.f32 %v525, %v551
        %v564 = vadd.f32 %v526, %v551
        %v565 = vadd.f32 %v527, %v551
        %v566 = vadd.f32 %v528, %v551
        %v567 = vadd.f32 %v529, %v551
        %v568 = vadd.f32 %v530, %v551
        %v569 = vadd.f32 %v531, %v551
        %v570 = vadd.f32 %v532, %v551
        %v571 = vadd.f32 %v533, %v551
        %v572 = vadd.f32 %v534, %v551
        %v573 = vadd.f32 %v535, %v551
        %v574 = vadd.f32 %v536, %v551
        %v575 = vadd.f32 %v537, %v551
        %v576 = vadd.f32 %v538, %v551
        %v577 = vadd.f32 %v539, %v551
        %v578 = vadd.f32 %v540, %v551
        %v579 = vadd.f32 %v541, %v551
        %v580 = vadd.f32 %v542, %v551
        %v581 = vadd.f32 %v543, %v551
        %v582 = vadd.f32 %v544, %v551
        %v583 = vadd.f32 %v545, %v551
        %v584 = vadd.f32 %v546, %v551
        %v585 = vxor.u32 %v553, 2147483648
        %v586 = vxor.u32 %v554, 2147483648
        %v587 = vxor.u32 %v555, 2147483648
        %v588 = vxor.u32 %v556, 2147483648
        %v589 = vxor.u32 %v557, 2147483648
        %v590 = vxor.u32 %v558, 2147483648
        %v591 = vxor.u32 %v559, 2147483648
        %v592 = vxor.u32 %v560, 2147483648
        %v593 = vxor.u32 %v561, 2147483648
        %v594 = vxor.u32 %v562, 2147483648
        %v595 = vxor.u32 %v563, 2147483648
        %v596 = vxor.u32 %v564, 2147483648
        %v597 = vxor.u32 %v565, 2147483648
        %v598 = vxor.u32 %v566, 2147483648
        %v599 = vxor.u32 %v567, 2147483648
        %v600 = vxor.u32 %v568, 2147483648
        %v601 = vxor.u32 %v569, 2147483648
        %v602 = vxor.u32 %v570, 2147483648
        %v603 = vxor.u32 %v571, 2147483648
        %v604 = vxor.u32 %v572, 2147483648
        %v605 = vxor.u32 %v573, 2147483648
        %v606 = vxor.u32 %v574, 2147483648
        %v607 = vxor.u32 %v575, 2147483648
        %v608 = vxor.u32 %v576, 2147483648
        %v609 = vxor.u32 %v577, 2147483648
        %v610 = vxor.u32 %v578, 2147483648
        %v611 = vxor.u32 %v579, 2147483648
        %v612 = vxor.u32 %v580, 2147483648
        %v613 = vxor.u32 %v581, 2147483648
        %v614 = vxor.u32 %v582, 2147483648
        %v615 = vxor.u32 %v583, 2147483648
        %v616 = vxor.u32 %v584, 2147483648
        %v617 = vmul.f32 %v585, 1.442695
        %v618 = vpow.pop %v617
        %v619 = vmul.f32 %v586, 1.442695
        %v620 = vpow.pop %v619
        %v621 = vmul.f32 %v587, 1.442695
        %v622 = vpow.pop %v621
        %v623 = vmul.f32 %v588, 1.442695
        %v624 = vpow.pop %v623
        %v625 = vmul.f32 %v589, 1.442695
        %v626 = vpow.pop %v625
        %v627 = vmul.f32 %v590, 1.442695
        %v628 = vpow.pop %v627
        %v629 = vmul.f32 %v591, 1.442695
        %v630 = vpow.pop %v629
        %v631 = vmul.f32 %v592, 1.442695
        %v632 = vpow.pop %v631
        %v633 = vmul.f32 %v593, 1.442695
        %v634 = vpow.pop %v633
        %v635 = vmul.f32 %v594, 1.442695
        %v636 = vpow.pop %v635
        %v637 = vmul.f32 %v595, 1.442695
        %v638 = vpow.pop %v637
        %v639 = vmul.f32 %v596, 1.442695
        %v640 = vpow.pop %v639
        %v641 = vmul.f32 %v597, 1.442695
        %v642 = vpow.pop %v641
        %v643 = vmul.f32 %v598, 1.442695
        %v644 = vpow.pop %v643
        %v645 = vmul.f32 %v599, 1.442695
        %v646 = vpow.pop %v645
        %v647 = vmul.f32 %v600, 1.442695
        %v648 = vpow.pop %v647
        %v649 = vmul.f32 %v601, 1.442695
        %v650 = vpow.pop %v649
        %v651 = vmul.f32 %v602, 1.442695
        %v652 = vpow.pop %v651
        %v653 = vmul.f32 %v603, 1.442695
        %v654 = vpow.pop %v653
        %v655 = vmul.f32 %v604, 1.442695
        %v656 = vpow.pop %v655
        %v657 = vmul.f32 %v605, 1.442695
        %v658 = vpow.pop %v657
        %v659 = vmul.f32 %v606, 1.442695
        %v660 = vpow.pop %v659
        %v661 = vmul.f32 %v607, 1.442695
        %v662 = vpow.pop %v661
        %v663 = vmul.f32 %v608, 1.442695
        %v664 = vpow.pop %v663
        %v665 = vmul.f32 %v609, 1.442695
        %v666 = vpow.pop %v665
        %v667 = vmul.f32 %v610, 1.442695
        %v668 = vpow.pop %v667
        %v669 = vmul.f32 %v611, 1.442695
        %v670 = vpow.pop %v669
        %v671 = vmul.f32 %v612, 1.442695
        %v672 = vpow.pop %v671
        %v673 = vmul.f32 %v613, 1.442695
        %v674 = vpow.pop %v673
        %v675 = vmul.f32 %v614, 1.442695
        %v676 = vpow.pop %v675
        %v677 = vmul.f32 %v615, 1.442695
        %v678 = vpow.pop %v677
        %v679 = vmul.f32 %v616, 1.442695
        %v680 = vpow.pop %v679
        %v681 = vadd.f32 %v618, 1.0
        %v682 = vadd.f32 %v620, 1.0
        %v683 = vadd.f32 %v622, 1.0
        %v684 = vadd.f32 %v624, 1.0
        %v685 = vadd.f32 %v626, 1.0
        %v686 = vadd.f32 %v628, 1.0
        %v687 = vadd.f32 %v630, 1.0
        %v688 = vadd.f32 %v632, 1.0
        %v689 = vadd.f32 %v634, 1.0
        %v690 = vadd.f32 %v636, 1.0
        %v691 = vadd.f32 %v638, 1.0
        %v692 = vadd.f32 %v640, 1.0
        %v693 = vadd.f32 %v642, 1.0
        %v694 = vadd.f32 %v644, 1.0
        %v695 = vadd.f32 %v646, 1.0
        %v696 = vadd.f32 %v648, 1.0
        %v697 = vadd.f32 %v650, 1.0
        %v698 = vadd.f32 %v652, 1.0
        %v699 = vadd.f32 %v654, 1.0
        %v700 = vadd.f32 %v656, 1.0
        %v701 = vadd.f32 %v658, 1.0
        %v702 = vadd.f32 %v660, 1.0
        %v703 = vadd.f32 %v662, 1.0
        %v704 = vadd.f32 %v664, 1.0
        %v705 = vadd.f32 %v666, 1.0
        %v706 = vadd.f32 %v668, 1.0
        %v707 = vadd.f32 %v670, 1.0
        %v708 = vadd.f32 %v672, 1.0
        %v709 = vadd.f32 %v674, 1.0
        %v710 = vadd.f32 %v676, 1.0
        %v711 = vadd.f32 %v678, 1.0
        %v712 = vadd.f32 %v680, 1.0
        %v713 = vrcp.pop %v681
        %v714 = vmul.f32 1.0, %v713
        %v715 = vrcp.pop %v682
        %v716 = vmul.f32 1.0, %v715
        %v717 = vrcp.pop %v683
        %v718 = vmul.f32 1.0, %v717
        %v719 = vrcp.pop %v684
        %v720 = vmul.f32 1.0, %v719
        %v721 = vrcp.pop %v685
        %v722 = vmul.f32 1.0, %v721
        %v723 = vrcp.pop %v686
        %v724 = vmul.f32 1.0, %v723
        %v725 = vrcp.pop %v687
        %v726 = vmul.f32 1.0, %v725
        %v727 = vrcp.pop %v688
        %v728 = vmul.f32 1.0, %v727
        %v729 = vrcp.pop %v689
        %v730 = vmul.f32 1.0, %v729
        %v731 = vrcp.pop %v690
        %v732 = vmul.f32 1.0, %v731
        %v733 = vrcp.pop %v691
        %v734 = vmul.f32 1.0, %v733
        %v735 = vrcp.pop %v692
        %v736 = vmul.f32 1.0, %v735
        %v737 = vrcp.pop %v693
        %v738 = vmul.f32 1.0, %v737
        %v739 = vrcp.pop %v694
        %v740 = vmul.f32 1.0, %v739
        %v741 = vrcp.pop %v695
        %v742 = vmul.f32 1.0, %v741
        %v743 = vrcp.pop %v696
        %v744 = vmul.f32 1.0, %v743
        %v745 = vrcp.pop %v697
        %v746 = vmul.f32 1.0, %v745
        %v747 = vrcp.pop %v698
        %v748 = vmul.f32 1.0, %v747
        %v749 = vrcp.pop %v699
        %v750 = vmul.f32 1.0, %v749
        %v751 = vrcp.pop %v700
        %v752 = vmul.f32 1.0, %v751
        %v753 = vrcp.pop %v701
        %v754 = vmul.f32 1.0, %v753
        %v755 = vrcp.pop %v702
        %v756 = vmul.f32 1.0, %v755
        %v757 = vrcp.pop %v703
        %v758 = vmul.f32 1.0, %v757
        %v759 = vrcp.pop %v704
        %v760 = vmul.f32 1.0, %v759
        %v761 = vrcp.pop %v705
        %v762 = vmul.f32 1.0, %v761
        %v763 = vrcp.pop %v706
        %v764 = vmul.f32 1.0, %v763
        %v765 = vrcp.pop %v707
        %v766 = vmul.f32 1.0, %v765
        %v767 = vrcp.pop %v708
        %v768 = vmul.f32 1.0, %v767
        %v769 = vrcp.pop %v709
        %v770 = vmul.f32 1.0, %v769
        %v771 = vrcp.pop %v710
        %v772 = vmul.f32 1.0, %v771
        %v773 = vrcp.pop %v711
        %v774 = vmul.f32 1.0, %v773
        %v775 = vrcp.pop %v712
        %v776 = vmul.f32 1.0, %v775
        %v777 = vmul.f32 %v553, %v714
        %v778 = vmul.f32 %v554, %v716
        %v779 = vmul.f32 %v555, %v718
        %v780 = vmul.f32 %v556, %v720
        %v781 = vmul.f32 %v557, %v722
        %v782 = vmul.f32 %v558, %v724
        %v783 = vmul.f32 %v559, %v726
        %v784 = vmul.f32 %v560, %v728
        %v785 = vmul.f32 %v561, %v730
        %v786 = vmul.f32 %v562, %v732
        %v787 = vmul.f32 %v563, %v734
        %v788 = vmul.f32 %v564, %v736
        %v789 = vmul.f32 %v565, %v738
        %v790 = vmul.f32 %v566, %v740
        %v791 = vmul.f32 %v567, %v742
        %v792 = vmul.f32 %v568, %v744
        %v793 = vmul.f32 %v569, %v746
        %v794 = vmul.f32 %v570, %v748
        %v795 = vmul.f32 %v571, %v750
        %v796 = vmul.f32 %v572, %v752
        %v797 = vmul.f32 %v573, %v754
        %v798 = vmul.f32 %v574, %v756
        %v799 = vmul.f32 %v575, %v758
        %v800 = vmul.f32 %v576, %v760
        %v801 = vmul.f32 %v577, %v762
        %v802 = vmul.f32 %v578, %v764
        %v803 = vmul.f32 %v579, %v766
        %v804 = vmul.f32 %v580, %v768
        %v805 = vmul.f32 %v581, %v770
        %v806 = vmul.f32 %v582, %v772
        %v807 = vmul.f32 %v583, %v774
        %v808 = vmul.f32 %v584, %v776
        %s809 = scalar_lea.vmem [#allocation2], 24
        %vm810 = vcmask 523264
        %811 = vst.msk [vmem:[%s809 + $0x1] sm:$0xff] %vm810, %v777
        %812 = vst.msk [vmem:[%s809 + $0x9] sm:$0xff] %vm810, %v778
        %813 = vst.msk [vmem:[%s809 + $0x19] sm:$0xff] %vm810, %v779
        %814 = vst.msk [vmem:[%s809 + $0x21] sm:$0xff] %vm810, %v780
        %815 = vst.msk [vmem:[%s809 + $0x31] sm:$0xff] %vm810, %v781
        %816 = vst.msk [vmem:[%s809 + $0x39] sm:$0xff] %vm810, %v782
        %817 = vst.msk [vmem:[%s809 + $0x49] sm:$0xff] %vm810, %v783
        %818 = vst.msk [vmem:[%s809 + $0x51] sm:$0xff] %vm810, %v784
        %819 = vst.msk [vmem:[%s809 + $0x61] sm:$0xff] %vm810, %v785
        %820 = vst.msk [vmem:[%s809 + $0x69] sm:$0xff] %vm810, %v786
        %821 = vst.msk [vmem:[%s809 + $0x79] sm:$0xff] %vm810, %v787
        %822 = vst.msk [vmem:[%s809 + $0x81] sm:$0xff] %vm810, %v788
        %823 = vst.msk [vmem:[%s809 + $0x91] sm:$0xff] %vm810, %v789
        %824 = vst.msk [vmem:[%s809 + $0x99] sm:$0xff] %vm810, %v790
        %825 = vst.msk [vmem:[%s809 + $0xa9] sm:$0xff] %vm810, %v791
        %826 = vst.msk [vmem:[%s809 + $0xb1] sm:$0xff] %vm810, %v792
        %827 = vst.msk [vmem:[%s809 + $0xc1] sm:$0xff] %vm810, %v793
        %828 = vst.msk [vmem:[%s809 + $0xc9] sm:$0xff] %vm810, %v794
        %829 = vst.msk [vmem:[%s809 + $0xd9] sm:$0xff] %vm810, %v795
        %830 = vst.msk [vmem:[%s809 + $0xe1] sm:$0xff] %vm810, %v796
        %831 = vst.msk [vmem:[%s809 + $0xf1] sm:$0xff] %vm810, %v797
        %832 = vst.msk [vmem:[%s809 + $0xf9] sm:$0xff] %vm810, %v798
        %833 = vst.msk [vmem:[%s809 + $0x109] sm:$0xff] %vm810, %v799
        %834 = vst.msk [vmem:[%s809 + $0x111] sm:$0xff] %vm810, %v800
        %835 = vst.msk [vmem:[%s809 + $0x121] sm:$0xff] %vm810, %v801
        %836 = vst.msk [vmem:[%s809 + $0x129] sm:$0xff] %vm810, %v802
        %837 = vst.msk [vmem:[%s809 + $0x139] sm:$0xff] %vm810, %v803
        %838 = vst.msk [vmem:[%s809 + $0x141] sm:$0xff] %vm810, %v804
        %839 = vst.msk [vmem:[%s809 + $0x151] sm:$0xff] %vm810, %v805
        %840 = vst.msk [vmem:[%s809 + $0x159] sm:$0xff] %vm810, %v806
        %841 = vst.msk [vmem:[%s809 + $0x169] sm:$0xff] %vm810, %v807
        %842 = vst.msk [vmem:[%s809 + $0x171] sm:$0xff] %vm810, %v808
        %843 = vst.msk [vmem:[#allocation2 + $0x1] sm:$0xff] %vm810, 0.0
        %844 = vst.msk [vmem:[#allocation2 + $0x9] sm:$0xff] %vm810, 0.0
        %s845 = scalar_lea.vmem [#allocation2], 408
        %846 = vst.msk [vmem:[%s845 + $0x1] sm:$0xff] %vm810, 0.0
        %847 = vst.msk [vmem:[%s845 + $0x9] sm:$0xff] %vm810, 0.0
        %v848 = vld [vmem:[#allocation2] sm:$0xff]
        %v849 = vld [vmem:[#allocation2 + $0x8] sm:$0xff]
        %v850 = vld [vmem:[#allocation2 + $0x18] sm:$0xff]
        %v851 = vld [vmem:[#allocation2 + $0x20] sm:$0xff]
        %v852 = vld [vmem:[#allocation2 + $0x30] sm:$0xff]
        %v853 = vld [vmem:[#allocation2 + $0x38] sm:$0xff]
        %v854 = vld [vmem:[#allocation2 + $0x48] sm:$0xff]
        %v855 = vld [vmem:[#allocation2 + $0x50] sm:$0xff]
        %v856 = vld [vmem:[#allocation2 + $0x60] sm:$0xff]
        %v857 = vld [vmem:[#allocation2 + $0x68] sm:$0xff]
        %v858 = vld [vmem:[#allocation2 + $0x78] sm:$0xff]
        %v859 = vld [vmem:[#allocation2 + $0x80] sm:$0xff]
        %v860 = vld [vmem:[#allocation2 + $0x90] sm:$0xff]
        %v861 = vld [vmem:[#allocation2 + $0x98] sm:$0xff]
        %v862 = vld [vmem:[#allocation2 + $0xa8] sm:$0xff]
        %v863 = vld [vmem:[#allocation2 + $0xb0] sm:$0xff]
        %v864 = vld [vmem:[#allocation2 + $0xc0] sm:$0xff]
        %v865 = vld [vmem:[#allocation2 + $0xc8] sm:$0xff]
        %v866 = vld [vmem:[#allocation2 + $0xd8] sm:$0xff]
        %v867 = vld [vmem:[#allocation2 + $0xe0] sm:$0xff]
        %v868 = vld [vmem:[#allocation2 + $0xf0] sm:$0xff]
        %v869 = vld [vmem:[#allocation2 + $0xf8] sm:$0xff]
        %v870 = vld [vmem:[#allocation2 + $0x108] sm:$0xff]
        %v871 = vld [vmem:[#allocation2 + $0x110] sm:$0xff]
        %v872 = vld [vmem:[#allocation2 + $0x120] sm:$0xff]
        %v873 = vld [vmem:[#allocation2 + $0x128] sm:$0xff]
        %v874 = vld [vmem:[#allocation2 + $0x138] sm:$0xff]
        %v875 = vld [vmem:[#allocation2 + $0x140] sm:$0xff]
        %v876 = vld [vmem:[#allocation2 + $0x150] sm:$0xff]
        %v877 = vld [vmem:[#allocation2 + $0x158] sm:$0xff]
        %v878 = vld [vmem:[#allocation2 + $0x168] sm:$0xff]
        %v879 = vld [vmem:[#allocation2 + $0x170] sm:$0xff]
        %v880 = vpack.c.bf16 %v849, %v848
        %v881 = vpack.c.bf16 %v851, %v850
        %v882 = vpack.c.bf16 %v853, %v852
        %v883 = vpack.c.bf16 %v855, %v854
        %v884 = vpack.c.bf16 %v857, %v856
        %v885 = vpack.c.bf16 %v859, %v858
        %v886 = vpack.c.bf16 %v861, %v860
        %v887 = vpack.c.bf16 %v863, %v862
        %v888 = vpack.c.bf16 %v865, %v864
        %v889 = vpack.c.bf16 %v867, %v866
        %v890 = vpack.c.bf16 %v869, %v868
        %v891 = vpack.c.bf16 %v871, %v870
        %v892 = vpack.c.bf16 %v873, %v872
        %v893 = vpack.c.bf16 %v875, %v874
        %v894 = vpack.c.bf16 %v877, %v876
        %v895 = vpack.c.bf16 %v879, %v878
        %v896 = vld [vmem:[%s3] sm:$0xf]
        %v897 = vld [vmem:[%s3 + $0x4] sm:$0xf]
        %v898 = vld [vmem:[%s3 + $0x8] sm:$0xf]
        %v899 = vld [vmem:[%s3 + $0xc] sm:$0xf]
        %v900 = vld [vmem:[%s3 + $0x10] sm:$0xf]
        %v901 = vld [vmem:[%s3 + $0x14] sm:$0xf]
        %v902 = vld [vmem:[%s3 + $0x18] sm:$0xf]
        %v903 = vld [vmem:[%s3 + $0x1c] sm:$0xf]
        %v904 = vld [vmem:[#allocation2 + $0x1] sm:$0xff]
        %v905 = vld [vmem:[#allocation2 + $0x9] sm:$0xff]
        %v906 = vld [vmem:[#allocation2 + $0x19] sm:$0xff]
        %v907 = vld [vmem:[#allocation2 + $0x21] sm:$0xff]
        %v908 = vld [vmem:[#allocation2 + $0x31] sm:$0xff]
        %v909 = vld [vmem:[#allocation2 + $0x39] sm:$0xff]
        %v910 = vld [vmem:[#allocation2 + $0x49] sm:$0xff]
        %v911 = vld [vmem:[#allocation2 + $0x51] sm:$0xff]
        %v912 = vld [vmem:[#allocation2 + $0x61] sm:$0xff]
        %v913 = vld [vmem:[#allocation2 + $0x69] sm:$0xff]
        %v914 = vld [vmem:[#allocation2 + $0x79] sm:$0xff]
        %v915 = vld [vmem:[#allocation2 + $0x81] sm:$0xff]
        %v916 = vld [vmem:[#allocation2 + $0x91] sm:$0xff]
        %v917 = vld [vmem:[#allocation2 + $0x99] sm:$0xff]
        %v918 = vld [vmem:[#allocation2 + $0xa9] sm:$0xff]
        %v919 = vld [vmem:[#allocation2 + $0xb1] sm:$0xff]
        %v920 = vld [vmem:[#allocation2 + $0xc1] sm:$0xff]
        %v921 = vld [vmem:[#allocation2 + $0xc9] sm:$0xff]
        %v922 = vld [vmem:[#allocation2 + $0xd9] sm:$0xff]
        %v923 = vld [vmem:[#allocation2 + $0xe1] sm:$0xff]
        %v924 = vld [vmem:[#allocation2 + $0xf1] sm:$0xff]
        %v925 = vld [vmem:[#allocation2 + $0xf9] sm:$0xff]
        %v926 = vld [vmem:[#allocation2 + $0x109] sm:$0xff]
        %v927 = vld [vmem:[#allocation2 + $0x111] sm:$0xff]
        %v928 = vld [vmem:[#allocation2 + $0x121] sm:$0xff]
        %v929 = vld [vmem:[#allocation2 + $0x129] sm:$0xff]
        %v930 = vld [vmem:[#allocation2 + $0x139] sm:$0xff]
        %v931 = vld [vmem:[#allocation2 + $0x141] sm:$0xff]
        %v932 = vld [vmem:[#allocation2 + $0x151] sm:$0xff]
        %v933 = vld [vmem:[#allocation2 + $0x159] sm:$0xff]
        %v934 = vld [vmem:[#allocation2 + $0x169] sm:$0xff]
        %v935 = vld [vmem:[#allocation2 + $0x171] sm:$0xff]
        %v936 = vpack.c.bf16 %v905, %v904
        %v937 = vpack.c.bf16 %v907, %v906
        %v938 = vpack.c.bf16 %v909, %v908
        %v939 = vpack.c.bf16 %v911, %v910
        %v940 = vpack.c.bf16 %v913, %v912
        %v941 = vpack.c.bf16 %v915, %v914
        %v942 = vpack.c.bf16 %v917, %v916
        %v943 = vpack.c.bf16 %v919, %v918
        %v944 = vpack.c.bf16 %v921, %v920
        %v945 = vpack.c.bf16 %v923, %v922
        %v946 = vpack.c.bf16 %v925, %v924
        %v947 = vpack.c.bf16 %v927, %v926
        %v948 = vpack.c.bf16 %v929, %v928
        %v949 = vpack.c.bf16 %v931, %v930
        %v950 = vpack.c.bf16 %v933, %v932
        %v951 = vpack.c.bf16 %v935, %v934
        %s952 = scalar_lea.vmem %s3, 32
        %v953 = vld [vmem:[%s952] sm:$0xf]
        %v954 = vld [vmem:[%s952 + $0x4] sm:$0xf]
        %v955 = vld [vmem:[%s952 + $0x8] sm:$0xf]
        %v956 = vld [vmem:[%s952 + $0xc] sm:$0xf]
        %v957 = vld [vmem:[%s952 + $0x10] sm:$0xf]
        %v958 = vld [vmem:[%s952 + $0x14] sm:$0xf]
        %v959 = vld [vmem:[%s952 + $0x18] sm:$0xf]
        %v960 = vld [vmem:[%s952 + $0x1c] sm:$0xf]
        %v969 = vunpack.c.l.b16 %v953
        %v970 = vunpack.c.l.b16 %v954
        %v971 = vunpack.c.l.b16 %v955
        %v972 = vunpack.c.l.b16 %v956
        %v973 = vunpack.c.l.b16 %v957
        %v974 = vunpack.c.l.b16 %v958
        %v975 = vunpack.c.l.b16 %v959
        %v976 = vunpack.c.l.b16 %v960
        %v977 = vpack.c.b16 %v970, %v969
        %v978 = vpack.c.b16 %v972, %v971
        %v979 = vpack.c.b16 %v974, %v973
        %v980 = vpack.c.b16 %v976, %v975
        %v986 = vsel %vm810, %v936, 0
        %v989 = vsel %vm810, %v937, 0
        %v992 = vsel %vm810, %v938, 0
        %v995 = vsel %vm810, %v939, 0
        %v998 = vsel %vm810, %v940, 0
        %v1001 = vsel %vm810, %v941, 0
        %v1004 = vsel %vm810, %v942, 0
        %v1007 = vsel %vm810, %v943, 0
        %v1010 = vsel %vm810, %v944, 0
        %v1013 = vsel %vm810, %v945, 0
        %v1016 = vsel %vm810, %v946, 0
        %v1019 = vsel %vm810, %v947, 0
        %v1022 = vsel %vm810, %v948, 0
        %v1025 = vsel %vm810, %v949, 0
        %v1028 = vsel %vm810, %v950, 0
        %v1031 = vsel %vm810, %v951, 0
        %1033 = vmatprep.subr.bf16.mxu0 0
        %1034 = vmatpush1.bf16.msra.mxu0 %v977
        %1035 = vmatprep.subr.bf16.mxu0 0
        %1036 = vmatpush1.bf16.msra.mxu0 %v978
        %1037 = vmatprep.subr.bf16.mxu0 0
        %1038 = vmatpush1.bf16.msra.mxu0 %v979
        %1039 = vmatprep.subr.bf16.mxu0 0
        %1040 = vmatpush1.bf16.msra.mxu0 %v980
        %1041 = vmatprep.subr.bf16.mxu0 0
        %1042 = vmatpush1.bf16.msra.mxu0 0
        %1043 = vmatprep.subr.bf16.mxu0 0
        %1044 = vmatpush1.bf16.msra.mxu0 0
        %1045 = vmatprep.subr.bf16.mxu0 0
        %1046 = vmatpush1.bf16.msra.mxu0 0
        %1047 = vmatprep.subr.bf16.mxu0 0
        %1048 = vmatpush1.bf16.msra.mxu0 0
        %1049 = vmatprep.subr.bf16.mxu0 0
        %1050 = vmatpush1.bf16.msra.mxu0 0
        %1051 = vmatprep.subr.bf16.mxu0 0
        %1052 = vmatpush1.bf16.msra.mxu0 0
        %1053 = vmatprep.subr.bf16.mxu0 0
        %1054 = vmatpush1.bf16.msra.mxu0 0
        %1055 = vmatprep.subr.bf16.mxu0 0
        %1056 = vmatpush1.bf16.msra.mxu0 0
        %1057 = vmatprep.subr.bf16.mxu0 0
        %1058 = vmatpush1.bf16.msra.mxu0 0
        %1059 = vmatprep.subr.bf16.mxu0 0
        %1060 = vmatpush1.bf16.msra.mxu0 0
        %1061 = vmatprep.subr.bf16.mxu0 0
        %1062 = vmatpush1.bf16.msra.mxu0 0
        %1063 = vmatprep.subr.bf16.mxu0 0
        %1064 = vmatpush1.bf16.msra.mxu0 0
        %1065 = vmatprep.mubr.bf16.mxu0 0
        %1066 = vmatmul.mubr.bf16.gmra.mrb[0].mxu0 %v986
        %v1067 = vpop.f32.mrb[0].mxu0
        %v1068 = vadd.f32 0.0, %v1067
        %v1069 = vpop.f32.mrb[0].mxu0
        %v1070 = vpop.f32.mrb[0].mxu0
        %v1071 = vadd.f32 0.0, %v1070
        %v1072 = vpop.f32.mrb[0].mxu0
        %1073 = vmatprep.mubr.bf16.mxu0 0
        %1074 = vmatmul.mubr.bf16.gmra.mrb[0].mxu0 %v989
        %v1075 = vpop.f32.mrb[0].mxu0
        %v1076 = vadd.f32 0.0, %v1075
        %v1077 = vpop.f32.mrb[0].mxu0
        %v1078 = vpop.f32.mrb[0].mxu0
        %v1079 = vadd.f32 0.0, %v1078
        %v1080 = vpop.f32.mrb[0].mxu0
        %1081 = vmatprep.mubr.bf16.mxu0 0
        %1082 = vmatmul.mubr.bf16.gmra.mrb[0].mxu0 %v992
        %v1083 = vpop.f32.mrb[0].mxu0
        %v1084 = vadd.f32 0.0, %v1083
        %v1085 = vpop.f32.mrb[0].mxu0
        %v1086 = vpop.f32.mrb[0].mxu0
        %v1087 = vadd.f32 0.0, %v1086
        %v1088 = vpop.f32.mrb[0].mxu0
        %1089 = vmatprep.mubr.bf16.mxu0 0
        %1090 = vmatmul.mubr.bf16.gmra.mrb[0].mxu0 %v995
        %v1091 = vpop.f32.mrb[0].mxu0
        %v1092 = vadd.f32 0.0, %v1091
        %v1093 = vpop.f32.mrb[0].mxu0
        %v1094 = vpop.f32.mrb[0].mxu0
        %v1095 = vadd.f32 0.0, %v1094
        %v1096 = vpop.f32.mrb[0].mxu0
        %1097 = vmatprep.mubr.bf16.mxu0 0
        %1098 = vmatmul.mubr.bf16.gmra.mrb[0].mxu0 %v998
        %v1099 = vpop.f32.mrb[0].mxu0
        %v1100 = vadd.f32 0.0, %v1099
        %v1101 = vpop.f32.mrb[0].mxu0
        %v1102 = vpop.f32.mrb[0].mxu0
        %v1103 = vadd.f32 0.0, %v1102
        %v1104 = vpop.f32.mrb[0].mxu0
        %1105 = vmatprep.mubr.bf16.mxu0 0
        %1106 = vmatmul.mubr.bf16.gmra.mrb[0].mxu0 %v1001
        %v1107 = vpop.f32.mrb[0].mxu0
        %v1108 = vadd.f32 0.0, %v1107
        %v1109 = vpop.f32.mrb[0].mxu0
        %v1110 = vpop.f32.mrb[0].mxu0
        %v1111 = vadd.f32 0.0, %v1110
        %v1112 = vpop.f32.mrb[0].mxu0
        %1113 = vmatprep.mubr.bf16.mxu0 0
        %1114 = vmatmul.mubr.bf16.gmra.mrb[0].mxu0 %v1004
        %v1115 = vpop.f32.mrb[0].mxu0
        %v1116 = vadd.f32 0.0, %v1115
        %v1117 = vpop.f32.mrb[0].mxu0
        %v1118 = vpop.f32.mrb[0].mxu0
        %v1119 = vadd.f32 0.0, %v1118
        %v1120 = vpop.f32.mrb[0].mxu0
        %1121 = vmatprep.mubr.bf16.mxu0 0
        %1122 = vmatmul.mubr.bf16.gmra.mrb[0].mxu0 %v1007
        %v1123 = vpop.f32.mrb[0].mxu0
        %v1124 = vadd.f32 0.0, %v1123
        %v1125 = vpop.f32.mrb[0].mxu0
        %v1126 = vpop.f32.mrb[0].mxu0
        %v1127 = vadd.f32 0.0, %v1126
        %v1128 = vpop.f32.mrb[0].mxu0
        %1129 = vmatprep.mubr.bf16.mxu0 0
        %1130 = vmatmul.mubr.bf16.gmra.mrb[0].mxu0 %v1010
        %v1131 = vpop.f32.mrb[0].mxu0
        %v1132 = vadd.f32 0.0, %v1131
        %v1133 = vpop.f32.mrb[0].mxu0
        %v1134 = vpop.f32.mrb[0].mxu0
        %v1135 = vadd.f32 0.0, %v1134
        %v1136 = vpop.f32.mrb[0].mxu0
        %1137 = vmatprep.mubr.bf16.mxu0 0
        %1138 = vmatmul.mubr.bf16.gmra.mrb[0].mxu0 %v1013
        %v1139 = vpop.f32.mrb[0].mxu0
        %v1140 = vadd.f32 0.0, %v1139
        %v1141 = vpop.f32.mrb[0].mxu0
        %v1142 = vpop.f32.mrb[0].mxu0
        %v1143 = vadd.f32 0.0, %v1142
        %v1144 = vpop.f32.mrb[0].mxu0
        %1145 = vmatprep.mubr.bf16.mxu0 0
        %1146 = vmatmul.mubr.bf16.gmra.mrb[0].mxu0 %v1016
        %v1147 = vpop.f32.mrb[0].mxu0
        %v1148 = vadd.f32 0.0, %v1147
        %v1149 = vpop.f32.mrb[0].mxu0
        %v1150 = vpop.f32.mrb[0].mxu0
        %v1151 = vadd.f32 0.0, %v1150
        %v1152 = vpop.f32.mrb[0].mxu0
        %1153 = vmatprep.mubr.bf16.mxu0 0
        %1154 = vmatmul.mubr.bf16.gmra.mrb[0].mxu0 %v1019
        %v1155 = vpop.f32.mrb[0].mxu0
        %v1156 = vadd.f32 0.0, %v1155
        %v1157 = vpop.f32.mrb[0].mxu0
        %v1158 = vpop.f32.mrb[0].mxu0
        %v1159 = vadd.f32 0.0, %v1158
        %v1160 = vpop.f32.mrb[0].mxu0
        %1161 = vmatprep.mubr.bf16.mxu0 0
        %1162 = vmatmul.mubr.bf16.gmra.mrb[0].mxu0 %v1022
        %v1163 = vpop.f32.mrb[0].mxu0
        %v1164 = vadd.f32 0.0, %v1163
        %v1165 = vpop.f32.mrb[0].mxu0
        %v1166 = vpop.f32.mrb[0].mxu0
        %v1167 = vadd.f32 0.0, %v1166
        %v1168 = vpop.f32.mrb[0].mxu0
        %1169 = vmatprep.mubr.bf16.mxu0 0
        %1170 = vmatmul.mubr.bf16.gmra.mrb[0].mxu0 %v1025
        %v1171 = vpop.f32.mrb[0].mxu0
        %v1172 = vadd.f32 0.0, %v1171
        %v1173 = vpop.f32.mrb[0].mxu0
        %v1174 = vpop.f32.mrb[0].mxu0
        %v1175 = vadd.f32 0.0, %v1174
        %v1176 = vpop.f32.mrb[0].mxu0
        %1177 = vmatprep.mubr.bf16.mxu0 0
        %1178 = vmatmul.mubr.bf16.gmra.mrb[0].mxu0 %v1028
        %v1179 = vpop.f32.mrb[0].mxu0
        %v1180 = vadd.f32 0.0, %v1179
        %v1181 = vpop.f32.mrb[0].mxu0
        %v1182 = vpop.f32.mrb[0].mxu0
        %v1183 = vadd.f32 0.0, %v1182
        %v1184 = vpop.f32.mrb[0].mxu0
        %1185 = vmatprep.mubr.bf16.mxu0 0
        %1186 = vmatmul.mubr.bf16.gmra.mrb[0].mxu0 %v1031
        %v1187 = vpop.f32.mrb[0].mxu0
        %v1188 = vadd.f32 0.0, %v1187
        %v1189 = vpop.f32.mrb[0].mxu0
        %v1190 = vpop.f32.mrb[0].mxu0
        %v1191 = vadd.f32 0.0, %v1190
        %v1192 = vpop.f32.mrb[0].mxu0
        %1193 = vdwg.mxu0
        %v1202 = vunpack.c.l.b16 %v896
        %v1203 = vunpack.c.l.b16 %v897
        %v1204 = vunpack.c.l.b16 %v898
        %v1205 = vunpack.c.l.b16 %v899
        %v1206 = vunpack.c.l.b16 %v900
        %v1207 = vunpack.c.l.b16 %v901
        %v1208 = vunpack.c.l.b16 %v902
        %v1209 = vunpack.c.l.b16 %v903
        %v1210 = vpack.c.b16 %v1203, %v1202
        %v1211 = vpack.c.b16 %v1205, %v1204
        %v1212 = vpack.c.b16 %v1207, %v1206
        %v1213 = vpack.c.b16 %v1209, %v1208
        %v1219 = vsel %vm810, %v880, 0
        %v1222 = vsel %vm810, %v881, 0
        %v1225 = vsel %vm810, %v882, 0
        %v1228 = vsel %vm810, %v883, 0
        %v1231 = vsel %vm810, %v884, 0
        %v1234 = vsel %vm810, %v885, 0
        %v1237 = vsel %vm810, %v886, 0
        %v1240 = vsel %vm810, %v887, 0
        %v1243 = vsel %vm810, %v888, 0
        %v1246 = vsel %vm810, %v889, 0
        %v1249 = vsel %vm810, %v890, 0
        %v1252 = vsel %vm810, %v891, 0
        %v1255 = vsel %vm810, %v892, 0
        %v1258 = vsel %vm810, %v893, 0
        %v1261 = vsel %vm810, %v894, 0
        %v1264 = vsel %vm810, %v895, 0
        %1266 = vmatprep.subr.bf16.mxu0 0
        %1267 = vmatpush1.bf16.msra.mxu0 %v1210
        %1268 = vmatprep.subr.bf16.mxu0 0
        %1269 = vmatpush1.bf16.msra.mxu0 %v1211
        %1270 = vmatprep.subr.bf16.mxu0 0
        %1271 = vmatpush1.bf16.msra.mxu0 %v1212
        %1272 = vmatprep.subr.bf16.mxu0 0
        %1273 = vmatpush1.bf16.msra.mxu0 %v1213
        %1274 = vmatprep.subr.bf16.mxu0 0
        %1275 = vmatpush1.bf16.msra.mxu0 0
        %1276 = vmatprep.subr.bf16.mxu0 0
        %1277 = vmatpush1.bf16.msra.mxu0 0
        %1278 = vmatprep.subr.bf16.mxu0 0
        %1279 = vmatpush1.bf16.msra.mxu0 0
        %1280 = vmatprep.subr.bf16.mxu0 0
        %1281 = vmatpush1.bf16.msra.mxu0 0
        %1282 = vmatprep.subr.bf16.mxu0 0
        %1283 = vmatpush1.bf16.msra.mxu0 0
        %1284 = vmatprep.subr.bf16.mxu0 0
        %1285 = vmatpush1.bf16.msra.mxu0 0
        %1286 = vmatprep.subr.bf16.mxu0 0
        %1287 = vmatpush1.bf16.msra.mxu0 0
        %1288 = vmatprep.subr.bf16.mxu0 0
        %1289 = vmatpush1.bf16.msra.mxu0 0
        %1290 = vmatprep.subr.bf16.mxu0 0
        %1291 = vmatpush1.bf16.msra.mxu0 0
        %1292 = vmatprep.subr.bf16.mxu0 0
        %1293 = vmatpush1.bf16.msra.mxu0 0
        %1294 = vmatprep.subr.bf16.mxu0 0
        %1295 = vmatpush1.bf16.msra.mxu0 0
        %1296 = vmatprep.subr.bf16.mxu0 0
        %1297 = vmatpush1.bf16.msra.mxu0 0
        %1298 = vmatprep.mubr.bf16.mxu0 0
        %1299 = vmatmul.mubr.bf16.gmra.mrb[0].mxu0 %v1219
        %v1300 = vpop.f32.mrb[0].mxu0
        %v1301 = vadd.f32 %v1068, %v1300
        %v1302 = vpop.f32.mrb[0].mxu0
        %v1303 = vpop.f32.mrb[0].mxu0
        %v1304 = vadd.f32 %v1071, %v1303
        %v1305 = vpop.f32.mrb[0].mxu0
        %1306 = vmatprep.mubr.bf16.mxu0 0
        %1307 = vmatmul.mubr.bf16.gmra.mrb[0].mxu0 %v1222
        %v1308 = vpop.f32.mrb[0].mxu0
        %v1309 = vadd.f32 %v1076, %v1308
        %v1310 = vpop.f32.mrb[0].mxu0
        %v1311 = vpop.f32.mrb[0].mxu0
        %v1312 = vadd.f32 %v1079, %v1311
        %v1313 = vpop.f32.mrb[0].mxu0
        %1314 = vmatprep.mubr.bf16.mxu0 0
        %1315 = vmatmul.mubr.bf16.gmra.mrb[0].mxu0 %v1225
        %v1316 = vpop.f32.mrb[0].mxu0
        %v1317 = vadd.f32 %v1084, %v1316
        %v1318 = vpop.f32.mrb[0].mxu0
        %v1319 = vpop.f32.mrb[0].mxu0
        %v1320 = vadd.f32 %v1087, %v1319
        %v1321 = vpop.f32.mrb[0].mxu0
        %1322 = vmatprep.mubr.bf16.mxu0 0
        %1323 = vmatmul.mubr.bf16.gmra.mrb[0].mxu0 %v1228
        %v1324 = vpop.f32.mrb[0].mxu0
        %v1325 = vadd.f32 %v1092, %v1324
        %v1326 = vpop.f32.mrb[0].mxu0
        %v1327 = vpop.f32.mrb[0].mxu0
        %v1328 = vadd.f32 %v1095, %v1327
        %v1329 = vpop.f32.mrb[0].mxu0
        %1330 = vmatprep.mubr.bf16.mxu0 0
        %1331 = vmatmul.mubr.bf16.gmra.mrb[0].mxu0 %v1231
        %v1332 = vpop.f32.mrb[0].mxu0
        %v1333 = vadd.f32 %v1100, %v1332
        %v1334 = vpop.f32.mrb[0].mxu0
        %v1335 = vpop.f32.mrb[0].mxu0
        %v1336 = vadd.f32 %v1103, %v1335
        %v1337 = vpop.f32.mrb[0].mxu0
        %1338 = vmatprep.mubr.bf16.mxu0 0
        %1339 = vmatmul.mubr.bf16.gmra.mrb[0].mxu0 %v1234
        %v1340 = vpop.f32.mrb[0].mxu0
        %v1341 = vadd.f32 %v1108, %v1340
        %v1342 = vpop.f32.mrb[0].mxu0
        %v1343 = vpop.f32.mrb[0].mxu0
        %v1344 = vadd.f32 %v1111, %v1343
        %v1345 = vpop.f32.mrb[0].mxu0
        %1346 = vmatprep.mubr.bf16.mxu0 0
        %1347 = vmatmul.mubr.bf16.gmra.mrb[0].mxu0 %v1237
        %v1348 = vpop.f32.mrb[0].mxu0
        %v1349 = vadd.f32 %v1116, %v1348
        %v1350 = vpop.f32.mrb[0].mxu0
        %v1351 = vpop.f32.mrb[0].mxu0
        %v1352 = vadd.f32 %v1119, %v1351
        %v1353 = vpop.f32.mrb[0].mxu0
        %1354 = vmatprep.mubr.bf16.mxu0 0
        %1355 = vmatmul.mubr.bf16.gmra.mrb[0].mxu0 %v1240
        %v1356 = vpop.f32.mrb[0].mxu0
        %v1357 = vadd.f32 %v1124, %v1356
        %v1358 = vpop.f32.mrb[0].mxu0
        %v1359 = vpop.f32.mrb[0].mxu0
        %v1360 = vadd.f32 %v1127, %v1359
        %v1361 = vpop.f32.mrb[0].mxu0
        %1362 = vmatprep.mubr.bf16.mxu0 0
        %1363 = vmatmul.mubr.bf16.gmra.mrb[0].mxu0 %v1243
        %v1364 = vpop.f32.mrb[0].mxu0
        %v1365 = vadd.f32 %v1132, %v1364
        %v1366 = vpop.f32.mrb[0].mxu0
        %v1367 = vpop.f32.mrb[0].mxu0
        %v1368 = vadd.f32 %v1135, %v1367
        %v1369 = vpop.f32.mrb[0].mxu0
        %1370 = vmatprep.mubr.bf16.mxu0 0
        %1371 = vmatmul.mubr.bf16.gmra.mrb[0].mxu0 %v1246
        %v1372 = vpop.f32.mrb[0].mxu0
        %v1373 = vadd.f32 %v1140, %v1372
        %v1374 = vpop.f32.mrb[0].mxu0
        %v1375 = vpop.f32.mrb[0].mxu0
        %v1376 = vadd.f32 %v1143, %v1375
        %v1377 = vpop.f32.mrb[0].mxu0
        %1378 = vmatprep.mubr.bf16.mxu0 0
        %1379 = vmatmul.mubr.bf16.gmra.mrb[0].mxu0 %v1249
        %v1380 = vpop.f32.mrb[0].mxu0
        %v1381 = vadd.f32 %v1148, %v1380
        %v1382 = vpop.f32.mrb[0].mxu0
        %v1383 = vpop.f32.mrb[0].mxu0
        %v1384 = vadd.f32 %v1151, %v1383
        %v1385 = vpop.f32.mrb[0].mxu0
        %1386 = vmatprep.mubr.bf16.mxu0 0
        %1387 = vmatmul.mubr.bf16.gmra.mrb[0].mxu0 %v1252
        %v1388 = vpop.f32.mrb[0].mxu0
        %v1389 = vadd.f32 %v1156, %v1388
        %v1390 = vpop.f32.mrb[0].mxu0
        %v1391 = vpop.f32.mrb[0].mxu0
        %v1392 = vadd.f32 %v1159, %v1391
        %v1393 = vpop.f32.mrb[0].mxu0
        %1394 = vmatprep.mubr.bf16.mxu0 0
        %1395 = vmatmul.mubr.bf16.gmra.mrb[0].mxu0 %v1255
        %v1396 = vpop.f32.mrb[0].mxu0
        %v1397 = vadd.f32 %v1164, %v1396
        %v1398 = vpop.f32.mrb[0].mxu0
        %v1399 = vpop.f32.mrb[0].mxu0
        %v1400 = vadd.f32 %v1167, %v1399
        %v1401 = vpop.f32.mrb[0].mxu0
        %1402 = vmatprep.mubr.bf16.mxu0 0
        %1403 = vmatmul.mubr.bf16.gmra.mrb[0].mxu0 %v1258
        %v1404 = vpop.f32.mrb[0].mxu0
        %v1405 = vadd.f32 %v1172, %v1404
        %v1406 = vpop.f32.mrb[0].mxu0
        %v1407 = vpop.f32.mrb[0].mxu0
        %v1408 = vadd.f32 %v1175, %v1407
        %v1409 = vpop.f32.mrb[0].mxu0
        %1410 = vmatprep.mubr.bf16.mxu0 0
        %1411 = vmatmul.mubr.bf16.gmra.mrb[0].mxu0 %v1261
        %v1412 = vpop.f32.mrb[0].mxu0
        %v1413 = vadd.f32 %v1180, %v1412
        %v1414 = vpop.f32.mrb[0].mxu0
        %v1415 = vpop.f32.mrb[0].mxu0
        %v1416 = vadd.f32 %v1183, %v1415
        %v1417 = vpop.f32.mrb[0].mxu0
        %1418 = vmatprep.mubr.bf16.mxu0 0
        %1419 = vmatmul.mubr.bf16.gmra.mrb[0].mxu0 %v1264
        %v1420 = vpop.f32.mrb[0].mxu0
        %v1421 = vadd.f32 %v1188, %v1420
        %v1422 = vpop.f32.mrb[0].mxu0
        %v1423 = vpop.f32.mrb[0].mxu0
        %v1424 = vadd.f32 %v1191, %v1423
        %v1425 = vpop.f32.mrb[0].mxu0
        %1426 = vdwg.mxu0
        %v1427 = vld [vmem:[#allocation2 + $0x2] sm:$0xff]
        %v1428 = vld [vmem:[#allocation2 + $0xa] sm:$0xff]
        %v1429 = vld [vmem:[#allocation2 + $0x1a] sm:$0xff]
        %v1430 = vld [vmem:[#allocation2 + $0x22] sm:$0xff]
        %v1431 = vld [vmem:[#allocation2 + $0x32] sm:$0xff]
        %v1432 = vld [vmem:[#allocation2 + $0x3a] sm:$0xff]
        %v1433 = vld [vmem:[#allocation2 + $0x4a] sm:$0xff]
        %v1434 = vld [vmem:[#allocation2 + $0x52] sm:$0xff]
        %v1435 = vld [vmem:[#allocation2 + $0x62] sm:$0xff]
        %v1436 = vld [vmem:[#allocation2 + $0x6a] sm:$0xff]
        %v1437 = vld [vmem:[#allocation2 + $0x7a] sm:$0xff]
        %v1438 = vld [vmem:[#allocation2 + $0x82] sm:$0xff]
        %v1439 = vld [vmem:[#allocation2 + $0x92] sm:$0xff]
        %v1440 = vld [vmem:[#allocation2 + $0x9a] sm:$0xff]
        %v1441 = vld [vmem:[#allocation2 + $0xaa] sm:$0xff]
        %v1442 = vld [vmem:[#allocation2 + $0xb2] sm:$0xff]
        %v1443 = vld [vmem:[#allocation2 + $0xc2] sm:$0xff]
        %v1444 = vld [vmem:[#allocation2 + $0xca] sm:$0xff]
        %v1445 = vld [vmem:[#allocation2 + $0xda] sm:$0xff]
        %v1446 = vld [vmem:[#allocation2 + $0xe2] sm:$0xff]
        %v1447 = vld [vmem:[#allocation2 + $0xf2] sm:$0xff]
        %v1448 = vld [vmem:[#allocation2 + $0xfa] sm:$0xff]
        %v1449 = vld [vmem:[#allocation2 + $0x10a] sm:$0xff]
        %v1450 = vld [vmem:[#allocation2 + $0x112] sm:$0xff]
        %v1451 = vld [vmem:[#allocation2 + $0x122] sm:$0xff]
        %v1452 = vld [vmem:[#allocation2 + $0x12a] sm:$0xff]
        %v1453 = vld [vmem:[#allocation2 + $0x13a] sm:$0xff]
        %v1454 = vld [vmem:[#allocation2 + $0x142] sm:$0xff]
        %v1455 = vld [vmem:[#allocation2 + $0x152] sm:$0xff]
        %v1456 = vld [vmem:[#allocation2 + $0x15a] sm:$0xff]
        %v1457 = vld [vmem:[#allocation2 + $0x16a] sm:$0xff]
        %v1458 = vld [vmem:[#allocation2 + $0x172] sm:$0xff]
        %v1459 = vpack.c.bf16 %v1428, %v1427
        %v1460 = vpack.c.bf16 %v1430, %v1429
        %v1461 = vpack.c.bf16 %v1432, %v1431
        %v1462 = vpack.c.bf16 %v1434, %v1433
        %v1463 = vpack.c.bf16 %v1436, %v1435
        %v1464 = vpack.c.bf16 %v1438, %v1437
        %v1465 = vpack.c.bf16 %v1440, %v1439
        %v1466 = vpack.c.bf16 %v1442, %v1441
        %v1467 = vpack.c.bf16 %v1444, %v1443
        %v1468 = vpack.c.bf16 %v1446, %v1445
        %v1469 = vpack.c.bf16 %v1448, %v1447
        %v1470 = vpack.c.bf16 %v1450, %v1449
        %v1471 = vpack.c.bf16 %v1452, %v1451
        %v1472 = vpack.c.bf16 %v1454, %v1453
        %v1473 = vpack.c.bf16 %v1456, %v1455
        %v1474 = vpack.c.bf16 %v1458, %v1457
        %s1475 = scalar_lea.vmem %s3, 64
        %v1476 = vld [vmem:[%s1475] sm:$0xf]
        %v1477 = vld [vmem:[%s1475 + $0x4] sm:$0xf]
        %v1478 = vld [vmem:[%s1475 + $0x8] sm:$0xf]
        %v1479 = vld [vmem:[%s1475 + $0xc] sm:$0xf]
        %v1480 = vld [vmem:[%s1475 + $0x10] sm:$0xf]
        %v1481 = vld [vmem:[%s1475 + $0x14] sm:$0xf]
        %v1482 = vld [vmem:[%s1475 + $0x18] sm:$0xf]
        %v1483 = vld [vmem:[%s1475 + $0x1c] sm:$0xf]
        %v1492 = vunpack.c.l.b16 %v1476
        %v1493 = vunpack.c.l.b16 %v1477
        %v1494 = vunpack.c.l.b16 %v1478
        %v1495 = vunpack.c.l.b16 %v1479
        %v1496 = vunpack.c.l.b16 %v1480
        %v1497 = vunpack.c.l.b16 %v1481
        %v1498 = vunpack.c.l.b16 %v1482
        %v1499 = vunpack.c.l.b16 %v1483
        %v1500 = vpack.c.b16 %v1493, %v1492
        %v1501 = vpack.c.b16 %v1495, %v1494
        %v1502 = vpack.c.b16 %v1497, %v1496
        %v1503 = vpack.c.b16 %v1499, %v1498
        %v1509 = vsel %vm810, %v1459, 0
        %v1512 = vsel %vm810, %v1460, 0
        %v1515 = vsel %vm810, %v1461, 0
        %v1518 = vsel %vm810, %v1462, 0
        %v1521 = vsel %vm810, %v1463, 0
        %v1524 = vsel %vm810, %v1464, 0
        %v1527 = vsel %vm810, %v1465, 0
        %v1530 = vsel %vm810, %v1466, 0
        %v1533 = vsel %vm810, %v1467, 0
        %v1536 = vsel %vm810, %v1468, 0
        %v1539 = vsel %vm810, %v1469, 0
        %v1542 = vsel %vm810, %v1470, 0
        %v1545 = vsel %vm810, %v1471, 0
        %v1548 = vsel %vm810, %v1472, 0
        %v1551 = vsel %vm810, %v1473, 0
        %v1554 = vsel %vm810, %v1474, 0
        %1556 = vmatprep.subr.bf16.mxu0 0
        %1557 = vmatpush1.bf16.msra.mxu0 %v1500
        %1558 = vmatprep.subr.bf16.mxu0 0
        %1559 = vmatpush1.bf16.msra.mxu0 %v1501
        %1560 = vmatprep.subr.bf16.mxu0 0
        %1561 = vmatpush1.bf16.msra.mxu0 %v1502
        %1562 = vmatprep.subr.bf16.mxu0 0
        %1563 = vmatpush1.bf16.msra.mxu0 %v1503
        %1564 = vmatprep.subr.bf16.mxu0 0
        %1565 = vmatpush1.bf16.msra.mxu0 0
        %1566 = vmatprep.subr.bf16.mxu0 0
        %1567 = vmatpush1.bf16.msra.mxu0 0
        %1568 = vmatprep.subr.bf16.mxu0 0
        %1569 = vmatpush1.bf16.msra.mxu0 0
        %1570 = vmatprep.subr.bf16.mxu0 0
        %1571 = vmatpush1.bf16.msra.mxu0 0
        %1572 = vmatprep.subr.bf16.mxu0 0
        %1573 = vmatpush1.bf16.msra.mxu0 0
        %1574 = vmatprep.subr.bf16.mxu0 0
        %1575 = vmatpush1.bf16.msra.mxu0 0
        %1576 = vmatprep.subr.bf16.mxu0 0
        %1577 = vmatpush1.bf16.msra.mxu0 0
        %1578 = vmatprep.subr.bf16.mxu0 0
        %1579 = vmatpush1.bf16.msra.mxu0 0
        %1580 = vmatprep.subr.bf16.mxu0 0
        %1581 = vmatpush1.bf16.msra.mxu0 0
        %1582 = vmatprep.subr.bf16.mxu0 0
        %1583 = vmatpush1.bf16.msra.mxu0 0
        %1584 = vmatprep.subr.bf16.mxu0 0
        %1585 = vmatpush1.bf16.msra.mxu0 0
        %1586 = vmatprep.subr.bf16.mxu0 0
        %1587 = vmatpush1.bf16.msra.mxu0 0
        %1588 = vmatprep.mubr.bf16.mxu0 0
        %1589 = vmatmul.mubr.bf16.gmra.mrb[0].mxu0 %v1509
        %v1590 = vpop.f32.mrb[0].mxu0
        %v1591 = vadd.f32 0.0, %v1590
        %v1592 = vpop.f32.mrb[0].mxu0
        %v1593 = vpop.f32.mrb[0].mxu0
        %v1594 = vadd.f32 0.0, %v1593
        %v1595 = vpop.f32.mrb[0].mxu0
        %1596 = vmatprep.mubr.bf16.mxu0 0
        %1597 = vmatmul.mubr.bf16.gmra.mrb[0].mxu0 %v1512
        %v1598 = vpop.f32.mrb[0].mxu0
        %v1599 = vadd.f32 0.0, %v1598
        %v1600 = vpop.f32.mrb[0].mxu0
        %v1601 = vpop.f32.mrb[0].mxu0
        %v1602 = vadd.f32 0.0, %v1601
        %v1603 = vpop.f32.mrb[0].mxu0
        %1604 = vmatprep.mubr.bf16.mxu0 0
        %1605 = vmatmul.mubr.bf16.gmra.mrb[0].mxu0 %v1515
        %v1606 = vpop.f32.mrb[0].mxu0
        %v1607 = vadd.f32 0.0, %v1606
        %v1608 = vpop.f32.mrb[0].mxu0
        %v1609 = vpop.f32.mrb[0].mxu0
        %v1610 = vadd.f32 0.0, %v1609
        %v1611 = vpop.f32.mrb[0].mxu0
        %1612 = vmatprep.mubr.bf16.mxu0 0
        %1613 = vmatmul.mubr.bf16.gmra.mrb[0].mxu0 %v1518
        %v1614 = vpop.f32.mrb[0].mxu0
        %v1615 = vadd.f32 0.0, %v1614
        %v1616 = vpop.f32.mrb[0].mxu0
        %v1617 = vpop.f32.mrb[0].mxu0
        %v1618 = vadd.f32 0.0, %v1617
        %v1619 = vpop.f32.mrb[0].mxu0
        %1620 = vmatprep.mubr.bf16.mxu0 0
        %1621 = vmatmul.mubr.bf16.gmra.mrb[0].mxu0 %v1521
        %v1622 = vpop.f32.mrb[0].mxu0
        %v1623 = vadd.f32 0.0, %v1622
        %v1624 = vpop.f32.mrb[0].mxu0
        %v1625 = vpop.f32.mrb[0].mxu0
        %v1626 = vadd.f32 0.0, %v1625
        %v1627 = vpop.f32.mrb[0].mxu0
        %1628 = vmatprep.mubr.bf16.mxu0 0
        %1629 = vmatmul.mubr.bf16.gmra.mrb[0].mxu0 %v1524
        %v1630 = vpop.f32.mrb[0].mxu0
        %v1631 = vadd.f32 0.0, %v1630
        %v1632 = vpop.f32.mrb[0].mxu0
        %v1633 = vpop.f32.mrb[0].mxu0
        %v1634 = vadd.f32 0.0, %v1633
        %v1635 = vpop.f32.mrb[0].mxu0
        %1636 = vmatprep.mubr.bf16.mxu0 0
        %1637 = vmatmul.mubr.bf16.gmra.mrb[0].mxu0 %v1527
        %v1638 = vpop.f32.mrb[0].mxu0
        %v1639 = vadd.f32 0.0, %v1638
        %v1640 = vpop.f32.mrb[0].mxu0
        %v1641 = vpop.f32.mrb[0].mxu0
        %v1642 = vadd.f32 0.0, %v1641
        %v1643 = vpop.f32.mrb[0].mxu0
        %1644 = vmatprep.mubr.bf16.mxu0 0
        %1645 = vmatmul.mubr.bf16.gmra.mrb[0].mxu0 %v1530
        %v1646 = vpop.f32.mrb[0].mxu0
        %v1647 = vadd.f32 0.0, %v1646
        %v1648 = vpop.f32.mrb[0].mxu0
        %v1649 = vpop.f32.mrb[0].mxu0
        %v1650 = vadd.f32 0.0, %v1649
        %v1651 = vpop.f32.mrb[0].mxu0
        %1652 = vmatprep.mubr.bf16.mxu0 0
        %1653 = vmatmul.mubr.bf16.gmra.mrb[0].mxu0 %v1533
        %v1654 = vpop.f32.mrb[0].mxu0
        %v1655 = vadd.f32 0.0, %v1654
        %v1656 = vpop.f32.mrb[0].mxu0
        %v1657 = vpop.f32.mrb[0].mxu0
        %v1658 = vadd.f32 0.0, %v1657
        %v1659 = vpop.f32.mrb[0].mxu0
        %1660 = vmatprep.mubr.bf16.mxu0 0
        %1661 = vmatmul.mubr.bf16.gmra.mrb[0].mxu0 %v1536
        %v1662 = vpop.f32.mrb[0].mxu0
        %v1663 = vadd.f32 0.0, %v1662
        %v1664 = vpop.f32.mrb[0].mxu0
        %v1665 = vpop.f32.mrb[0].mxu0
        %v1666 = vadd.f32 0.0, %v1665
        %v1667 = vpop.f32.mrb[0].mxu0
        %1668 = vmatprep.mubr.bf16.mxu0 0
        %1669 = vmatmul.mubr.bf16.gmra.mrb[0].mxu0 %v1539
        %v1670 = vpop.f32.mrb[0].mxu0
        %v1671 = vadd.f32 0.0, %v1670
        %v1672 = vpop.f32.mrb[0].mxu0
        %v1673 = vpop.f32.mrb[0].mxu0
        %v1674 = vadd.f32 0.0, %v1673
        %v1675 = vpop.f32.mrb[0].mxu0
        %1676 = vmatprep.mubr.bf16.mxu0 0
        %1677 = vmatmul.mubr.bf16.gmra.mrb[0].mxu0 %v1542
        %v1678 = vpop.f32.mrb[0].mxu0
        %v1679 = vadd.f32 0.0, %v1678
        %v1680 = vpop.f32.mrb[0].mxu0
        %v1681 = vpop.f32.mrb[0].mxu0
        %v1682 = vadd.f32 0.0, %v1681
        %v1683 = vpop.f32.mrb[0].mxu0
        %1684 = vmatprep.mubr.bf16.mxu0 0
        %1685 = vmatmul.mubr.bf16.gmra.mrb[0].mxu0 %v1545
        %v1686 = vpop.f32.mrb[0].mxu0
        %v1687 = vadd.f32 0.0, %v1686
        %v1688 = vpop.f32.mrb[0].mxu0
        %v1689 = vpop.f32.mrb[0].mxu0
        %v1690 = vadd.f32 0.0, %v1689
        %v1691 = vpop.f32.mrb[0].mxu0
        %1692 = vmatprep.mubr.bf16.mxu0 0
        %1693 = vmatmul.mubr.bf16.gmra.mrb[0].mxu0 %v1548
        %v1694 = vpop.f32.mrb[0].mxu0
        %v1695 = vadd.f32 0.0, %v1694
        %v1696 = vpop.f32.mrb[0].mxu0
        %v1697 = vpop.f32.mrb[0].mxu0
        %v1698 = vadd.f32 0.0, %v1697
        %v1699 = vpop.f32.mrb[0].mxu0
        %1700 = vmatprep.mubr.bf16.mxu0 0
        %1701 = vmatmul.mubr.bf16.gmra.mrb[0].mxu0 %v1551
        %v1702 = vpop.f32.mrb[0].mxu0
        %v1703 = vadd.f32 0.0, %v1702
        %v1704 = vpop.f32.mrb[0].mxu0
        %v1705 = vpop.f32.mrb[0].mxu0
        %v1706 = vadd.f32 0.0, %v1705
        %v1707 = vpop.f32.mrb[0].mxu0
        %1708 = vmatprep.mubr.bf16.mxu0 0
        %1709 = vmatmul.mubr.bf16.gmra.mrb[0].mxu0 %v1554
        %v1710 = vpop.f32.mrb[0].mxu0
        %v1711 = vadd.f32 0.0, %v1710
        %v1712 = vpop.f32.mrb[0].mxu0
        %v1713 = vpop.f32.mrb[0].mxu0
        %v1714 = vadd.f32 0.0, %v1713
        %v1715 = vpop.f32.mrb[0].mxu0
        %1716 = vdwg.mxu0
        %v1717 = vadd.f32 %v1301, %v1591
        %v1718 = vadd.f32 %v1304, %v1594
        %v1719 = vadd.f32 %v1309, %v1599
        %v1720 = vadd.f32 %v1312, %v1602
        %v1721 = vadd.f32 %v1317, %v1607
        %v1722 = vadd.f32 %v1320, %v1610
        %v1723 = vadd.f32 %v1325, %v1615
        %v1724 = vadd.f32 %v1328, %v1618
        %v1725 = vadd.f32 %v1333, %v1623
        %v1726 = vadd.f32 %v1336, %v1626
        %v1727 = vadd.f32 %v1341, %v1631
        %v1728 = vadd.f32 %v1344, %v1634
        %v1729 = vadd.f32 %v1349, %v1639
        %v1730 = vadd.f32 %v1352, %v1642
        %v1731 = vadd.f32 %v1357, %v1647
        %v1732 = vadd.f32 %v1360, %v1650
        %v1733 = vadd.f32 %v1365, %v1655
        %v1734 = vadd.f32 %v1368, %v1658
        %v1735 = vadd.f32 %v1373, %v1663
        %v1736 = vadd.f32 %v1376, %v1666
        %v1737 = vadd.f32 %v1381, %v1671
        %v1738 = vadd.f32 %v1384, %v1674
        %v1739 = vadd.f32 %v1389, %v1679
        %v1740 = vadd.f32 %v1392, %v1682
        %v1741 = vadd.f32 %v1397, %v1687
        %v1742 = vadd.f32 %v1400, %v1690
        %v1743 = vadd.f32 %v1405, %v1695
        %v1744 = vadd.f32 %v1408, %v1698
        %v1745 = vadd.f32 %v1413, %v1703
        %v1746 = vadd.f32 %v1416, %v1706
        %v1747 = vadd.f32 %v1421, %v1711
        %v1748 = vadd.f32 %v1424, %v1714
        %v1749 = vld [vmem:[%s809] sm:$0xff]
        %v1750 = vld [vmem:[%s809 + $0x8] sm:$0xff]
        %v1751 = vld [vmem:[%s809 + $0x18] sm:$0xff]
        %v1752 = vld [vmem:[%s809 + $0x20] sm:$0xff]
        %v1753 = vld [vmem:[%s809 + $0x30] sm:$0xff]
        %v1754 = vld [vmem:[%s809 + $0x38] sm:$0xff]
        %v1755 = vld [vmem:[%s809 + $0x48] sm:$0xff]
        %v1756 = vld [vmem:[%s809 + $0x50] sm:$0xff]
        %v1757 = vld [vmem:[%s809 + $0x60] sm:$0xff]
        %v1758 = vld [vmem:[%s809 + $0x68] sm:$0xff]
        %v1759 = vld [vmem:[%s809 + $0x78] sm:$0xff]
        %v1760 = vld [vmem:[%s809 + $0x80] sm:$0xff]
        %v1761 = vld [vmem:[%s809 + $0x90] sm:$0xff]
        %v1762 = vld [vmem:[%s809 + $0x98] sm:$0xff]
        %v1763 = vld [vmem:[%s809 + $0xa8] sm:$0xff]
        %v1764 = vld [vmem:[%s809 + $0xb0] sm:$0xff]
        %v1765 = vld [vmem:[%s809 + $0xc0] sm:$0xff]
        %v1766 = vld [vmem:[%s809 + $0xc8] sm:$0xff]
        %v1767 = vld [vmem:[%s809 + $0xd8] sm:$0xff]
        %v1768 = vld [vmem:[%s809 + $0xe0] sm:$0xff]
        %v1769 = vld [vmem:[%s809 + $0xf0] sm:$0xff]
        %v1770 = vld [vmem:[%s809 + $0xf8] sm:$0xff]
        %v1771 = vld [vmem:[%s809 + $0x108] sm:$0xff]
        %v1772 = vld [vmem:[%s809 + $0x110] sm:$0xff]
        %v1773 = vld [vmem:[%s809 + $0x120] sm:$0xff]
        %v1774 = vld [vmem:[%s809 + $0x128] sm:$0xff]
        %v1775 = vld [vmem:[%s809 + $0x138] sm:$0xff]
        %v1776 = vld [vmem:[%s809 + $0x140] sm:$0xff]
        %v1777 = vld [vmem:[%s809 + $0x150] sm:$0xff]
        %v1778 = vld [vmem:[%s809 + $0x158] sm:$0xff]
        %v1779 = vld [vmem:[%s809 + $0x168] sm:$0xff]
        %v1780 = vld [vmem:[%s809 + $0x170] sm:$0xff]
        %v1781 = vpack.c.bf16 %v1750, %v1749
        %v1782 = vpack.c.bf16 %v1752, %v1751
        %v1783 = vpack.c.bf16 %v1754, %v1753
        %v1784 = vpack.c.bf16 %v1756, %v1755
        %v1785 = vpack.c.bf16 %v1758, %v1757
        %v1786 = vpack.c.bf16 %v1760, %v1759
        %v1787 = vpack.c.bf16 %v1762, %v1761
        %v1788 = vpack.c.bf16 %v1764, %v1763
        %v1789 = vpack.c.bf16 %v1766, %v1765
        %v1790 = vpack.c.bf16 %v1768, %v1767
        %v1791 = vpack.c.bf16 %v1770, %v1769
        %v1792 = vpack.c.bf16 %v1772, %v1771
        %v1793 = vpack.c.bf16 %v1774, %v1773
        %v1794 = vpack.c.bf16 %v1776, %v1775
        %v1795 = vpack.c.bf16 %v1778, %v1777
        %v1796 = vpack.c.bf16 %v1780, %v1779
        %s1797 = scalar_lea.vmem %s3, 96
        %v1798 = vld [vmem:[%s1797] sm:$0xf]
        %v1799 = vld [vmem:[%s1797 + $0x4] sm:$0xf]
        %v1800 = vld [vmem:[%s1797 + $0x8] sm:$0xf]
        %v1801 = vld [vmem:[%s1797 + $0xc] sm:$0xf]
        %v1802 = vld [vmem:[%s1797 + $0x10] sm:$0xf]
        %v1803 = vld [vmem:[%s1797 + $0x14] sm:$0xf]
        %v1804 = vld [vmem:[%s1797 + $0x18] sm:$0xf]
        %v1805 = vld [vmem:[%s1797 + $0x1c] sm:$0xf]
        %v1814 = vunpack.c.l.b16 %v1798
        %v1815 = vunpack.c.l.b16 %v1799
        %v1816 = vunpack.c.l.b16 %v1800
        %v1817 = vunpack.c.l.b16 %v1801
        %v1818 = vunpack.c.l.b16 %v1802
        %v1819 = vunpack.c.l.b16 %v1803
        %v1820 = vunpack.c.l.b16 %v1804
        %v1821 = vunpack.c.l.b16 %v1805
        %v1822 = vpack.c.b16 %v1815, %v1814
        %v1823 = vpack.c.b16 %v1817, %v1816
        %v1824 = vpack.c.b16 %v1819, %v1818
        %v1825 = vpack.c.b16 %v1821, %v1820
        %v1831 = vsel %vm810, %v1781, 0
        %v1834 = vsel %vm810, %v1782, 0
        %v1837 = vsel %vm810, %v1783, 0
        %v1840 = vsel %vm810, %v1784, 0
        %v1843 = vsel %vm810, %v1785, 0
        %v1846 = vsel %vm810, %v1786, 0
        %v1849 = vsel %vm810, %v1787, 0
        %v1852 = vsel %vm810, %v1788, 0
        %v1855 = vsel %vm810, %v1789, 0
        %v1858 = vsel %vm810, %v1790, 0
        %v1861 = vsel %vm810, %v1791, 0
        %v1864 = vsel %vm810, %v1792, 0
        %v1867 = vsel %vm810, %v1793, 0
        %v1870 = vsel %vm810, %v1794, 0
        %v1873 = vsel %vm810, %v1795, 0
        %v1876 = vsel %vm810, %v1796, 0
        %1878 = vmatprep.subr.bf16.mxu0 0
        %1879 = vmatpush1.bf16.msra.mxu0 %v1822
        %1880 = vmatprep.subr.bf16.mxu0 0
        %1881 = vmatpush1.bf16.msra.mxu0 %v1823
        %1882 = vmatprep.subr.bf16.mxu0 0
        %1883 = vmatpush1.bf16.msra.mxu0 %v1824
        %1884 = vmatprep.subr.bf16.mxu0 0
        %1885 = vmatpush1.bf16.msra.mxu0 %v1825
        %1886 = vmatprep.subr.bf16.mxu0 0
        %1887 = vmatpush1.bf16.msra.mxu0 0
        %1888 = vmatprep.subr.bf16.mxu0 0
        %1889 = vmatpush1.bf16.msra.mxu0 0
        %1890 = vmatprep.subr.bf16.mxu0 0
        %1891 = vmatpush1.bf16.msra.mxu0 0
        %1892 = vmatprep.subr.bf16.mxu0 0
        %1893 = vmatpush1.bf16.msra.mxu0 0
        %1894 = vmatprep.subr.bf16.mxu0 0
        %1895 = vmatpush1.bf16.msra.mxu0 0
        %1896 = vmatprep.subr.bf16.mxu0 0
        %1897 = vmatpush1.bf16.msra.mxu0 0
        %1898 = vmatprep.subr.bf16.mxu0 0
        %1899 = vmatpush1.bf16.msra.mxu0 0
        %1900 = vmatprep.subr.bf16.mxu0 0
        %1901 = vmatpush1.bf16.msra.mxu0 0
        %1902 = vmatprep.subr.bf16.mxu0 0
        %1903 = vmatpush1.bf16.msra.mxu0 0
        %1904 = vmatprep.subr.bf16.mxu0 0
        %1905 = vmatpush1.bf16.msra.mxu0 0
        %1906 = vmatprep.subr.bf16.mxu0 0
        %1907 = vmatpush1.bf16.msra.mxu0 0
        %1908 = vmatprep.subr.bf16.mxu0 0
        %1909 = vmatpush1.bf16.msra.mxu0 0
        %1910 = vmatprep.mubr.bf16.mxu0 0
        %1911 = vmatmul.mubr.bf16.gmra.mrb[0].mxu0 %v1831
        %v1912 = vpop.f32.mrb[0].mxu0
        %v1913 = vadd.f32 0.0, %v1912
        %v1914 = vpop.f32.mrb[0].mxu0
        %v1915 = vpop.f32.mrb[0].mxu0
        %v1916 = vadd.f32 0.0, %v1915
        %v1917 = vpop.f32.mrb[0].mxu0
        %1918 = vmatprep.mubr.bf16.mxu0 0
        %1919 = vmatmul.mubr.bf16.gmra.mrb[0].mxu0 %v1834
        %v1920 = vpop.f32.mrb[0].mxu0
        %v1921 = vadd.f32 0.0, %v1920
        %v1922 = vpop.f32.mrb[0].mxu0
        %v1923 = vpop.f32.mrb[0].mxu0
        %v1924 = vadd.f32 0.0, %v1923
        %v1925 = vpop.f32.mrb[0].mxu0
        %1926 = vmatprep.mubr.bf16.mxu0 0
        %1927 = vmatmul.mubr.bf16.gmra.mrb[0].mxu0 %v1837
        %v1928 = vpop.f32.mrb[0].mxu0
        %v1929 = vadd.f32 0.0, %v1928
        %v1930 = vpop.f32.mrb[0].mxu0
        %v1931 = vpop.f32.mrb[0].mxu0
        %v1932 = vadd.f32 0.0, %v1931
        %v1933 = vpop.f32.mrb[0].mxu0
        %1934 = vmatprep.mubr.bf16.mxu0 0
        %1935 = vmatmul.mubr.bf16.gmra.mrb[0].mxu0 %v1840
        %v1936 = vpop.f32.mrb[0].mxu0
        %v1937 = vadd.f32 0.0, %v1936
        %v1938 = vpop.f32.mrb[0].mxu0
        %v1939 = vpop.f32.mrb[0].mxu0
        %v1940 = vadd.f32 0.0, %v1939
        %v1941 = vpop.f32.mrb[0].mxu0
        %1942 = vmatprep.mubr.bf16.mxu0 0
        %1943 = vmatmul.mubr.bf16.gmra.mrb[0].mxu0 %v1843
        %v1944 = vpop.f32.mrb[0].mxu0
        %v1945 = vadd.f32 0.0, %v1944
        %v1946 = vpop.f32.mrb[0].mxu0
        %v1947 = vpop.f32.mrb[0].mxu0
        %v1948 = vadd.f32 0.0, %v1947
        %v1949 = vpop.f32.mrb[0].mxu0
        %1950 = vmatprep.mubr.bf16.mxu0 0
        %1951 = vmatmul.mubr.bf16.gmra.mrb[0].mxu0 %v1846
        %v1952 = vpop.f32.mrb[0].mxu0
        %v1953 = vadd.f32 0.0, %v1952
        %v1954 = vpop.f32.mrb[0].mxu0
        %v1955 = vpop.f32.mrb[0].mxu0
        %v1956 = vadd.f32 0.0, %v1955
        %v1957 = vpop.f32.mrb[0].mxu0
        %1958 = vmatprep.mubr.bf16.mxu0 0
        %1959 = vmatmul.mubr.bf16.gmra.mrb[0].mxu0 %v1849
        %v1960 = vpop.f32.mrb[0].mxu0
        %v1961 = vadd.f32 0.0, %v1960
        %v1962 = vpop.f32.mrb[0].mxu0
        %v1963 = vpop.f32.mrb[0].mxu0
        %v1964 = vadd.f32 0.0, %v1963
        %v1965 = vpop.f32.mrb[0].mxu0
        %1966 = vmatprep.mubr.bf16.mxu0 0
        %1967 = vmatmul.mubr.bf16.gmra.mrb[0].mxu0 %v1852
        %v1968 = vpop.f32.mrb[0].mxu0
        %v1969 = vadd.f32 0.0, %v1968
        %v1970 = vpop.f32.mrb[0].mxu0
        %v1971 = vpop.f32.mrb[0].mxu0
        %v1972 = vadd.f32 0.0, %v1971
        %v1973 = vpop.f32.mrb[0].mxu0
        %1974 = vmatprep.mubr.bf16.mxu0 0
        %1975 = vmatmul.mubr.bf16.gmra.mrb[0].mxu0 %v1855
        %v1976 = vpop.f32.mrb[0].mxu0
        %v1977 = vadd.f32 0.0, %v1976
        %v1978 = vpop.f32.mrb[0].mxu0
        %v1979 = vpop.f32.mrb[0].mxu0
        %v1980 = vadd.f32 0.0, %v1979
        %v1981 = vpop.f32.mrb[0].mxu0
        %1982 = vmatprep.mubr.bf16.mxu0 0
        %1983 = vmatmul.mubr.bf16.gmra.mrb[0].mxu0 %v1858
        %v1984 = vpop.f32.mrb[0].mxu0
        %v1985 = vadd.f32 0.0, %v1984
        %v1986 = vpop.f32.mrb[0].mxu0
        %v1987 = vpop.f32.mrb[0].mxu0
        %v1988 = vadd.f32 0.0, %v1987
        %v1989 = vpop.f32.mrb[0].mxu0
        %1990 = vmatprep.mubr.bf16.mxu0 0
        %1991 = vmatmul.mubr.bf16.gmra.mrb[0].mxu0 %v1861
        %v1992 = vpop.f32.mrb[0].mxu0
        %v1993 = vadd.f32 0.0, %v1992
        %v1994 = vpop.f32.mrb[0].mxu0
        %v1995 = vpop.f32.mrb[0].mxu0
        %v1996 = vadd.f32 0.0, %v1995
        %v1997 = vpop.f32.mrb[0].mxu0
        %1998 = vmatprep.mubr.bf16.mxu0 0
        %1999 = vmatmul.mubr.bf16.gmra.mrb[0].mxu0 %v1864
        %v2000 = vpop.f32.mrb[0].mxu0
        %v2001 = vadd.f32 0.0, %v2000
        %v2002 = vpop.f32.mrb[0].mxu0
        %v2003 = vpop.f32.mrb[0].mxu0
        %v2004 = vadd.f32 0.0, %v2003
        %v2005 = vpop.f32.mrb[0].mxu0
        %2006 = vmatprep.mubr.bf16.mxu0 0
        %2007 = vmatmul.mubr.bf16.gmra.mrb[0].mxu0 %v1867
        %v2008 = vpop.f32.mrb[0].mxu0
        %v2009 = vadd.f32 0.0, %v2008
        %v2010 = vpop.f32.mrb[0].mxu0
        %v2011 = vpop.f32.mrb[0].mxu0
        %v2012 = vadd.f32 0.0, %v2011
        %v2013 = vpop.f32.mrb[0].mxu0
        %2014 = vmatprep.mubr.bf16.mxu0 0
        %2015 = vmatmul.mubr.bf16.gmra.mrb[0].mxu0 %v1870
        %v2016 = vpop.f32.mrb[0].mxu0
        %v2017 = vadd.f32 0.0, %v2016
        %v2018 = vpop.f32.mrb[0].mxu0
        %v2019 = vpop.f32.mrb[0].mxu0
        %v2020 = vadd.f32 0.0, %v2019
        %v2021 = vpop.f32.mrb[0].mxu0
        %2022 = vmatprep.mubr.bf16.mxu0 0
        %2023 = vmatmul.mubr.bf16.gmra.mrb[0].mxu0 %v1873
        %v2024 = vpop.f32.mrb[0].mxu0
        %v2025 = vadd.f32 0.0, %v2024
        %v2026 = vpop.f32.mrb[0].mxu0
        %v2027 = vpop.f32.mrb[0].mxu0
        %v2028 = vadd.f32 0.0, %v2027
        %v2029 = vpop.f32.mrb[0].mxu0
        %2030 = vmatprep.mubr.bf16.mxu0 0
        %2031 = vmatmul.mubr.bf16.gmra.mrb[0].mxu0 %v1876
        %v2032 = vpop.f32.mrb[0].mxu0
        %v2033 = vadd.f32 0.0, %v2032
        %v2034 = vpop.f32.mrb[0].mxu0
        %v2035 = vpop.f32.mrb[0].mxu0
        %v2036 = vadd.f32 0.0, %v2035
        %v2037 = vpop.f32.mrb[0].mxu0
        %2038 = vdwg.mxu0
        %v2039 = vadd.f32 %v1717, %v1913
        %v2040 = vadd.f32 %v1718, %v1916
        %v2041 = vadd.f32 %v1719, %v1921
        %v2042 = vadd.f32 %v1720, %v1924
        %v2043 = vadd.f32 %v1721, %v1929
        %v2044 = vadd.f32 %v1722, %v1932
        %v2045 = vadd.f32 %v1723, %v1937
        %v2046 = vadd.f32 %v1724, %v1940
        %v2047 = vadd.f32 %v1725, %v1945
        %v2048 = vadd.f32 %v1726, %v1948
        %v2049 = vadd.f32 %v1727, %v1953
        %v2050 = vadd.f32 %v1728, %v1956
        %v2051 = vadd.f32 %v1729, %v1961
        %v2052 = vadd.f32 %v1730, %v1964
        %v2053 = vadd.f32 %v1731, %v1969
        %v2054 = vadd.f32 %v1732, %v1972
        %v2055 = vadd.f32 %v1733, %v1977
        %v2056 = vadd.f32 %v1734, %v1980
        %v2057 = vadd.f32 %v1735, %v1985
        %v2058 = vadd.f32 %v1736, %v1988
        %v2059 = vadd.f32 %v1737, %v1993
        %v2060 = vadd.f32 %v1738, %v1996
        %v2061 = vadd.f32 %v1739, %v2001
        %v2062 = vadd.f32 %v1740, %v2004
        %v2063 = vadd.f32 %v1741, %v2009
        %v2064 = vadd.f32 %v1742, %v2012
        %v2065 = vadd.f32 %v1743, %v2017
        %v2066 = vadd.f32 %v1744, %v2020
        %v2067 = vadd.f32 %v1745, %v2025
        %v2068 = vadd.f32 %v1746, %v2028
        %v2069 = vadd.f32 %v1747, %v2033
        %v2070 = vadd.f32 %v1748, %v2036
        %v2071 = vld [vmem:[%s809 + $0x1] sm:$0xff]
        %v2072 = vld [vmem:[%s809 + $0x9] sm:$0xff]
        %v2073 = vld [vmem:[%s809 + $0x19] sm:$0xff]
        %v2074 = vld [vmem:[%s809 + $0x21] sm:$0xff]
        %v2075 = vld [vmem:[%s809 + $0x31] sm:$0xff]
        %v2076 = vld [vmem:[%s809 + $0x39] sm:$0xff]
        %v2077 = vld [vmem:[%s809 + $0x49] sm:$0xff]
        %v2078 = vld [vmem:[%s809 + $0x51] sm:$0xff]
        %v2079 = vld [vmem:[%s809 + $0x61] sm:$0xff]
        %v2080 = vld [vmem:[%s809 + $0x69] sm:$0xff]
        %v2081 = vld [vmem:[%s809 + $0x79] sm:$0xff]
        %v2082 = vld [vmem:[%s809 + $0x81] sm:$0xff]
        %v2083 = vld [vmem:[%s809 + $0x91] sm:$0xff]
        %v2084 = vld [vmem:[%s809 + $0x99] sm:$0xff]
        %v2085 = vld [vmem:[%s809 + $0xa9] sm:$0xff]
        %v2086 = vld [vmem:[%s809 + $0xb1] sm:$0xff]
        %v2087 = vld [vmem:[%s809 + $0xc1] sm:$0xff]
        %v2088 = vld [vmem:[%s809 + $0xc9] sm:$0xff]
        %v2089 = vld [vmem:[%s809 + $0xd9] sm:$0xff]
        %v2090 = vld [vmem:[%s809 + $0xe1] sm:$0xff]
        %v2091 = vld [vmem:[%s809 + $0xf1] sm:$0xff]
        %v2092 = vld [vmem:[%s809 + $0xf9] sm:$0xff]
        %v2093 = vld [vmem:[%s809 + $0x109] sm:$0xff]
        %v2094 = vld [vmem:[%s809 + $0x111] sm:$0xff]
        %v2095 = vld [vmem:[%s809 + $0x121] sm:$0xff]
        %v2096 = vld [vmem:[%s809 + $0x129] sm:$0xff]
        %v2097 = vld [vmem:[%s809 + $0x139] sm:$0xff]
        %v2098 = vld [vmem:[%s809 + $0x141] sm:$0xff]
        %v2099 = vld [vmem:[%s809 + $0x151] sm:$0xff]
        %v2100 = vld [vmem:[%s809 + $0x159] sm:$0xff]
        %v2101 = vld [vmem:[%s809 + $0x169] sm:$0xff]
        %v2102 = vld [vmem:[%s809 + $0x171] sm:$0xff]
        %v2103 = vpack.c.bf16 %v2072, %v2071
        %v2104 = vpack.c.bf16 %v2074, %v2073
        %v2105 = vpack.c.bf16 %v2076, %v2075
        %v2106 = vpack.c.bf16 %v2078, %v2077
        %v2107 = vpack.c.bf16 %v2080, %v2079
        %v2108 = vpack.c.bf16 %v2082, %v2081
        %v2109 = vpack.c.bf16 %v2084, %v2083
        %v2110 = vpack.c.bf16 %v2086, %v2085
        %v2111 = vpack.c.bf16 %v2088, %v2087
        %v2112 = vpack.c.bf16 %v2090, %v2089
        %v2113 = vpack.c.bf16 %v2092, %v2091
        %v2114 = vpack.c.bf16 %v2094, %v2093
        %v2115 = vpack.c.bf16 %v2096, %v2095
        %v2116 = vpack.c.bf16 %v2098, %v2097
        %v2117 = vpack.c.bf16 %v2100, %v2099
        %v2118 = vpack.c.bf16 %v2102, %v2101
        %s2119 = scalar_lea.vmem %s3, 128
        %v2120 = vld [vmem:[%s2119] sm:$0xf]
        %v2121 = vld [vmem:[%s2119 + $0x4] sm:$0xf]
        %v2122 = vld [vmem:[%s2119 + $0x8] sm:$0xf]
        %v2123 = vld [vmem:[%s2119 + $0xc] sm:$0xf]
        %v2124 = vld [vmem:[%s2119 + $0x10] sm:$0xf]
        %v2125 = vld [vmem:[%s2119 + $0x14] sm:$0xf]
        %v2126 = vld [vmem:[%s2119 + $0x18] sm:$0xf]
        %v2127 = vld [vmem:[%s2119 + $0x1c] sm:$0xf]
        %v2136 = vunpack.c.l.b16 %v2120
        %v2137 = vunpack.c.l.b16 %v2121
        %v2138 = vunpack.c.l.b16 %v2122
        %v2139 = vunpack.c.l.b16 %v2123
        %v2140 = vunpack.c.l.b16 %v2124
        %v2141 = vunpack.c.l.b16 %v2125
        %v2142 = vunpack.c.l.b16 %v2126
        %v2143 = vunpack.c.l.b16 %v2127
        %v2144 = vpack.c.b16 %v2137, %v2136
        %v2145 = vpack.c.b16 %v2139, %v2138
        %v2146 = vpack.c.b16 %v2141, %v2140
        %v2147 = vpack.c.b16 %v2143, %v2142
        %v2153 = vsel %vm810, %v2103, 0
        %v2156 = vsel %vm810, %v2104, 0
        %v2159 = vsel %vm810, %v2105, 0
        %v2162 = vsel %vm810, %v2106, 0
        %v2165 = vsel %vm810, %v2107, 0
        %v2168 = vsel %vm810, %v2108, 0
        %v2171 = vsel %vm810, %v2109, 0
        %v2174 = vsel %vm810, %v2110, 0
        %v2177 = vsel %vm810, %v2111, 0
        %v2180 = vsel %vm810, %v2112, 0
        %v2183 = vsel %vm810, %v2113, 0
        %v2186 = vsel %vm810, %v2114, 0
        %v2189 = vsel %vm810, %v2115, 0
        %v2192 = vsel %vm810, %v2116, 0
        %v2195 = vsel %vm810, %v2117, 0
        %v2198 = vsel %vm810, %v2118, 0
        %2200 = vmatprep.subr.bf16.mxu0 0
        %2201 = vmatpush1.bf16.msra.mxu0 %v2144
        %2202 = vmatprep.subr.bf16.mxu0 0
        %2203 = vmatpush1.bf16.msra.mxu0 %v2145
        %2204 = vmatprep.subr.bf16.mxu0 0
        %2205 = vmatpush1.bf16.msra.mxu0 %v2146
        %2206 = vmatprep.subr.bf16.mxu0 0
        %2207 = vmatpush1.bf16.msra.mxu0 %v2147
        %2208 = vmatprep.subr.bf16.mxu0 0
        %2209 = vmatpush1.bf16.msra.mxu0 0
        %2210 = vmatprep.subr.bf16.mxu0 0
        %2211 = vmatpush1.bf16.msra.mxu0 0
        %2212 = vmatprep.subr.bf16.mxu0 0
        %2213 = vmatpush1.bf16.msra.mxu0 0
        %2214 = vmatprep.subr.bf16.mxu0 0
        %2215 = vmatpush1.bf16.msra.mxu0 0
        %2216 = vmatprep.subr.bf16.mxu0 0
        %2217 = vmatpush1.bf16.msra.mxu0 0
        %2218 = vmatprep.subr.bf16.mxu0 0
        %2219 = vmatpush1.bf16.msra.mxu0 0
        %2220 = vmatprep.subr.bf16.mxu0 0
        %2221 = vmatpush1.bf16.msra.mxu0 0
        %2222 = vmatprep.subr.bf16.mxu0 0
        %2223 = vmatpush1.bf16.msra.mxu0 0
        %2224 = vmatprep.subr.bf16.mxu0 0
        %2225 = vmatpush1.bf16.msra.mxu0 0
        %2226 = vmatprep.subr.bf16.mxu0 0
        %2227 = vmatpush1.bf16.msra.mxu0 0
        %2228 = vmatprep.subr.bf16.mxu0 0
        %2229 = vmatpush1.bf16.msra.mxu0 0
        %2230 = vmatprep.subr.bf16.mxu0 0
        %2231 = vmatpush1.bf16.msra.mxu0 0
        %2232 = vmatprep.mubr.bf16.mxu0 0
        %2233 = vmatmul.mubr.bf16.gmra.mrb[0].mxu0 %v2153
        %v2234 = vpop.f32.mrb[0].mxu0
        %v2235 = vadd.f32 0.0, %v2234
        %v2236 = vpop.f32.mrb[0].mxu0
        %v2237 = vpop.f32.mrb[0].mxu0
        %v2238 = vadd.f32 0.0, %v2237
        %v2239 = vpop.f32.mrb[0].mxu0
        %2240 = vmatprep.mubr.bf16.mxu0 0
        %2241 = vmatmul.mubr.bf16.gmra.mrb[0].mxu0 %v2156
        %v2242 = vpop.f32.mrb[0].mxu0
        %v2243 = vadd.f32 0.0, %v2242
        %v2244 = vpop.f32.mrb[0].mxu0
        %v2245 = vpop.f32.mrb[0].mxu0
        %v2246 = vadd.f32 0.0, %v2245
        %v2247 = vpop.f32.mrb[0].mxu0
        %2248 = vmatprep.mubr.bf16.mxu0 0
        %2249 = vmatmul.mubr.bf16.gmra.mrb[0].mxu0 %v2159
        %v2250 = vpop.f32.mrb[0].mxu0
        %v2251 = vadd.f32 0.0, %v2250
        %v2252 = vpop.f32.mrb[0].mxu0
        %v2253 = vpop.f32.mrb[0].mxu0
        %v2254 = vadd.f32 0.0, %v2253
        %v2255 = vpop.f32.mrb[0].mxu0
        %2256 = vmatprep.mubr.bf16.mxu0 0
        %2257 = vmatmul.mubr.bf16.gmra.mrb[0].mxu0 %v2162
        %v2258 = vpop.f32.mrb[0].mxu0
        %v2259 = vadd.f32 0.0, %v2258
        %v2260 = vpop.f32.mrb[0].mxu0
        %v2261 = vpop.f32.mrb[0].mxu0
        %v2262 = vadd.f32 0.0, %v2261
        %v2263 = vpop.f32.mrb[0].mxu0
        %2264 = vmatprep.mubr.bf16.mxu0 0
        %2265 = vmatmul.mubr.bf16.gmra.mrb[0].mxu0 %v2165
        %v2266 = vpop.f32.mrb[0].mxu0
        %v2267 = vadd.f32 0.0, %v2266
        %v2268 = vpop.f32.mrb[0].mxu0
        %v2269 = vpop.f32.mrb[0].mxu0
        %v2270 = vadd.f32 0.0, %v2269
        %v2271 = vpop.f32.mrb[0].mxu0
        %2272 = vmatprep.mubr.bf16.mxu0 0
        %2273 = vmatmul.mubr.bf16.gmra.mrb[0].mxu0 %v2168
        %v2274 = vpop.f32.mrb[0].mxu0
        %v2275 = vadd.f32 0.0, %v2274
        %v2276 = vpop.f32.mrb[0].mxu0
        %v2277 = vpop.f32.mrb[0].mxu0
        %v2278 = vadd.f32 0.0, %v2277
        %v2279 = vpop.f32.mrb[0].mxu0
        %2280 = vmatprep.mubr.bf16.mxu0 0
        %2281 = vmatmul.mubr.bf16.gmra.mrb[0].mxu0 %v2171
        %v2282 = vpop.f32.mrb[0].mxu0
        %v2283 = vadd.f32 0.0, %v2282
        %v2284 = vpop.f32.mrb[0].mxu0
        %v2285 = vpop.f32.mrb[0].mxu0
        %v2286 = vadd.f32 0.0, %v2285
        %v2287 = vpop.f32.mrb[0].mxu0
        %2288 = vmatprep.mubr.bf16.mxu0 0
        %2289 = vmatmul.mubr.bf16.gmra.mrb[0].mxu0 %v2174
        %v2290 = vpop.f32.mrb[0].mxu0
        %v2291 = vadd.f32 0.0, %v2290
        %v2292 = vpop.f32.mrb[0].mxu0
        %v2293 = vpop.f32.mrb[0].mxu0
        %v2294 = vadd.f32 0.0, %v2293
        %v2295 = vpop.f32.mrb[0].mxu0
        %2296 = vmatprep.mubr.bf16.mxu0 0
        %2297 = vmatmul.mubr.bf16.gmra.mrb[0].mxu0 %v2177
        %v2298 = vpop.f32.mrb[0].mxu0
        %v2299 = vadd.f32 0.0, %v2298
        %v2300 = vpop.f32.mrb[0].mxu0
        %v2301 = vpop.f32.mrb[0].mxu0
        %v2302 = vadd.f32 0.0, %v2301
        %v2303 = vpop.f32.mrb[0].mxu0
        %2304 = vmatprep.mubr.bf16.mxu0 0
        %2305 = vmatmul.mubr.bf16.gmra.mrb[0].mxu0 %v2180
        %v2306 = vpop.f32.mrb[0].mxu0
        %v2307 = vadd.f32 0.0, %v2306
        %v2308 = vpop.f32.mrb[0].mxu0
        %v2309 = vpop.f32.mrb[0].mxu0
        %v2310 = vadd.f32 0.0, %v2309
        %v2311 = vpop.f32.mrb[0].mxu0
        %2312 = vmatprep.mubr.bf16.mxu0 0
        %2313 = vmatmul.mubr.bf16.gmra.mrb[0].mxu0 %v2183
        %v2314 = vpop.f32.mrb[0].mxu0
        %v2315 = vadd.f32 0.0, %v2314
        %v2316 = vpop.f32.mrb[0].mxu0
        %v2317 = vpop.f32.mrb[0].mxu0
        %v2318 = vadd.f32 0.0, %v2317
        %v2319 = vpop.f32.mrb[0].mxu0
        %2320 = vmatprep.mubr.bf16.mxu0 0
        %2321 = vmatmul.mubr.bf16.gmra.mrb[0].mxu0 %v2186
        %v2322 = vpop.f32.mrb[0].mxu0
        %v2323 = vadd.f32 0.0, %v2322
        %v2324 = vpop.f32.mrb[0].mxu0
        %v2325 = vpop.f32.mrb[0].mxu0
        %v2326 = vadd.f32 0.0, %v2325
        %v2327 = vpop.f32.mrb[0].mxu0
        %2328 = vmatprep.mubr.bf16.mxu0 0
        %2329 = vmatmul.mubr.bf16.gmra.mrb[0].mxu0 %v2189
        %v2330 = vpop.f32.mrb[0].mxu0
        %v2331 = vadd.f32 0.0, %v2330
        %v2332 = vpop.f32.mrb[0].mxu0
        %v2333 = vpop.f32.mrb[0].mxu0
        %v2334 = vadd.f32 0.0, %v2333
        %v2335 = vpop.f32.mrb[0].mxu0
        %2336 = vmatprep.mubr.bf16.mxu0 0
        %2337 = vmatmul.mubr.bf16.gmra.mrb[0].mxu0 %v2192
        %v2338 = vpop.f32.mrb[0].mxu0
        %v2339 = vadd.f32 0.0, %v2338
        %v2340 = vpop.f32.mrb[0].mxu0
        %v2341 = vpop.f32.mrb[0].mxu0
        %v2342 = vadd.f32 0.0, %v2341
        %v2343 = vpop.f32.mrb[0].mxu0
        %2344 = vmatprep.mubr.bf16.mxu0 0
        %2345 = vmatmul.mubr.bf16.gmra.mrb[0].mxu0 %v2195
        %v2346 = vpop.f32.mrb[0].mxu0
        %v2347 = vadd.f32 0.0, %v2346
        %v2348 = vpop.f32.mrb[0].mxu0
        %v2349 = vpop.f32.mrb[0].mxu0
        %v2350 = vadd.f32 0.0, %v2349
        %v2351 = vpop.f32.mrb[0].mxu0
        %2352 = vmatprep.mubr.bf16.mxu0 0
        %2353 = vmatmul.mubr.bf16.gmra.mrb[0].mxu0 %v2198
        %v2354 = vpop.f32.mrb[0].mxu0
        %v2355 = vadd.f32 0.0, %v2354
        %v2356 = vpop.f32.mrb[0].mxu0
        %v2357 = vpop.f32.mrb[0].mxu0
        %v2358 = vadd.f32 0.0, %v2357
        %v2359 = vpop.f32.mrb[0].mxu0
        %2360 = vdwg.mxu0
        %v2361 = vadd.f32 %v2039, %v2235
        %v2362 = vadd.f32 %v2040, %v2238
        %v2363 = vadd.f32 %v2041, %v2243
        %v2364 = vadd.f32 %v2042, %v2246
        %v2365 = vadd.f32 %v2043, %v2251
        %v2366 = vadd.f32 %v2044, %v2254
        %v2367 = vadd.f32 %v2045, %v2259
        %v2368 = vadd.f32 %v2046, %v2262
        %v2369 = vadd.f32 %v2047, %v2267
        %v2370 = vadd.f32 %v2048, %v2270
        %v2371 = vadd.f32 %v2049, %v2275
        %v2372 = vadd.f32 %v2050, %v2278
        %v2373 = vadd.f32 %v2051, %v2283
        %v2374 = vadd.f32 %v2052, %v2286
        %v2375 = vadd.f32 %v2053, %v2291
        %v2376 = vadd.f32 %v2054, %v2294
        %v2377 = vadd.f32 %v2055, %v2299
        %v2378 = vadd.f32 %v2056, %v2302
        %v2379 = vadd.f32 %v2057, %v2307
        %v2380 = vadd.f32 %v2058, %v2310
        %v2381 = vadd.f32 %v2059, %v2315
        %v2382 = vadd.f32 %v2060, %v2318
        %v2383 = vadd.f32 %v2061, %v2323
        %v2384 = vadd.f32 %v2062, %v2326
        %v2385 = vadd.f32 %v2063, %v2331
        %v2386 = vadd.f32 %v2064, %v2334
        %v2387 = vadd.f32 %v2065, %v2339
        %v2388 = vadd.f32 %v2066, %v2342
        %v2389 = vadd.f32 %v2067, %v2347
        %v2390 = vadd.f32 %v2068, %v2350
        %v2391 = vadd.f32 %v2069, %v2355
        %v2392 = vadd.f32 %v2070, %v2358
        %v2393 = vld [vmem:[%s809 + $0x2] sm:$0xff]
        %v2394 = vld [vmem:[%s809 + $0xa] sm:$0xff]
        %v2395 = vld [vmem:[%s809 + $0x1a] sm:$0xff]
        %v2396 = vld [vmem:[%s809 + $0x22] sm:$0xff]
        %v2397 = vld [vmem:[%s809 + $0x32] sm:$0xff]
        %v2398 = vld [vmem:[%s809 + $0x3a] sm:$0xff]
        %v2399 = vld [vmem:[%s809 + $0x4a] sm:$0xff]
        %v2400 = vld [vmem:[%s809 + $0x52] sm:$0xff]
        %v2401 = vld [vmem:[%s809 + $0x62] sm:$0xff]
        %v2402 = vld [vmem:[%s809 + $0x6a] sm:$0xff]
        %v2403 = vld [vmem:[%s809 + $0x7a] sm:$0xff]
        %v2404 = vld [vmem:[%s809 + $0x82] sm:$0xff]
        %v2405 = vld [vmem:[%s809 + $0x92] sm:$0xff]
        %v2406 = vld [vmem:[%s809 + $0x9a] sm:$0xff]
        %v2407 = vld [vmem:[%s809 + $0xaa] sm:$0xff]
        %v2408 = vld [vmem:[%s809 + $0xb2] sm:$0xff]
        %v2409 = vld [vmem:[%s809 + $0xc2] sm:$0xff]
        %v2410 = vld [vmem:[%s809 + $0xca] sm:$0xff]
        %v2411 = vld [vmem:[%s809 + $0xda] sm:$0xff]
        %v2412 = vld [vmem:[%s809 + $0xe2] sm:$0xff]
        %v2413 = vld [vmem:[%s809 + $0xf2] sm:$0xff]
        %v2414 = vld [vmem:[%s809 + $0xfa] sm:$0xff]
        %v2415 = vld [vmem:[%s809 + $0x10a] sm:$0xff]
        %v2416 = vld [vmem:[%s809 + $0x112] sm:$0xff]
        %v2417 = vld [vmem:[%s809 + $0x122] sm:$0xff]
        %v2418 = vld [vmem:[%s809 + $0x12a] sm:$0xff]
        %v2419 = vld [vmem:[%s809 + $0x13a] sm:$0xff]
        %v2420 = vld [vmem:[%s809 + $0x142] sm:$0xff]
        %v2421 = vld [vmem:[%s809 + $0x152] sm:$0xff]
        %v2422 = vld [vmem:[%s809 + $0x15a] sm:$0xff]
        %v2423 = vld [vmem:[%s809 + $0x16a] sm:$0xff]
        %v2424 = vld [vmem:[%s809 + $0x172] sm:$0xff]
        %v2425 = vpack.c.bf16 %v2394, %v2393
        %v2426 = vpack.c.bf16 %v2396, %v2395
        %v2427 = vpack.c.bf16 %v2398, %v2397
        %v2428 = vpack.c.bf16 %v2400, %v2399
        %v2429 = vpack.c.bf16 %v2402, %v2401
        %v2430 = vpack.c.bf16 %v2404, %v2403
        %v2431 = vpack.c.bf16 %v2406, %v2405
        %v2432 = vpack.c.bf16 %v2408, %v2407
        %v2433 = vpack.c.bf16 %v2410, %v2409
        %v2434 = vpack.c.bf16 %v2412, %v2411
        %v2435 = vpack.c.bf16 %v2414, %v2413
        %v2436 = vpack.c.bf16 %v2416, %v2415
        %v2437 = vpack.c.bf16 %v2418, %v2417
        %v2438 = vpack.c.bf16 %v2420, %v2419
        %v2439 = vpack.c.bf16 %v2422, %v2421
        %v2440 = vpack.c.bf16 %v2424, %v2423
        %s2441 = scalar_lea.vmem %s3, 160
        %v2442 = vld [vmem:[%s2441] sm:$0xf]
        %v2443 = vld [vmem:[%s2441 + $0x4] sm:$0xf]
        %v2444 = vld [vmem:[%s2441 + $0x8] sm:$0xf]
        %v2445 = vld [vmem:[%s2441 + $0xc] sm:$0xf]
        %v2446 = vld [vmem:[%s2441 + $0x10] sm:$0xf]
        %v2447 = vld [vmem:[%s2441 + $0x14] sm:$0xf]
        %v2448 = vld [vmem:[%s2441 + $0x18] sm:$0xf]
        %v2449 = vld [vmem:[%s2441 + $0x1c] sm:$0xf]
        %v2458 = vunpack.c.l.b16 %v2442
        %v2459 = vunpack.c.l.b16 %v2443
        %v2460 = vunpack.c.l.b16 %v2444
        %v2461 = vunpack.c.l.b16 %v2445
        %v2462 = vunpack.c.l.b16 %v2446
        %v2463 = vunpack.c.l.b16 %v2447
        %v2464 = vunpack.c.l.b16 %v2448
        %v2465 = vunpack.c.l.b16 %v2449
        %v2466 = vpack.c.b16 %v2459, %v2458
        %v2467 = vpack.c.b16 %v2461, %v2460
        %v2468 = vpack.c.b16 %v2463, %v2462
        %v2469 = vpack.c.b16 %v2465, %v2464
        %v2475 = vsel %vm810, %v2425, 0
        %v2478 = vsel %vm810, %v2426, 0
        %v2481 = vsel %vm810, %v2427, 0
        %v2484 = vsel %vm810, %v2428, 0
        %v2487 = vsel %vm810, %v2429, 0
        %v2490 = vsel %vm810, %v2430, 0
        %v2493 = vsel %vm810, %v2431, 0
        %v2496 = vsel %vm810, %v2432, 0
        %v2499 = vsel %vm810, %v2433, 0
        %v2502 = vsel %vm810, %v2434, 0
        %v2505 = vsel %vm810, %v2435, 0
        %v2508 = vsel %vm810, %v2436, 0
        %v2511 = vsel %vm810, %v2437, 0
        %v2514 = vsel %vm810, %v2438, 0
        %v2517 = vsel %vm810, %v2439, 0
        %v2520 = vsel %vm810, %v2440, 0
        %2522 = vmatprep.subr.bf16.mxu0 0
        %2523 = vmatpush1.bf16.msra.mxu0 %v2466
        %2524 = vmatprep.subr.bf16.mxu0 0
        %2525 = vmatpush1.bf16.msra.mxu0 %v2467
        %2526 = vmatprep.subr.bf16.mxu0 0
        %2527 = vmatpush1.bf16.msra.mxu0 %v2468
        %2528 = vmatprep.subr.bf16.mxu0 0
        %2529 = vmatpush1.bf16.msra.mxu0 %v2469
        %2530 = vmatprep.subr.bf16.mxu0 0
        %2531 = vmatpush1.bf16.msra.mxu0 0
        %2532 = vmatprep.subr.bf16.mxu0 0
        %2533 = vmatpush1.bf16.msra.mxu0 0
        %2534 = vmatprep.subr.bf16.mxu0 0
        %2535 = vmatpush1.bf16.msra.mxu0 0
        %2536 = vmatprep.subr.bf16.mxu0 0
        %2537 = vmatpush1.bf16.msra.mxu0 0
        %2538 = vmatprep.subr.bf16.mxu0 0
        %2539 = vmatpush1.bf16.msra.mxu0 0
        %2540 = vmatprep.subr.bf16.mxu0 0
        %2541 = vmatpush1.bf16.msra.mxu0 0
        %2542 = vmatprep.subr.bf16.mxu0 0
        %2543 = vmatpush1.bf16.msra.mxu0 0
        %2544 = vmatprep.subr.bf16.mxu0 0
        %2545 = vmatpush1.bf16.msra.mxu0 0
        %2546 = vmatprep.subr.bf16.mxu0 0
        %2547 = vmatpush1.bf16.msra.mxu0 0
        %2548 = vmatprep.subr.bf16.mxu0 0
        %2549 = vmatpush1.bf16.msra.mxu0 0
        %2550 = vmatprep.subr.bf16.mxu0 0
        %2551 = vmatpush1.bf16.msra.mxu0 0
        %2552 = vmatprep.subr.bf16.mxu0 0
        %2553 = vmatpush1.bf16.msra.mxu0 0
        %2554 = vmatprep.mubr.bf16.mxu0 0
        %2555 = vmatmul.mubr.bf16.gmra.mrb[0].mxu0 %v2475
        %v2556 = vpop.f32.mrb[0].mxu0
        %v2557 = vadd.f32 0.0, %v2556
        %v2558 = vpop.f32.mrb[0].mxu0
        %v2559 = vpop.f32.mrb[0].mxu0
        %v2560 = vadd.f32 0.0, %v2559
        %v2561 = vpop.f32.mrb[0].mxu0
        %2562 = vmatprep.mubr.bf16.mxu0 0
        %2563 = vmatmul.mubr.bf16.gmra.mrb[0].mxu0 %v2478
        %v2564 = vpop.f32.mrb[0].mxu0
        %v2565 = vadd.f32 0.0, %v2564
        %v2566 = vpop.f32.mrb[0].mxu0
        %v2567 = vpop.f32.mrb[0].mxu0
        %v2568 = vadd.f32 0.0, %v2567
        %v2569 = vpop.f32.mrb[0].mxu0
        %2570 = vmatprep.mubr.bf16.mxu0 0
        %2571 = vmatmul.mubr.bf16.gmra.mrb[0].mxu0 %v2481
        %v2572 = vpop.f32.mrb[0].mxu0
        %v2573 = vadd.f32 0.0, %v2572
        %v2574 = vpop.f32.mrb[0].mxu0
        %v2575 = vpop.f32.mrb[0].mxu0
        %v2576 = vadd.f32 0.0, %v2575
        %v2577 = vpop.f32.mrb[0].mxu0
        %2578 = vmatprep.mubr.bf16.mxu0 0
        %2579 = vmatmul.mubr.bf16.gmra.mrb[0].mxu0 %v2484
        %v2580 = vpop.f32.mrb[0].mxu0
        %v2581 = vadd.f32 0.0, %v2580
        %v2582 = vpop.f32.mrb[0].mxu0
        %v2583 = vpop.f32.mrb[0].mxu0
        %v2584 = vadd.f32 0.0, %v2583
        %v2585 = vpop.f32.mrb[0].mxu0
        %2586 = vmatprep.mubr.bf16.mxu0 0
        %2587 = vmatmul.mubr.bf16.gmra.mrb[0].mxu0 %v2487
        %v2588 = vpop.f32.mrb[0].mxu0
        %v2589 = vadd.f32 0.0, %v2588
        %v2590 = vpop.f32.mrb[0].mxu0
        %v2591 = vpop.f32.mrb[0].mxu0
        %v2592 = vadd.f32 0.0, %v2591
        %v2593 = vpop.f32.mrb[0].mxu0
        %2594 = vmatprep.mubr.bf16.mxu0 0
        %2595 = vmatmul.mubr.bf16.gmra.mrb[0].mxu0 %v2490
        %v2596 = vpop.f32.mrb[0].mxu0
        %v2597 = vadd.f32 0.0, %v2596
        %v2598 = vpop.f32.mrb[0].mxu0
        %v2599 = vpop.f32.mrb[0].mxu0
        %v2600 = vadd.f32 0.0, %v2599
        %v2601 = vpop.f32.mrb[0].mxu0
        %2602 = vmatprep.mubr.bf16.mxu0 0
        %2603 = vmatmul.mubr.bf16.gmra.mrb[0].mxu0 %v2493
        %v2604 = vpop.f32.mrb[0].mxu0
        %v2605 = vadd.f32 0.0, %v2604
        %v2606 = vpop.f32.mrb[0].mxu0
        %v2607 = vpop.f32.mrb[0].mxu0
        %v2608 = vadd.f32 0.0, %v2607
        %v2609 = vpop.f32.mrb[0].mxu0
        %2610 = vmatprep.mubr.bf16.mxu0 0
        %2611 = vmatmul.mubr.bf16.gmra.mrb[0].mxu0 %v2496
        %v2612 = vpop.f32.mrb[0].mxu0
        %v2613 = vadd.f32 0.0, %v2612
        %v2614 = vpop.f32.mrb[0].mxu0
        %v2615 = vpop.f32.mrb[0].mxu0
        %v2616 = vadd.f32 0.0, %v2615
        %v2617 = vpop.f32.mrb[0].mxu0
        %2618 = vmatprep.mubr.bf16.mxu0 0
        %2619 = vmatmul.mubr.bf16.gmra.mrb[0].mxu0 %v2499
        %v2620 = vpop.f32.mrb[0].mxu0
        %v2621 = vadd.f32 0.0, %v2620
        %v2622 = vpop.f32.mrb[0].mxu0
        %v2623 = vpop.f32.mrb[0].mxu0
        %v2624 = vadd.f32 0.0, %v2623
        %v2625 = vpop.f32.mrb[0].mxu0
        %2626 = vmatprep.mubr.bf16.mxu0 0
        %2627 = vmatmul.mubr.bf16.gmra.mrb[0].mxu0 %v2502
        %v2628 = vpop.f32.mrb[0].mxu0
        %v2629 = vadd.f32 0.0, %v2628
        %v2630 = vpop.f32.mrb[0].mxu0
        %v2631 = vpop.f32.mrb[0].mxu0
        %v2632 = vadd.f32 0.0, %v2631
        %v2633 = vpop.f32.mrb[0].mxu0
        %2634 = vmatprep.mubr.bf16.mxu0 0
        %2635 = vmatmul.mubr.bf16.gmra.mrb[0].mxu0 %v2505
        %v2636 = vpop.f32.mrb[0].mxu0
        %v2637 = vadd.f32 0.0, %v2636
        %v2638 = vpop.f32.mrb[0].mxu0
        %v2639 = vpop.f32.mrb[0].mxu0
        %v2640 = vadd.f32 0.0, %v2639
        %v2641 = vpop.f32.mrb[0].mxu0
        %2642 = vmatprep.mubr.bf16.mxu0 0
        %2643 = vmatmul.mubr.bf16.gmra.mrb[0].mxu0 %v2508
        %v2644 = vpop.f32.mrb[0].mxu0
        %v2645 = vadd.f32 0.0, %v2644
        %v2646 = vpop.f32.mrb[0].mxu0
        %v2647 = vpop.f32.mrb[0].mxu0
        %v2648 = vadd.f32 0.0, %v2647
        %v2649 = vpop.f32.mrb[0].mxu0
        %2650 = vmatprep.mubr.bf16.mxu0 0
        %2651 = vmatmul.mubr.bf16.gmra.mrb[0].mxu0 %v2511
        %v2652 = vpop.f32.mrb[0].mxu0
        %v2653 = vadd.f32 0.0, %v2652
        %v2654 = vpop.f32.mrb[0].mxu0
        %v2655 = vpop.f32.mrb[0].mxu0
        %v2656 = vadd.f32 0.0, %v2655
        %v2657 = vpop.f32.mrb[0].mxu0
        %2658 = vmatprep.mubr.bf16.mxu0 0
        %2659 = vmatmul.mubr.bf16.gmra.mrb[0].mxu0 %v2514
        %v2660 = vpop.f32.mrb[0].mxu0
        %v2661 = vadd.f32 0.0, %v2660
        %v2662 = vpop.f32.mrb[0].mxu0
        %v2663 = vpop.f32.mrb[0].mxu0
        %v2664 = vadd.f32 0.0, %v2663
        %v2665 = vpop.f32.mrb[0].mxu0
        %2666 = vmatprep.mubr.bf16.mxu0 0
        %2667 = vmatmul.mubr.bf16.gmra.mrb[0].mxu0 %v2517
        %v2668 = vpop.f32.mrb[0].mxu0
        %v2669 = vadd.f32 0.0, %v2668
        %v2670 = vpop.f32.mrb[0].mxu0
        %v2671 = vpop.f32.mrb[0].mxu0
        %v2672 = vadd.f32 0.0, %v2671
        %v2673 = vpop.f32.mrb[0].mxu0
        %2674 = vmatprep.mubr.bf16.mxu0 0
        %2675 = vmatmul.mubr.bf16.gmra.mrb[0].mxu0 %v2520
        %v2676 = vpop.f32.mrb[0].mxu0
        %v2677 = vadd.f32 0.0, %v2676
        %v2678 = vpop.f32.mrb[0].mxu0
        %v2679 = vpop.f32.mrb[0].mxu0
        %v2680 = vadd.f32 0.0, %v2679
        %v2681 = vpop.f32.mrb[0].mxu0
        %2682 = vdwg.mxu0
        %v2683 = vadd.f32 %v2361, %v2557
        %v2684 = vadd.f32 %v2362, %v2560
        %v2685 = vadd.f32 %v2363, %v2565
        %v2686 = vadd.f32 %v2364, %v2568
        %v2687 = vadd.f32 %v2365, %v2573
        %v2688 = vadd.f32 %v2366, %v2576
        %v2689 = vadd.f32 %v2367, %v2581
        %v2690 = vadd.f32 %v2368, %v2584
        %v2691 = vadd.f32 %v2369, %v2589
        %v2692 = vadd.f32 %v2370, %v2592
        %v2693 = vadd.f32 %v2371, %v2597
        %v2694 = vadd.f32 %v2372, %v2600
        %v2695 = vadd.f32 %v2373, %v2605
        %v2696 = vadd.f32 %v2374, %v2608
        %v2697 = vadd.f32 %v2375, %v2613
        %v2698 = vadd.f32 %v2376, %v2616
        %v2699 = vadd.f32 %v2377, %v2621
        %v2700 = vadd.f32 %v2378, %v2624
        %v2701 = vadd.f32 %v2379, %v2629
        %v2702 = vadd.f32 %v2380, %v2632
        %v2703 = vadd.f32 %v2381, %v2637
        %v2704 = vadd.f32 %v2382, %v2640
        %v2705 = vadd.f32 %v2383, %v2645
        %v2706 = vadd.f32 %v2384, %v2648
        %v2707 = vadd.f32 %v2385, %v2653
        %v2708 = vadd.f32 %v2386, %v2656
        %v2709 = vadd.f32 %v2387, %v2661
        %v2710 = vadd.f32 %v2388, %v2664
        %v2711 = vadd.f32 %v2389, %v2669
        %v2712 = vadd.f32 %v2390, %v2672
        %v2713 = vadd.f32 %v2391, %v2677
        %v2714 = vadd.f32 %v2392, %v2680
        %s2715 = scalar_lea.vmem [#allocation2], 48
        %v2716 = vld [vmem:[%s2715] sm:$0xff]
        %v2717 = vld [vmem:[%s2715 + $0x8] sm:$0xff]
        %v2718 = vld [vmem:[%s2715 + $0x18] sm:$0xff]
        %v2719 = vld [vmem:[%s2715 + $0x20] sm:$0xff]
        %v2720 = vld [vmem:[%s2715 + $0x30] sm:$0xff]
        %v2721 = vld [vmem:[%s2715 + $0x38] sm:$0xff]
        %v2722 = vld [vmem:[%s2715 + $0x48] sm:$0xff]
        %v2723 = vld [vmem:[%s2715 + $0x50] sm:$0xff]
        %v2724 = vld [vmem:[%s2715 + $0x60] sm:$0xff]
        %v2725 = vld [vmem:[%s2715 + $0x68] sm:$0xff]
        %v2726 = vld [vmem:[%s2715 + $0x78] sm:$0xff]
        %v2727 = vld [vmem:[%s2715 + $0x80] sm:$0xff]
        %v2728 = vld [vmem:[%s2715 + $0x90] sm:$0xff]
        %v2729 = vld [vmem:[%s2715 + $0x98] sm:$0xff]
        %v2730 = vld [vmem:[%s2715 + $0xa8] sm:$0xff]
        %v2731 = vld [vmem:[%s2715 + $0xb0] sm:$0xff]
        %v2732 = vld [vmem:[%s2715 + $0xc0] sm:$0xff]
        %v2733 = vld [vmem:[%s2715 + $0xc8] sm:$0xff]
        %v2734 = vld [vmem:[%s2715 + $0xd8] sm:$0xff]
        %v2735 = vld [vmem:[%s2715 + $0xe0] sm:$0xff]
        %v2736 = vld [vmem:[%s2715 + $0xf0] sm:$0xff]
        %v2737 = vld [vmem:[%s2715 + $0xf8] sm:$0xff]
        %v2738 = vld [vmem:[%s2715 + $0x108] sm:$0xff]
        %v2739 = vld [vmem:[%s2715 + $0x110] sm:$0xff]
        %v2740 = vld [vmem:[%s2715 + $0x120] sm:$0xff]
        %v2741 = vld [vmem:[%s2715 + $0x128] sm:$0xff]
        %v2742 = vld [vmem:[%s2715 + $0x138] sm:$0xff]
        %v2743 = vld [vmem:[%s2715 + $0x140] sm:$0xff]
        %v2744 = vld [vmem:[%s2715 + $0x150] sm:$0xff]
        %v2745 = vld [vmem:[%s2715 + $0x158] sm:$0xff]
        %v2746 = vld [vmem:[%s2715 + $0x168] sm:$0xff]
        %v2747 = vld [vmem:[%s2715 + $0x170] sm:$0xff]
        %v2748 = vpack.c.bf16 %v2717, %v2716
        %v2749 = vpack.c.bf16 %v2719, %v2718
        %v2750 = vpack.c.bf16 %v2721, %v2720
        %v2751 = vpack.c.bf16 %v2723, %v2722
        %v2752 = vpack.c.bf16 %v2725, %v2724
        %v2753 = vpack.c.bf16 %v2727, %v2726
        %v2754 = vpack.c.bf16 %v2729, %v2728
        %v2755 = vpack.c.bf16 %v2731, %v2730
        %v2756 = vpack.c.bf16 %v2733, %v2732
        %v2757 = vpack.c.bf16 %v2735, %v2734
        %v2758 = vpack.c.bf16 %v2737, %v2736
        %v2759 = vpack.c.bf16 %v2739, %v2738
        %v2760 = vpack.c.bf16 %v2741, %v2740
        %v2761 = vpack.c.bf16 %v2743, %v2742
        %v2762 = vpack.c.bf16 %v2745, %v2744
        %v2763 = vpack.c.bf16 %v2747, %v2746
        %s2764 = scalar_lea.vmem %s3, 192
        %v2765 = vld [vmem:[%s2764] sm:$0xf]
        %v2766 = vld [vmem:[%s2764 + $0x4] sm:$0xf]
        %v2767 = vld [vmem:[%s2764 + $0x8] sm:$0xf]
        %v2768 = vld [vmem:[%s2764 + $0xc] sm:$0xf]
        %v2769 = vld [vmem:[%s2764 + $0x10] sm:$0xf]
        %v2770 = vld [vmem:[%s2764 + $0x14] sm:$0xf]
        %v2771 = vld [vmem:[%s2764 + $0x18] sm:$0xf]
        %v2772 = vld [vmem:[%s2764 + $0x1c] sm:$0xf]
        %v2781 = vunpack.c.l.b16 %v2765
        %v2782 = vunpack.c.l.b16 %v2766
        %v2783 = vunpack.c.l.b16 %v2767
        %v2784 = vunpack.c.l.b16 %v2768
        %v2785 = vunpack.c.l.b16 %v2769
        %v2786 = vunpack.c.l.b16 %v2770
        %v2787 = vunpack.c.l.b16 %v2771
        %v2788 = vunpack.c.l.b16 %v2772
        %v2789 = vpack.c.b16 %v2782, %v2781
        %v2790 = vpack.c.b16 %v2784, %v2783
        %v2791 = vpack.c.b16 %v2786, %v2785
        %v2792 = vpack.c.b16 %v2788, %v2787
        %v2798 = vsel %vm810, %v2748, 0
        %v2801 = vsel %vm810, %v2749, 0
        %v2804 = vsel %vm810, %v2750, 0
        %v2807 = vsel %vm810, %v2751, 0
        %v2810 = vsel %vm810, %v2752, 0
        %v2813 = vsel %vm810, %v2753, 0
        %v2816 = vsel %vm810, %v2754, 0
        %v2819 = vsel %vm810, %v2755, 0
        %v2822 = vsel %vm810, %v2756, 0
        %v2825 = vsel %vm810, %v2757, 0
        %v2828 = vsel %vm810, %v2758, 0
        %v2831 = vsel %vm810, %v2759, 0
        %v2834 = vsel %vm810, %v2760, 0
        %v2837 = vsel %vm810, %v2761, 0
        %v2840 = vsel %vm810, %v2762, 0
        %v2843 = vsel %vm810, %v2763, 0
        %2845 = vmatprep.subr.bf16.mxu0 0
        %2846 = vmatpush1.bf16.msra.mxu0 %v2789
        %2847 = vmatprep.subr.bf16.mxu0 0
        %2848 = vmatpush1.bf16.msra.mxu0 %v2790
        %2849 = vmatprep.subr.bf16.mxu0 0
        %2850 = vmatpush1.bf16.msra.mxu0 %v2791
        %2851 = vmatprep.subr.bf16.mxu0 0
        %2852 = vmatpush1.bf16.msra.mxu0 %v2792
        %2853 = vmatprep.subr.bf16.mxu0 0
        %2854 = vmatpush1.bf16.msra.mxu0 0
        %2855 = vmatprep.subr.bf16.mxu0 0
        %2856 = vmatpush1.bf16.msra.mxu0 0
        %2857 = vmatprep.subr.bf16.mxu0 0
        %2858 = vmatpush1.bf16.msra.mxu0 0
        %2859 = vmatprep.subr.bf16.mxu0 0
        %2860 = vmatpush1.bf16.msra.mxu0 0
        %2861 = vmatprep.subr.bf16.mxu0 0
        %2862 = vmatpush1.bf16.msra.mxu0 0
        %2863 = vmatprep.subr.bf16.mxu0 0
        %2864 = vmatpush1.bf16.msra.mxu0 0
        %2865 = vmatprep.subr.bf16.mxu0 0
        %2866 = vmatpush1.bf16.msra.mxu0 0
        %2867 = vmatprep.subr.bf16.mxu0 0
        %2868 = vmatpush1.bf16.msra.mxu0 0
        %2869 = vmatprep.subr.bf16.mxu0 0
        %2870 = vmatpush1.bf16.msra.mxu0 0
        %2871 = vmatprep.subr.bf16.mxu0 0
        %2872 = vmatpush1.bf16.msra.mxu0 0
        %2873 = vmatprep.subr.bf16.mxu0 0
        %2874 = vmatpush1.bf16.msra.mxu0 0
        %2875 = vmatprep.subr.bf16.mxu0 0
        %2876 = vmatpush1.bf16.msra.mxu0 0
        %2877 = vmatprep.mubr.bf16.mxu0 0
        %2878 = vmatmul.mubr.bf16.gmra.mrb[0].mxu0 %v2798
        %v2879 = vpop.f32.mrb[0].mxu0
        %v2880 = vadd.f32 0.0, %v2879
        %v2881 = vpop.f32.mrb[0].mxu0
        %v2882 = vpop.f32.mrb[0].mxu0
        %v2883 = vadd.f32 0.0, %v2882
        %v2884 = vpop.f32.mrb[0].mxu0
        %2885 = vmatprep.mubr.bf16.mxu0 0
        %2886 = vmatmul.mubr.bf16.gmra.mrb[0].mxu0 %v2801
        %v2887 = vpop.f32.mrb[0].mxu0
        %v2888 = vadd.f32 0.0, %v2887
        %v2889 = vpop.f32.mrb[0].mxu0
        %v2890 = vpop.f32.mrb[0].mxu0
        %v2891 = vadd.f32 0.0, %v2890
        %v2892 = vpop.f32.mrb[0].mxu0
        %2893 = vmatprep.mubr.bf16.mxu0 0
        %2894 = vmatmul.mubr.bf16.gmra.mrb[0].mxu0 %v2804
        %v2895 = vpop.f32.mrb[0].mxu0
        %v2896 = vadd.f32 0.0, %v2895
        %v2897 = vpop.f32.mrb[0].mxu0
        %v2898 = vpop.f32.mrb[0].mxu0
        %v2899 = vadd.f32 0.0, %v2898
        %v2900 = vpop.f32.mrb[0].mxu0
        %2901 = vmatprep.mubr.bf16.mxu0 0
        %2902 = vmatmul.mubr.bf16.gmra.mrb[0].mxu0 %v2807
        %v2903 = vpop.f32.mrb[0].mxu0
        %v2904 = vadd.f32 0.0, %v2903
        %v2905 = vpop.f32.mrb[0].mxu0
        %v2906 = vpop.f32.mrb[0].mxu0
        %v2907 = vadd.f32 0.0, %v2906
        %v2908 = vpop.f32.mrb[0].mxu0
        %2909 = vmatprep.mubr.bf16.mxu0 0
        %2910 = vmatmul.mubr.bf16.gmra.mrb[0].mxu0 %v2810
        %v2911 = vpop.f32.mrb[0].mxu0
        %v2912 = vadd.f32 0.0, %v2911
        %v2913 = vpop.f32.mrb[0].mxu0
        %v2914 = vpop.f32.mrb[0].mxu0
        %v2915 = vadd.f32 0.0, %v2914
        %v2916 = vpop.f32.mrb[0].mxu0
        %2917 = vmatprep.mubr.bf16.mxu0 0
        %2918 = vmatmul.mubr.bf16.gmra.mrb[0].mxu0 %v2813
        %v2919 = vpop.f32.mrb[0].mxu0
        %v2920 = vadd.f32 0.0, %v2919
        %v2921 = vpop.f32.mrb[0].mxu0
        %v2922 = vpop.f32.mrb[0].mxu0
        %v2923 = vadd.f32 0.0, %v2922
        %v2924 = vpop.f32.mrb[0].mxu0
        %2925 = vmatprep.mubr.bf16.mxu0 0
        %2926 = vmatmul.mubr.bf16.gmra.mrb[0].mxu0 %v2816
        %v2927 = vpop.f32.mrb[0].mxu0
        %v2928 = vadd.f32 0.0, %v2927
        %v2929 = vpop.f32.mrb[0].mxu0
        %v2930 = vpop.f32.mrb[0].mxu0
        %v2931 = vadd.f32 0.0, %v2930
        %v2932 = vpop.f32.mrb[0].mxu0
        %2933 = vmatprep.mubr.bf16.mxu0 0
        %2934 = vmatmul.mubr.bf16.gmra.mrb[0].mxu0 %v2819
        %v2935 = vpop.f32.mrb[0].mxu0
        %v2936 = vadd.f32 0.0, %v2935
        %v2937 = vpop.f32.mrb[0].mxu0
        %v2938 = vpop.f32.mrb[0].mxu0
        %v2939 = vadd.f32 0.0, %v2938
        %v2940 = vpop.f32.mrb[0].mxu0
        %2941 = vmatprep.mubr.bf16.mxu0 0
        %2942 = vmatmul.mubr.bf16.gmra.mrb[0].mxu0 %v2822
        %v2943 = vpop.f32.mrb[0].mxu0
        %v2944 = vadd.f32 0.0, %v2943
        %v2945 = vpop.f32.mrb[0].mxu0
        %v2946 = vpop.f32.mrb[0].mxu0
        %v2947 = vadd.f32 0.0, %v2946
        %v2948 = vpop.f32.mrb[0].mxu0
        %2949 = vmatprep.mubr.bf16.mxu0 0
        %2950 = vmatmul.mubr.bf16.gmra.mrb[0].mxu0 %v2825
        %v2951 = vpop.f32.mrb[0].mxu0
        %v2952 = vadd.f32 0.0, %v2951
        %v2953 = vpop.f32.mrb[0].mxu0
        %v2954 = vpop.f32.mrb[0].mxu0
        %v2955 = vadd.f32 0.0, %v2954
        %v2956 = vpop.f32.mrb[0].mxu0
        %2957 = vmatprep.mubr.bf16.mxu0 0
        %2958 = vmatmul.mubr.bf16.gmra.mrb[0].mxu0 %v2828
        %v2959 = vpop.f32.mrb[0].mxu0
        %v2960 = vadd.f32 0.0, %v2959
        %v2961 = vpop.f32.mrb[0].mxu0
        %v2962 = vpop.f32.mrb[0].mxu0
        %v2963 = vadd.f32 0.0, %v2962
        %v2964 = vpop.f32.mrb[0].mxu0
        %2965 = vmatprep.mubr.bf16.mxu0 0
        %2966 = vmatmul.mubr.bf16.gmra.mrb[0].mxu0 %v2831
        %v2967 = vpop.f32.mrb[0].mxu0
        %v2968 = vadd.f32 0.0, %v2967
        %v2969 = vpop.f32.mrb[0].mxu0
        %v2970 = vpop.f32.mrb[0].mxu0
        %v2971 = vadd.f32 0.0, %v2970
        %v2972 = vpop.f32.mrb[0].mxu0
        %2973 = vmatprep.mubr.bf16.mxu0 0
        %2974 = vmatmul.mubr.bf16.gmra.mrb[0].mxu0 %v2834
        %v2975 = vpop.f32.mrb[0].mxu0
        %v2976 = vadd.f32 0.0, %v2975
        %v2977 = vpop.f32.mrb[0].mxu0
        %v2978 = vpop.f32.mrb[0].mxu0
        %v2979 = vadd.f32 0.0, %v2978
        %v2980 = vpop.f32.mrb[0].mxu0
        %2981 = vmatprep.mubr.bf16.mxu0 0
        %2982 = vmatmul.mubr.bf16.gmra.mrb[0].mxu0 %v2837
        %v2983 = vpop.f32.mrb[0].mxu0
        %v2984 = vadd.f32 0.0, %v2983
        %v2985 = vpop.f32.mrb[0].mxu0
        %v2986 = vpop.f32.mrb[0].mxu0
        %v2987 = vadd.f32 0.0, %v2986
        %v2988 = vpop.f32.mrb[0].mxu0
        %2989 = vmatprep.mubr.bf16.mxu0 0
        %2990 = vmatmul.mubr.bf16.gmra.mrb[0].mxu0 %v2840
        %v2991 = vpop.f32.mrb[0].mxu0
        %v2992 = vadd.f32 0.0, %v2991
        %v2993 = vpop.f32.mrb[0].mxu0
        %v2994 = vpop.f32.mrb[0].mxu0
        %v2995 = vadd.f32 0.0, %v2994
        %v2996 = vpop.f32.mrb[0].mxu0
        %2997 = vmatprep.mubr.bf16.mxu0 0
        %2998 = vmatmul.mubr.bf16.gmra.mrb[0].mxu0 %v2843
        %v2999 = vpop.f32.mrb[0].mxu0
        %v3000 = vadd.f32 0.0, %v2999
        %v3001 = vpop.f32.mrb[0].mxu0
        %v3002 = vpop.f32.mrb[0].mxu0
        %v3003 = vadd.f32 0.0, %v3002
        %v3004 = vpop.f32.mrb[0].mxu0
        %3005 = vdwg.mxu0
        %v3006 = vadd.f32 %v2683, %v2880
        %v3007 = vadd.f32 %v2684, %v2883
        %v3008 = vadd.f32 %v2685, %v2888
        %v3009 = vadd.f32 %v2686, %v2891
        %v3010 = vadd.f32 %v2687, %v2896
        %v3011 = vadd.f32 %v2688, %v2899
        %v3012 = vadd.f32 %v2689, %v2904
        %v3013 = vadd.f32 %v2690, %v2907
        %v3014 = vadd.f32 %v2691, %v2912
        %v3015 = vadd.f32 %v2692, %v2915
        %v3016 = vadd.f32 %v2693, %v2920
        %v3017 = vadd.f32 %v2694, %v2923
        %v3018 = vadd.f32 %v2695, %v2928
        %v3019 = vadd.f32 %v2696, %v2931
        %v3020 = vadd.f32 %v2697, %v2936
        %v3021 = vadd.f32 %v2698, %v2939
        %v3022 = vadd.f32 %v2699, %v2944
        %v3023 = vadd.f32 %v2700, %v2947
        %v3024 = vadd.f32 %v2701, %v2952
        %v3025 = vadd.f32 %v2702, %v2955
        %v3026 = vadd.f32 %v2703, %v2960
        %v3027 = vadd.f32 %v2704, %v2963
        %v3028 = vadd.f32 %v2705, %v2968
        %v3029 = vadd.f32 %v2706, %v2971
        %v3030 = vadd.f32 %v2707, %v2976
        %v3031 = vadd.f32 %v2708, %v2979
        %v3032 = vadd.f32 %v2709, %v2984
        %v3033 = vadd.f32 %v2710, %v2987
        %v3034 = vadd.f32 %v2711, %v2992
        %v3035 = vadd.f32 %v2712, %v2995
        %v3036 = vadd.f32 %v2713, %v3000
        %v3037 = vadd.f32 %v2714, %v3003
        %v3038 = vld [vmem:[%s2715 + $0x1] sm:$0xff]
        %v3039 = vld [vmem:[%s2715 + $0x9] sm:$0xff]
        %v3040 = vld [vmem:[%s2715 + $0x19] sm:$0xff]
        %v3041 = vld [vmem:[%s2715 + $0x21] sm:$0xff]
        %v3042 = vld [vmem:[%s2715 + $0x31] sm:$0xff]
        %v3043 = vld [vmem:[%s2715 + $0x39] sm:$0xff]
        %v3044 = vld [vmem:[%s2715 + $0x49] sm:$0xff]
        %v3045 = vld [vmem:[%s2715 + $0x51] sm:$0xff]
        %v3046 = vld [vmem:[%s2715 + $0x61] sm:$0xff]
        %v3047 = vld [vmem:[%s2715 + $0x69] sm:$0xff]
        %v3048 = vld [vmem:[%s2715 + $0x79] sm:$0xff]
        %v3049 = vld [vmem:[%s2715 + $0x81] sm:$0xff]
        %v3050 = vld [vmem:[%s2715 + $0x91] sm:$0xff]
        %v3051 = vld [vmem:[%s2715 + $0x99] sm:$0xff]
        %v3052 = vld [vmem:[%s2715 + $0xa9] sm:$0xff]
        %v3053 = vld [vmem:[%s2715 + $0xb1] sm:$0xff]
        %v3054 = vld [vmem:[%s2715 + $0xc1] sm:$0xff]
        %v3055 = vld [vmem:[%s2715 + $0xc9] sm:$0xff]
        %v3056 = vld [vmem:[%s2715 + $0xd9] sm:$0xff]
        %v3057 = vld [vmem:[%s2715 + $0xe1] sm:$0xff]
        %v3058 = vld [vmem:[%s2715 + $0xf1] sm:$0xff]
        %v3059 = vld [vmem:[%s2715 + $0xf9] sm:$0xff]
        %v3060 = vld [vmem:[%s2715 + $0x109] sm:$0xff]
        %v3061 = vld [vmem:[%s2715 + $0x111] sm:$0xff]
        %v3062 = vld [vmem:[%s2715 + $0x121] sm:$0xff]
        %v3063 = vld [vmem:[%s2715 + $0x129] sm:$0xff]
        %v3064 = vld [vmem:[%s2715 + $0x139] sm:$0xff]
        %v3065 = vld [vmem:[%s2715 + $0x141] sm:$0xff]
        %v3066 = vld [vmem:[%s2715 + $0x151] sm:$0xff]
        %v3067 = vld [vmem:[%s2715 + $0x159] sm:$0xff]
        %v3068 = vld [vmem:[%s2715 + $0x169] sm:$0xff]
        %v3069 = vld [vmem:[%s2715 + $0x171] sm:$0xff]
        %v3070 = vpack.c.bf16 %v3039, %v3038
        %v3071 = vpack.c.bf16 %v3041, %v3040
        %v3072 = vpack.c.bf16 %v3043, %v3042
        %v3073 = vpack.c.bf16 %v3045, %v3044
        %v3074 = vpack.c.bf16 %v3047, %v3046
        %v3075 = vpack.c.bf16 %v3049, %v3048
        %v3076 = vpack.c.bf16 %v3051, %v3050
        %v3077 = vpack.c.bf16 %v3053, %v3052
        %v3078 = vpack.c.bf16 %v3055, %v3054
        %v3079 = vpack.c.bf16 %v3057, %v3056
        %v3080 = vpack.c.bf16 %v3059, %v3058
        %v3081 = vpack.c.bf16 %v3061, %v3060
        %v3082 = vpack.c.bf16 %v3063, %v3062
        %v3083 = vpack.c.bf16 %v3065, %v3064
        %v3084 = vpack.c.bf16 %v3067, %v3066
        %v3085 = vpack.c.bf16 %v3069, %v3068
        %s3086 = scalar_lea.vmem %s3, 224
        %v3087 = vld [vmem:[%s3086] sm:$0xf]
        %v3088 = vld [vmem:[%s3086 + $0x4] sm:$0xf]
        %v3089 = vld [vmem:[%s3086 + $0x8] sm:$0xf]
        %v3090 = vld [vmem:[%s3086 + $0xc] sm:$0xf]
        %v3091 = vld [vmem:[%s3086 + $0x10] sm:$0xf]
        %v3092 = vld [vmem:[%s3086 + $0x14] sm:$0xf]
        %v3093 = vld [vmem:[%s3086 + $0x18] sm:$0xf]
        %v3094 = vld [vmem:[%s3086 + $0x1c] sm:$0xf]
        %v3103 = vunpack.c.l.b16 %v3087
        %v3104 = vunpack.c.l.b16 %v3088
        %v3105 = vunpack.c.l.b16 %v3089
        %v3106 = vunpack.c.l.b16 %v3090
        %v3107 = vunpack.c.l.b16 %v3091
        %v3108 = vunpack.c.l.b16 %v3092
        %v3109 = vunpack.c.l.b16 %v3093
        %v3110 = vunpack.c.l.b16 %v3094
        %v3111 = vpack.c.b16 %v3104, %v3103
        %v3112 = vpack.c.b16 %v3106, %v3105
        %v3113 = vpack.c.b16 %v3108, %v3107
        %v3114 = vpack.c.b16 %v3110, %v3109
        %v3120 = vsel %vm810, %v3070, 0
        %v3123 = vsel %vm810, %v3071, 0
        %v3126 = vsel %vm810, %v3072, 0
        %v3129 = vsel %vm810, %v3073, 0
        %v3132 = vsel %vm810, %v3074, 0
        %v3135 = vsel %vm810, %v3075, 0
        %v3138 = vsel %vm810, %v3076, 0
        %v3141 = vsel %vm810, %v3077, 0
        %v3144 = vsel %vm810, %v3078, 0
        %v3147 = vsel %vm810, %v3079, 0
        %v3150 = vsel %vm810, %v3080, 0
        %v3153 = vsel %vm810, %v3081, 0
        %v3156 = vsel %vm810, %v3082, 0
        %v3159 = vsel %vm810, %v3083, 0
        %v3162 = vsel %vm810, %v3084, 0
        %v3165 = vsel %vm810, %v3085, 0
        %3167 = vmatprep.subr.bf16.mxu0 0
        %3168 = vmatpush1.bf16.msra.mxu0 %v3111
        %3169 = vmatprep.subr.bf16.mxu0 0
        %3170 = vmatpush1.bf16.msra.mxu0 %v3112
        %3171 = vmatprep.subr.bf16.mxu0 0
        %3172 = vmatpush1.bf16.msra.mxu0 %v3113
        %3173 = vmatprep.subr.bf16.mxu0 0
        %3174 = vmatpush1.bf16.msra.mxu0 %v3114
        %3175 = vmatprep.subr.bf16.mxu0 0
        %3176 = vmatpush1.bf16.msra.mxu0 0
        %3177 = vmatprep.subr.bf16.mxu0 0
        %3178 = vmatpush1.bf16.msra.mxu0 0
        %3179 = vmatprep.subr.bf16.mxu0 0
        %3180 = vmatpush1.bf16.msra.mxu0 0
        %3181 = vmatprep.subr.bf16.mxu0 0
        %3182 = vmatpush1.bf16.msra.mxu0 0
        %3183 = vmatprep.subr.bf16.mxu0 0
        %3184 = vmatpush1.bf16.msra.mxu0 0
        %3185 = vmatprep.subr.bf16.mxu0 0
        %3186 = vmatpush1.bf16.msra.mxu0 0
        %3187 = vmatprep.subr.bf16.mxu0 0
        %3188 = vmatpush1.bf16.msra.mxu0 0
        %3189 = vmatprep.subr.bf16.mxu0 0
        %3190 = vmatpush1.bf16.msra.mxu0 0
        %3191 = vmatprep.subr.bf16.mxu0 0
        %3192 = vmatpush1.bf16.msra.mxu0 0
        %3193 = vmatprep.subr.bf16.mxu0 0
        %3194 = vmatpush1.bf16.msra.mxu0 0
        %3195 = vmatprep.subr.bf16.mxu0 0
        %3196 = vmatpush1.bf16.msra.mxu0 0
        %3197 = vmatprep.subr.bf16.mxu0 0
        %3198 = vmatpush1.bf16.msra.mxu0 0
        %3199 = vmatprep.mubr.bf16.mxu0 0
        %3200 = vmatmul.mubr.bf16.gmra.mrb[0].mxu0 %v3120
        %v3201 = vpop.f32.mrb[0].mxu0
        %v3202 = vadd.f32 0.0, %v3201
        %v3203 = vpop.f32.mrb[0].mxu0
        %v3204 = vpop.f32.mrb[0].mxu0
        %v3205 = vadd.f32 0.0, %v3204
        %v3206 = vpop.f32.mrb[0].mxu0
        %3207 = vmatprep.mubr.bf16.mxu0 0
        %3208 = vmatmul.mubr.bf16.gmra.mrb[0].mxu0 %v3123
        %v3209 = vpop.f32.mrb[0].mxu0
        %v3210 = vadd.f32 0.0, %v3209
        %v3211 = vpop.f32.mrb[0].mxu0
        %v3212 = vpop.f32.mrb[0].mxu0
        %v3213 = vadd.f32 0.0, %v3212
        %v3214 = vpop.f32.mrb[0].mxu0
        %3215 = vmatprep.mubr.bf16.mxu0 0
        %3216 = vmatmul.mubr.bf16.gmra.mrb[0].mxu0 %v3126
        %v3217 = vpop.f32.mrb[0].mxu0
        %v3218 = vadd.f32 0.0, %v3217
        %v3219 = vpop.f32.mrb[0].mxu0
        %v3220 = vpop.f32.mrb[0].mxu0
        %v3221 = vadd.f32 0.0, %v3220
        %v3222 = vpop.f32.mrb[0].mxu0
        %3223 = vmatprep.mubr.bf16.mxu0 0
        %3224 = vmatmul.mubr.bf16.gmra.mrb[0].mxu0 %v3129
        %v3225 = vpop.f32.mrb[0].mxu0
        %v3226 = vadd.f32 0.0, %v3225
        %v3227 = vpop.f32.mrb[0].mxu0
        %v3228 = vpop.f32.mrb[0].mxu0
        %v3229 = vadd.f32 0.0, %v3228
        %v3230 = vpop.f32.mrb[0].mxu0
        %3231 = vmatprep.mubr.bf16.mxu0 0
        %3232 = vmatmul.mubr.bf16.gmra.mrb[0].mxu0 %v3132
        %v3233 = vpop.f32.mrb[0].mxu0
        %v3234 = vadd.f32 0.0, %v3233
        %v3235 = vpop.f32.mrb[0].mxu0
        %v3236 = vpop.f32.mrb[0].mxu0
        %v3237 = vadd.f32 0.0, %v3236
        %v3238 = vpop.f32.mrb[0].mxu0
        %3239 = vmatprep.mubr.bf16.mxu0 0
        %3240 = vmatmul.mubr.bf16.gmra.mrb[0].mxu0 %v3135
        %v3241 = vpop.f32.mrb[0].mxu0
        %v3242 = vadd.f32 0.0, %v3241
        %v3243 = vpop.f32.mrb[0].mxu0
        %v3244 = vpop.f32.mrb[0].mxu0
        %v3245 = vadd.f32 0.0, %v3244
        %v3246 = vpop.f32.mrb[0].mxu0
        %3247 = vmatprep.mubr.bf16.mxu0 0
        %3248 = vmatmul.mubr.bf16.gmra.mrb[0].mxu0 %v3138
        %v3249 = vpop.f32.mrb[0].mxu0
        %v3250 = vadd.f32 0.0, %v3249
        %v3251 = vpop.f32.mrb[0].mxu0
        %v3252 = vpop.f32.mrb[0].mxu0
        %v3253 = vadd.f32 0.0, %v3252
        %v3254 = vpop.f32.mrb[0].mxu0
        %3255 = vmatprep.mubr.bf16.mxu0 0
        %3256 = vmatmul.mubr.bf16.gmra.mrb[0].mxu0 %v3141
        %v3257 = vpop.f32.mrb[0].mxu0
        %v3258 = vadd.f32 0.0, %v3257
        %v3259 = vpop.f32.mrb[0].mxu0
        %v3260 = vpop.f32.mrb[0].mxu0
        %v3261 = vadd.f32 0.0, %v3260
        %v3262 = vpop.f32.mrb[0].mxu0
        %3263 = vmatprep.mubr.bf16.mxu0 0
        %3264 = vmatmul.mubr.bf16.gmra.mrb[0].mxu0 %v3144
        %v3265 = vpop.f32.mrb[0].mxu0
        %v3266 = vadd.f32 0.0, %v3265
        %v3267 = vpop.f32.mrb[0].mxu0
        %v3268 = vpop.f32.mrb[0].mxu0
        %v3269 = vadd.f32 0.0, %v3268
        %v3270 = vpop.f32.mrb[0].mxu0
        %3271 = vmatprep.mubr.bf16.mxu0 0
        %3272 = vmatmul.mubr.bf16.gmra.mrb[0].mxu0 %v3147
        %v3273 = vpop.f32.mrb[0].mxu0
        %v3274 = vadd.f32 0.0, %v3273
        %v3275 = vpop.f32.mrb[0].mxu0
        %v3276 = vpop.f32.mrb[0].mxu0
        %v3277 = vadd.f32 0.0, %v3276
        %v3278 = vpop.f32.mrb[0].mxu0
        %3279 = vmatprep.mubr.bf16.mxu0 0
        %3280 = vmatmul.mubr.bf16.gmra.mrb[0].mxu0 %v3150
        %v3281 = vpop.f32.mrb[0].mxu0
        %v3282 = vadd.f32 0.0, %v3281
        %v3283 = vpop.f32.mrb[0].mxu0
        %v3284 = vpop.f32.mrb[0].mxu0
        %v3285 = vadd.f32 0.0, %v3284
        %v3286 = vpop.f32.mrb[0].mxu0
        %3287 = vmatprep.mubr.bf16.mxu0 0
        %3288 = vmatmul.mubr.bf16.gmra.mrb[0].mxu0 %v3153
        %v3289 = vpop.f32.mrb[0].mxu0
        %v3290 = vadd.f32 0.0, %v3289
        %v3291 = vpop.f32.mrb[0].mxu0
        %v3292 = vpop.f32.mrb[0].mxu0
        %v3293 = vadd.f32 0.0, %v3292
        %v3294 = vpop.f32.mrb[0].mxu0
        %3295 = vmatprep.mubr.bf16.mxu0 0
        %3296 = vmatmul.mubr.bf16.gmra.mrb[0].mxu0 %v3156
        %v3297 = vpop.f32.mrb[0].mxu0
        %v3298 = vadd.f32 0.0, %v3297
        %v3299 = vpop.f32.mrb[0].mxu0
        %v3300 = vpop.f32.mrb[0].mxu0
        %v3301 = vadd.f32 0.0, %v3300
        %v3302 = vpop.f32.mrb[0].mxu0
        %3303 = vmatprep.mubr.bf16.mxu0 0
        %3304 = vmatmul.mubr.bf16.gmra.mrb[0].mxu0 %v3159
        %v3305 = vpop.f32.mrb[0].mxu0
        %v3306 = vadd.f32 0.0, %v3305
        %v3307 = vpop.f32.mrb[0].mxu0
        %v3308 = vpop.f32.mrb[0].mxu0
        %v3309 = vadd.f32 0.0, %v3308
        %v3310 = vpop.f32.mrb[0].mxu0
        %3311 = vmatprep.mubr.bf16.mxu0 0
        %3312 = vmatmul.mubr.bf16.gmra.mrb[0].mxu0 %v3162
        %v3313 = vpop.f32.mrb[0].mxu0
        %v3314 = vadd.f32 0.0, %v3313
        %v3315 = vpop.f32.mrb[0].mxu0
        %v3316 = vpop.f32.mrb[0].mxu0
        %v3317 = vadd.f32 0.0, %v3316
        %v3318 = vpop.f32.mrb[0].mxu0
        %3319 = vmatprep.mubr.bf16.mxu0 0
        %3320 = vmatmul.mubr.bf16.gmra.mrb[0].mxu0 %v3165
        %v3321 = vpop.f32.mrb[0].mxu0
        %v3322 = vadd.f32 0.0, %v3321
        %v3323 = vpop.f32.mrb[0].mxu0
        %v3324 = vpop.f32.mrb[0].mxu0
        %v3325 = vadd.f32 0.0, %v3324
        %v3326 = vpop.f32.mrb[0].mxu0
        %3327 = vdwg.mxu0
        %v3328 = vadd.f32 %v3006, %v3202
        %v3329 = vadd.f32 %v3007, %v3205
        %v3330 = vadd.f32 %v3008, %v3210
        %v3331 = vadd.f32 %v3009, %v3213
        %v3332 = vadd.f32 %v3010, %v3218
        %v3333 = vadd.f32 %v3011, %v3221
        %v3334 = vadd.f32 %v3012, %v3226
        %v3335 = vadd.f32 %v3013, %v3229
        %v3336 = vadd.f32 %v3014, %v3234
        %v3337 = vadd.f32 %v3015, %v3237
        %v3338 = vadd.f32 %v3016, %v3242
        %v3339 = vadd.f32 %v3017, %v3245
        %v3340 = vadd.f32 %v3018, %v3250
        %v3341 = vadd.f32 %v3019, %v3253
        %v3342 = vadd.f32 %v3020, %v3258
        %v3343 = vadd.f32 %v3021, %v3261
        %v3344 = vadd.f32 %v3022, %v3266
        %v3345 = vadd.f32 %v3023, %v3269
        %v3346 = vadd.f32 %v3024, %v3274
        %v3347 = vadd.f32 %v3025, %v3277
        %v3348 = vadd.f32 %v3026, %v3282
        %v3349 = vadd.f32 %v3027, %v3285
        %v3350 = vadd.f32 %v3028, %v3290
        %v3351 = vadd.f32 %v3029, %v3293
        %v3352 = vadd.f32 %v3030, %v3298
        %v3353 = vadd.f32 %v3031, %v3301
        %v3354 = vadd.f32 %v3032, %v3306
        %v3355 = vadd.f32 %v3033, %v3309
        %v3356 = vadd.f32 %v3034, %v3314
        %v3357 = vadd.f32 %v3035, %v3317
        %v3358 = vadd.f32 %v3036, %v3322
        %v3359 = vadd.f32 %v3037, %v3325
        %v3360 = vld [vmem:[%s2715 + $0x2] sm:$0xff]
        %v3361 = vld [vmem:[%s2715 + $0xa] sm:$0xff]
        %v3362 = vld [vmem:[%s2715 + $0x1a] sm:$0xff]
        %v3363 = vld [vmem:[%s2715 + $0x22] sm:$0xff]
        %v3364 = vld [vmem:[%s2715 + $0x32] sm:$0xff]
        %v3365 = vld [vmem:[%s2715 + $0x3a] sm:$0xff]
        %v3366 = vld [vmem:[%s2715 + $0x4a] sm:$0xff]
        %v3367 = vld [vmem:[%s2715 + $0x52] sm:$0xff]
        %v3368 = vld [vmem:[%s2715 + $0x62] sm:$0xff]
        %v3369 = vld [vmem:[%s2715 + $0x6a] sm:$0xff]
        %v3370 = vld [vmem:[%s2715 + $0x7a] sm:$0xff]
        %v3371 = vld [vmem:[%s2715 + $0x82] sm:$0xff]
        %v3372 = vld [vmem:[%s2715 + $0x92] sm:$0xff]
        %v3373 = vld [vmem:[%s2715 + $0x9a] sm:$0xff]
        %v3374 = vld [vmem:[%s2715 + $0xaa] sm:$0xff]
        %v3375 = vld [vmem:[%s2715 + $0xb2] sm:$0xff]
        %v3376 = vld [vmem:[%s2715 + $0xc2] sm:$0xff]
        %v3377 = vld [vmem:[%s2715 + $0xca] sm:$0xff]
        %v3378 = vld [vmem:[%s2715 + $0xda] sm:$0xff]
        %v3379 = vld [vmem:[%s2715 + $0xe2] sm:$0xff]
        %v3380 = vld [vmem:[%s2715 + $0xf2] sm:$0xff]
        %v3381 = vld [vmem:[%s2715 + $0xfa] sm:$0xff]
        %v3382 = vld [vmem:[%s2715 + $0x10a] sm:$0xff]
        %v3383 = vld [vmem:[%s2715 + $0x112] sm:$0xff]
        %v3384 = vld [vmem:[%s2715 + $0x122] sm:$0xff]
        %v3385 = vld [vmem:[%s2715 + $0x12a] sm:$0xff]
        %v3386 = vld [vmem:[%s2715 + $0x13a] sm:$0xff]
        %v3387 = vld [vmem:[%s2715 + $0x142] sm:$0xff]
        %v3388 = vld [vmem:[%s2715 + $0x152] sm:$0xff]
        %v3389 = vld [vmem:[%s2715 + $0x15a] sm:$0xff]
        %v3390 = vld [vmem:[%s2715 + $0x16a] sm:$0xff]
        %v3391 = vld [vmem:[%s2715 + $0x172] sm:$0xff]
        %v3392 = vpack.c.bf16 %v3361, %v3360
        %v3393 = vpack.c.bf16 %v3363, %v3362
        %v3394 = vpack.c.bf16 %v3365, %v3364
        %v3395 = vpack.c.bf16 %v3367, %v3366
        %v3396 = vpack.c.bf16 %v3369, %v3368
        %v3397 = vpack.c.bf16 %v3371, %v3370
        %v3398 = vpack.c.bf16 %v3373, %v3372
        %v3399 = vpack.c.bf16 %v3375, %v3374
        %v3400 = vpack.c.bf16 %v3377, %v3376
        %v3401 = vpack.c.bf16 %v3379, %v3378
        %v3402 = vpack.c.bf16 %v3381, %v3380
        %v3403 = vpack.c.bf16 %v3383, %v3382
        %v3404 = vpack.c.bf16 %v3385, %v3384
        %v3405 = vpack.c.bf16 %v3387, %v3386
        %v3406 = vpack.c.bf16 %v3389, %v3388
        %v3407 = vpack.c.bf16 %v3391, %v3390
        %s3408 = scalar_lea.vmem %s3, 256
        %v3409 = vld [vmem:[%s3408] sm:$0xf]
        %v3410 = vld [vmem:[%s3408 + $0x4] sm:$0xf]
        %v3411 = vld [vmem:[%s3408 + $0x8] sm:$0xf]
        %v3412 = vld [vmem:[%s3408 + $0xc] sm:$0xf]
        %v3413 = vld [vmem:[%s3408 + $0x10] sm:$0xf]
        %v3414 = vld [vmem:[%s3408 + $0x14] sm:$0xf]
        %v3415 = vld [vmem:[%s3408 + $0x18] sm:$0xf]
        %v3416 = vld [vmem:[%s3408 + $0x1c] sm:$0xf]
        %v3425 = vunpack.c.l.b16 %v3409
        %v3426 = vunpack.c.l.b16 %v3410
        %v3427 = vunpack.c.l.b16 %v3411
        %v3428 = vunpack.c.l.b16 %v3412
        %v3429 = vunpack.c.l.b16 %v3413
        %v3430 = vunpack.c.l.b16 %v3414
        %v3431 = vunpack.c.l.b16 %v3415
        %v3432 = vunpack.c.l.b16 %v3416
        %v3433 = vpack.c.b16 %v3426, %v3425
        %v3434 = vpack.c.b16 %v3428, %v3427
        %v3435 = vpack.c.b16 %v3430, %v3429
        %v3436 = vpack.c.b16 %v3432, %v3431
        %v3442 = vsel %vm810, %v3392, 0
        %v3445 = vsel %vm810, %v3393, 0
        %v3448 = vsel %vm810, %v3394, 0
        %v3451 = vsel %vm810, %v3395, 0
        %v3454 = vsel %vm810, %v3396, 0
        %v3457 = vsel %vm810, %v3397, 0
        %v3460 = vsel %vm810, %v3398, 0
        %v3463 = vsel %vm810, %v3399, 0
        %v3466 = vsel %vm810, %v3400, 0
        %v3469 = vsel %vm810, %v3401, 0
        %v3472 = vsel %vm810, %v3402, 0
        %v3475 = vsel %vm810, %v3403, 0
        %v3478 = vsel %vm810, %v3404, 0
        %v3481 = vsel %vm810, %v3405, 0
        %v3484 = vsel %vm810, %v3406, 0
        %v3487 = vsel %vm810, %v3407, 0
        %3489 = vmatprep.subr.bf16.mxu0 0
        %3490 = vmatpush1.bf16.msra.mxu0 %v3433
        %3491 = vmatprep.subr.bf16.mxu0 0
        %3492 = vmatpush1.bf16.msra.mxu0 %v3434
        %3493 = vmatprep.subr.bf16.mxu0 0
        %3494 = vmatpush1.bf16.msra.mxu0 %v3435
        %3495 = vmatprep.subr.bf16.mxu0 0
        %3496 = vmatpush1.bf16.msra.mxu0 %v3436
        %3497 = vmatprep.subr.bf16.mxu0 0
        %3498 = vmatpush1.bf16.msra.mxu0 0
        %3499 = vmatprep.subr.bf16.mxu0 0
        %3500 = vmatpush1.bf16.msra.mxu0 0
        %3501 = vmatprep.subr.bf16.mxu0 0
        %3502 = vmatpush1.bf16.msra.mxu0 0
        %3503 = vmatprep.subr.bf16.mxu0 0
        %3504 = vmatpush1.bf16.msra.mxu0 0
        %3505 = vmatprep.subr.bf16.mxu0 0
        %3506 = vmatpush1.bf16.msra.mxu0 0
        %3507 = vmatprep.subr.bf16.mxu0 0
        %3508 = vmatpush1.bf16.msra.mxu0 0
        %3509 = vmatprep.subr.bf16.mxu0 0
        %3510 = vmatpush1.bf16.msra.mxu0 0
        %3511 = vmatprep.subr.bf16.mxu0 0
        %3512 = vmatpush1.bf16.msra.mxu0 0
        %3513 = vmatprep.subr.bf16.mxu0 0
        %3514 = vmatpush1.bf16.msra.mxu0 0
        %3515 = vmatprep.subr.bf16.mxu0 0
        %3516 = vmatpush1.bf16.msra.mxu0 0
        %3517 = vmatprep.subr.bf16.mxu0 0
        %3518 = vmatpush1.bf16.msra.mxu0 0
        %3519 = vmatprep.subr.bf16.mxu0 0
        %3520 = vmatpush1.bf16.msra.mxu0 0
        %3521 = vmatprep.mubr.bf16.mxu0 0
        %3522 = vmatmul.mubr.bf16.gmra.mrb[0].mxu0 %v3442
        %v3523 = vpop.f32.mrb[0].mxu0
        %v3524 = vadd.f32 0.0, %v3523
        %v3525 = vpop.f32.mrb[0].mxu0
        %v3526 = vpop.f32.mrb[0].mxu0
        %v3527 = vadd.f32 0.0, %v3526
        %v3528 = vpop.f32.mrb[0].mxu0
        %3529 = vmatprep.mubr.bf16.mxu0 0
        %3530 = vmatmul.mubr.bf16.gmra.mrb[0].mxu0 %v3445
        %v3531 = vpop.f32.mrb[0].mxu0
        %v3532 = vadd.f32 0.0, %v3531
        %v3533 = vpop.f32.mrb[0].mxu0
        %v3534 = vpop.f32.mrb[0].mxu0
        %v3535 = vadd.f32 0.0, %v3534
        %v3536 = vpop.f32.mrb[0].mxu0
        %3537 = vmatprep.mubr.bf16.mxu0 0
        %3538 = vmatmul.mubr.bf16.gmra.mrb[0].mxu0 %v3448
        %v3539 = vpop.f32.mrb[0].mxu0
        %v3540 = vadd.f32 0.0, %v3539
        %v3541 = vpop.f32.mrb[0].mxu0
        %v3542 = vpop.f32.mrb[0].mxu0
        %v3543 = vadd.f32 0.0, %v3542
        %v3544 = vpop.f32.mrb[0].mxu0
        %3545 = vmatprep.mubr.bf16.mxu0 0
        %3546 = vmatmul.mubr.bf16.gmra.mrb[0].mxu0 %v3451
        %v3547 = vpop.f32.mrb[0].mxu0
        %v3548 = vadd.f32 0.0, %v3547
        %v3549 = vpop.f32.mrb[0].mxu0
        %v3550 = vpop.f32.mrb[0].mxu0
        %v3551 = vadd.f32 0.0, %v3550
        %v3552 = vpop.f32.mrb[0].mxu0
        %3553 = vmatprep.mubr.bf16.mxu0 0
        %3554 = vmatmul.mubr.bf16.gmra.mrb[0].mxu0 %v3454
        %v3555 = vpop.f32.mrb[0].mxu0
        %v3556 = vadd.f32 0.0, %v3555
        %v3557 = vpop.f32.mrb[0].mxu0
        %v3558 = vpop.f32.mrb[0].mxu0
        %v3559 = vadd.f32 0.0, %v3558
        %v3560 = vpop.f32.mrb[0].mxu0
        %3561 = vmatprep.mubr.bf16.mxu0 0
        %3562 = vmatmul.mubr.bf16.gmra.mrb[0].mxu0 %v3457
        %v3563 = vpop.f32.mrb[0].mxu0
        %v3564 = vadd.f32 0.0, %v3563
        %v3565 = vpop.f32.mrb[0].mxu0
        %v3566 = vpop.f32.mrb[0].mxu0
        %v3567 = vadd.f32 0.0, %v3566
        %v3568 = vpop.f32.mrb[0].mxu0
        %3569 = vmatprep.mubr.bf16.mxu0 0
        %3570 = vmatmul.mubr.bf16.gmra.mrb[0].mxu0 %v3460
        %v3571 = vpop.f32.mrb[0].mxu0
        %v3572 = vadd.f32 0.0, %v3571
        %v3573 = vpop.f32.mrb[0].mxu0
        %v3574 = vpop.f32.mrb[0].mxu0
        %v3575 = vadd.f32 0.0, %v3574
        %v3576 = vpop.f32.mrb[0].mxu0
        %3577 = vmatprep.mubr.bf16.mxu0 0
        %3578 = vmatmul.mubr.bf16.gmra.mrb[0].mxu0 %v3463
        %v3579 = vpop.f32.mrb[0].mxu0
        %v3580 = vadd.f32 0.0, %v3579
        %v3581 = vpop.f32.mrb[0].mxu0
        %v3582 = vpop.f32.mrb[0].mxu0
        %v3583 = vadd.f32 0.0, %v3582
        %v3584 = vpop.f32.mrb[0].mxu0
        %3585 = vmatprep.mubr.bf16.mxu0 0
        %3586 = vmatmul.mubr.bf16.gmra.mrb[0].mxu0 %v3466
        %v3587 = vpop.f32.mrb[0].mxu0
        %v3588 = vadd.f32 0.0, %v3587
        %v3589 = vpop.f32.mrb[0].mxu0
        %v3590 = vpop.f32.mrb[0].mxu0
        %v3591 = vadd.f32 0.0, %v3590
        %v3592 = vpop.f32.mrb[0].mxu0
        %3593 = vmatprep.mubr.bf16.mxu0 0
        %3594 = vmatmul.mubr.bf16.gmra.mrb[0].mxu0 %v3469
        %v3595 = vpop.f32.mrb[0].mxu0
        %v3596 = vadd.f32 0.0, %v3595
        %v3597 = vpop.f32.mrb[0].mxu0
        %v3598 = vpop.f32.mrb[0].mxu0
        %v3599 = vadd.f32 0.0, %v3598
        %v3600 = vpop.f32.mrb[0].mxu0
        %3601 = vmatprep.mubr.bf16.mxu0 0
        %3602 = vmatmul.mubr.bf16.gmra.mrb[0].mxu0 %v3472
        %v3603 = vpop.f32.mrb[0].mxu0
        %v3604 = vadd.f32 0.0, %v3603
        %v3605 = vpop.f32.mrb[0].mxu0
        %v3606 = vpop.f32.mrb[0].mxu0
        %v3607 = vadd.f32 0.0, %v3606
        %v3608 = vpop.f32.mrb[0].mxu0
        %3609 = vmatprep.mubr.bf16.mxu0 0
        %3610 = vmatmul.mubr.bf16.gmra.mrb[0].mxu0 %v3475
        %v3611 = vpop.f32.mrb[0].mxu0
        %v3612 = vadd.f32 0.0, %v3611
        %v3613 = vpop.f32.mrb[0].mxu0
        %v3614 = vpop.f32.mrb[0].mxu0
        %v3615 = vadd.f32 0.0, %v3614
        %v3616 = vpop.f32.mrb[0].mxu0
        %3617 = vmatprep.mubr.bf16.mxu0 0
        %3618 = vmatmul.mubr.bf16.gmra.mrb[0].mxu0 %v3478
        %v3619 = vpop.f32.mrb[0].mxu0
        %v3620 = vadd.f32 0.0, %v3619
        %v3621 = vpop.f32.mrb[0].mxu0
        %v3622 = vpop.f32.mrb[0].mxu0
        %v3623 = vadd.f32 0.0, %v3622
        %v3624 = vpop.f32.mrb[0].mxu0
        %3625 = vmatprep.mubr.bf16.mxu0 0
        %3626 = vmatmul.mubr.bf16.gmra.mrb[0].mxu0 %v3481
        %v3627 = vpop.f32.mrb[0].mxu0
        %v3628 = vadd.f32 0.0, %v3627
        %v3629 = vpop.f32.mrb[0].mxu0
        %v3630 = vpop.f32.mrb[0].mxu0
        %v3631 = vadd.f32 0.0, %v3630
        %v3632 = vpop.f32.mrb[0].mxu0
        %3633 = vmatprep.mubr.bf16.mxu0 0
        %3634 = vmatmul.mubr.bf16.gmra.mrb[0].mxu0 %v3484
        %v3635 = vpop.f32.mrb[0].mxu0
        %v3636 = vadd.f32 0.0, %v3635
        %v3637 = vpop.f32.mrb[0].mxu0
        %v3638 = vpop.f32.mrb[0].mxu0
        %v3639 = vadd.f32 0.0, %v3638
        %v3640 = vpop.f32.mrb[0].mxu0
        %3641 = vmatprep.mubr.bf16.mxu0 0
        %3642 = vmatmul.mubr.bf16.gmra.mrb[0].mxu0 %v3487
        %v3643 = vpop.f32.mrb[0].mxu0
        %v3644 = vadd.f32 0.0, %v3643
        %v3645 = vpop.f32.mrb[0].mxu0
        %v3646 = vpop.f32.mrb[0].mxu0
        %v3647 = vadd.f32 0.0, %v3646
        %v3648 = vpop.f32.mrb[0].mxu0
        %3649 = vdwg.mxu0
        %v3650 = vadd.f32 %v3328, %v3524
        %v3651 = vadd.f32 %v3329, %v3527
        %v3652 = vadd.f32 %v3330, %v3532
        %v3653 = vadd.f32 %v3331, %v3535
        %v3654 = vadd.f32 %v3332, %v3540
        %v3655 = vadd.f32 %v3333, %v3543
        %v3656 = vadd.f32 %v3334, %v3548
        %v3657 = vadd.f32 %v3335, %v3551
        %v3658 = vadd.f32 %v3336, %v3556
        %v3659 = vadd.f32 %v3337, %v3559
        %v3660 = vadd.f32 %v3338, %v3564
        %v3661 = vadd.f32 %v3339, %v3567
        %v3662 = vadd.f32 %v3340, %v3572
        %v3663 = vadd.f32 %v3341, %v3575
        %v3664 = vadd.f32 %v3342, %v3580
        %v3665 = vadd.f32 %v3343, %v3583
        %v3666 = vadd.f32 %v3344, %v3588
        %v3667 = vadd.f32 %v3345, %v3591
        %v3668 = vadd.f32 %v3346, %v3596
        %v3669 = vadd.f32 %v3347, %v3599
        %v3670 = vadd.f32 %v3348, %v3604
        %v3671 = vadd.f32 %v3349, %v3607
        %v3672 = vadd.f32 %v3350, %v3612
        %v3673 = vadd.f32 %v3351, %v3615
        %v3674 = vadd.f32 %v3352, %v3620
        %v3675 = vadd.f32 %v3353, %v3623
        %v3676 = vadd.f32 %v3354, %v3628
        %v3677 = vadd.f32 %v3355, %v3631
        %v3678 = vadd.f32 %v3356, %v3636
        %v3679 = vadd.f32 %v3357, %v3639
        %v3680 = vadd.f32 %v3358, %v3644
        %v3681 = vadd.f32 %v3359, %v3647
        %v3682 = vld [vmem:[%s4] sm:$0x1]
        %v3684 = vlaneseq
        %v3685 = vshrl.u32 %v3684, 7
        %v3686 = vsub.s32 0, %v3685
        %v3687 = vrot.slane %v3682, %v3686
        %v3689 = vadd.f32 %v3650, %v3687
        %v3690 = vadd.f32 %v3651, %v3687
        %v3691 = vadd.f32 %v3652, %v3687
        %v3692 = vadd.f32 %v3653, %v3687
        %v3693 = vadd.f32 %v3654, %v3687
        %v3694 = vadd.f32 %v3655, %v3687
        %v3695 = vadd.f32 %v3656, %v3687
        %v3696 = vadd.f32 %v3657, %v3687
        %v3697 = vadd.f32 %v3658, %v3687
        %v3698 = vadd.f32 %v3659, %v3687
        %v3699 = vadd.f32 %v3660, %v3687
        %v3700 = vadd.f32 %v3661, %v3687
        %v3701 = vadd.f32 %v3662, %v3687
        %v3702 = vadd.f32 %v3663, %v3687
        %v3703 = vadd.f32 %v3664, %v3687
        %v3704 = vadd.f32 %v3665, %v3687
        %v3705 = vadd.f32 %v3666, %v3687
        %v3706 = vadd.f32 %v3667, %v3687
        %v3707 = vadd.f32 %v3668, %v3687
        %v3708 = vadd.f32 %v3669, %v3687
        %v3709 = vadd.f32 %v3670, %v3687
        %v3710 = vadd.f32 %v3671, %v3687
        %v3711 = vadd.f32 %v3672, %v3687
        %v3712 = vadd.f32 %v3673, %v3687
        %v3713 = vadd.f32 %v3674, %v3687
        %v3714 = vadd.f32 %v3675, %v3687
        %v3715 = vadd.f32 %v3676, %v3687
        %v3716 = vadd.f32 %v3677, %v3687
        %v3717 = vadd.f32 %v3678, %v3687
        %v3718 = vadd.f32 %v3679, %v3687
        %v3719 = vadd.f32 %v3680, %v3687
        %v3720 = vadd.f32 %v3681, %v3687
        %v3721 = vld [vmem:[%s402] sm:$0xff]
        %v3722 = vld [vmem:[%s402 + $0x8] sm:$0xff]
        %v3723 = vld [vmem:[%s402 + $0x10] sm:$0xff]
        %v3724 = vld [vmem:[%s402 + $0x18] sm:$0xff]
        %v3725 = vld [vmem:[%s402 + $0x20] sm:$0xff]
        %v3726 = vld [vmem:[%s402 + $0x28] sm:$0xff]
        %v3727 = vld [vmem:[%s402 + $0x30] sm:$0xff]
        %v3728 = vld [vmem:[%s402 + $0x38] sm:$0xff]
        %v3729 = vld [vmem:[%s402 + $0x40] sm:$0xff]
        %v3730 = vld [vmem:[%s402 + $0x48] sm:$0xff]
        %v3731 = vld [vmem:[%s402 + $0x50] sm:$0xff]
        %v3732 = vld [vmem:[%s402 + $0x58] sm:$0xff]
        %v3733 = vld [vmem:[%s402 + $0x60] sm:$0xff]
        %v3734 = vld [vmem:[%s402 + $0x68] sm:$0xff]
        %v3735 = vld [vmem:[%s402 + $0x70] sm:$0xff]
        %v3736 = vld [vmem:[%s402 + $0x78] sm:$0xff]
        %v3737 = vld [vmem:[%s402 + $0x80] sm:$0xff]
        %v3738 = vld [vmem:[%s402 + $0x88] sm:$0xff]
        %v3739 = vld [vmem:[%s402 + $0x90] sm:$0xff]
        %v3740 = vld [vmem:[%s402 + $0x98] sm:$0xff]
        %v3741 = vld [vmem:[%s402 + $0xa0] sm:$0xff]
        %v3742 = vld [vmem:[%s402 + $0xa8] sm:$0xff]
        %v3743 = vld [vmem:[%s402 + $0xb0] sm:$0xff]
        %v3744 = vld [vmem:[%s402 + $0xb8] sm:$0xff]
        %v3745 = vld [vmem:[%s402 + $0xc0] sm:$0xff]
        %v3746 = vld [vmem:[%s402 + $0xc8] sm:$0xff]
        %v3747 = vld [vmem:[%s402 + $0xd0] sm:$0xff]
        %v3748 = vld [vmem:[%s402 + $0xd8] sm:$0xff]
        %v3749 = vld [vmem:[%s402 + $0xe0] sm:$0xff]
        %v3750 = vld [vmem:[%s402 + $0xe8] sm:$0xff]
        %v3751 = vld [vmem:[%s402 + $0xf0] sm:$0xff]
        %v3752 = vld [vmem:[%s402 + $0xf8] sm:$0xff]
        %v3753 = vpack.c.bf16 %v3722, %v3721
        %v3754 = vpack.c.bf16 %v3724, %v3723
        %v3755 = vpack.c.bf16 %v3726, %v3725
        %v3756 = vpack.c.bf16 %v3728, %v3727
        %v3757 = vpack.c.bf16 %v3730, %v3729
        %v3758 = vpack.c.bf16 %v3732, %v3731
        %v3759 = vpack.c.bf16 %v3734, %v3733
        %v3760 = vpack.c.bf16 %v3736, %v3735
        %v3761 = vpack.c.bf16 %v3738, %v3737
        %v3762 = vpack.c.bf16 %v3740, %v3739
        %v3763 = vpack.c.bf16 %v3742, %v3741
        %v3764 = vpack.c.bf16 %v3744, %v3743
        %v3765 = vpack.c.bf16 %v3746, %v3745
        %v3766 = vpack.c.bf16 %v3748, %v3747
        %v3767 = vpack.c.bf16 %v3750, %v3749
        %v3768 = vpack.c.bf16 %v3752, %v3751
        %v3769 = vld [vmem:[%s6] sm:$0xf]
        %v3770 = vld [vmem:[%s6 + $0x4] sm:$0xf]
        %v3771 = vld [vmem:[%s6 + $0x8] sm:$0xf]
        %v3772 = vld [vmem:[%s6 + $0xc] sm:$0xf]
        %v3773 = vld [vmem:[%s7] sm:$0x1]
        %v3775 = vlaneseq
        %v3776 = vshrl.u32 %v3775, 7
        %v3777 = vsub.s32 0, %v3776
        %v3778 = vrot.slane %v3773, %v3777
        %v3784 = vunpack.c.l.b16 %v3769
        %v3785 = vunpack.c.l.b16 %v3770
        %v3786 = vunpack.c.l.b16 %v3771
        %v3787 = vunpack.c.l.b16 %v3772
        %v3788 = vpack.c.b16 %v3785, %v3784
        %v3789 = vpack.c.b16 %v3787, %v3786
        %vm3792 = vcmask 261120
        %v3794 = vsel %vm3792, %v3753, 0
        %v3797 = vsel %vm3792, %v3754, 0
        %v3800 = vsel %vm3792, %v3755, 0
        %v3803 = vsel %vm3792, %v3756, 0
        %v3806 = vsel %vm3792, %v3757, 0
        %v3809 = vsel %vm3792, %v3758, 0
        %v3812 = vsel %vm3792, %v3759, 0
        %v3815 = vsel %vm3792, %v3760, 0
        %v3818 = vsel %vm3792, %v3761, 0
        %v3821 = vsel %vm3792, %v3762, 0
        %v3824 = vsel %vm3792, %v3763, 0
        %v3827 = vsel %vm3792, %v3764, 0
        %v3830 = vsel %vm3792, %v3765, 0
        %v3833 = vsel %vm3792, %v3766, 0
        %v3836 = vsel %vm3792, %v3767, 0
        %v3839 = vsel %vm3792, %v3768, 0
        %3841 = vmatprep.subr.bf16.mxu0 0
        %3842 = vmatpush1.bf16.msra.mxu0 %v3788
        %3843 = vmatprep.subr.bf16.mxu0 0
        %3844 = vmatpush1.bf16.msra.mxu0 %v3789
        %3845 = vmatprep.subr.bf16.mxu0 0
        %3846 = vmatpush1.bf16.msra.mxu0 0
        %3847 = vmatprep.subr.bf16.mxu0 0
        %3848 = vmatpush1.bf16.msra.mxu0 0
        %3849 = vmatprep.subr.bf16.mxu0 0
        %3850 = vmatpush1.bf16.msra.mxu0 0
        %3851 = vmatprep.subr.bf16.mxu0 0
        %3852 = vmatpush1.bf16.msra.mxu0 0
        %3853 = vmatprep.subr.bf16.mxu0 0
        %3854 = vmatpush1.bf16.msra.mxu0 0
        %3855 = vmatprep.subr.bf16.mxu0 0
        %3856 = vmatpush1.bf16.msra.mxu0 0
        %3857 = vmatprep.subr.bf16.mxu0 0
        %3858 = vmatpush1.bf16.msra.mxu0 0
        %3859 = vmatprep.subr.bf16.mxu0 0
        %3860 = vmatpush1.bf16.msra.mxu0 0
        %3861 = vmatprep.subr.bf16.mxu0 0
        %3862 = vmatpush1.bf16.msra.mxu0 0
        %3863 = vmatprep.subr.bf16.mxu0 0
        %3864 = vmatpush1.bf16.msra.mxu0 0
        %3865 = vmatprep.subr.bf16.mxu0 0
        %3866 = vmatpush1.bf16.msra.mxu0 0
        %3867 = vmatprep.subr.bf16.mxu0 0
        %3868 = vmatpush1.bf16.msra.mxu0 0
        %3869 = vmatprep.subr.bf16.mxu0 0
        %3870 = vmatpush1.bf16.msra.mxu0 0
        %3871 = vmatprep.subr.bf16.mxu0 0
        %3872 = vmatpush1.bf16.msra.mxu0 0
        %3873 = vmatprep.mubr.bf16.mxu0 0
        %3874 = vmatmul.mubr.bf16.gmra.mrb[0].mxu0 %v3794
        %v3875 = vpop.f32.mrb[0].mxu0
        %v3876 = vadd.f32 %v3778, %v3875
        %v3877 = vpop.f32.mrb[0].mxu0
        %v3878 = vpop.f32.mrb[0].mxu0
        %v3879 = vadd.f32 %v3778, %v3878
        %v3880 = vpop.f32.mrb[0].mxu0
        %3881 = vmatprep.mubr.bf16.mxu0 0
        %3882 = vmatmul.mubr.bf16.gmra.mrb[0].mxu0 %v3797
        %v3883 = vpop.f32.mrb[0].mxu0
        %v3884 = vadd.f32 %v3778, %v3883
        %v3885 = vpop.f32.mrb[0].mxu0
        %v3886 = vpop.f32.mrb[0].mxu0
        %v3887 = vadd.f32 %v3778, %v3886
        %v3888 = vpop.f32.mrb[0].mxu0
        %3889 = vmatprep.mubr.bf16.mxu0 0
        %3890 = vmatmul.mubr.bf16.gmra.mrb[0].mxu0 %v3800
        %v3891 = vpop.f32.mrb[0].mxu0
        %v3892 = vadd.f32 %v3778, %v3891
        %v3893 = vpop.f32.mrb[0].mxu0
        %v3894 = vpop.f32.mrb[0].mxu0
        %v3895 = vadd.f32 %v3778, %v3894
        %v3896 = vpop.f32.mrb[0].mxu0
        %3897 = vmatprep.mubr.bf16.mxu0 0
        %3898 = vmatmul.mubr.bf16.gmra.mrb[0].mxu0 %v3803
        %v3899 = vpop.f32.mrb[0].mxu0
        %v3900 = vadd.f32 %v3778, %v3899
        %v3901 = vpop.f32.mrb[0].mxu0
        %v3902 = vpop.f32.mrb[0].mxu0
        %v3903 = vadd.f32 %v3778, %v3902
        %v3904 = vpop.f32.mrb[0].mxu0
        %3905 = vmatprep.mubr.bf16.mxu0 0
        %3906 = vmatmul.mubr.bf16.gmra.mrb[0].mxu0 %v3806
        %v3907 = vpop.f32.mrb[0].mxu0
        %v3908 = vadd.f32 %v3778, %v3907
        %v3909 = vpop.f32.mrb[0].mxu0
        %v3910 = vpop.f32.mrb[0].mxu0
        %v3911 = vadd.f32 %v3778, %v3910
        %v3912 = vpop.f32.mrb[0].mxu0
        %3913 = vmatprep.mubr.bf16.mxu0 0
        %3914 = vmatmul.mubr.bf16.gmra.mrb[0].mxu0 %v3809
        %v3915 = vpop.f32.mrb[0].mxu0
        %v3916 = vadd.f32 %v3778, %v3915
        %v3917 = vpop.f32.mrb[0].mxu0
        %v3918 = vpop.f32.mrb[0].mxu0
        %v3919 = vadd.f32 %v3778, %v3918
        %v3920 = vpop.f32.mrb[0].mxu0
        %3921 = vmatprep.mubr.bf16.mxu0 0
        %3922 = vmatmul.mubr.bf16.gmra.mrb[0].mxu0 %v3812
        %v3923 = vpop.f32.mrb[0].mxu0
        %v3924 = vadd.f32 %v3778, %v3923
        %v3925 = vpop.f32.mrb[0].mxu0
        %v3926 = vpop.f32.mrb[0].mxu0
        %v3927 = vadd.f32 %v3778, %v3926
        %v3928 = vpop.f32.mrb[0].mxu0
        %3929 = vmatprep.mubr.bf16.mxu0 0
        %3930 = vmatmul.mubr.bf16.gmra.mrb[0].mxu0 %v3815
        %v3931 = vpop.f32.mrb[0].mxu0
        %v3932 = vadd.f32 %v3778, %v3931
        %v3933 = vpop.f32.mrb[0].mxu0
        %v3934 = vpop.f32.mrb[0].mxu0
        %v3935 = vadd.f32 %v3778, %v3934
        %v3936 = vpop.f32.mrb[0].mxu0
        %3937 = vmatprep.mubr.bf16.mxu0 0
        %3938 = vmatmul.mubr.bf16.gmra.mrb[0].mxu0 %v3818
        %v3939 = vpop.f32.mrb[0].mxu0
        %v3940 = vadd.f32 %v3778, %v3939
        %v3941 = vpop.f32.mrb[0].mxu0
        %v3942 = vpop.f32.mrb[0].mxu0
        %v3943 = vadd.f32 %v3778, %v3942
        %v3944 = vpop.f32.mrb[0].mxu0
        %3945 = vmatprep.mubr.bf16.mxu0 0
        %3946 = vmatmul.mubr.bf16.gmra.mrb[0].mxu0 %v3821
        %v3947 = vpop.f32.mrb[0].mxu0
        %v3948 = vadd.f32 %v3778, %v3947
        %v3949 = vpop.f32.mrb[0].mxu0
        %v3950 = vpop.f32.mrb[0].mxu0
        %v3951 = vadd.f32 %v3778, %v3950
        %v3952 = vpop.f32.mrb[0].mxu0
        %3953 = vmatprep.mubr.bf16.mxu0 0
        %3954 = vmatmul.mubr.bf16.gmra.mrb[0].mxu0 %v3824
        %v3955 = vpop.f32.mrb[0].mxu0
        %v3956 = vadd.f32 %v3778, %v3955
        %v3957 = vpop.f32.mrb[0].mxu0
        %v3958 = vpop.f32.mrb[0].mxu0
        %v3959 = vadd.f32 %v3778, %v3958
        %v3960 = vpop.f32.mrb[0].mxu0
        %3961 = vmatprep.mubr.bf16.mxu0 0
        %3962 = vmatmul.mubr.bf16.gmra.mrb[0].mxu0 %v3827
        %v3963 = vpop.f32.mrb[0].mxu0
        %v3964 = vadd.f32 %v3778, %v3963
        %v3965 = vpop.f32.mrb[0].mxu0
        %v3966 = vpop.f32.mrb[0].mxu0
        %v3967 = vadd.f32 %v3778, %v3966
        %v3968 = vpop.f32.mrb[0].mxu0
        %3969 = vmatprep.mubr.bf16.mxu0 0
        %3970 = vmatmul.mubr.bf16.gmra.mrb[0].mxu0 %v3830
        %v3971 = vpop.f32.mrb[0].mxu0
        %v3972 = vadd.f32 %v3778, %v3971
        %v3973 = vpop.f32.mrb[0].mxu0
        %v3974 = vpop.f32.mrb[0].mxu0
        %v3975 = vadd.f32 %v3778, %v3974
        %v3976 = vpop.f32.mrb[0].mxu0
        %3977 = vmatprep.mubr.bf16.mxu0 0
        %3978 = vmatmul.mubr.bf16.gmra.mrb[0].mxu0 %v3833
        %v3979 = vpop.f32.mrb[0].mxu0
        %v3980 = vadd.f32 %v3778, %v3979
        %v3981 = vpop.f32.mrb[0].mxu0
        %v3982 = vpop.f32.mrb[0].mxu0
        %v3983 = vadd.f32 %v3778, %v3982
        %v3984 = vpop.f32.mrb[0].mxu0
        %3985 = vmatprep.mubr.bf16.mxu0 0
        %3986 = vmatmul.mubr.bf16.gmra.mrb[0].mxu0 %v3836
        %v3987 = vpop.f32.mrb[0].mxu0
        %v3988 = vadd.f32 %v3778, %v3987
        %v3989 = vpop.f32.mrb[0].mxu0
        %v3990 = vpop.f32.mrb[0].mxu0
        %v3991 = vadd.f32 %v3778, %v3990
        %v3992 = vpop.f32.mrb[0].mxu0
        %3993 = vmatprep.mubr.bf16.mxu0 0
        %3994 = vmatmul.mubr.bf16.gmra.mrb[0].mxu0 %v3839
        %v3995 = vpop.f32.mrb[0].mxu0
        %v3996 = vadd.f32 %v3778, %v3995
        %v3997 = vpop.f32.mrb[0].mxu0
        %v3998 = vpop.f32.mrb[0].mxu0
        %v3999 = vadd.f32 %v3778, %v3998
        %v4000 = vpop.f32.mrb[0].mxu0
        %4001 = vdwg.mxu0
        %v4002 = vadd.f32 %v3689, %v3876
        %v4003 = vadd.f32 %v3690, %v3879
        %v4004 = vadd.f32 %v3691, %v3884
        %v4005 = vadd.f32 %v3692, %v3887
        %v4006 = vadd.f32 %v3693, %v3892
        %v4007 = vadd.f32 %v3694, %v3895
        %v4008 = vadd.f32 %v3695, %v3900
        %v4009 = vadd.f32 %v3696, %v3903
        %v4010 = vadd.f32 %v3697, %v3908
        %v4011 = vadd.f32 %v3698, %v3911
        %v4012 = vadd.f32 %v3699, %v3916
        %v4013 = vadd.f32 %v3700, %v3919
        %v4014 = vadd.f32 %v3701, %v3924
        %v4015 = vadd.f32 %v3702, %v3927
        %v4016 = vadd.f32 %v3703, %v3932
        %v4017 = vadd.f32 %v3704, %v3935
        %v4018 = vadd.f32 %v3705, %v3940
        %v4019 = vadd.f32 %v3706, %v3943
        %v4020 = vadd.f32 %v3707, %v3948
        %v4021 = vadd.f32 %v3708, %v3951
        %v4022 = vadd.f32 %v3709, %v3956
        %v4023 = vadd.f32 %v3710, %v3959
        %v4024 = vadd.f32 %v3711, %v3964
        %v4025 = vadd.f32 %v3712, %v3967
        %v4026 = vadd.f32 %v3713, %v3972
        %v4027 = vadd.f32 %v3714, %v3975
        %v4028 = vadd.f32 %v3715, %v3980
        %v4029 = vadd.f32 %v3716, %v3983
        %v4030 = vadd.f32 %v3717, %v3988
        %v4031 = vadd.f32 %v3718, %v3991
        %v4032 = vadd.f32 %v3719, %v3996
        %v4033 = vadd.f32 %v3720, %v3999
        %4034 = vst.msk [vmem:[%s375] sm:$0xff] %vm810, %v4002
        %4035 = vst.msk [vmem:[%s375 + $0x8] sm:$0xff] %vm810, %v4003
        %4036 = vst.msk [vmem:[%s375 + $0x10] sm:$0xff] %vm810, %v4004
        %4037 = vst.msk [vmem:[%s375 + $0x18] sm:$0xff] %vm810, %v4005
        %4038 = vst.msk [vmem:[%s375 + $0x20] sm:$0xff] %vm810, %v4006
        %4039 = vst.msk [vmem:[%s375 + $0x28] sm:$0xff] %vm810, %v4007
        %4040 = vst.msk [vmem:[%s375 + $0x30] sm:$0xff] %vm810, %v4008
        %4041 = vst.msk [vmem:[%s375 + $0x38] sm:$0xff] %vm810, %v4009
        %4042 = vst.msk [vmem:[%s375 + $0x40] sm:$0xff] %vm810, %v4010
        %4043 = vst.msk [vmem:[%s375 + $0x48] sm:$0xff] %vm810, %v4011
        %4044 = vst.msk [vmem:[%s375 + $0x50] sm:$0xff] %vm810, %v4012
        %4045 = vst.msk [vmem:[%s375 + $0x58] sm:$0xff] %vm810, %v4013
        %4046 = vst.msk [vmem:[%s375 + $0x60] sm:$0xff] %vm810, %v4014
        %4047 = vst.msk [vmem:[%s375 + $0x68] sm:$0xff] %vm810, %v4015
        %4048 = vst.msk [vmem:[%s375 + $0x70] sm:$0xff] %vm810, %v4016
        %4049 = vst.msk [vmem:[%s375 + $0x78] sm:$0xff] %vm810, %v4017
        %4050 = vst.msk [vmem:[%s375 + $0x80] sm:$0xff] %vm810, %v4018
        %4051 = vst.msk [vmem:[%s375 + $0x88] sm:$0xff] %vm810, %v4019
        %4052 = vst.msk [vmem:[%s375 + $0x90] sm:$0xff] %vm810, %v4020
        %4053 = vst.msk [vmem:[%s375 + $0x98] sm:$0xff] %vm810, %v4021
        %4054 = vst.msk [vmem:[%s375 + $0xa0] sm:$0xff] %vm810, %v4022
        %4055 = vst.msk [vmem:[%s375 + $0xa8] sm:$0xff] %vm810, %v4023
        %4056 = vst.msk [vmem:[%s375 + $0xb0] sm:$0xff] %vm810, %v4024
        %4057 = vst.msk [vmem:[%s375 + $0xb8] sm:$0xff] %vm810, %v4025
        %4058 = vst.msk [vmem:[%s375 + $0xc0] sm:$0xff] %vm810, %v4026
        %4059 = vst.msk [vmem:[%s375 + $0xc8] sm:$0xff] %vm810, %v4027
        %4060 = vst.msk [vmem:[%s375 + $0xd0] sm:$0xff] %vm810, %v4028
        %4061 = vst.msk [vmem:[%s375 + $0xd8] sm:$0xff] %vm810, %v4029
        %4062 = vst.msk [vmem:[%s375 + $0xe0] sm:$0xff] %vm810, %v4030
        %4063 = vst.msk [vmem:[%s375 + $0xe8] sm:$0xff] %vm810, %v4031
        %4064 = vst.msk [vmem:[%s375 + $0xf0] sm:$0xff] %vm810, %v4032
        %4065 = vst.msk [vmem:[%s375 + $0xf8] sm:$0xff] %vm810, %v4033
        %s4066 = sand.u32 %s236, 1
        %s4067 = scalar_lea.sflag [#allocation4], %s4066
        %s4068 = sand.u32 %s236, 1
        %s4069 = smul.addr %s4068, 256
        %s4070 = scalar_lea.vmem [#allocation3], %s4069
        // Predicated region
        $region53: #{resnet_block_forward.3} parent=51 // pred_check
          %p4071 = pneg %p246
        $region54: #{resnet_block_forward.3} parent=51 // pred_check_branch
          %4073 = sbr.rel (%p4071) target = $region56
        $region55: #{resnet_block_forward.3} parent=51 // pred_region
          %s4074 = smul.u32 16, %s27
          %s4076 = ssub.s32 4096, 4096
          %4077 = vsyncadd %s4067, %s4076
          %s4078 = smul.addr %s4074, 2
          %s4079 = smul.addr %s26, 32
          %s4080 = sadd.s32 %s4078, %s4079
          %s4081 = smul.addr %s4080, 128
          %s4082 = scalar_lea.hbm %s8, %s4081
          %s4083 = sshll.u32 %s4070, 4
          %s4084 = int_to_ptr.vmem [resolvable:$true] %s4083
          %4089 = dma.vmem_to_hbm [thread:$0]  %s4084, 4096, %s4082, %s4067, 128, 128, 8
        $region56: #{resnet_block_forward.3} parent=51 // pred_fallthru
          _
      $region52: #{resnet_block_forward.3} parent=5 // pred_fallthru
        _
      %p4090 = scmp.le.s32.totalorder 2, %s17
      // Predicated region
      $region57: #{resnet_block_forward.3} parent=5 // pred_check
        %p4091 = pneg %p4090
      $region58: #{resnet_block_forward.3} parent=5 // pred_check_branch
        %4093 = sbr.rel (%p4091) target = $region60
      $region59: #{resnet_block_forward.3} parent=5 // pred_region
        %s4094 = ssub.s32 %s17, 2
        // Predicated region
        $region61: #{resnet_block_forward.3} parent=59 // pred_check
          %p4095 = pneg %p252
        $region62: #{resnet_block_forward.3} parent=59 // pred_check_branch
          %4097 = sbr.rel (%p4095) target = $region64
        $region63: #{resnet_block_forward.3} parent=59 // pred_region
          %s4098 = sand.u32 %s237, 1
          %s4099 = scalar_lea.sflag [#allocation4], %s4098
          %s4100 = sand.u32 %s237, 1
          %s4101 = smul.addr %s4100, 256
          %s4102 = scalar_lea.vmem [#allocation3], %s4101
          %4103 = dma.done %s4099, 4096
        $region64: #{resnet_block_forward.3} parent=59 // pred_fallthru
          _
      $region60: #{resnet_block_forward.3} parent=5 // pred_fallthru
        _
    $region6: #{resnet_block_forward.3} parent=1 // loop_footer
      %s21 = sadd.s32 1, %s17
    $region7: #{resnet_block_forward.3} parent=1 // loop_footer_branch
      %16 = sbr.rel target = $region3
    $region8: #{resnet_block_forward.3} parent=1 // loop_exit
      _
    %4104 = vsyncpa [#allocation4], 1
    %s4105 = scalar_lea.sflag [#allocation4], 1
    %4106 = vsyncpa %s4105, 1

</llo_original>
